<compile_context>
chip_gen: v5e
topology: v5e:2x2
jax: 0.10.0
libtpu: 0.0.40
codegen_flags: <defaults>
</compile_context>

<pallas_src>
import functools

import jax
import jax.numpy as jnp
from jax.experimental import pallas as pl
from jax.experimental.pallas import tpu as pltpu

# Input spatial geometry implied by the module: (D, H, W) = (10, 10, 2); after the five
# convs the spatial size is (4, 4, 1), matching nn.Linear(256*4*4*1, 1).
D_GRID = 10
H_GRID = 10


def _fused_cnn_kernel(x_ref, w1_ref, b1_ref,
                      w2_ref, b2_ref, w3_ref, b3_ref,
                      w4_ref, b4_ref, w5_ref, b5_ref,
                      fcw_ref, fcb_ref, out_ref,
                      a1, a2, a3, a4, a5, fc_scr,
                      *, nb, rv1, rvp, r_scr):
    """Full forward pass for one block of `nb` samples (everything VMEM resident)."""
    # ---- zero ONLY the tail rows a consumer may read but the producer never writes ----
    tail1 = (rv1 // 8) * 8                         # 8-aligned start -> dense stores
    a1[pl.ds(tail1, r_scr - tail1), :] = jnp.zeros((r_scr - tail1, 32), jnp.bfloat16)
    a2[pl.ds(rvp, r_scr - rvp), :] = jnp.zeros((r_scr - rvp, 64), jnp.bfloat16)
    a3[pl.ds(rvp, r_scr - rvp), :] = jnp.zeros((r_scr - rvp, 128), jnp.bfloat16)
    a4[pl.ds(rvp, r_scr - rvp), :] = jnp.zeros((r_scr - rvp, 128), jnp.bfloat16)
    a5[pl.ds(rvp, r_scr - rvp), :] = jnp.zeros((r_scr - rvp, 256), jnp.bfloat16)

    # ---- conv1: kernel (3,3,2), Cin=1 -> contraction length 2: VPU broadcast-mul path ----
    acc1 = jnp.zeros((rv1, 32), jnp.float32)
    for dz in range(3):
        for dy in range(3):
            shift = dz * H_GRID + dy
            xs = x_ref[pl.ds(shift, rv1), :]       # (rv1, 2) f32, lanes = W
            w = w1_ref[dz * 3 + dy]                # (2, 32) f32  [dx, cout]
            acc1 = acc1 + xs[:, 0:1] * w[0:1, :] + xs[:, 1:2] * w[1:2, :]
    a1[pl.ds(0, rv1), :] = jnp.maximum(acc1 + b1_ref[...], 0.0).astype(jnp.bfloat16)

    # ---- conv2..conv5: ONE K-concatenated MXU dot per layer (bf16 in, f32 accumulate) ----
    def conv2x2(in_scr, w_ref, b_ref, out_scr):
        xk = jnp.concatenate(
            [in_scr[pl.ds(0, rvp), :],             # (dz, dy) = (0, 0)
             in_scr[pl.ds(1, rvp), :],             # (0, 1)
             in_scr[pl.ds(H_GRID, rvp), :],        # (1, 0)
             in_scr[pl.ds(H_GRID + 1, rvp), :]],   # (1, 1)
            axis=1)                                # (rvp, 4*Cin) bf16
        acc = jnp.dot(xk, w_ref[...], preferred_element_type=jnp.float32)
        out_scr[pl.ds(0, rvp), :] = jnp.maximum(
            acc + b_ref[...], 0.0).astype(jnp.bfloat16)

    conv2x2(a1, w2_ref, b2_ref, a2)    # (8,8,32)  -> (7,7,64)   K=128
    conv2x2(a2, w3_ref, b3_ref, a3)    # (7,7,64)  -> (6,6,128)  K=256
    conv2x2(a3, w4_ref, b4_ref, a4)    # (6,6,128) -> (5,5,128)  K=512
    conv2x2(a4, w5_ref, b5_ref, a5)    # (5,5,128) -> (4,4,256)  K=512

    # ---- flatten + fc(4096 -> 1) + tanh: VPU multiply + XLU reduces, one dense store ----
    fcw = fcw_ref[...]                              # (100, 256) f32, zero-padded slab
    stripe = D_GRID * H_GRID
    for s in range(nb):                             # static, nb <= 16
        rows = a5[pl.ds(s * stripe, stripe), :].astype(jnp.float32)   # (100, 256)
        fc_scr[pl.ds(s, 1), :] = jnp.sum(rows * fcw, axis=0, keepdims=True)
    vals = jnp.sum(fc_scr[...], axis=1, keepdims=True)                # (nb, 1)
    out_ref[...] = jnp.tanh(vals + fcb_ref[...])


def _full_spec(a):
    nd = a.ndim
    return pl.BlockSpec(a.shape, lambda i, _nd=nd: (0,) * _nd)


def cnn_forward(packed, x, block_samples: int = 16):
    """x: (N, 1, 10, 10, 2) in PyTorch NCDHW layout. Returns (N, 1) float32."""
    assert x.shape[1:] == (1, D_GRID, H_GRID, 2), x.shape
    n = x.shape[0]
    nb = n if n <= block_samples else block_samples
    if nb < n and nb % 2:                 # keep block rows (nb*100) sublane (8) aligned
        nb += 1
    stripe = D_GRID * H_GRID
    r_b = nb * stripe                     # rows per grid block (row = (sample, d, h))
    rv1 = r_b - 2 * H_GRID - 2            # rows written by conv1
    rvp = ((r_b - H_GRID - 1) + 7) // 8 * 8   # rows written by conv2..5 (8-aligned)
    r_scr = rvp + 16                      # scratch rows incl. headroom for shifted reads

    x2d = x.reshape(n * stripe, 2).astype(jnp.float32)   # pure reshape (C = 1)

    kernel = functools.partial(_fused_cnn_kernel, nb=nb, rv1=rv1, rvp=rvp, r_scr=r_scr)
    return pl.pallas_call(
        kernel,
        out_shape=jax.ShapeDtypeStruct((n, 1), jnp.float32),
        grid_spec=pltpu.PrefetchScalarGridSpec(
            num_scalar_prefetch=0,
            grid=(pl.cdiv(n, nb),),
            in_specs=[pl.BlockSpec((r_b, 2), lambda i: (i, 0))]
                     + [_full_spec(p) for p in packed],
            out_specs=pl.BlockSpec((nb, 1), lambda i: (i, 0)),
            scratch_shapes=[
                pltpu.VMEM((r_scr, 32), jnp.bfloat16),    # act1
                pltpu.VMEM((r_scr, 64), jnp.bfloat16),    # act2
                pltpu.VMEM((r_scr, 128), jnp.bfloat16),   # act3
                pltpu.VMEM((r_scr, 128), jnp.bfloat16),   # act4
                pltpu.VMEM((r_scr, 256), jnp.bfloat16),   # act5
                pltpu.VMEM((nb, 256), jnp.float32),       # fc partial sums
            ]),
        compiler_params=pltpu.CompilerParams(
            dimension_semantics=("parallel",)),           # megacore-shard batch blocks
    )(x2d, *packed)


cnn_forward_jit = jax.jit(cnn_forward, static_argnames=("block_samples",))


def init_params(key):
    """PyTorch-layout parameters, uniform(-1/sqrt(fan_in), 1/sqrt(fan_in)) init."""
    def conv_p(k, cout, cin, kd, kh, kw):
        k1, k2 = jax.random.split(k)
        fan_in = cin * kd * kh * kw
        bound = 1.0 / float(fan_in) ** 0.5
        w = jax.random.uniform(k1, (cout, cin, kd, kh, kw), jnp.float32, -bound, bound)
        b = jax.random.uniform(k2, (cout,), jnp.float32, -bound, bound)
        return w, b

    keys = jax.random.split(key, 6)
    params = {
        "conv1": conv_p(keys[0], 32, 1, 3, 3, 2),
        "conv2": conv_p(keys[1], 64, 32, 2, 2, 1),
        "conv3": conv_p(keys[2], 128, 64, 2, 2, 1),
        "conv4": conv_p(keys[3], 128, 128, 2, 2, 1),
        "conv5": conv_p(keys[4], 256, 128, 2, 2, 1),
    }
    k1, k2 = jax.random.split(keys[5])
    fc_in = 256 * 4 * 4 * 1
    bound = 1.0 / float(fc_in) ** 0.5
    fc_w = jax.random.uniform(k1, (1, fc_in), jnp.float32, -bound, bound)
    fc_b = jax.random.uniform(k2, (1,), jnp.float32, -bound, bound)
    params["fc"] = (fc_w, fc_b)
    return params


def pack_params(params):
    """One-time repack of PyTorch-layout parameters into kernel-ready layouts."""
    def pack_conv1(w, b):
        # (32, 1, 3, 3, 2) -> (9, 2, 32): [dz*3+dy, dx, cout]; stays f32 (VPU path).
        wp = jnp.transpose(w[:, 0], (1, 2, 3, 0)).reshape(9, 2, 32)
        return wp.astype(jnp.float32), b.reshape(1, 32).astype(jnp.float32)

    def pack_conv(w, b):
        # (Cout, Cin, 2, 2, 1) -> single (4*Cin, Cout) bf16 slab, rows ordered
        # [(dz,dy) block major, ci minor] to match the kernel's lane concatenation.
        cout, cin = w.shape[0], w.shape[1]
        wp = jnp.transpose(w[:, :, :, :, 0], (2, 3, 1, 0)).reshape(4 * cin, cout)
        return wp.astype(jnp.bfloat16), b.reshape(1, cout).astype(jnp.float32)

    def pack_fc(w, b):
        # PyTorch flatten index of (C=256, D=4, H=4, W=1) is c*16 + d*4 + h.
        # (1, 4096) -> zero-padded (10*10, 256) slab indexed by [d*10 + h, c].
        wp = jnp.transpose(w.reshape(256, 4, 4), (1, 2, 0)).astype(jnp.float32)
        slab = jnp.zeros((D_GRID, H_GRID, 256), jnp.float32)
        slab = slab.at[:4, :4, :].set(wp)
        return slab.reshape(D_GRID * H_GRID, 256), b.reshape(1, 1).astype(jnp.float32)

    w1, b1 = pack_conv1(*params["conv1"])
    w2, b2 = pack_conv(*params["conv2"])
    w3, b3 = pack_conv(*params["conv3"])
    w4, b4 = pack_conv(*params["conv4"])
    w5, b5 = pack_conv(*params["conv5"])
    fw, fb = pack_fc(*params["fc"])
    return (w1, b1, w2, b2, w3, b3, w4, b4, w5, b5, fw, fb)


def _reference_forward(params, x):
    """Pure-JAX reference using the same bf16 cast points as the kernel."""
    def conv(h, w, b, dt):
        y = jax.lax.conv_general_dilated(
            h.astype(dt), w.astype(dt), window_strides=(1, 1, 1), padding="VALID",
            dimension_numbers=("NCDHW", "OIDHW", "NCDHW"),
            preferred_element_type=jnp.float32,
            precision=jax.lax.Precision.HIGHEST)
        return jax.nn.relu(y + b.astype(jnp.float32)[None, :, None, None, None])

    h = conv(x, *params["conv1"], jnp.float32)                 # f32 conv1 (as in kernel)
    for name in ("conv2", "conv3", "conv4", "conv5"):
        h = conv(h, *params[name], jnp.bfloat16)               # bf16 in, f32 accumulate
    flat = h.astype(jnp.bfloat16).astype(jnp.float32).reshape(x.shape[0], -1)
    fw, fb = params["fc"]
    return jnp.tanh(jnp.dot(flat, fw.T, precision=jax.lax.Precision.HIGHEST) + fb)


if __name__ == "__main__":
    key = jax.random.PRNGKey(0)
    kx, kp = jax.random.split(key)
    # Input (N, C, D, H, W) = (2, 1, 10, 10, 2) -> conv stack -> (2, 256, 4, 4, 1) -> fc -> (2, 1)
    x = jax.random.normal(kx, (2, 1, D_GRID, H_GRID, 2), dtype=jnp.float32)
    params = init_params(kp)
    packed = pack_params(params)              # one-time weight repack (no per-call transposes)
    out = jax.block_until_ready(cnn_forward_jit(packed, x))
    assert out.shape == (2, 1)
    assert bool(jnp.all(jnp.abs(out) <= 1.0))                  # tanh range sanity check
    ref = jax.block_until_ready(jax.jit(_reference_forward)(params, x))
    assert bool(jnp.allclose(out, ref, atol=1e-2, rtol=1e-2)), (out, ref)
    print("KERNEL_OK")
</pallas_src>

<mosaic_0001>
module attributes {stable_mosaic.version = 11 : i64} {
  func.func @_fused_cnn_kernel(%arg0: i32, %arg1: memref<200x2xf32, #tpu.memory_space<vmem>>, %arg2: memref<9x2x32xf32, #tpu.memory_space<vmem>>, %arg3: memref<1x32xf32, #tpu.memory_space<vmem>>, %arg4: memref<128x64xbf16, #tpu.memory_space<vmem>>, %arg5: memref<1x64xf32, #tpu.memory_space<vmem>>, %arg6: memref<256x128xbf16, #tpu.memory_space<vmem>>, %arg7: memref<1x128xf32, #tpu.memory_space<vmem>>, %arg8: memref<512x128xbf16, #tpu.memory_space<vmem>>, %arg9: memref<1x128xf32, #tpu.memory_space<vmem>>, %arg10: memref<512x256xbf16, #tpu.memory_space<vmem>>, %arg11: memref<1x256xf32, #tpu.memory_space<vmem>>, %arg12: memref<100x256xf32, #tpu.memory_space<vmem>>, %arg13: memref<1x1xf32, #tpu.memory_space<vmem>>, %arg14: memref<2x1xf32, #tpu.memory_space<vmem>>, %arg15: memref<208x32xbf16, #tpu.memory_space<vmem>>, %arg16: memref<208x64xbf16, #tpu.memory_space<vmem>>, %arg17: memref<208x128xbf16, #tpu.memory_space<vmem>>, %arg18: memref<208x128xbf16, #tpu.memory_space<vmem>>, %arg19: memref<208x256xbf16, #tpu.memory_space<vmem>>, %arg20: memref<2x256xf32, #tpu.memory_space<vmem>>) attributes {dimension_semantics = [#tpu.dimension_semantics<parallel>], iteration_bounds = array<i64: 1>, scalar_prefetch = 0 : i64, scratch_operands = 6 : i64, tpu.core_type = #tpu.core_type<tc>, window_params = [{transform_indices = @transform_0, window_bounds = array<i64: 200, 2>}, {pipeline_mode = #tpu.pipeline_mode<synchronous>, transform_indices = @transform_1, window_bounds = array<i64: 9, 2, 32>}, {pipeline_mode = #tpu.pipeline_mode<synchronous>, transform_indices = @transform_2, window_bounds = array<i64: 1, 32>}, {pipeline_mode = #tpu.pipeline_mode<synchronous>, transform_indices = @transform_3, window_bounds = array<i64: 128, 64>}, {pipeline_mode = #tpu.pipeline_mode<synchronous>, transform_indices = @transform_4, window_bounds = array<i64: 1, 64>}, {pipeline_mode = #tpu.pipeline_mode<synchronous>, transform_indices = @transform_5, window_bounds = array<i64: 256, 128>}, {pipeline_mode = #tpu.pipeline_mode<synchronous>, transform_indices = @transform_6, window_bounds = array<i64: 1, 128>}, {pipeline_mode = #tpu.pipeline_mode<synchronous>, transform_indices = @transform_7, window_bounds = array<i64: 512, 128>}, {pipeline_mode = #tpu.pipeline_mode<synchronous>, transform_indices = @transform_8, window_bounds = array<i64: 1, 128>}, {pipeline_mode = #tpu.pipeline_mode<synchronous>, transform_indices = @transform_9, window_bounds = array<i64: 512, 256>}, {pipeline_mode = #tpu.pipeline_mode<synchronous>, transform_indices = @transform_10, window_bounds = array<i64: 1, 256>}, {pipeline_mode = #tpu.pipeline_mode<synchronous>, transform_indices = @transform_11, window_bounds = array<i64: 100, 256>}, {pipeline_mode = #tpu.pipeline_mode<synchronous>, transform_indices = @transform_12, window_bounds = array<i64: 1, 1>}, {transform_indices = @transform_13, window_bounds = array<i64: 2, 1>}]} {
    %cst = arith.constant 0.000000e+00 : bf16
    %0 = vector.broadcast %cst : bf16 to vector<32x32xbf16>
    %c176 = arith.constant 176 : index
    %c0 = arith.constant 0 : index
    %1 = vector.load %arg15[%c176, %c0] : memref<208x32xbf16, #tpu.memory_space<vmem>>, vector<32x32xbf16>
    tpu.vector_store %arg15[%c176, %c0], %0 {strides = array<i32>} : memref<208x32xbf16, #tpu.memory_space<vmem>>, vector<32x32xbf16>,
    %cst_0 = arith.constant 0.000000e+00 : bf16
    %2 = vector.broadcast %cst_0 : bf16 to vector<16x64xbf16>
    %c192 = arith.constant 192 : index
    %c0_1 = arith.constant 0 : index
    %3 = vector.load %arg16[%c192, %c0_1] : memref<208x64xbf16, #tpu.memory_space<vmem>>, vector<16x64xbf16>
    tpu.vector_store %arg16[%c192, %c0_1], %2 {strides = array<i32>} : memref<208x64xbf16, #tpu.memory_space<vmem>>, vector<16x64xbf16>,
    %cst_2 = arith.constant 0.000000e+00 : bf16
    %4 = vector.broadcast %cst_2 : bf16 to vector<16x128xbf16>
    %c192_3 = arith.constant 192 : index
    %c0_4 = arith.constant 0 : index
    %5 = vector.load %arg17[%c192_3, %c0_4] : memref<208x128xbf16, #tpu.memory_space<vmem>>, vector<16x128xbf16>
    tpu.vector_store %arg17[%c192_3, %c0_4], %4 {strides = array<i32>} : memref<208x128xbf16, #tpu.memory_space<vmem>>, vector<16x128xbf16>,
    %cst_5 = arith.constant 0.000000e+00 : bf16
    %6 = vector.broadcast %cst_5 : bf16 to vector<16x128xbf16>
    %c192_6 = arith.constant 192 : index
    %c0_7 = arith.constant 0 : index
    %7 = vector.load %arg18[%c192_6, %c0_7] : memref<208x128xbf16, #tpu.memory_space<vmem>>, vector<16x128xbf16>
    tpu.vector_store %arg18[%c192_6, %c0_7], %6 {strides = array<i32>} : memref<208x128xbf16, #tpu.memory_space<vmem>>, vector<16x128xbf16>,
    %cst_8 = arith.constant 0.000000e+00 : bf16
    %8 = vector.broadcast %cst_8 : bf16 to vector<16x256xbf16>
    %c192_9 = arith.constant 192 : index
    %c0_10 = arith.constant 0 : index
    %9 = vector.load %arg19[%c192_9, %c0_10] : memref<208x256xbf16, #tpu.memory_space<vmem>>, vector<16x256xbf16>
    tpu.vector_store %arg19[%c192_9, %c0_10], %8 {strides = array<i32>} : memref<208x256xbf16, #tpu.memory_space<vmem>>, vector<16x256xbf16>,
    %cst_11 = arith.constant 0.000000e+00 : f32
    %10 = vector.broadcast %cst_11 : f32 to vector<178x32xf32>
    %c0_12 = arith.constant 0 : index
    %c0_13 = arith.constant 0 : index
    %11 = vector.load %arg1[%c0_12, %c0_13] : memref<200x2xf32, #tpu.memory_space<vmem>>, vector<178x2xf32>
    %c0_14 = arith.constant 0 : index
    %c0_15 = arith.constant 0 : index
    %c0_16 = arith.constant 0 : index
    %12 = vector.load %arg2[%c0_14, %c0_15, %c0_16] : memref<9x2x32xf32, #tpu.memory_space<vmem>>, vector<1x2x32xf32>
    %13 = vector.shape_cast %12 : vector<1x2x32xf32> to vector<2x32xf32>
    %14 = vector.extract_strided_slice %11 {offsets = [0, 0], sizes = [178, 1], strides = [1, 1]} : vector<178x2xf32> to vector<178x1xf32>
    %15 = vector.extract_strided_slice %13 {offsets = [0, 0], sizes = [1, 32], strides = [1, 1]} : vector<2x32xf32> to vector<1x32xf32>
    %16 = vector.broadcast %14 : vector<178x1xf32> to vector<178x32xf32>
    %17 = vector.broadcast %15 : vector<1x32xf32> to vector<178x32xf32>
    %18 = arith.mulf %16, %17 : vector<178x32xf32>
    %19 = arith.addf %10, %18 : vector<178x32xf32>
    %20 = vector.extract_strided_slice %11 {offsets = [0, 1], sizes = [178, 1], strides = [1, 1]} : vector<178x2xf32> to vector<178x1xf32>
    %21 = vector.extract_strided_slice %13 {offsets = [1, 0], sizes = [1, 32], strides = [1, 1]} : vector<2x32xf32> to vector<1x32xf32>
    %22 = vector.broadcast %20 : vector<178x1xf32> to vector<178x32xf32>
    %23 = vector.broadcast %21 : vector<1x32xf32> to vector<178x32xf32>
    %24 = arith.mulf %22, %23 : vector<178x32xf32>
    %25 = arith.addf %19, %24 : vector<178x32xf32>
    %c1 = arith.constant 1 : index
    %c0_17 = arith.constant 0 : index
    %26 = vector.load %arg1[%c1, %c0_17] : memref<200x2xf32, #tpu.memory_space<vmem>>, vector<178x2xf32>
    %c1_18 = arith.constant 1 : index
    %c0_19 = arith.constant 0 : index
    %c0_20 = arith.constant 0 : index
    %27 = vector.load %arg2[%c1_18, %c0_19, %c0_20] : memref<9x2x32xf32, #tpu.memory_space<vmem>>, vector<1x2x32xf32>
    %28 = vector.shape_cast %27 : vector<1x2x32xf32> to vector<2x32xf32>
    %29 = vector.extract_strided_slice %26 {offsets = [0, 0], sizes = [178, 1], strides = [1, 1]} : vector<178x2xf32> to vector<178x1xf32>
    %30 = vector.extract_strided_slice %28 {offsets = [0, 0], sizes = [1, 32], strides = [1, 1]} : vector<2x32xf32> to vector<1x32xf32>
    %31 = vector.broadcast %29 : vector<178x1xf32> to vector<178x32xf32>
    %32 = vector.broadcast %30 : vector<1x32xf32> to vector<178x32xf32>
    %33 = arith.mulf %31, %32 : vector<178x32xf32>
    %34 = arith.addf %25, %33 : vector<178x32xf32>
    %35 = vector.extract_strided_slice %26 {offsets = [0, 1], sizes = [178, 1], strides = [1, 1]} : vector<178x2xf32> to vector<178x1xf32>
    %36 = vector.extract_strided_slice %28 {offsets = [1, 0], sizes = [1, 32], strides = [1, 1]} : vector<2x32xf32> to vector<1x32xf32>
    %37 = vector.broadcast %35 : vector<178x1xf32> to vector<178x32xf32>
    %38 = vector.broadcast %36 : vector<1x32xf32> to vector<178x32xf32>
    %39 = arith.mulf %37, %38 : vector<178x32xf32>
    %40 = arith.addf %34, %39 : vector<178x32xf32>
    %c2 = arith.constant 2 : index
    %c0_21 = arith.constant 0 : index
    %41 = vector.load %arg1[%c2, %c0_21] : memref<200x2xf32, #tpu.memory_space<vmem>>, vector<178x2xf32>
    %c2_22 = arith.constant 2 : index
    %c0_23 = arith.constant 0 : index
    %c0_24 = arith.constant 0 : index
    %42 = vector.load %arg2[%c2_22, %c0_23, %c0_24] : memref<9x2x32xf32, #tpu.memory_space<vmem>>, vector<1x2x32xf32>
    %43 = vector.shape_cast %42 : vector<1x2x32xf32> to vector<2x32xf32>
    %44 = vector.extract_strided_slice %41 {offsets = [0, 0], sizes = [178, 1], strides = [1, 1]} : vector<178x2xf32> to vector<178x1xf32>
    %45 = vector.extract_strided_slice %43 {offsets = [0, 0], sizes = [1, 32], strides = [1, 1]} : vector<2x32xf32> to vector<1x32xf32>
    %46 = vector.broadcast %44 : vector<178x1xf32> to vector<178x32xf32>
    %47 = vector.broadcast %45 : vector<1x32xf32> to vector<178x32xf32>
    %48 = arith.mulf %46, %47 : vector<178x32xf32>
    %49 = arith.addf %40, %48 : vector<178x32xf32>
    %50 = vector.extract_strided_slice %41 {offsets = [0, 1], sizes = [178, 1], strides = [1, 1]} : vector<178x2xf32> to vector<178x1xf32>
    %51 = vector.extract_strided_slice %43 {offsets = [1, 0], sizes = [1, 32], strides = [1, 1]} : vector<2x32xf32> to vector<1x32xf32>
    %52 = vector.broadcast %50 : vector<178x1xf32> to vector<178x32xf32>
    %53 = vector.broadcast %51 : vector<1x32xf32> to vector<178x32xf32>
    %54 = arith.mulf %52, %53 : vector<178x32xf32>
    %55 = arith.addf %49, %54 : vector<178x32xf32>
    %c10 = arith.constant 10 : index
    %c0_25 = arith.constant 0 : index
    %56 = vector.load %arg1[%c10, %c0_25] : memref<200x2xf32, #tpu.memory_space<vmem>>, vector<178x2xf32>
    %c3 = arith.constant 3 : index
    %c0_26 = arith.constant 0 : index
    %c0_27 = arith.constant 0 : index
    %57 = vector.load %arg2[%c3, %c0_26, %c0_27] : memref<9x2x32xf32, #tpu.memory_space<vmem>>, vector<1x2x32xf32>
    %58 = vector.shape_cast %57 : vector<1x2x32xf32> to vector<2x32xf32>
    %59 = vector.extract_strided_slice %56 {offsets = [0, 0], sizes = [178, 1], strides = [1, 1]} : vector<178x2xf32> to vector<178x1xf32>
    %60 = vector.extract_strided_slice %58 {offsets = [0, 0], sizes = [1, 32], strides = [1, 1]} : vector<2x32xf32> to vector<1x32xf32>
    %61 = vector.broadcast %59 : vector<178x1xf32> to vector<178x32xf32>
    %62 = vector.broadcast %60 : vector<1x32xf32> to vector<178x32xf32>
    %63 = arith.mulf %61, %62 : vector<178x32xf32>
    %64 = arith.addf %55, %63 : vector<178x32xf32>
    %65 = vector.extract_strided_slice %56 {offsets = [0, 1], sizes = [178, 1], strides = [1, 1]} : vector<178x2xf32> to vector<178x1xf32>
    %66 = vector.extract_strided_slice %58 {offsets = [1, 0], sizes = [1, 32], strides = [1, 1]} : vector<2x32xf32> to vector<1x32xf32>
    %67 = vector.broadcast %65 : vector<178x1xf32> to vector<178x32xf32>
    %68 = vector.broadcast %66 : vector<1x32xf32> to vector<178x32xf32>
    %69 = arith.mulf %67, %68 : vector<178x32xf32>
    %70 = arith.addf %64, %69 : vector<178x32xf32>
    %c11 = arith.constant 11 : index
    %c0_28 = arith.constant 0 : index
    %71 = vector.load %arg1[%c11, %c0_28] : memref<200x2xf32, #tpu.memory_space<vmem>>, vector<178x2xf32>
    %c4 = arith.constant 4 : index
    %c0_29 = arith.constant 0 : index
    %c0_30 = arith.constant 0 : index
    %72 = vector.load %arg2[%c4, %c0_29, %c0_30] : memref<9x2x32xf32, #tpu.memory_space<vmem>>, vector<1x2x32xf32>
    %73 = vector.shape_cast %72 : vector<1x2x32xf32> to vector<2x32xf32>
    %74 = vector.extract_strided_slice %71 {offsets = [0, 0], sizes = [178, 1], strides = [1, 1]} : vector<178x2xf32> to vector<178x1xf32>
    %75 = vector.extract_strided_slice %73 {offsets = [0, 0], sizes = [1, 32], strides = [1, 1]} : vector<2x32xf32> to vector<1x32xf32>
    %76 = vector.broadcast %74 : vector<178x1xf32> to vector<178x32xf32>
    %77 = vector.broadcast %75 : vector<1x32xf32> to vector<178x32xf32>
    %78 = arith.mulf %76, %77 : vector<178x32xf32>
    %79 = arith.addf %70, %78 : vector<178x32xf32>
    %80 = vector.extract_strided_slice %71 {offsets = [0, 1], sizes = [178, 1], strides = [1, 1]} : vector<178x2xf32> to vector<178x1xf32>
    %81 = vector.extract_strided_slice %73 {offsets = [1, 0], sizes = [1, 32], strides = [1, 1]} : vector<2x32xf32> to vector<1x32xf32>
    %82 = vector.broadcast %80 : vector<178x1xf32> to vector<178x32xf32>
    %83 = vector.broadcast %81 : vector<1x32xf32> to vector<178x32xf32>
    %84 = arith.mulf %82, %83 : vector<178x32xf32>
    %85 = arith.addf %79, %84 : vector<178x32xf32>
    %c12 = arith.constant 12 : index
    %c0_31 = arith.constant 0 : index
    %86 = vector.load %arg1[%c12, %c0_31] : memref<200x2xf32, #tpu.memory_space<vmem>>, vector<178x2xf32>
    %c5 = arith.constant 5 : index
    %c0_32 = arith.constant 0 : index
    %c0_33 = arith.constant 0 : index
    %87 = vector.load %arg2[%c5, %c0_32, %c0_33] : memref<9x2x32xf32, #tpu.memory_space<vmem>>, vector<1x2x32xf32>
    %88 = vector.shape_cast %87 : vector<1x2x32xf32> to vector<2x32xf32>
    %89 = vector.extract_strided_slice %86 {offsets = [0, 0], sizes = [178, 1], strides = [1, 1]} : vector<178x2xf32> to vector<178x1xf32>
    %90 = vector.extract_strided_slice %88 {offsets = [0, 0], sizes = [1, 32], strides = [1, 1]} : vector<2x32xf32> to vector<1x32xf32>
    %91 = vector.broadcast %89 : vector<178x1xf32> to vector<178x32xf32>
    %92 = vector.broadcast %90 : vector<1x32xf32> to vector<178x32xf32>
    %93 = arith.mulf %91, %92 : vector<178x32xf32>
    %94 = arith.addf %85, %93 : vector<178x32xf32>
    %95 = vector.extract_strided_slice %86 {offsets = [0, 1], sizes = [178, 1], strides = [1, 1]} : vector<178x2xf32> to vector<178x1xf32>
    %96 = vector.extract_strided_slice %88 {offsets = [1, 0], sizes = [1, 32], strides = [1, 1]} : vector<2x32xf32> to vector<1x32xf32>
    %97 = vector.broadcast %95 : vector<178x1xf32> to vector<178x32xf32>
    %98 = vector.broadcast %96 : vector<1x32xf32> to vector<178x32xf32>
    %99 = arith.mulf %97, %98 : vector<178x32xf32>
    %100 = arith.addf %94, %99 : vector<178x32xf32>
    %c20 = arith.constant 20 : index
    %c0_34 = arith.constant 0 : index
    %101 = vector.load %arg1[%c20, %c0_34] : memref<200x2xf32, #tpu.memory_space<vmem>>, vector<178x2xf32>
    %c6 = arith.constant 6 : index
    %c0_35 = arith.constant 0 : index
    %c0_36 = arith.constant 0 : index
    %102 = vector.load %arg2[%c6, %c0_35, %c0_36] : memref<9x2x32xf32, #tpu.memory_space<vmem>>, vector<1x2x32xf32>
    %103 = vector.shape_cast %102 : vector<1x2x32xf32> to vector<2x32xf32>
    %104 = vector.extract_strided_slice %101 {offsets = [0, 0], sizes = [178, 1], strides = [1, 1]} : vector<178x2xf32> to vector<178x1xf32>
    %105 = vector.extract_strided_slice %103 {offsets = [0, 0], sizes = [1, 32], strides = [1, 1]} : vector<2x32xf32> to vector<1x32xf32>
    %106 = vector.broadcast %104 : vector<178x1xf32> to vector<178x32xf32>
    %107 = vector.broadcast %105 : vector<1x32xf32> to vector<178x32xf32>
    %108 = arith.mulf %106, %107 : vector<178x32xf32>
    %109 = arith.addf %100, %108 : vector<178x32xf32>
    %110 = vector.extract_strided_slice %101 {offsets = [0, 1], sizes = [178, 1], strides = [1, 1]} : vector<178x2xf32> to vector<178x1xf32>
    %111 = vector.extract_strided_slice %103 {offsets = [1, 0], sizes = [1, 32], strides = [1, 1]} : vector<2x32xf32> to vector<1x32xf32>
    %112 = vector.broadcast %110 : vector<178x1xf32> to vector<178x32xf32>
    %113 = vector.broadcast %111 : vector<1x32xf32> to vector<178x32xf32>
    %114 = arith.mulf %112, %113 : vector<178x32xf32>
    %115 = arith.addf %109, %114 : vector<178x32xf32>
    %c21 = arith.constant 21 : index
    %c0_37 = arith.constant 0 : index
    %116 = vector.load %arg1[%c21, %c0_37] : memref<200x2xf32, #tpu.memory_space<vmem>>, vector<178x2xf32>
    %c7 = arith.constant 7 : index
    %c0_38 = arith.constant 0 : index
    %c0_39 = arith.constant 0 : index
    %117 = vector.load %arg2[%c7, %c0_38, %c0_39] : memref<9x2x32xf32, #tpu.memory_space<vmem>>, vector<1x2x32xf32>
    %118 = vector.shape_cast %117 : vector<1x2x32xf32> to vector<2x32xf32>
    %119 = vector.extract_strided_slice %116 {offsets = [0, 0], sizes = [178, 1], strides = [1, 1]} : vector<178x2xf32> to vector<178x1xf32>
    %120 = vector.extract_strided_slice %118 {offsets = [0, 0], sizes = [1, 32], strides = [1, 1]} : vector<2x32xf32> to vector<1x32xf32>
    %121 = vector.broadcast %119 : vector<178x1xf32> to vector<178x32xf32>
    %122 = vector.broadcast %120 : vector<1x32xf32> to vector<178x32xf32>
    %123 = arith.mulf %121, %122 : vector<178x32xf32>
    %124 = arith.addf %115, %123 : vector<178x32xf32>
    %125 = vector.extract_strided_slice %116 {offsets = [0, 1], sizes = [178, 1], strides = [1, 1]} : vector<178x2xf32> to vector<178x1xf32>
    %126 = vector.extract_strided_slice %118 {offsets = [1, 0], sizes = [1, 32], strides = [1, 1]} : vector<2x32xf32> to vector<1x32xf32>
    %127 = vector.broadcast %125 : vector<178x1xf32> to vector<178x32xf32>
    %128 = vector.broadcast %126 : vector<1x32xf32> to vector<178x32xf32>
    %129 = arith.mulf %127, %128 : vector<178x32xf32>
    %130 = arith.addf %124, %129 : vector<178x32xf32>
    %c22 = arith.constant 22 : index
    %c0_40 = arith.constant 0 : index
    %131 = vector.load %arg1[%c22, %c0_40] : memref<200x2xf32, #tpu.memory_space<vmem>>, vector<178x2xf32>
    %c8 = arith.constant 8 : index
    %c0_41 = arith.constant 0 : index
    %c0_42 = arith.constant 0 : index
    %132 = vector.load %arg2[%c8, %c0_41, %c0_42] : memref<9x2x32xf32, #tpu.memory_space<vmem>>, vector<1x2x32xf32>
    %133 = vector.shape_cast %132 : vector<1x2x32xf32> to vector<2x32xf32>
    %134 = vector.extract_strided_slice %131 {offsets = [0, 0], sizes = [178, 1], strides = [1, 1]} : vector<178x2xf32> to vector<178x1xf32>
    %135 = vector.extract_strided_slice %133 {offsets = [0, 0], sizes = [1, 32], strides = [1, 1]} : vector<2x32xf32> to vector<1x32xf32>
    %136 = vector.broadcast %134 : vector<178x1xf32> to vector<178x32xf32>
    %137 = vector.broadcast %135 : vector<1x32xf32> to vector<178x32xf32>
    %138 = arith.mulf %136, %137 : vector<178x32xf32>
    %139 = arith.addf %130, %138 : vector<178x32xf32>
    %140 = vector.extract_strided_slice %131 {offsets = [0, 1], sizes = [178, 1], strides = [1, 1]} : vector<178x2xf32> to vector<178x1xf32>
    %141 = vector.extract_strided_slice %133 {offsets = [1, 0], sizes = [1, 32], strides = [1, 1]} : vector<2x32xf32> to vector<1x32xf32>
    %142 = vector.broadcast %140 : vector<178x1xf32> to vector<178x32xf32>
    %143 = vector.broadcast %141 : vector<1x32xf32> to vector<178x32xf32>
    %144 = arith.mulf %142, %143 : vector<178x32xf32>
    %145 = arith.addf %139, %144 : vector<178x32xf32>
    %c0_43 = arith.constant 0 : index
    %c0_44 = arith.constant 0 : index
    %146 = vector.load %arg3[%c0_43, %c0_44] : memref<1x32xf32, #tpu.memory_space<vmem>>, vector<1x32xf32>
    %147 = vector.broadcast %146 : vector<1x32xf32> to vector<178x32xf32>
    %148 = arith.addf %145, %147 : vector<178x32xf32>
    %cst_45 = arith.constant 0.000000e+00 : f32
    %149 = vector.broadcast %cst_45 : f32 to vector<178x32xf32>
    %150 = arith.maximumf %148, %149 : vector<178x32xf32>
    %151 = arith.truncf %150 : vector<178x32xf32> to vector<178x32xbf16>
    %c0_46 = arith.constant 0 : index
    %c0_47 = arith.constant 0 : index
    %152 = vector.load %arg15[%c0_46, %c0_47] : memref<208x32xbf16, #tpu.memory_space<vmem>>, vector<178x32xbf16>
    tpu.vector_store %arg15[%c0_46, %c0_47], %151 {strides = array<i32>} : memref<208x32xbf16, #tpu.memory_space<vmem>>, vector<178x32xbf16>,
    %c0_48 = arith.constant 0 : index
    %c0_49 = arith.constant 0 : index
    %153 = vector.load %arg15[%c0_48, %c0_49] : memref<208x32xbf16, #tpu.memory_space<vmem>>, vector<192x32xbf16>
    %c1_50 = arith.constant 1 : index
    %c0_51 = arith.constant 0 : index
    %154 = vector.load %arg15[%c1_50, %c0_51] : memref<208x32xbf16, #tpu.memory_space<vmem>>, vector<192x32xbf16>
    %c10_52 = arith.constant 10 : index
    %c0_53 = arith.constant 0 : index
    %155 = vector.load %arg15[%c10_52, %c0_53] : memref<208x32xbf16, #tpu.memory_space<vmem>>, vector<192x32xbf16>
    %c11_54 = arith.constant 11 : index
    %c0_55 = arith.constant 0 : index
    %156 = vector.load %arg15[%c11_54, %c0_55] : memref<208x32xbf16, #tpu.memory_space<vmem>>, vector<192x32xbf16>
    %157 = tpu.concatenate %153, %154, %155, %156 in 1 : vector<192x32xbf16>, vector<192x32xbf16>, vector<192x32xbf16>, vector<192x32xbf16> -> vector<192x128xbf16>
    %c0_56 = arith.constant 0 : index
    %c0_57 = arith.constant 0 : index
    %158 = vector.load %arg4[%c0_56, %c0_57] : memref<128x64xbf16, #tpu.memory_space<vmem>>, vector<128x64xbf16>
    %cst_58 = arith.constant dense<0.000000e+00> : vector<192x64xf32>
    %159 = tpu.matmul %157, %158, %cst_58 {dimension_numbers = #tpu.dot_dimension_numbers<[1], [0], [0], [1], [0, 0, 1, 1], [], []>} : vector<192x128xbf16>, vector<128x64xbf16>, vector<192x64xf32> -> vector<192x64xf32>
    %c0_59 = arith.constant 0 : index
    %c0_60 = arith.constant 0 : index
    %160 = vector.load %arg5[%c0_59, %c0_60] : memref<1x64xf32, #tpu.memory_space<vmem>>, vector<1x64xf32>
    %161 = vector.broadcast %160 : vector<1x64xf32> to vector<192x64xf32>
    %162 = arith.addf %159, %161 : vector<192x64xf32>
    %cst_61 = arith.constant 0.000000e+00 : f32
    %163 = vector.broadcast %cst_61 : f32 to vector<192x64xf32>
    %164 = arith.maximumf %162, %163 : vector<192x64xf32>
    %165 = arith.truncf %164 : vector<192x64xf32> to vector<192x64xbf16>
    %c0_62 = arith.constant 0 : index
    %c0_63 = arith.constant 0 : index
    %166 = vector.load %arg16[%c0_62, %c0_63] : memref<208x64xbf16, #tpu.memory_space<vmem>>, vector<192x64xbf16>
    tpu.vector_store %arg16[%c0_62, %c0_63], %165 {strides = array<i32>} : memref<208x64xbf16, #tpu.memory_space<vmem>>, vector<192x64xbf16>,
    %c0_64 = arith.constant 0 : index
    %c0_65 = arith.constant 0 : index
    %167 = vector.load %arg16[%c0_64, %c0_65] : memref<208x64xbf16, #tpu.memory_space<vmem>>, vector<192x64xbf16>
    %c1_66 = arith.constant 1 : index
    %c0_67 = arith.constant 0 : index
    %168 = vector.load %arg16[%c1_66, %c0_67] : memref<208x64xbf16, #tpu.memory_space<vmem>>, vector<192x64xbf16>
    %c10_68 = arith.constant 10 : index
    %c0_69 = arith.constant 0 : index
    %169 = vector.load %arg16[%c10_68, %c0_69] : memref<208x64xbf16, #tpu.memory_space<vmem>>, vector<192x64xbf16>
    %c11_70 = arith.constant 11 : index
    %c0_71 = arith.constant 0 : index
    %170 = vector.load %arg16[%c11_70, %c0_71] : memref<208x64xbf16, #tpu.memory_space<vmem>>, vector<192x64xbf16>
    %171 = tpu.concatenate %167, %168, %169, %170 in 1 : vector<192x64xbf16>, vector<192x64xbf16>, vector<192x64xbf16>, vector<192x64xbf16> -> vector<192x256xbf16>
    %c0_72 = arith.constant 0 : index
    %c0_73 = arith.constant 0 : index
    %172 = vector.load %arg6[%c0_72, %c0_73] : memref<256x128xbf16, #tpu.memory_space<vmem>>, vector<256x128xbf16>
    %cst_74 = arith.constant dense<0.000000e+00> : vector<192x128xf32>
    %173 = tpu.matmul %171, %172, %cst_74 {dimension_numbers = #tpu.dot_dimension_numbers<[1], [0], [0], [1], [0, 0, 1, 1], [], []>} : vector<192x256xbf16>, vector<256x128xbf16>, vector<192x128xf32> -> vector<192x128xf32>
    %c0_75 = arith.constant 0 : index
    %c0_76 = arith.constant 0 : index
    %174 = vector.load %arg7[%c0_75, %c0_76] : memref<1x128xf32, #tpu.memory_space<vmem>>, vector<1x128xf32>
    %175 = vector.broadcast %174 : vector<1x128xf32> to vector<192x128xf32>
    %176 = arith.addf %173, %175 : vector<192x128xf32>
    %cst_77 = arith.constant 0.000000e+00 : f32
    %177 = vector.broadcast %cst_77 : f32 to vector<192x128xf32>
    %178 = arith.maximumf %176, %177 : vector<192x128xf32>
    %179 = arith.truncf %178 : vector<192x128xf32> to vector<192x128xbf16>
    %c0_78 = arith.constant 0 : index
    %c0_79 = arith.constant 0 : index
    %180 = vector.load %arg17[%c0_78, %c0_79] : memref<208x128xbf16, #tpu.memory_space<vmem>>, vector<192x128xbf16>
    tpu.vector_store %arg17[%c0_78, %c0_79], %179 {strides = array<i32>} : memref<208x128xbf16, #tpu.memory_space<vmem>>, vector<192x128xbf16>,
    %c0_80 = arith.constant 0 : index
    %c0_81 = arith.constant 0 : index
    %181 = vector.load %arg17[%c0_80, %c0_81] : memref<208x128xbf16, #tpu.memory_space<vmem>>, vector<192x128xbf16>
    %c1_82 = arith.constant 1 : index
    %c0_83 = arith.constant 0 : index
    %182 = vector.load %arg17[%c1_82, %c0_83] : memref<208x128xbf16, #tpu.memory_space<vmem>>, vector<192x128xbf16>
    %c10_84 = arith.constant 10 : index
    %c0_85 = arith.constant 0 : index
    %183 = vector.load %arg17[%c10_84, %c0_85] : memref<208x128xbf16, #tpu.memory_space<vmem>>, vector<192x128xbf16>
    %c11_86 = arith.constant 11 : index
    %c0_87 = arith.constant 0 : index
    %184 = vector.load %arg17[%c11_86, %c0_87] : memref<208x128xbf16, #tpu.memory_space<vmem>>, vector<192x128xbf16>
    %185 = tpu.concatenate %181, %182, %183, %184 in 1 : vector<192x128xbf16>, vector<192x128xbf16>, vector<192x128xbf16>, vector<192x128xbf16> -> vector<192x512xbf16>
    %c0_88 = arith.constant 0 : index
    %c0_89 = arith.constant 0 : index
    %186 = vector.load %arg8[%c0_88, %c0_89] : memref<512x128xbf16, #tpu.memory_space<vmem>>, vector<512x128xbf16>
    %cst_90 = arith.constant dense<0.000000e+00> : vector<192x128xf32>
    %187 = tpu.matmul %185, %186, %cst_90 {dimension_numbers = #tpu.dot_dimension_numbers<[1], [0], [0], [1], [0, 0, 1, 1], [], []>} : vector<192x512xbf16>, vector<512x128xbf16>, vector<192x128xf32> -> vector<192x128xf32>
    %c0_91 = arith.constant 0 : index
    %c0_92 = arith.constant 0 : index
    %188 = vector.load %arg9[%c0_91, %c0_92] : memref<1x128xf32, #tpu.memory_space<vmem>>, vector<1x128xf32>
    %189 = vector.broadcast %188 : vector<1x128xf32> to vector<192x128xf32>
    %190 = arith.addf %187, %189 : vector<192x128xf32>
    %cst_93 = arith.constant 0.000000e+00 : f32
    %191 = vector.broadcast %cst_93 : f32 to vector<192x128xf32>
    %192 = arith.maximumf %190, %191 : vector<192x128xf32>
    %193 = arith.truncf %192 : vector<192x128xf32> to vector<192x128xbf16>
    %c0_94 = arith.constant 0 : index
    %c0_95 = arith.constant 0 : index
    %194 = vector.load %arg18[%c0_94, %c0_95] : memref<208x128xbf16, #tpu.memory_space<vmem>>, vector<192x128xbf16>
    tpu.vector_store %arg18[%c0_94, %c0_95], %193 {strides = array<i32>} : memref<208x128xbf16, #tpu.memory_space<vmem>>, vector<192x128xbf16>,
    %c0_96 = arith.constant 0 : index
    %c0_97 = arith.constant 0 : index
    %195 = vector.load %arg18[%c0_96, %c0_97] : memref<208x128xbf16, #tpu.memory_space<vmem>>, vector<192x128xbf16>
    %c1_98 = arith.constant 1 : index
    %c0_99 = arith.constant 0 : index
    %196 = vector.load %arg18[%c1_98, %c0_99] : memref<208x128xbf16, #tpu.memory_space<vmem>>, vector<192x128xbf16>
    %c10_100 = arith.constant 10 : index
    %c0_101 = arith.constant 0 : index
    %197 = vector.load %arg18[%c10_100, %c0_101] : memref<208x128xbf16, #tpu.memory_space<vmem>>, vector<192x128xbf16>
    %c11_102 = arith.constant 11 : index
    %c0_103 = arith.constant 0 : index
    %198 = vector.load %arg18[%c11_102, %c0_103] : memref<208x128xbf16, #tpu.memory_space<vmem>>, vector<192x128xbf16>
    %199 = tpu.concatenate %195, %196, %197, %198 in 1 : vector<192x128xbf16>, vector<192x128xbf16>, vector<192x128xbf16>, vector<192x128xbf16> -> vector<192x512xbf16>
    %c0_104 = arith.constant 0 : index
    %c0_105 = arith.constant 0 : index
    %200 = vector.load %arg10[%c0_104, %c0_105] : memref<512x256xbf16, #tpu.memory_space<vmem>>, vector<512x256xbf16>
    %cst_106 = arith.constant dense<0.000000e+00> : vector<192x256xf32>
    %201 = tpu.matmul %199, %200, %cst_106 {dimension_numbers = #tpu.dot_dimension_numbers<[1], [0], [0], [1], [0, 0, 1, 1], [], []>} : vector<192x512xbf16>, vector<512x256xbf16>, vector<192x256xf32> -> vector<192x256xf32>
    %c0_107 = arith.constant 0 : index
    %c0_108 = arith.constant 0 : index
    %202 = vector.load %arg11[%c0_107, %c0_108] : memref<1x256xf32, #tpu.memory_space<vmem>>, vector<1x256xf32>
    %203 = vector.broadcast %202 : vector<1x256xf32> to vector<192x256xf32>
    %204 = arith.addf %201, %203 : vector<192x256xf32>
    %cst_109 = arith.constant 0.000000e+00 : f32
    %205 = vector.broadcast %cst_109 : f32 to vector<192x256xf32>
    %206 = arith.maximumf %204, %205 : vector<192x256xf32>
    %207 = arith.truncf %206 : vector<192x256xf32> to vector<192x256xbf16>
    %c0_110 = arith.constant 0 : index
    %c0_111 = arith.constant 0 : index
    %208 = vector.load %arg19[%c0_110, %c0_111] : memref<208x256xbf16, #tpu.memory_space<vmem>>, vector<192x256xbf16>
    tpu.vector_store %arg19[%c0_110, %c0_111], %207 {strides = array<i32>} : memref<208x256xbf16, #tpu.memory_space<vmem>>, vector<192x256xbf16>,
    %c0_112 = arith.constant 0 : index
    %c0_113 = arith.constant 0 : index
    %209 = vector.load %arg12[%c0_112, %c0_113] : memref<100x256xf32, #tpu.memory_space<vmem>>, vector<100x256xf32>
    %c0_114 = arith.constant 0 : index
    %c0_115 = arith.constant 0 : index
    %210 = vector.load %arg19[%c0_114, %c0_115] : memref<208x256xbf16, #tpu.memory_space<vmem>>, vector<100x256xbf16>
    %211 = arith.extf %210 : vector<100x256xbf16> to vector<100x256xf32>
    %212 = arith.mulf %211, %209 : vector<100x256xf32>
    %cst_116 = arith.constant dense<0.000000e+00> : vector<256xf32>
    %213 = vector.multi_reduction <add>, %212, %cst_116 [0] : vector<100x256xf32> to vector<256xf32>
    %214 = vector.shape_cast %213 : vector<256xf32> to vector<1x256xf32>
    %c0_117 = arith.constant 0 : index
    %c0_118 = arith.constant 0 : index
    %215 = vector.load %arg20[%c0_117, %c0_118] : memref<2x256xf32, #tpu.memory_space<vmem>>, vector<1x256xf32>
    tpu.vector_store %arg20[%c0_117, %c0_118], %214 {strides = array<i32>} : memref<2x256xf32, #tpu.memory_space<vmem>>, vector<1x256xf32>,
    %c100 = arith.constant 100 : index
    %c0_119 = arith.constant 0 : index
    %216 = vector.load %arg19[%c100, %c0_119] : memref<208x256xbf16, #tpu.memory_space<vmem>>, vector<100x256xbf16>
    %217 = arith.extf %216 : vector<100x256xbf16> to vector<100x256xf32>
    %218 = arith.mulf %217, %209 : vector<100x256xf32>
    %cst_120 = arith.constant dense<0.000000e+00> : vector<256xf32>
    %219 = vector.multi_reduction <add>, %218, %cst_120 [0] : vector<100x256xf32> to vector<256xf32>
    %220 = vector.shape_cast %219 : vector<256xf32> to vector<1x256xf32>
    %c1_121 = arith.constant 1 : index
    %c0_122 = arith.constant 0 : index
    %221 = vector.load %arg20[%c1_121, %c0_122] : memref<2x256xf32, #tpu.memory_space<vmem>>, vector<1x256xf32>
    tpu.vector_store %arg20[%c1_121, %c0_122], %220 {strides = array<i32>} : memref<2x256xf32, #tpu.memory_space<vmem>>, vector<1x256xf32>,
    %c0_123 = arith.constant 0 : index
    %c0_124 = arith.constant 0 : index
    %222 = vector.load %arg20[%c0_123, %c0_124] : memref<2x256xf32, #tpu.memory_space<vmem>>, vector<2x256xf32>
    %cst_125 = arith.constant dense<0.000000e+00> : vector<2xf32>
    %223 = vector.multi_reduction <add>, %222, %cst_125 [1] : vector<2x256xf32> to vector<2xf32>
    %224 = vector.shape_cast %223 : vector<2xf32> to vector<2x1xf32>
    %c0_126 = arith.constant 0 : index
    %c0_127 = arith.constant 0 : index
    %225 = vector.load %arg13[%c0_126, %c0_127] : memref<1x1xf32, #tpu.memory_space<vmem>>, vector<1x1xf32>
    %226 = vector.broadcast %225 : vector<1x1xf32> to vector<2x1xf32>
    %227 = arith.addf %224, %226 : vector<2x1xf32>
    %228 = math.tanh %227 : vector<2x1xf32>
    %c0_128 = arith.constant 0 : index
    %c0_129 = arith.constant 0 : index
    %229 = vector.load %arg14[%c0_128, %c0_129] : memref<2x1xf32, #tpu.memory_space<vmem>>, vector<2x1xf32>
    tpu.vector_store %arg14[%c0_128, %c0_129], %228 {strides = array<i32>} : memref<2x1xf32, #tpu.memory_space<vmem>>, vector<2x1xf32>,
    return
  }
  func.func @transform_0(%arg0: i32) -> (i32, i32) {
    %c0_i32 = arith.constant 0 : i32
    %c0_i32_0 = arith.constant 0 : i32
    return %arg0, %c0_i32 : i32, i32
  }
  func.func @transform_1(%arg0: i32) -> (i32, i32, i32) {
    %c0_i32 = arith.constant 0 : i32
    %c0_i32_0 = arith.constant 0 : i32
    %c0_i32_1 = arith.constant 0 : i32
    %c0_i32_2 = arith.constant 0 : i32
    return %c0_i32, %c0_i32_0, %c0_i32_1 : i32, i32, i32
  }
  func.func @transform_2(%arg0: i32) -> (i32, i32) {
    %c0_i32 = arith.constant 0 : i32
    %c0_i32_0 = arith.constant 0 : i32
    %c0_i32_1 = arith.constant 0 : i32
    return %c0_i32, %c0_i32_0 : i32, i32
  }
  func.func @transform_3(%arg0: i32) -> (i32, i32) {
    %c0_i32 = arith.constant 0 : i32
    %c0_i32_0 = arith.constant 0 : i32
    %c0_i32_1 = arith.constant 0 : i32
    return %c0_i32, %c0_i32_0 : i32, i32
  }
  func.func @transform_4(%arg0: i32) -> (i32, i32) {
    %c0_i32 = arith.constant 0 : i32
    %c0_i32_0 = arith.constant 0 : i32
    %c0_i32_1 = arith.constant 0 : i32
    return %c0_i32, %c0_i32_0 : i32, i32
  }
  func.func @transform_5(%arg0: i32) -> (i32, i32) {
    %c0_i32 = arith.constant 0 : i32
    %c0_i32_0 = arith.constant 0 : i32
    %c0_i32_1 = arith.constant 0 : i32
    return %c0_i32, %c0_i32_0 : i32, i32
  }
  func.func @transform_6(%arg0: i32) -> (i32, i32) {
    %c0_i32 = arith.constant 0 : i32
    %c0_i32_0 = arith.constant 0 : i32
    %c0_i32_1 = arith.constant 0 : i32
    return %c0_i32, %c0_i32_0 : i32, i32
  }
  func.func @transform_7(%arg0: i32) -> (i32, i32) {
    %c0_i32 = arith.constant 0 : i32
    %c0_i32_0 = arith.constant 0 : i32
    %c0_i32_1 = arith.constant 0 : i32
    return %c0_i32, %c0_i32_0 : i32, i32
  }
  func.func @transform_8(%arg0: i32) -> (i32, i32) {
    %c0_i32 = arith.constant 0 : i32
    %c0_i32_0 = arith.constant 0 : i32
    %c0_i32_1 = arith.constant 0 : i32
    return %c0_i32, %c0_i32_0 : i32, i32
  }
  func.func @transform_9(%arg0: i32) -> (i32, i32) {
    %c0_i32 = arith.constant 0 : i32
    %c0_i32_0 = arith.constant 0 : i32
    %c0_i32_1 = arith.constant 0 : i32
    return %c0_i32, %c0_i32_0 : i32, i32
  }
  func.func @transform_10(%arg0: i32) -> (i32, i32) {
    %c0_i32 = arith.constant 0 : i32
    %c0_i32_0 = arith.constant 0 : i32
    %c0_i32_1 = arith.constant 0 : i32
    return %c0_i32, %c0_i32_0 : i32, i32
  }
  func.func @transform_11(%arg0: i32) -> (i32, i32) {
    %c0_i32 = arith.constant 0 : i32
    %c0_i32_0 = arith.constant 0 : i32
    %c0_i32_1 = arith.constant 0 : i32
    return %c0_i32, %c0_i32_0 : i32, i32
  }
  func.func @transform_12(%arg0: i32) -> (i32, i32) {
    %c0_i32 = arith.constant 0 : i32
    %c0_i32_0 = arith.constant 0 : i32
    %c0_i32_1 = arith.constant 0 : i32
    return %c0_i32, %c0_i32_0 : i32, i32
  }
  func.func @transform_13(%arg0: i32) -> (i32, i32) {
    %c0_i32 = arith.constant 0 : i32
    %c0_i32_0 = arith.constant 0 : i32
    return %arg0, %c0_i32 : i32, i32
  }
}

</mosaic_0001>

<llo_original>
// kernel: cnn_forward.1
$region0: #{cnn_forward.1}
  #allocation0 [shape = 'u32[]', space=smem, size = 0x4, offset = 0x4, fixed_abs, tag = 'smem constant byte address 0x4 - core index']
  #allocation1 [shape = 'u32[72,128]{1,0:T(1,128)}', space=vmem, size = 0x9000, scoped, tag = 'internal scratch']
  #allocation2 [shape = 'bf16[208,32]{1,0:T(8,128)(2,1)}', space=vmem, size = 0xd000, scoped, tag = 'scratch operand']
  #allocation3 [shape = 'bf16[208,64]{1,0:T(8,128)(2,1)}', space=vmem, size = 0xd000, scoped, tag = 'scratch operand']
  #allocation4 [shape = 'bf16[208,128]{1,0:T(8,128)(2,1)}', space=vmem, size = 0xd000, scoped, tag = 'scratch operand']
  #allocation5 [shape = 'bf16[208,128]{1,0:T(8,128)(2,1)}', space=vmem, size = 0xd000, scoped, tag = 'scratch operand']
  #allocation6 [shape = 'bf16[208,256]{1,0:T(8,128)(2,1)}', space=vmem, size = 0x1a000, scoped, tag = 'scratch operand']
  #allocation7 [shape = 'f32[2,256]{1,0:T(2,128)}', space=vmem, size = 0x800, scoped, tag = 'scratch operand']
  #allocation8 [shape = 'f32[1,1]{1,0:T(1,128)S(1)}', space=vmem, size = 0x200, scoped, tag = 'scoped memory for cnn_forward.1']
  %s0 = inlined_call_operand.vmem [shape: f32[200,2], index: 0, kind: input, shape index: {}]
  %s1 = inlined_call_operand.vmem [shape: f32[9,2,32], index: 1, kind: input, shape index: {}]
  %s2 = inlined_call_operand.vmem [shape: f32[1,32], index: 2, kind: input, shape index: {}]
  %s3 = inlined_call_operand.vmem [shape: bf16[128,64], index: 3, kind: input, shape index: {}]
  %s4 = inlined_call_operand.vmem [shape: f32[1,64], index: 4, kind: input, shape index: {}]
  %s5 = inlined_call_operand.vmem [shape: bf16[256,128], index: 5, kind: input, shape index: {}]
  %s6 = inlined_call_operand.vmem [shape: f32[1,128], index: 6, kind: input, shape index: {}]
  %s7 = inlined_call_operand.vmem [shape: bf16[512,128], index: 7, kind: input, shape index: {}]
  %s8 = inlined_call_operand.vmem [shape: f32[1,128], index: 8, kind: input, shape index: {}]
  %s9 = inlined_call_operand.hbm [shape: bf16[512,256], index: 9, kind: input, shape index: {}]
  %s10 = inlined_call_operand.vmem [shape: f32[1,256], index: 10, kind: input, shape index: {}]
  %s11 = inlined_call_operand.hbm [shape: f32[100,256], index: 11, kind: input, shape index: {}]
  %s12 = inlined_call_operand.<no memory space> [shape: f32[1,1], index: 12, kind: input, shape index: {}]
  %s13 = inlined_call_operand.vmem [shape: f32[2,1], index: 13, kind: output, shape index: {}]
  %s14 = sld [smem:[#allocation0]]
  $region70: #{cnn_forward.1} parent=0
    _
  %s16 = ssub.s32 1, %s14
  %s17 = scalar_select 0, %s16, %s14
  %v18 = vstv %s12
  %19 = vst [vmem:[#allocation8] sm:$0x1] %v18
  $region1: #{cnn_forward.1} parent=0
    #allocation9 [shape = 'u8[262144]{0}', space=vmem, size = 0x40000, scoped, tag = 'input window, operand 9, single buffered']
    #allocation10 [shape = 's32[1]{0}', space=sflag, size = 0x4, scoped, tag = 'scoped memory for cnn_forward.1']
    #allocation11 [shape = 'u8[106496]{0}', space=vmem, size = 0x1a000, scoped, tag = 'input window, operand 11, single buffered']
    #allocation12 [shape = 's32[1]{0}', space=sflag, size = 0x4, scoped, tag = 'scoped memory for cnn_forward.1']
    %20 = vsyncpa [#allocation10], 0
    %21 = vsyncpa [#allocation12], 0
    // Predicated region
    $region2: #{cnn_forward.1} parent=1 // pred_check
      _
    $region3: #{cnn_forward.1} parent=1 // pred_check_branch
      %23 = sbr.rel (0) target = $region5
    $region4: #{cnn_forward.1} parent=1 // pred_region
      _
    $region5: #{cnn_forward.1} parent=1 // pred_fallthru
      _
    // Predicated region
    $region6: #{cnn_forward.1} parent=1 // pred_check
      _
    $region7: #{cnn_forward.1} parent=1 // pred_check_branch
      %25 = sbr.rel (0) target = $region9
    $region8: #{cnn_forward.1} parent=1 // pred_region
      _
    $region9: #{cnn_forward.1} parent=1 // pred_fallthru
      _
    // Predicated region
    $region10: #{cnn_forward.1} parent=1 // pred_check
      _
    $region11: #{cnn_forward.1} parent=1 // pred_check_branch
      %27 = sbr.rel (0) target = $region13
    $region12: #{cnn_forward.1} parent=1 // pred_region
      _
    $region13: #{cnn_forward.1} parent=1 // pred_fallthru
      _
    // Predicated region
    $region14: #{cnn_forward.1} parent=1 // pred_check
      _
    $region15: #{cnn_forward.1} parent=1 // pred_check_branch
      %29 = sbr.rel (0) target = $region17
    $region16: #{cnn_forward.1} parent=1 // pred_region
      _
    $region17: #{cnn_forward.1} parent=1 // pred_fallthru
      _
    // Predicated region
    $region18: #{cnn_forward.1} parent=1 // pred_check
      _
    $region19: #{cnn_forward.1} parent=1 // pred_check_branch
      %31 = sbr.rel (0) target = $region21
    $region20: #{cnn_forward.1} parent=1 // pred_region
      _
    $region21: #{cnn_forward.1} parent=1 // pred_fallthru
      _
    // Predicated region
    $region22: #{cnn_forward.1} parent=1 // pred_check
      _
    $region23: #{cnn_forward.1} parent=1 // pred_check_branch
      %33 = sbr.rel (0) target = $region25
    $region24: #{cnn_forward.1} parent=1 // pred_region
      _
    $region25: #{cnn_forward.1} parent=1 // pred_fallthru
      _
    // Predicated region
    $region26: #{cnn_forward.1} parent=1 // pred_check
      _
    $region27: #{cnn_forward.1} parent=1 // pred_check_branch
      %35 = sbr.rel (0) target = $region29
    $region28: #{cnn_forward.1} parent=1 // pred_region
      _
    $region29: #{cnn_forward.1} parent=1 // pred_fallthru
      _
    // Predicated region
    $region30: #{cnn_forward.1} parent=1 // pred_check
      _
    $region31: #{cnn_forward.1} parent=1 // pred_check_branch
      %37 = sbr.rel (0) target = $region33
    $region32: #{cnn_forward.1} parent=1 // pred_region
      _
    $region33: #{cnn_forward.1} parent=1 // pred_fallthru
      _
    // Predicated region
    $region34: #{cnn_forward.1} parent=1 // pred_check
      _
    $region35: #{cnn_forward.1} parent=1 // pred_check_branch
      %39 = sbr.rel (0) target = $region37
    $region36: #{cnn_forward.1} parent=1 // pred_region
      _
    $region37: #{cnn_forward.1} parent=1 // pred_fallthru
      _
    // Predicated region
    $region38: #{cnn_forward.1} parent=1 // pred_check
      _
    $region39: #{cnn_forward.1} parent=1 // pred_check_branch
      %41 = sbr.rel (0) target = $region41
    $region40: #{cnn_forward.1} parent=1 // pred_region
      %43 = vsyncadd [#allocation10], 0
      %s44 = sshll.u32 %s9, 4
      %s45 = int_to_ptr.hbm [resolvable:$true] %s44
      %s46 = sshll.u32 [#allocation9], 4
      %s47 = int_to_ptr.vmem [resolvable:$true] %s46
      %52 = dma.hbm_to_vmem [thread:$0]  %s45, 8192, %s47, [#allocation10], 128, 128, 8
    $region41: #{cnn_forward.1} parent=1 // pred_fallthru
      _
    // Predicated region
    $region42: #{cnn_forward.1} parent=1 // pred_check
      _
    $region43: #{cnn_forward.1} parent=1 // pred_check_branch
      %54 = sbr.rel (0) target = $region45
    $region44: #{cnn_forward.1} parent=1 // pred_region
      _
    $region45: #{cnn_forward.1} parent=1 // pred_fallthru
      _
    // Predicated region
    $region46: #{cnn_forward.1} parent=1 // pred_check
      _
    $region47: #{cnn_forward.1} parent=1 // pred_check_branch
      %56 = sbr.rel (0) target = $region49
    $region48: #{cnn_forward.1} parent=1 // pred_region
      %58 = vsyncadd [#allocation12], 0
      %s59 = sshll.u32 %s11, 4
      %s60 = int_to_ptr.hbm [resolvable:$true] %s59
      %s61 = sshll.u32 [#allocation11], 4
      %s62 = int_to_ptr.vmem [resolvable:$true] %s61
      %67 = dma.hbm_to_vmem [thread:$0]  %s60, 3328, %s62, [#allocation12], 256, 256, 16
    $region49: #{cnn_forward.1} parent=1 // pred_fallthru
      _
    // Predicated region
    $region50: #{cnn_forward.1} parent=1 // pred_check
      _
    $region51: #{cnn_forward.1} parent=1 // pred_check_branch
      %69 = sbr.rel (0) target = $region53
    $region52: #{cnn_forward.1} parent=1 // pred_region
      _
    $region53: #{cnn_forward.1} parent=1 // pred_fallthru
      _
    // Predicated region
    $region54: #{cnn_forward.1} parent=1 // pred_check
      _
    $region55: #{cnn_forward.1} parent=1 // pred_check_branch
      %71 = sbr.rel (0) target = $region57
    $region56: #{cnn_forward.1} parent=1 // pred_region
      %73 = dma.done [#allocation10], 8192
    $region57: #{cnn_forward.1} parent=1 // pred_fallthru
      _
    // Predicated region
    $region58: #{cnn_forward.1} parent=1 // pred_check
      _
    $region59: #{cnn_forward.1} parent=1 // pred_check_branch
      %75 = sbr.rel (0) target = $region61
    $region60: #{cnn_forward.1} parent=1 // pred_region
      %77 = dma.done [#allocation12], 3328
    $region61: #{cnn_forward.1} parent=1 // pred_fallthru
      _
    %vm79 = vcmask 257024
    %80 = vst.msk [vmem:[#allocation2 + $0x58] sm:$0xf] %vm79, 0
    %81 = vst.msk [vmem:[#allocation2 + $0x5c] sm:$0xf] %vm79, 0
    %82 = vst.msk [vmem:[#allocation2 + $0x60] sm:$0xf] %vm79, 0
    %83 = vst.msk [vmem:[#allocation2 + $0x64] sm:$0xf] %vm79, 0
    %vm84 = vcmask 519168
    %85 = vst.msk [vmem:[#allocation3 + $0x60] sm:$0xf] %vm84, 0
    %86 = vst.msk [vmem:[#allocation3 + $0x64] sm:$0xf] %vm84, 0
    %87 = vst [vmem:[#allocation4 + $0x60] sm:$0xf] 0
    %88 = vst [vmem:[#allocation4 + $0x64] sm:$0xf] 0
    %89 = vst [vmem:[#allocation5 + $0x60] sm:$0xf] 0
    %90 = vst [vmem:[#allocation5 + $0x64] sm:$0xf] 0
    %91 = vst [vmem:[#allocation6 + $0xc0] sm:$0xff] 0
    %92 = vst [vmem:[#allocation6 + $0xc8] sm:$0xff] 0
    %v93 = vld [vmem:[%s0] sm:$0xff]
    %v94 = vld [vmem:[%s0 + $0x8] sm:$0xff]
    %v95 = vld [vmem:[%s0 + $0x10] sm:$0xff]
    %v96 = vld [vmem:[%s0 + $0x18] sm:$0xff]
    %v97 = vld [vmem:[%s0 + $0x20] sm:$0xff]
    %v98 = vld [vmem:[%s0 + $0x28] sm:$0xff]
    %v99 = vld [vmem:[%s0 + $0x30] sm:$0xff]
    %v100 = vld [vmem:[%s0 + $0x38] sm:$0xff]
    %v101 = vld [vmem:[%s0 + $0x40] sm:$0xff]
    %v102 = vld [vmem:[%s0 + $0x48] sm:$0xff]
    %v103 = vld [vmem:[%s0 + $0x50] sm:$0xff]
    %v104 = vld [vmem:[%s0 + $0x58] sm:$0xff]
    %v105 = vld [vmem:[%s0 + $0x60] sm:$0xff]
    %v106 = vld [vmem:[%s0 + $0x68] sm:$0xff]
    %v107 = vld [vmem:[%s0 + $0x70] sm:$0xff]
    %v108 = vld [vmem:[%s0 + $0x78] sm:$0xff]
    %v109 = vld [vmem:[%s0 + $0x80] sm:$0xff]
    %v110 = vld [vmem:[%s0 + $0x88] sm:$0xff]
    %v111 = vld [vmem:[%s0 + $0x90] sm:$0xff]
    %v112 = vld [vmem:[%s0 + $0x98] sm:$0xff]
    %v113 = vld [vmem:[%s0 + $0xa0] sm:$0xff]
    %v114 = vld [vmem:[%s0 + $0xa8] sm:$0xff]
    %v115 = vld [vmem:[%s0 + $0xb0] sm:$0x3]
    %v116 = vld [vmem:[%s1] sm:$0x3]
    %118 = vset.pattern.permute.xlu0 0
    %119 = vperm.xlu0 %118, %v93
    %v120 = vpop.permute.xlu0 %119
    %123 = vset.pattern.permute.xlu0 0
    %124 = vperm.xlu0 %123, %v94
    %v125 = vpop.permute.xlu0 %124
    %128 = vset.pattern.permute.xlu0 0
    %129 = vperm.xlu0 %128, %v95
    %v130 = vpop.permute.xlu0 %129
    %133 = vset.pattern.permute.xlu0 0
    %134 = vperm.xlu0 %133, %v96
    %v135 = vpop.permute.xlu0 %134
    %138 = vset.pattern.permute.xlu0 0
    %139 = vperm.xlu0 %138, %v97
    %v140 = vpop.permute.xlu0 %139
    %143 = vset.pattern.permute.xlu0 0
    %144 = vperm.xlu0 %143, %v98
    %v145 = vpop.permute.xlu0 %144
    %148 = vset.pattern.permute.xlu0 0
    %149 = vperm.xlu0 %148, %v99
    %v150 = vpop.permute.xlu0 %149
    %153 = vset.pattern.permute.xlu0 0
    %154 = vperm.xlu0 %153, %v100
    %v155 = vpop.permute.xlu0 %154
    %158 = vset.pattern.permute.xlu0 0
    %159 = vperm.xlu0 %158, %v101
    %v160 = vpop.permute.xlu0 %159
    %163 = vset.pattern.permute.xlu0 0
    %164 = vperm.xlu0 %163, %v102
    %v165 = vpop.permute.xlu0 %164
    %168 = vset.pattern.permute.xlu0 0
    %169 = vperm.xlu0 %168, %v103
    %v170 = vpop.permute.xlu0 %169
    %173 = vset.pattern.permute.xlu0 0
    %174 = vperm.xlu0 %173, %v104
    %v175 = vpop.permute.xlu0 %174
    %178 = vset.pattern.permute.xlu0 0
    %179 = vperm.xlu0 %178, %v105
    %v180 = vpop.permute.xlu0 %179
    %183 = vset.pattern.permute.xlu0 0
    %184 = vperm.xlu0 %183, %v106
    %v185 = vpop.permute.xlu0 %184
    %188 = vset.pattern.permute.xlu0 0
    %189 = vperm.xlu0 %188, %v107
    %v190 = vpop.permute.xlu0 %189
    %193 = vset.pattern.permute.xlu0 0
    %194 = vperm.xlu0 %193, %v108
    %v195 = vpop.permute.xlu0 %194
    %198 = vset.pattern.permute.xlu0 0
    %199 = vperm.xlu0 %198, %v109
    %v200 = vpop.permute.xlu0 %199
    %203 = vset.pattern.permute.xlu0 0
    %204 = vperm.xlu0 %203, %v110
    %v205 = vpop.permute.xlu0 %204
    %208 = vset.pattern.permute.xlu0 0
    %209 = vperm.xlu0 %208, %v111
    %v210 = vpop.permute.xlu0 %209
    %213 = vset.pattern.permute.xlu0 0
    %214 = vperm.xlu0 %213, %v112
    %v215 = vpop.permute.xlu0 %214
    %218 = vset.pattern.permute.xlu0 0
    %219 = vperm.xlu0 %218, %v113
    %v220 = vpop.permute.xlu0 %219
    %223 = vset.pattern.permute.xlu0 0
    %224 = vperm.xlu0 %223, %v114
    %v225 = vpop.permute.xlu0 %224
    %228 = vset.pattern.permute.xlu0 0
    %229 = vperm.xlu0 %228, %v115
    %v230 = vpop.permute.xlu0 %229
    %v232 = vperm.slane %v116, 0
    %v233 = vmul.f32 %v120, %v232
    %v234 = vmul.f32 %v125, %v232
    %v235 = vmul.f32 %v130, %v232
    %v236 = vmul.f32 %v135, %v232
    %v237 = vmul.f32 %v140, %v232
    %v238 = vmul.f32 %v145, %v232
    %v239 = vmul.f32 %v150, %v232
    %v240 = vmul.f32 %v155, %v232
    %v241 = vmul.f32 %v160, %v232
    %v242 = vmul.f32 %v165, %v232
    %v243 = vmul.f32 %v170, %v232
    %v244 = vmul.f32 %v175, %v232
    %v245 = vmul.f32 %v180, %v232
    %v246 = vmul.f32 %v185, %v232
    %v247 = vmul.f32 %v190, %v232
    %v248 = vmul.f32 %v195, %v232
    %v249 = vmul.f32 %v200, %v232
    %v250 = vmul.f32 %v205, %v232
    %v251 = vmul.f32 %v210, %v232
    %v252 = vmul.f32 %v215, %v232
    %v253 = vmul.f32 %v220, %v232
    %v254 = vmul.f32 %v225, %v232
    %v255 = vmul.f32 %v230, %v232
    %v256 = vadd.f32 %v233, 0.0
    %v257 = vadd.f32 %v234, 0.0
    %v258 = vadd.f32 %v235, 0.0
    %v259 = vadd.f32 %v236, 0.0
    %v260 = vadd.f32 %v237, 0.0
    %v261 = vadd.f32 %v238, 0.0
    %v262 = vadd.f32 %v239, 0.0
    %v263 = vadd.f32 %v240, 0.0
    %v264 = vadd.f32 %v241, 0.0
    %v265 = vadd.f32 %v242, 0.0
    %v266 = vadd.f32 %v243, 0.0
    %v267 = vadd.f32 %v244, 0.0
    %v268 = vadd.f32 %v245, 0.0
    %v269 = vadd.f32 %v246, 0.0
    %v270 = vadd.f32 %v247, 0.0
    %v271 = vadd.f32 %v248, 0.0
    %v272 = vadd.f32 %v249, 0.0
    %v273 = vadd.f32 %v250, 0.0
    %v274 = vadd.f32 %v251, 0.0
    %v275 = vadd.f32 %v252, 0.0
    %v276 = vadd.f32 %v253, 0.0
    %v277 = vadd.f32 %v254, 0.0
    %v278 = vadd.f32 %v255, 0.0
    %279 = vset.pattern.permute.xlu0 1
    %280 = vperm.xlu0 %279, %v93
    %v281 = vpop.permute.xlu0 %280
    %283 = vset.pattern.permute.xlu0 1
    %284 = vperm.xlu0 %283, %v94
    %v285 = vpop.permute.xlu0 %284
    %287 = vset.pattern.permute.xlu0 1
    %288 = vperm.xlu0 %287, %v95
    %v289 = vpop.permute.xlu0 %288
    %291 = vset.pattern.permute.xlu0 1
    %292 = vperm.xlu0 %291, %v96
    %v293 = vpop.permute.xlu0 %292
    %295 = vset.pattern.permute.xlu0 1
    %296 = vperm.xlu0 %295, %v97
    %v297 = vpop.permute.xlu0 %296
    %299 = vset.pattern.permute.xlu0 1
    %300 = vperm.xlu0 %299, %v98
    %v301 = vpop.permute.xlu0 %300
    %303 = vset.pattern.permute.xlu0 1
    %304 = vperm.xlu0 %303, %v99
    %v305 = vpop.permute.xlu0 %304
    %307 = vset.pattern.permute.xlu0 1
    %308 = vperm.xlu0 %307, %v100
    %v309 = vpop.permute.xlu0 %308
    %311 = vset.pattern.permute.xlu0 1
    %312 = vperm.xlu0 %311, %v101
    %v313 = vpop.permute.xlu0 %312
    %315 = vset.pattern.permute.xlu0 1
    %316 = vperm.xlu0 %315, %v102
    %v317 = vpop.permute.xlu0 %316
    %319 = vset.pattern.permute.xlu0 1
    %320 = vperm.xlu0 %319, %v103
    %v321 = vpop.permute.xlu0 %320
    %323 = vset.pattern.permute.xlu0 1
    %324 = vperm.xlu0 %323, %v104
    %v325 = vpop.permute.xlu0 %324
    %327 = vset.pattern.permute.xlu0 1
    %328 = vperm.xlu0 %327, %v105
    %v329 = vpop.permute.xlu0 %328
    %331 = vset.pattern.permute.xlu0 1
    %332 = vperm.xlu0 %331, %v106
    %v333 = vpop.permute.xlu0 %332
    %335 = vset.pattern.permute.xlu0 1
    %336 = vperm.xlu0 %335, %v107
    %v337 = vpop.permute.xlu0 %336
    %339 = vset.pattern.permute.xlu0 1
    %340 = vperm.xlu0 %339, %v108
    %v341 = vpop.permute.xlu0 %340
    %343 = vset.pattern.permute.xlu0 1
    %344 = vperm.xlu0 %343, %v109
    %v345 = vpop.permute.xlu0 %344
    %347 = vset.pattern.permute.xlu0 1
    %348 = vperm.xlu0 %347, %v110
    %v349 = vpop.permute.xlu0 %348
    %351 = vset.pattern.permute.xlu0 1
    %352 = vperm.xlu0 %351, %v111
    %v353 = vpop.permute.xlu0 %352
    %355 = vset.pattern.permute.xlu0 1
    %356 = vperm.xlu0 %355, %v112
    %v357 = vpop.permute.xlu0 %356
    %359 = vset.pattern.permute.xlu0 1
    %360 = vperm.xlu0 %359, %v113
    %v361 = vpop.permute.xlu0 %360
    %363 = vset.pattern.permute.xlu0 1
    %364 = vperm.xlu0 %363, %v114
    %v365 = vpop.permute.xlu0 %364
    %367 = vset.pattern.permute.xlu0 1
    %368 = vperm.xlu0 %367, %v115
    %v369 = vpop.permute.xlu0 %368
    %v371 = vperm.slane %v116, 1
    %v372 = vmul.f32 %v281, %v371
    %v373 = vmul.f32 %v285, %v371
    %v374 = vmul.f32 %v289, %v371
    %v375 = vmul.f32 %v293, %v371
    %v376 = vmul.f32 %v297, %v371
    %v377 = vmul.f32 %v301, %v371
    %v378 = vmul.f32 %v305, %v371
    %v379 = vmul.f32 %v309, %v371
    %v380 = vmul.f32 %v313, %v371
    %v381 = vmul.f32 %v317, %v371
    %v382 = vmul.f32 %v321, %v371
    %v383 = vmul.f32 %v325, %v371
    %v384 = vmul.f32 %v329, %v371
    %v385 = vmul.f32 %v333, %v371
    %v386 = vmul.f32 %v337, %v371
    %v387 = vmul.f32 %v341, %v371
    %v388 = vmul.f32 %v345, %v371
    %v389 = vmul.f32 %v349, %v371
    %v390 = vmul.f32 %v353, %v371
    %v391 = vmul.f32 %v357, %v371
    %v392 = vmul.f32 %v361, %v371
    %v393 = vmul.f32 %v365, %v371
    %v394 = vmul.f32 %v369, %v371
    %v395 = vadd.f32 %v256, %v372
    %v396 = vadd.f32 %v257, %v373
    %v397 = vadd.f32 %v258, %v374
    %v398 = vadd.f32 %v259, %v375
    %v399 = vadd.f32 %v260, %v376
    %v400 = vadd.f32 %v261, %v377
    %v401 = vadd.f32 %v262, %v378
    %v402 = vadd.f32 %v263, %v379
    %v403 = vadd.f32 %v264, %v380
    %v404 = vadd.f32 %v265, %v381
    %v405 = vadd.f32 %v266, %v382
    %v406 = vadd.f32 %v267, %v383
    %v407 = vadd.f32 %v268, %v384
    %v408 = vadd.f32 %v269, %v385
    %v409 = vadd.f32 %v270, %v386
    %v410 = vadd.f32 %v271, %v387
    %v411 = vadd.f32 %v272, %v388
    %v412 = vadd.f32 %v273, %v389
    %v413 = vadd.f32 %v274, %v390
    %v414 = vadd.f32 %v275, %v391
    %v415 = vadd.f32 %v276, %v392
    %v416 = vadd.f32 %v277, %v393
    %v417 = vadd.f32 %v278, %v394
    %v418 = vld [vmem:[%s0 + $0x1] sm:$0xff]
    %v419 = vld [vmem:[%s0 + $0x9] sm:$0xff]
    %v420 = vld [vmem:[%s0 + $0x11] sm:$0xff]
    %v421 = vld [vmem:[%s0 + $0x19] sm:$0xff]
    %v422 = vld [vmem:[%s0 + $0x21] sm:$0xff]
    %v423 = vld [vmem:[%s0 + $0x29] sm:$0xff]
    %v424 = vld [vmem:[%s0 + $0x31] sm:$0xff]
    %v425 = vld [vmem:[%s0 + $0x39] sm:$0xff]
    %v426 = vld [vmem:[%s0 + $0x41] sm:$0xff]
    %v427 = vld [vmem:[%s0 + $0x49] sm:$0xff]
    %v428 = vld [vmem:[%s0 + $0x51] sm:$0xff]
    %v429 = vld [vmem:[%s0 + $0x59] sm:$0xff]
    %v430 = vld [vmem:[%s0 + $0x61] sm:$0xff]
    %v431 = vld [vmem:[%s0 + $0x69] sm:$0xff]
    %v432 = vld [vmem:[%s0 + $0x71] sm:$0xff]
    %v433 = vld [vmem:[%s0 + $0x79] sm:$0xff]
    %v434 = vld [vmem:[%s0 + $0x81] sm:$0xff]
    %v435 = vld [vmem:[%s0 + $0x89] sm:$0xff]
    %v436 = vld [vmem:[%s0 + $0x91] sm:$0xff]
    %v437 = vld [vmem:[%s0 + $0x99] sm:$0xff]
    %v438 = vld [vmem:[%s0 + $0xa1] sm:$0xff]
    %v439 = vld [vmem:[%s0 + $0xa9] sm:$0xff]
    %v440 = vld [vmem:[%s0 + $0xb1] sm:$0x3]
    %s441 = scalar_lea.vmem %s1, 2
    %v442 = vld [vmem:[%s441] sm:$0x3]
    %444 = vset.pattern.permute.xlu0 0
    %445 = vperm.xlu0 %444, %v418
    %v446 = vpop.permute.xlu0 %445
    %449 = vset.pattern.permute.xlu0 0
    %450 = vperm.xlu0 %449, %v419
    %v451 = vpop.permute.xlu0 %450
    %454 = vset.pattern.permute.xlu0 0
    %455 = vperm.xlu0 %454, %v420
    %v456 = vpop.permute.xlu0 %455
    %459 = vset.pattern.permute.xlu0 0
    %460 = vperm.xlu0 %459, %v421
    %v461 = vpop.permute.xlu0 %460
    %464 = vset.pattern.permute.xlu0 0
    %465 = vperm.xlu0 %464, %v422
    %v466 = vpop.permute.xlu0 %465
    %469 = vset.pattern.permute.xlu0 0
    %470 = vperm.xlu0 %469, %v423
    %v471 = vpop.permute.xlu0 %470
    %474 = vset.pattern.permute.xlu0 0
    %475 = vperm.xlu0 %474, %v424
    %v476 = vpop.permute.xlu0 %475
    %479 = vset.pattern.permute.xlu0 0
    %480 = vperm.xlu0 %479, %v425
    %v481 = vpop.permute.xlu0 %480
    %484 = vset.pattern.permute.xlu0 0
    %485 = vperm.xlu0 %484, %v426
    %v486 = vpop.permute.xlu0 %485
    %489 = vset.pattern.permute.xlu0 0
    %490 = vperm.xlu0 %489, %v427
    %v491 = vpop.permute.xlu0 %490
    %494 = vset.pattern.permute.xlu0 0
    %495 = vperm.xlu0 %494, %v428
    %v496 = vpop.permute.xlu0 %495
    %499 = vset.pattern.permute.xlu0 0
    %500 = vperm.xlu0 %499, %v429
    %v501 = vpop.permute.xlu0 %500
    %504 = vset.pattern.permute.xlu0 0
    %505 = vperm.xlu0 %504, %v430
    %v506 = vpop.permute.xlu0 %505
    %509 = vset.pattern.permute.xlu0 0
    %510 = vperm.xlu0 %509, %v431
    %v511 = vpop.permute.xlu0 %510
    %514 = vset.pattern.permute.xlu0 0
    %515 = vperm.xlu0 %514, %v432
    %v516 = vpop.permute.xlu0 %515
    %519 = vset.pattern.permute.xlu0 0
    %520 = vperm.xlu0 %519, %v433
    %v521 = vpop.permute.xlu0 %520
    %524 = vset.pattern.permute.xlu0 0
    %525 = vperm.xlu0 %524, %v434
    %v526 = vpop.permute.xlu0 %525
    %529 = vset.pattern.permute.xlu0 0
    %530 = vperm.xlu0 %529, %v435
    %v531 = vpop.permute.xlu0 %530
    %534 = vset.pattern.permute.xlu0 0
    %535 = vperm.xlu0 %534, %v436
    %v536 = vpop.permute.xlu0 %535
    %539 = vset.pattern.permute.xlu0 0
    %540 = vperm.xlu0 %539, %v437
    %v541 = vpop.permute.xlu0 %540
    %544 = vset.pattern.permute.xlu0 0
    %545 = vperm.xlu0 %544, %v438
    %v546 = vpop.permute.xlu0 %545
    %549 = vset.pattern.permute.xlu0 0
    %550 = vperm.xlu0 %549, %v439
    %v551 = vpop.permute.xlu0 %550
    %554 = vset.pattern.permute.xlu0 0
    %555 = vperm.xlu0 %554, %v440
    %v556 = vpop.permute.xlu0 %555
    %v558 = vperm.slane %v442, 0
    %v559 = vmul.f32 %v446, %v558
    %v560 = vmul.f32 %v451, %v558
    %v561 = vmul.f32 %v456, %v558
    %v562 = vmul.f32 %v461, %v558
    %v563 = vmul.f32 %v466, %v558
    %v564 = vmul.f32 %v471, %v558
    %v565 = vmul.f32 %v476, %v558
    %v566 = vmul.f32 %v481, %v558
    %v567 = vmul.f32 %v486, %v558
    %v568 = vmul.f32 %v491, %v558
    %v569 = vmul.f32 %v496, %v558
    %v570 = vmul.f32 %v501, %v558
    %v571 = vmul.f32 %v506, %v558
    %v572 = vmul.f32 %v511, %v558
    %v573 = vmul.f32 %v516, %v558
    %v574 = vmul.f32 %v521, %v558
    %v575 = vmul.f32 %v526, %v558
    %v576 = vmul.f32 %v531, %v558
    %v577 = vmul.f32 %v536, %v558
    %v578 = vmul.f32 %v541, %v558
    %v579 = vmul.f32 %v546, %v558
    %v580 = vmul.f32 %v551, %v558
    %v581 = vmul.f32 %v556, %v558
    %v582 = vadd.f32 %v395, %v559
    %v583 = vadd.f32 %v396, %v560
    %v584 = vadd.f32 %v397, %v561
    %v585 = vadd.f32 %v398, %v562
    %v586 = vadd.f32 %v399, %v563
    %v587 = vadd.f32 %v400, %v564
    %v588 = vadd.f32 %v401, %v565
    %v589 = vadd.f32 %v402, %v566
    %v590 = vadd.f32 %v403, %v567
    %v591 = vadd.f32 %v404, %v568
    %v592 = vadd.f32 %v405, %v569
    %v593 = vadd.f32 %v406, %v570
    %v594 = vadd.f32 %v407, %v571
    %v595 = vadd.f32 %v408, %v572
    %v596 = vadd.f32 %v409, %v573
    %v597 = vadd.f32 %v410, %v574
    %v598 = vadd.f32 %v411, %v575
    %v599 = vadd.f32 %v412, %v576
    %v600 = vadd.f32 %v413, %v577
    %v601 = vadd.f32 %v414, %v578
    %v602 = vadd.f32 %v415, %v579
    %v603 = vadd.f32 %v416, %v580
    %v604 = vadd.f32 %v417, %v581
    %605 = vset.pattern.permute.xlu0 1
    %606 = vperm.xlu0 %605, %v418
    %v607 = vpop.permute.xlu0 %606
    %609 = vset.pattern.permute.xlu0 1
    %610 = vperm.xlu0 %609, %v419
    %v611 = vpop.permute.xlu0 %610
    %613 = vset.pattern.permute.xlu0 1
    %614 = vperm.xlu0 %613, %v420
    %v615 = vpop.permute.xlu0 %614
    %617 = vset.pattern.permute.xlu0 1
    %618 = vperm.xlu0 %617, %v421
    %v619 = vpop.permute.xlu0 %618
    %621 = vset.pattern.permute.xlu0 1
    %622 = vperm.xlu0 %621, %v422
    %v623 = vpop.permute.xlu0 %622
    %625 = vset.pattern.permute.xlu0 1
    %626 = vperm.xlu0 %625, %v423
    %v627 = vpop.permute.xlu0 %626
    %629 = vset.pattern.permute.xlu0 1
    %630 = vperm.xlu0 %629, %v424
    %v631 = vpop.permute.xlu0 %630
    %633 = vset.pattern.permute.xlu0 1
    %634 = vperm.xlu0 %633, %v425
    %v635 = vpop.permute.xlu0 %634
    %637 = vset.pattern.permute.xlu0 1
    %638 = vperm.xlu0 %637, %v426
    %v639 = vpop.permute.xlu0 %638
    %641 = vset.pattern.permute.xlu0 1
    %642 = vperm.xlu0 %641, %v427
    %v643 = vpop.permute.xlu0 %642
    %645 = vset.pattern.permute.xlu0 1
    %646 = vperm.xlu0 %645, %v428
    %v647 = vpop.permute.xlu0 %646
    %649 = vset.pattern.permute.xlu0 1
    %650 = vperm.xlu0 %649, %v429
    %v651 = vpop.permute.xlu0 %650
    %653 = vset.pattern.permute.xlu0 1
    %654 = vperm.xlu0 %653, %v430
    %v655 = vpop.permute.xlu0 %654
    %657 = vset.pattern.permute.xlu0 1
    %658 = vperm.xlu0 %657, %v431
    %v659 = vpop.permute.xlu0 %658
    %661 = vset.pattern.permute.xlu0 1
    %662 = vperm.xlu0 %661, %v432
    %v663 = vpop.permute.xlu0 %662
    %665 = vset.pattern.permute.xlu0 1
    %666 = vperm.xlu0 %665, %v433
    %v667 = vpop.permute.xlu0 %666
    %669 = vset.pattern.permute.xlu0 1
    %670 = vperm.xlu0 %669, %v434
    %v671 = vpop.permute.xlu0 %670
    %673 = vset.pattern.permute.xlu0 1
    %674 = vperm.xlu0 %673, %v435
    %v675 = vpop.permute.xlu0 %674
    %677 = vset.pattern.permute.xlu0 1
    %678 = vperm.xlu0 %677, %v436
    %v679 = vpop.permute.xlu0 %678
    %681 = vset.pattern.permute.xlu0 1
    %682 = vperm.xlu0 %681, %v437
    %v683 = vpop.permute.xlu0 %682
    %685 = vset.pattern.permute.xlu0 1
    %686 = vperm.xlu0 %685, %v438
    %v687 = vpop.permute.xlu0 %686
    %689 = vset.pattern.permute.xlu0 1
    %690 = vperm.xlu0 %689, %v439
    %v691 = vpop.permute.xlu0 %690
    %693 = vset.pattern.permute.xlu0 1
    %694 = vperm.xlu0 %693, %v440
    %v695 = vpop.permute.xlu0 %694
    %v697 = vperm.slane %v442, 1
    %v698 = vmul.f32 %v607, %v697
    %v699 = vmul.f32 %v611, %v697
    %v700 = vmul.f32 %v615, %v697
    %v701 = vmul.f32 %v619, %v697
    %v702 = vmul.f32 %v623, %v697
    %v703 = vmul.f32 %v627, %v697
    %v704 = vmul.f32 %v631, %v697
    %v705 = vmul.f32 %v635, %v697
    %v706 = vmul.f32 %v639, %v697
    %v707 = vmul.f32 %v643, %v697
    %v708 = vmul.f32 %v647, %v697
    %v709 = vmul.f32 %v651, %v697
    %v710 = vmul.f32 %v655, %v697
    %v711 = vmul.f32 %v659, %v697
    %v712 = vmul.f32 %v663, %v697
    %v713 = vmul.f32 %v667, %v697
    %v714 = vmul.f32 %v671, %v697
    %v715 = vmul.f32 %v675, %v697
    %v716 = vmul.f32 %v679, %v697
    %v717 = vmul.f32 %v683, %v697
    %v718 = vmul.f32 %v687, %v697
    %v719 = vmul.f32 %v691, %v697
    %v720 = vmul.f32 %v695, %v697
    %v721 = vadd.f32 %v582, %v698
    %v722 = vadd.f32 %v583, %v699
    %v723 = vadd.f32 %v584, %v700
    %v724 = vadd.f32 %v585, %v701
    %v725 = vadd.f32 %v586, %v702
    %v726 = vadd.f32 %v587, %v703
    %v727 = vadd.f32 %v588, %v704
    %v728 = vadd.f32 %v589, %v705
    %v729 = vadd.f32 %v590, %v706
    %v730 = vadd.f32 %v591, %v707
    %v731 = vadd.f32 %v592, %v708
    %v732 = vadd.f32 %v593, %v709
    %v733 = vadd.f32 %v594, %v710
    %v734 = vadd.f32 %v595, %v711
    %v735 = vadd.f32 %v596, %v712
    %v736 = vadd.f32 %v597, %v713
    %v737 = vadd.f32 %v598, %v714
    %v738 = vadd.f32 %v599, %v715
    %v739 = vadd.f32 %v600, %v716
    %v740 = vadd.f32 %v601, %v717
    %v741 = vadd.f32 %v602, %v718
    %v742 = vadd.f32 %v603, %v719
    %v743 = vadd.f32 %v604, %v720
    %v744 = vld [vmem:[%s0 + $0x2] sm:$0xff]
    %v745 = vld [vmem:[%s0 + $0xa] sm:$0xff]
    %v746 = vld [vmem:[%s0 + $0x12] sm:$0xff]
    %v747 = vld [vmem:[%s0 + $0x1a] sm:$0xff]
    %v748 = vld [vmem:[%s0 + $0x22] sm:$0xff]
    %v749 = vld [vmem:[%s0 + $0x2a] sm:$0xff]
    %v750 = vld [vmem:[%s0 + $0x32] sm:$0xff]
    %v751 = vld [vmem:[%s0 + $0x3a] sm:$0xff]
    %v752 = vld [vmem:[%s0 + $0x42] sm:$0xff]
    %v753 = vld [vmem:[%s0 + $0x4a] sm:$0xff]
    %v754 = vld [vmem:[%s0 + $0x52] sm:$0xff]
    %v755 = vld [vmem:[%s0 + $0x5a] sm:$0xff]
    %v756 = vld [vmem:[%s0 + $0x62] sm:$0xff]
    %v757 = vld [vmem:[%s0 + $0x6a] sm:$0xff]
    %v758 = vld [vmem:[%s0 + $0x72] sm:$0xff]
    %v759 = vld [vmem:[%s0 + $0x7a] sm:$0xff]
    %v760 = vld [vmem:[%s0 + $0x82] sm:$0xff]
    %v761 = vld [vmem:[%s0 + $0x8a] sm:$0xff]
    %v762 = vld [vmem:[%s0 + $0x92] sm:$0xff]
    %v763 = vld [vmem:[%s0 + $0x9a] sm:$0xff]
    %v764 = vld [vmem:[%s0 + $0xa2] sm:$0xff]
    %v765 = vld [vmem:[%s0 + $0xaa] sm:$0xff]
    %v766 = vld [vmem:[%s0 + $0xb2] sm:$0x3]
    %s767 = scalar_lea.vmem %s1, 4
    %v768 = vld [vmem:[%s767] sm:$0x3]
    %770 = vset.pattern.permute.xlu0 0
    %771 = vperm.xlu0 %770, %v744
    %v772 = vpop.permute.xlu0 %771
    %775 = vset.pattern.permute.xlu0 0
    %776 = vperm.xlu0 %775, %v745
    %v777 = vpop.permute.xlu0 %776
    %780 = vset.pattern.permute.xlu0 0
    %781 = vperm.xlu0 %780, %v746
    %v782 = vpop.permute.xlu0 %781
    %785 = vset.pattern.permute.xlu0 0
    %786 = vperm.xlu0 %785, %v747
    %v787 = vpop.permute.xlu0 %786
    %790 = vset.pattern.permute.xlu0 0
    %791 = vperm.xlu0 %790, %v748
    %v792 = vpop.permute.xlu0 %791
    %795 = vset.pattern.permute.xlu0 0
    %796 = vperm.xlu0 %795, %v749
    %v797 = vpop.permute.xlu0 %796
    %800 = vset.pattern.permute.xlu0 0
    %801 = vperm.xlu0 %800, %v750
    %v802 = vpop.permute.xlu0 %801
    %805 = vset.pattern.permute.xlu0 0
    %806 = vperm.xlu0 %805, %v751
    %v807 = vpop.permute.xlu0 %806
    %810 = vset.pattern.permute.xlu0 0
    %811 = vperm.xlu0 %810, %v752
    %v812 = vpop.permute.xlu0 %811
    %815 = vset.pattern.permute.xlu0 0
    %816 = vperm.xlu0 %815, %v753
    %v817 = vpop.permute.xlu0 %816
    %820 = vset.pattern.permute.xlu0 0
    %821 = vperm.xlu0 %820, %v754
    %v822 = vpop.permute.xlu0 %821
    %825 = vset.pattern.permute.xlu0 0
    %826 = vperm.xlu0 %825, %v755
    %v827 = vpop.permute.xlu0 %826
    %830 = vset.pattern.permute.xlu0 0
    %831 = vperm.xlu0 %830, %v756
    %v832 = vpop.permute.xlu0 %831
    %835 = vset.pattern.permute.xlu0 0
    %836 = vperm.xlu0 %835, %v757
    %v837 = vpop.permute.xlu0 %836
    %840 = vset.pattern.permute.xlu0 0
    %841 = vperm.xlu0 %840, %v758
    %v842 = vpop.permute.xlu0 %841
    %845 = vset.pattern.permute.xlu0 0
    %846 = vperm.xlu0 %845, %v759
    %v847 = vpop.permute.xlu0 %846
    %850 = vset.pattern.permute.xlu0 0
    %851 = vperm.xlu0 %850, %v760
    %v852 = vpop.permute.xlu0 %851
    %855 = vset.pattern.permute.xlu0 0
    %856 = vperm.xlu0 %855, %v761
    %v857 = vpop.permute.xlu0 %856
    %860 = vset.pattern.permute.xlu0 0
    %861 = vperm.xlu0 %860, %v762
    %v862 = vpop.permute.xlu0 %861
    %865 = vset.pattern.permute.xlu0 0
    %866 = vperm.xlu0 %865, %v763
    %v867 = vpop.permute.xlu0 %866
    %870 = vset.pattern.permute.xlu0 0
    %871 = vperm.xlu0 %870, %v764
    %v872 = vpop.permute.xlu0 %871
    %875 = vset.pattern.permute.xlu0 0
    %876 = vperm.xlu0 %875, %v765
    %v877 = vpop.permute.xlu0 %876
    %880 = vset.pattern.permute.xlu0 0
    %881 = vperm.xlu0 %880, %v766
    %v882 = vpop.permute.xlu0 %881
    %v884 = vperm.slane %v768, 0
    %v885 = vmul.f32 %v772, %v884
    %v886 = vmul.f32 %v777, %v884
    %v887 = vmul.f32 %v782, %v884
    %v888 = vmul.f32 %v787, %v884
    %v889 = vmul.f32 %v792, %v884
    %v890 = vmul.f32 %v797, %v884
    %v891 = vmul.f32 %v802, %v884
    %v892 = vmul.f32 %v807, %v884
    %v893 = vmul.f32 %v812, %v884
    %v894 = vmul.f32 %v817, %v884
    %v895 = vmul.f32 %v822, %v884
    %v896 = vmul.f32 %v827, %v884
    %v897 = vmul.f32 %v832, %v884
    %v898 = vmul.f32 %v837, %v884
    %v899 = vmul.f32 %v842, %v884
    %v900 = vmul.f32 %v847, %v884
    %v901 = vmul.f32 %v852, %v884
    %v902 = vmul.f32 %v857, %v884
    %v903 = vmul.f32 %v862, %v884
    %v904 = vmul.f32 %v867, %v884
    %v905 = vmul.f32 %v872, %v884
    %v906 = vmul.f32 %v877, %v884
    %v907 = vmul.f32 %v882, %v884
    %v908 = vadd.f32 %v721, %v885
    %v909 = vadd.f32 %v722, %v886
    %v910 = vadd.f32 %v723, %v887
    %v911 = vadd.f32 %v724, %v888
    %v912 = vadd.f32 %v725, %v889
    %v913 = vadd.f32 %v726, %v890
    %v914 = vadd.f32 %v727, %v891
    %v915 = vadd.f32 %v728, %v892
    %v916 = vadd.f32 %v729, %v893
    %v917 = vadd.f32 %v730, %v894
    %v918 = vadd.f32 %v731, %v895
    %v919 = vadd.f32 %v732, %v896
    %v920 = vadd.f32 %v733, %v897
    %v921 = vadd.f32 %v734, %v898
    %v922 = vadd.f32 %v735, %v899
    %v923 = vadd.f32 %v736, %v900
    %v924 = vadd.f32 %v737, %v901
    %v925 = vadd.f32 %v738, %v902
    %v926 = vadd.f32 %v739, %v903
    %v927 = vadd.f32 %v740, %v904
    %v928 = vadd.f32 %v741, %v905
    %v929 = vadd.f32 %v742, %v906
    %v930 = vadd.f32 %v743, %v907
    %931 = vset.pattern.permute.xlu0 1
    %932 = vperm.xlu0 %931, %v744
    %v933 = vpop.permute.xlu0 %932
    %935 = vset.pattern.permute.xlu0 1
    %936 = vperm.xlu0 %935, %v745
    %v937 = vpop.permute.xlu0 %936
    %939 = vset.pattern.permute.xlu0 1
    %940 = vperm.xlu0 %939, %v746
    %v941 = vpop.permute.xlu0 %940
    %943 = vset.pattern.permute.xlu0 1
    %944 = vperm.xlu0 %943, %v747
    %v945 = vpop.permute.xlu0 %944
    %947 = vset.pattern.permute.xlu0 1
    %948 = vperm.xlu0 %947, %v748
    %v949 = vpop.permute.xlu0 %948
    %951 = vset.pattern.permute.xlu0 1
    %952 = vperm.xlu0 %951, %v749
    %v953 = vpop.permute.xlu0 %952
    %955 = vset.pattern.permute.xlu0 1
    %956 = vperm.xlu0 %955, %v750
    %v957 = vpop.permute.xlu0 %956
    %959 = vset.pattern.permute.xlu0 1
    %960 = vperm.xlu0 %959, %v751
    %v961 = vpop.permute.xlu0 %960
    %963 = vset.pattern.permute.xlu0 1
    %964 = vperm.xlu0 %963, %v752
    %v965 = vpop.permute.xlu0 %964
    %967 = vset.pattern.permute.xlu0 1
    %968 = vperm.xlu0 %967, %v753
    %v969 = vpop.permute.xlu0 %968
    %971 = vset.pattern.permute.xlu0 1
    %972 = vperm.xlu0 %971, %v754
    %v973 = vpop.permute.xlu0 %972
    %975 = vset.pattern.permute.xlu0 1
    %976 = vperm.xlu0 %975, %v755
    %v977 = vpop.permute.xlu0 %976
    %979 = vset.pattern.permute.xlu0 1
    %980 = vperm.xlu0 %979, %v756
    %v981 = vpop.permute.xlu0 %980
    %983 = vset.pattern.permute.xlu0 1
    %984 = vperm.xlu0 %983, %v757
    %v985 = vpop.permute.xlu0 %984
    %987 = vset.pattern.permute.xlu0 1
    %988 = vperm.xlu0 %987, %v758
    %v989 = vpop.permute.xlu0 %988
    %991 = vset.pattern.permute.xlu0 1
    %992 = vperm.xlu0 %991, %v759
    %v993 = vpop.permute.xlu0 %992
    %995 = vset.pattern.permute.xlu0 1
    %996 = vperm.xlu0 %995, %v760
    %v997 = vpop.permute.xlu0 %996
    %999 = vset.pattern.permute.xlu0 1
    %1000 = vperm.xlu0 %999, %v761
    %v1001 = vpop.permute.xlu0 %1000
    %1003 = vset.pattern.permute.xlu0 1
    %1004 = vperm.xlu0 %1003, %v762
    %v1005 = vpop.permute.xlu0 %1004
    %1007 = vset.pattern.permute.xlu0 1
    %1008 = vperm.xlu0 %1007, %v763
    %v1009 = vpop.permute.xlu0 %1008
    %1011 = vset.pattern.permute.xlu0 1
    %1012 = vperm.xlu0 %1011, %v764
    %v1013 = vpop.permute.xlu0 %1012
    %1015 = vset.pattern.permute.xlu0 1
    %1016 = vperm.xlu0 %1015, %v765
    %v1017 = vpop.permute.xlu0 %1016
    %1019 = vset.pattern.permute.xlu0 1
    %1020 = vperm.xlu0 %1019, %v766
    %v1021 = vpop.permute.xlu0 %1020
    %v1023 = vperm.slane %v768, 1
    %v1024 = vmul.f32 %v933, %v1023
    %v1025 = vmul.f32 %v937, %v1023
    %v1026 = vmul.f32 %v941, %v1023
    %v1027 = vmul.f32 %v945, %v1023
    %v1028 = vmul.f32 %v949, %v1023
    %v1029 = vmul.f32 %v953, %v1023
    %v1030 = vmul.f32 %v957, %v1023
    %v1031 = vmul.f32 %v961, %v1023
    %v1032 = vmul.f32 %v965, %v1023
    %v1033 = vmul.f32 %v969, %v1023
    %v1034 = vmul.f32 %v973, %v1023
    %v1035 = vmul.f32 %v977, %v1023
    %v1036 = vmul.f32 %v981, %v1023
    %v1037 = vmul.f32 %v985, %v1023
    %v1038 = vmul.f32 %v989, %v1023
    %v1039 = vmul.f32 %v993, %v1023
    %v1040 = vmul.f32 %v997, %v1023
    %v1041 = vmul.f32 %v1001, %v1023
    %v1042 = vmul.f32 %v1005, %v1023
    %v1043 = vmul.f32 %v1009, %v1023
    %v1044 = vmul.f32 %v1013, %v1023
    %v1045 = vmul.f32 %v1017, %v1023
    %v1046 = vmul.f32 %v1021, %v1023
    %v1047 = vadd.f32 %v908, %v1024
    %v1048 = vadd.f32 %v909, %v1025
    %v1049 = vadd.f32 %v910, %v1026
    %v1050 = vadd.f32 %v911, %v1027
    %v1051 = vadd.f32 %v912, %v1028
    %v1052 = vadd.f32 %v913, %v1029
    %v1053 = vadd.f32 %v914, %v1030
    %v1054 = vadd.f32 %v915, %v1031
    %v1055 = vadd.f32 %v916, %v1032
    %v1056 = vadd.f32 %v917, %v1033
    %v1057 = vadd.f32 %v918, %v1034
    %v1058 = vadd.f32 %v919, %v1035
    %v1059 = vadd.f32 %v920, %v1036
    %v1060 = vadd.f32 %v921, %v1037
    %v1061 = vadd.f32 %v922, %v1038
    %v1062 = vadd.f32 %v923, %v1039
    %v1063 = vadd.f32 %v924, %v1040
    %v1064 = vadd.f32 %v925, %v1041
    %v1065 = vadd.f32 %v926, %v1042
    %v1066 = vadd.f32 %v927, %v1043
    %v1067 = vadd.f32 %v928, %v1044
    %v1068 = vadd.f32 %v929, %v1045
    %v1069 = vadd.f32 %v930, %v1046
    %v1070 = vld [vmem:[%s0 + $0xa] sm:$0xff]
    %v1071 = vld [vmem:[%s0 + $0x12] sm:$0xff]
    %v1072 = vld [vmem:[%s0 + $0x1a] sm:$0xff]
    %v1073 = vld [vmem:[%s0 + $0x22] sm:$0xff]
    %v1074 = vld [vmem:[%s0 + $0x2a] sm:$0xff]
    %v1075 = vld [vmem:[%s0 + $0x32] sm:$0xff]
    %v1076 = vld [vmem:[%s0 + $0x3a] sm:$0xff]
    %v1077 = vld [vmem:[%s0 + $0x42] sm:$0xff]
    %v1078 = vld [vmem:[%s0 + $0x4a] sm:$0xff]
    %v1079 = vld [vmem:[%s0 + $0x52] sm:$0xff]
    %v1080 = vld [vmem:[%s0 + $0x5a] sm:$0xff]
    %v1081 = vld [vmem:[%s0 + $0x62] sm:$0xff]
    %v1082 = vld [vmem:[%s0 + $0x6a] sm:$0xff]
    %v1083 = vld [vmem:[%s0 + $0x72] sm:$0xff]
    %v1084 = vld [vmem:[%s0 + $0x7a] sm:$0xff]
    %v1085 = vld [vmem:[%s0 + $0x82] sm:$0xff]
    %v1086 = vld [vmem:[%s0 + $0x8a] sm:$0xff]
    %v1087 = vld [vmem:[%s0 + $0x92] sm:$0xff]
    %v1088 = vld [vmem:[%s0 + $0x9a] sm:$0xff]
    %v1089 = vld [vmem:[%s0 + $0xa2] sm:$0xff]
    %v1090 = vld [vmem:[%s0 + $0xaa] sm:$0xff]
    %v1091 = vld [vmem:[%s0 + $0xb2] sm:$0xff]
    %v1092 = vld [vmem:[%s0 + $0xba] sm:$0x3]
    %s1093 = scalar_lea.vmem %s1, 6
    %v1094 = vld [vmem:[%s1093] sm:$0x3]
    %1096 = vset.pattern.permute.xlu0 0
    %1097 = vperm.xlu0 %1096, %v1070
    %v1098 = vpop.permute.xlu0 %1097
    %1101 = vset.pattern.permute.xlu0 0
    %1102 = vperm.xlu0 %1101, %v1071
    %v1103 = vpop.permute.xlu0 %1102
    %1106 = vset.pattern.permute.xlu0 0
    %1107 = vperm.xlu0 %1106, %v1072
    %v1108 = vpop.permute.xlu0 %1107
    %1111 = vset.pattern.permute.xlu0 0
    %1112 = vperm.xlu0 %1111, %v1073
    %v1113 = vpop.permute.xlu0 %1112
    %1116 = vset.pattern.permute.xlu0 0
    %1117 = vperm.xlu0 %1116, %v1074
    %v1118 = vpop.permute.xlu0 %1117
    %1121 = vset.pattern.permute.xlu0 0
    %1122 = vperm.xlu0 %1121, %v1075
    %v1123 = vpop.permute.xlu0 %1122
    %1126 = vset.pattern.permute.xlu0 0
    %1127 = vperm.xlu0 %1126, %v1076
    %v1128 = vpop.permute.xlu0 %1127
    %1131 = vset.pattern.permute.xlu0 0
    %1132 = vperm.xlu0 %1131, %v1077
    %v1133 = vpop.permute.xlu0 %1132
    %1136 = vset.pattern.permute.xlu0 0
    %1137 = vperm.xlu0 %1136, %v1078
    %v1138 = vpop.permute.xlu0 %1137
    %1141 = vset.pattern.permute.xlu0 0
    %1142 = vperm.xlu0 %1141, %v1079
    %v1143 = vpop.permute.xlu0 %1142
    %1146 = vset.pattern.permute.xlu0 0
    %1147 = vperm.xlu0 %1146, %v1080
    %v1148 = vpop.permute.xlu0 %1147
    %1151 = vset.pattern.permute.xlu0 0
    %1152 = vperm.xlu0 %1151, %v1081
    %v1153 = vpop.permute.xlu0 %1152
    %1156 = vset.pattern.permute.xlu0 0
    %1157 = vperm.xlu0 %1156, %v1082
    %v1158 = vpop.permute.xlu0 %1157
    %1161 = vset.pattern.permute.xlu0 0
    %1162 = vperm.xlu0 %1161, %v1083
    %v1163 = vpop.permute.xlu0 %1162
    %1166 = vset.pattern.permute.xlu0 0
    %1167 = vperm.xlu0 %1166, %v1084
    %v1168 = vpop.permute.xlu0 %1167
    %1171 = vset.pattern.permute.xlu0 0
    %1172 = vperm.xlu0 %1171, %v1085
    %v1173 = vpop.permute.xlu0 %1172
    %1176 = vset.pattern.permute.xlu0 0
    %1177 = vperm.xlu0 %1176, %v1086
    %v1178 = vpop.permute.xlu0 %1177
    %1181 = vset.pattern.permute.xlu0 0
    %1182 = vperm.xlu0 %1181, %v1087
    %v1183 = vpop.permute.xlu0 %1182
    %1186 = vset.pattern.permute.xlu0 0
    %1187 = vperm.xlu0 %1186, %v1088
    %v1188 = vpop.permute.xlu0 %1187
    %1191 = vset.pattern.permute.xlu0 0
    %1192 = vperm.xlu0 %1191, %v1089
    %v1193 = vpop.permute.xlu0 %1192
    %1196 = vset.pattern.permute.xlu0 0
    %1197 = vperm.xlu0 %1196, %v1090
    %v1198 = vpop.permute.xlu0 %1197
    %1201 = vset.pattern.permute.xlu0 0
    %1202 = vperm.xlu0 %1201, %v1091
    %v1203 = vpop.permute.xlu0 %1202
    %1206 = vset.pattern.permute.xlu0 0
    %1207 = vperm.xlu0 %1206, %v1092
    %v1208 = vpop.permute.xlu0 %1207
    %v1210 = vperm.slane %v1094, 0
    %v1211 = vmul.f32 %v1098, %v1210
    %v1212 = vmul.f32 %v1103, %v1210
    %v1213 = vmul.f32 %v1108, %v1210
    %v1214 = vmul.f32 %v1113, %v1210
    %v1215 = vmul.f32 %v1118, %v1210
    %v1216 = vmul.f32 %v1123, %v1210
    %v1217 = vmul.f32 %v1128, %v1210
    %v1218 = vmul.f32 %v1133, %v1210
    %v1219 = vmul.f32 %v1138, %v1210
    %v1220 = vmul.f32 %v1143, %v1210
    %v1221 = vmul.f32 %v1148, %v1210
    %v1222 = vmul.f32 %v1153, %v1210
    %v1223 = vmul.f32 %v1158, %v1210
    %v1224 = vmul.f32 %v1163, %v1210
    %v1225 = vmul.f32 %v1168, %v1210
    %v1226 = vmul.f32 %v1173, %v1210
    %v1227 = vmul.f32 %v1178, %v1210
    %v1228 = vmul.f32 %v1183, %v1210
    %v1229 = vmul.f32 %v1188, %v1210
    %v1230 = vmul.f32 %v1193, %v1210
    %v1231 = vmul.f32 %v1198, %v1210
    %v1232 = vmul.f32 %v1203, %v1210
    %v1233 = vmul.f32 %v1208, %v1210
    %v1234 = vadd.f32 %v1047, %v1211
    %v1235 = vadd.f32 %v1048, %v1212
    %v1236 = vadd.f32 %v1049, %v1213
    %v1237 = vadd.f32 %v1050, %v1214
    %v1238 = vadd.f32 %v1051, %v1215
    %v1239 = vadd.f32 %v1052, %v1216
    %v1240 = vadd.f32 %v1053, %v1217
    %v1241 = vadd.f32 %v1054, %v1218
    %v1242 = vadd.f32 %v1055, %v1219
    %v1243 = vadd.f32 %v1056, %v1220
    %v1244 = vadd.f32 %v1057, %v1221
    %v1245 = vadd.f32 %v1058, %v1222
    %v1246 = vadd.f32 %v1059, %v1223
    %v1247 = vadd.f32 %v1060, %v1224
    %v1248 = vadd.f32 %v1061, %v1225
    %v1249 = vadd.f32 %v1062, %v1226
    %v1250 = vadd.f32 %v1063, %v1227
    %v1251 = vadd.f32 %v1064, %v1228
    %v1252 = vadd.f32 %v1065, %v1229
    %v1253 = vadd.f32 %v1066, %v1230
    %v1254 = vadd.f32 %v1067, %v1231
    %v1255 = vadd.f32 %v1068, %v1232
    %v1256 = vadd.f32 %v1069, %v1233
    %1257 = vset.pattern.permute.xlu0 1
    %1258 = vperm.xlu0 %1257, %v1070
    %v1259 = vpop.permute.xlu0 %1258
    %1261 = vset.pattern.permute.xlu0 1
    %1262 = vperm.xlu0 %1261, %v1071
    %v1263 = vpop.permute.xlu0 %1262
    %1265 = vset.pattern.permute.xlu0 1
    %1266 = vperm.xlu0 %1265, %v1072
    %v1267 = vpop.permute.xlu0 %1266
    %1269 = vset.pattern.permute.xlu0 1
    %1270 = vperm.xlu0 %1269, %v1073
    %v1271 = vpop.permute.xlu0 %1270
    %1273 = vset.pattern.permute.xlu0 1
    %1274 = vperm.xlu0 %1273, %v1074
    %v1275 = vpop.permute.xlu0 %1274
    %1277 = vset.pattern.permute.xlu0 1
    %1278 = vperm.xlu0 %1277, %v1075
    %v1279 = vpop.permute.xlu0 %1278
    %1281 = vset.pattern.permute.xlu0 1
    %1282 = vperm.xlu0 %1281, %v1076
    %v1283 = vpop.permute.xlu0 %1282
    %1285 = vset.pattern.permute.xlu0 1
    %1286 = vperm.xlu0 %1285, %v1077
    %v1287 = vpop.permute.xlu0 %1286
    %1289 = vset.pattern.permute.xlu0 1
    %1290 = vperm.xlu0 %1289, %v1078
    %v1291 = vpop.permute.xlu0 %1290
    %1293 = vset.pattern.permute.xlu0 1
    %1294 = vperm.xlu0 %1293, %v1079
    %v1295 = vpop.permute.xlu0 %1294
    %1297 = vset.pattern.permute.xlu0 1
    %1298 = vperm.xlu0 %1297, %v1080
    %v1299 = vpop.permute.xlu0 %1298
    %1301 = vset.pattern.permute.xlu0 1
    %1302 = vperm.xlu0 %1301, %v1081
    %v1303 = vpop.permute.xlu0 %1302
    %1305 = vset.pattern.permute.xlu0 1
    %1306 = vperm.xlu0 %1305, %v1082
    %v1307 = vpop.permute.xlu0 %1306
    %1309 = vset.pattern.permute.xlu0 1
    %1310 = vperm.xlu0 %1309, %v1083
    %v1311 = vpop.permute.xlu0 %1310
    %1313 = vset.pattern.permute.xlu0 1
    %1314 = vperm.xlu0 %1313, %v1084
    %v1315 = vpop.permute.xlu0 %1314
    %1317 = vset.pattern.permute.xlu0 1
    %1318 = vperm.xlu0 %1317, %v1085
    %v1319 = vpop.permute.xlu0 %1318
    %1321 = vset.pattern.permute.xlu0 1
    %1322 = vperm.xlu0 %1321, %v1086
    %v1323 = vpop.permute.xlu0 %1322
    %1325 = vset.pattern.permute.xlu0 1
    %1326 = vperm.xlu0 %1325, %v1087
    %v1327 = vpop.permute.xlu0 %1326
    %1329 = vset.pattern.permute.xlu0 1
    %1330 = vperm.xlu0 %1329, %v1088
    %v1331 = vpop.permute.xlu0 %1330
    %1333 = vset.pattern.permute.xlu0 1
    %1334 = vperm.xlu0 %1333, %v1089
    %v1335 = vpop.permute.xlu0 %1334
    %1337 = vset.pattern.permute.xlu0 1
    %1338 = vperm.xlu0 %1337, %v1090
    %v1339 = vpop.permute.xlu0 %1338
    %1341 = vset.pattern.permute.xlu0 1
    %1342 = vperm.xlu0 %1341, %v1091
    %v1343 = vpop.permute.xlu0 %1342
    %1345 = vset.pattern.permute.xlu0 1
    %1346 = vperm.xlu0 %1345, %v1092
    %v1347 = vpop.permute.xlu0 %1346
    %v1349 = vperm.slane %v1094, 1
    %v1350 = vmul.f32 %v1259, %v1349
    %v1351 = vmul.f32 %v1263, %v1349
    %v1352 = vmul.f32 %v1267, %v1349
    %v1353 = vmul.f32 %v1271, %v1349
    %v1354 = vmul.f32 %v1275, %v1349
    %v1355 = vmul.f32 %v1279, %v1349
    %v1356 = vmul.f32 %v1283, %v1349
    %v1357 = vmul.f32 %v1287, %v1349
    %v1358 = vmul.f32 %v1291, %v1349
    %v1359 = vmul.f32 %v1295, %v1349
    %v1360 = vmul.f32 %v1299, %v1349
    %v1361 = vmul.f32 %v1303, %v1349
    %v1362 = vmul.f32 %v1307, %v1349
    %v1363 = vmul.f32 %v1311, %v1349
    %v1364 = vmul.f32 %v1315, %v1349
    %v1365 = vmul.f32 %v1319, %v1349
    %v1366 = vmul.f32 %v1323, %v1349
    %v1367 = vmul.f32 %v1327, %v1349
    %v1368 = vmul.f32 %v1331, %v1349
    %v1369 = vmul.f32 %v1335, %v1349
    %v1370 = vmul.f32 %v1339, %v1349
    %v1371 = vmul.f32 %v1343, %v1349
    %v1372 = vmul.f32 %v1347, %v1349
    %v1373 = vadd.f32 %v1234, %v1350
    %v1374 = vadd.f32 %v1235, %v1351
    %v1375 = vadd.f32 %v1236, %v1352
    %v1376 = vadd.f32 %v1237, %v1353
    %v1377 = vadd.f32 %v1238, %v1354
    %v1378 = vadd.f32 %v1239, %v1355
    %v1379 = vadd.f32 %v1240, %v1356
    %v1380 = vadd.f32 %v1241, %v1357
    %v1381 = vadd.f32 %v1242, %v1358
    %v1382 = vadd.f32 %v1243, %v1359
    %v1383 = vadd.f32 %v1244, %v1360
    %v1384 = vadd.f32 %v1245, %v1361
    %v1385 = vadd.f32 %v1246, %v1362
    %v1386 = vadd.f32 %v1247, %v1363
    %v1387 = vadd.f32 %v1248, %v1364
    %v1388 = vadd.f32 %v1249, %v1365
    %v1389 = vadd.f32 %v1250, %v1366
    %v1390 = vadd.f32 %v1251, %v1367
    %v1391 = vadd.f32 %v1252, %v1368
    %v1392 = vadd.f32 %v1253, %v1369
    %v1393 = vadd.f32 %v1254, %v1370
    %v1394 = vadd.f32 %v1255, %v1371
    %v1395 = vadd.f32 %v1256, %v1372
    %v1396 = vld [vmem:[%s0 + $0xb] sm:$0xff]
    %v1397 = vld [vmem:[%s0 + $0x13] sm:$0xff]
    %v1398 = vld [vmem:[%s0 + $0x1b] sm:$0xff]
    %v1399 = vld [vmem:[%s0 + $0x23] sm:$0xff]
    %v1400 = vld [vmem:[%s0 + $0x2b] sm:$0xff]
    %v1401 = vld [vmem:[%s0 + $0x33] sm:$0xff]
    %v1402 = vld [vmem:[%s0 + $0x3b] sm:$0xff]
    %v1403 = vld [vmem:[%s0 + $0x43] sm:$0xff]
    %v1404 = vld [vmem:[%s0 + $0x4b] sm:$0xff]
    %v1405 = vld [vmem:[%s0 + $0x53] sm:$0xff]
    %v1406 = vld [vmem:[%s0 + $0x5b] sm:$0xff]
    %v1407 = vld [vmem:[%s0 + $0x63] sm:$0xff]
    %v1408 = vld [vmem:[%s0 + $0x6b] sm:$0xff]
    %v1409 = vld [vmem:[%s0 + $0x73] sm:$0xff]
    %v1410 = vld [vmem:[%s0 + $0x7b] sm:$0xff]
    %v1411 = vld [vmem:[%s0 + $0x83] sm:$0xff]
    %v1412 = vld [vmem:[%s0 + $0x8b] sm:$0xff]
    %v1413 = vld [vmem:[%s0 + $0x93] sm:$0xff]
    %v1414 = vld [vmem:[%s0 + $0x9b] sm:$0xff]
    %v1415 = vld [vmem:[%s0 + $0xa3] sm:$0xff]
    %v1416 = vld [vmem:[%s0 + $0xab] sm:$0xff]
    %v1417 = vld [vmem:[%s0 + $0xb3] sm:$0xff]
    %v1418 = vld [vmem:[%s0 + $0xbb] sm:$0x3]
    %s1419 = scalar_lea.vmem %s1, 8
    %v1420 = vld [vmem:[%s1419] sm:$0x3]
    %1422 = vset.pattern.permute.xlu0 0
    %1423 = vperm.xlu0 %1422, %v1396
    %v1424 = vpop.permute.xlu0 %1423
    %1427 = vset.pattern.permute.xlu0 0
    %1428 = vperm.xlu0 %1427, %v1397
    %v1429 = vpop.permute.xlu0 %1428
    %1432 = vset.pattern.permute.xlu0 0
    %1433 = vperm.xlu0 %1432, %v1398
    %v1434 = vpop.permute.xlu0 %1433
    %1437 = vset.pattern.permute.xlu0 0
    %1438 = vperm.xlu0 %1437, %v1399
    %v1439 = vpop.permute.xlu0 %1438
    %1442 = vset.pattern.permute.xlu0 0
    %1443 = vperm.xlu0 %1442, %v1400
    %v1444 = vpop.permute.xlu0 %1443
    %1447 = vset.pattern.permute.xlu0 0
    %1448 = vperm.xlu0 %1447, %v1401
    %v1449 = vpop.permute.xlu0 %1448
    %1452 = vset.pattern.permute.xlu0 0
    %1453 = vperm.xlu0 %1452, %v1402
    %v1454 = vpop.permute.xlu0 %1453
    %1457 = vset.pattern.permute.xlu0 0
    %1458 = vperm.xlu0 %1457, %v1403
    %v1459 = vpop.permute.xlu0 %1458
    %1462 = vset.pattern.permute.xlu0 0
    %1463 = vperm.xlu0 %1462, %v1404
    %v1464 = vpop.permute.xlu0 %1463
    %1467 = vset.pattern.permute.xlu0 0
    %1468 = vperm.xlu0 %1467, %v1405
    %v1469 = vpop.permute.xlu0 %1468
    %1472 = vset.pattern.permute.xlu0 0
    %1473 = vperm.xlu0 %1472, %v1406
    %v1474 = vpop.permute.xlu0 %1473
    %1477 = vset.pattern.permute.xlu0 0
    %1478 = vperm.xlu0 %1477, %v1407
    %v1479 = vpop.permute.xlu0 %1478
    %1482 = vset.pattern.permute.xlu0 0
    %1483 = vperm.xlu0 %1482, %v1408
    %v1484 = vpop.permute.xlu0 %1483
    %1487 = vset.pattern.permute.xlu0 0
    %1488 = vperm.xlu0 %1487, %v1409
    %v1489 = vpop.permute.xlu0 %1488
    %1492 = vset.pattern.permute.xlu0 0
    %1493 = vperm.xlu0 %1492, %v1410
    %v1494 = vpop.permute.xlu0 %1493
    %1497 = vset.pattern.permute.xlu0 0
    %1498 = vperm.xlu0 %1497, %v1411
    %v1499 = vpop.permute.xlu0 %1498
    %1502 = vset.pattern.permute.xlu0 0
    %1503 = vperm.xlu0 %1502, %v1412
    %v1504 = vpop.permute.xlu0 %1503
    %1507 = vset.pattern.permute.xlu0 0
    %1508 = vperm.xlu0 %1507, %v1413
    %v1509 = vpop.permute.xlu0 %1508
    %1512 = vset.pattern.permute.xlu0 0
    %1513 = vperm.xlu0 %1512, %v1414
    %v1514 = vpop.permute.xlu0 %1513
    %1517 = vset.pattern.permute.xlu0 0
    %1518 = vperm.xlu0 %1517, %v1415
    %v1519 = vpop.permute.xlu0 %1518
    %1522 = vset.pattern.permute.xlu0 0
    %1523 = vperm.xlu0 %1522, %v1416
    %v1524 = vpop.permute.xlu0 %1523
    %1527 = vset.pattern.permute.xlu0 0
    %1528 = vperm.xlu0 %1527, %v1417
    %v1529 = vpop.permute.xlu0 %1528
    %1532 = vset.pattern.permute.xlu0 0
    %1533 = vperm.xlu0 %1532, %v1418
    %v1534 = vpop.permute.xlu0 %1533
    %v1536 = vperm.slane %v1420, 0
    %v1537 = vmul.f32 %v1424, %v1536
    %v1538 = vmul.f32 %v1429, %v1536
    %v1539 = vmul.f32 %v1434, %v1536
    %v1540 = vmul.f32 %v1439, %v1536
    %v1541 = vmul.f32 %v1444, %v1536
    %v1542 = vmul.f32 %v1449, %v1536
    %v1543 = vmul.f32 %v1454, %v1536
    %v1544 = vmul.f32 %v1459, %v1536
    %v1545 = vmul.f32 %v1464, %v1536
    %v1546 = vmul.f32 %v1469, %v1536
    %v1547 = vmul.f32 %v1474, %v1536
    %v1548 = vmul.f32 %v1479, %v1536
    %v1549 = vmul.f32 %v1484, %v1536
    %v1550 = vmul.f32 %v1489, %v1536
    %v1551 = vmul.f32 %v1494, %v1536
    %v1552 = vmul.f32 %v1499, %v1536
    %v1553 = vmul.f32 %v1504, %v1536
    %v1554 = vmul.f32 %v1509, %v1536
    %v1555 = vmul.f32 %v1514, %v1536
    %v1556 = vmul.f32 %v1519, %v1536
    %v1557 = vmul.f32 %v1524, %v1536
    %v1558 = vmul.f32 %v1529, %v1536
    %v1559 = vmul.f32 %v1534, %v1536
    %v1560 = vadd.f32 %v1373, %v1537
    %v1561 = vadd.f32 %v1374, %v1538
    %v1562 = vadd.f32 %v1375, %v1539
    %v1563 = vadd.f32 %v1376, %v1540
    %v1564 = vadd.f32 %v1377, %v1541
    %v1565 = vadd.f32 %v1378, %v1542
    %v1566 = vadd.f32 %v1379, %v1543
    %v1567 = vadd.f32 %v1380, %v1544
    %v1568 = vadd.f32 %v1381, %v1545
    %v1569 = vadd.f32 %v1382, %v1546
    %v1570 = vadd.f32 %v1383, %v1547
    %v1571 = vadd.f32 %v1384, %v1548
    %v1572 = vadd.f32 %v1385, %v1549
    %v1573 = vadd.f32 %v1386, %v1550
    %v1574 = vadd.f32 %v1387, %v1551
    %v1575 = vadd.f32 %v1388, %v1552
    %v1576 = vadd.f32 %v1389, %v1553
    %v1577 = vadd.f32 %v1390, %v1554
    %v1578 = vadd.f32 %v1391, %v1555
    %v1579 = vadd.f32 %v1392, %v1556
    %v1580 = vadd.f32 %v1393, %v1557
    %v1581 = vadd.f32 %v1394, %v1558
    %v1582 = vadd.f32 %v1395, %v1559
    %1583 = vset.pattern.permute.xlu0 1
    %1584 = vperm.xlu0 %1583, %v1396
    %v1585 = vpop.permute.xlu0 %1584
    %1587 = vset.pattern.permute.xlu0 1
    %1588 = vperm.xlu0 %1587, %v1397
    %v1589 = vpop.permute.xlu0 %1588
    %1591 = vset.pattern.permute.xlu0 1
    %1592 = vperm.xlu0 %1591, %v1398
    %v1593 = vpop.permute.xlu0 %1592
    %1595 = vset.pattern.permute.xlu0 1
    %1596 = vperm.xlu0 %1595, %v1399
    %v1597 = vpop.permute.xlu0 %1596
    %1599 = vset.pattern.permute.xlu0 1
    %1600 = vperm.xlu0 %1599, %v1400
    %v1601 = vpop.permute.xlu0 %1600
    %1603 = vset.pattern.permute.xlu0 1
    %1604 = vperm.xlu0 %1603, %v1401
    %v1605 = vpop.permute.xlu0 %1604
    %1607 = vset.pattern.permute.xlu0 1
    %1608 = vperm.xlu0 %1607, %v1402
    %v1609 = vpop.permute.xlu0 %1608
    %1611 = vset.pattern.permute.xlu0 1
    %1612 = vperm.xlu0 %1611, %v1403
    %v1613 = vpop.permute.xlu0 %1612
    %1615 = vset.pattern.permute.xlu0 1
    %1616 = vperm.xlu0 %1615, %v1404
    %v1617 = vpop.permute.xlu0 %1616
    %1619 = vset.pattern.permute.xlu0 1
    %1620 = vperm.xlu0 %1619, %v1405
    %v1621 = vpop.permute.xlu0 %1620
    %1623 = vset.pattern.permute.xlu0 1
    %1624 = vperm.xlu0 %1623, %v1406
    %v1625 = vpop.permute.xlu0 %1624
    %1627 = vset.pattern.permute.xlu0 1
    %1628 = vperm.xlu0 %1627, %v1407
    %v1629 = vpop.permute.xlu0 %1628
    %1631 = vset.pattern.permute.xlu0 1
    %1632 = vperm.xlu0 %1631, %v1408
    %v1633 = vpop.permute.xlu0 %1632
    %1635 = vset.pattern.permute.xlu0 1
    %1636 = vperm.xlu0 %1635, %v1409
    %v1637 = vpop.permute.xlu0 %1636
    %1639 = vset.pattern.permute.xlu0 1
    %1640 = vperm.xlu0 %1639, %v1410
    %v1641 = vpop.permute.xlu0 %1640
    %1643 = vset.pattern.permute.xlu0 1
    %1644 = vperm.xlu0 %1643, %v1411
    %v1645 = vpop.permute.xlu0 %1644
    %1647 = vset.pattern.permute.xlu0 1
    %1648 = vperm.xlu0 %1647, %v1412
    %v1649 = vpop.permute.xlu0 %1648
    %1651 = vset.pattern.permute.xlu0 1
    %1652 = vperm.xlu0 %1651, %v1413
    %v1653 = vpop.permute.xlu0 %1652
    %1655 = vset.pattern.permute.xlu0 1
    %1656 = vperm.xlu0 %1655, %v1414
    %v1657 = vpop.permute.xlu0 %1656
    %1659 = vset.pattern.permute.xlu0 1
    %1660 = vperm.xlu0 %1659, %v1415
    %v1661 = vpop.permute.xlu0 %1660
    %1663 = vset.pattern.permute.xlu0 1
    %1664 = vperm.xlu0 %1663, %v1416
    %v1665 = vpop.permute.xlu0 %1664
    %1667 = vset.pattern.permute.xlu0 1
    %1668 = vperm.xlu0 %1667, %v1417
    %v1669 = vpop.permute.xlu0 %1668
    %1671 = vset.pattern.permute.xlu0 1
    %1672 = vperm.xlu0 %1671, %v1418
    %v1673 = vpop.permute.xlu0 %1672
    %v1675 = vperm.slane %v1420, 1
    %v1676 = vmul.f32 %v1585, %v1675
    %v1677 = vmul.f32 %v1589, %v1675
    %v1678 = vmul.f32 %v1593, %v1675
    %v1679 = vmul.f32 %v1597, %v1675
    %v1680 = vmul.f32 %v1601, %v1675
    %v1681 = vmul.f32 %v1605, %v1675
    %v1682 = vmul.f32 %v1609, %v1675
    %v1683 = vmul.f32 %v1613, %v1675
    %v1684 = vmul.f32 %v1617, %v1675
    %v1685 = vmul.f32 %v1621, %v1675
    %v1686 = vmul.f32 %v1625, %v1675
    %v1687 = vmul.f32 %v1629, %v1675
    %v1688 = vmul.f32 %v1633, %v1675
    %v1689 = vmul.f32 %v1637, %v1675
    %v1690 = vmul.f32 %v1641, %v1675
    %v1691 = vmul.f32 %v1645, %v1675
    %v1692 = vmul.f32 %v1649, %v1675
    %v1693 = vmul.f32 %v1653, %v1675
    %v1694 = vmul.f32 %v1657, %v1675
    %v1695 = vmul.f32 %v1661, %v1675
    %v1696 = vmul.f32 %v1665, %v1675
    %v1697 = vmul.f32 %v1669, %v1675
    %v1698 = vmul.f32 %v1673, %v1675
    %v1699 = vadd.f32 %v1560, %v1676
    %v1700 = vadd.f32 %v1561, %v1677
    %v1701 = vadd.f32 %v1562, %v1678
    %v1702 = vadd.f32 %v1563, %v1679
    %v1703 = vadd.f32 %v1564, %v1680
    %v1704 = vadd.f32 %v1565, %v1681
    %v1705 = vadd.f32 %v1566, %v1682
    %v1706 = vadd.f32 %v1567, %v1683
    %v1707 = vadd.f32 %v1568, %v1684
    %v1708 = vadd.f32 %v1569, %v1685
    %v1709 = vadd.f32 %v1570, %v1686
    %v1710 = vadd.f32 %v1571, %v1687
    %v1711 = vadd.f32 %v1572, %v1688
    %v1712 = vadd.f32 %v1573, %v1689
    %v1713 = vadd.f32 %v1574, %v1690
    %v1714 = vadd.f32 %v1575, %v1691
    %v1715 = vadd.f32 %v1576, %v1692
    %v1716 = vadd.f32 %v1577, %v1693
    %v1717 = vadd.f32 %v1578, %v1694
    %v1718 = vadd.f32 %v1579, %v1695
    %v1719 = vadd.f32 %v1580, %v1696
    %v1720 = vadd.f32 %v1581, %v1697
    %v1721 = vadd.f32 %v1582, %v1698
    %v1722 = vld [vmem:[%s0 + $0xc] sm:$0xff]
    %v1723 = vld [vmem:[%s0 + $0x14] sm:$0xff]
    %v1724 = vld [vmem:[%s0 + $0x1c] sm:$0xff]
    %v1725 = vld [vmem:[%s0 + $0x24] sm:$0xff]
    %v1726 = vld [vmem:[%s0 + $0x2c] sm:$0xff]
    %v1727 = vld [vmem:[%s0 + $0x34] sm:$0xff]
    %v1728 = vld [vmem:[%s0 + $0x3c] sm:$0xff]
    %v1729 = vld [vmem:[%s0 + $0x44] sm:$0xff]
    %v1730 = vld [vmem:[%s0 + $0x4c] sm:$0xff]
    %v1731 = vld [vmem:[%s0 + $0x54] sm:$0xff]
    %v1732 = vld [vmem:[%s0 + $0x5c] sm:$0xff]
    %v1733 = vld [vmem:[%s0 + $0x64] sm:$0xff]
    %v1734 = vld [vmem:[%s0 + $0x6c] sm:$0xff]
    %v1735 = vld [vmem:[%s0 + $0x74] sm:$0xff]
    %v1736 = vld [vmem:[%s0 + $0x7c] sm:$0xff]
    %v1737 = vld [vmem:[%s0 + $0x84] sm:$0xff]
    %v1738 = vld [vmem:[%s0 + $0x8c] sm:$0xff]
    %v1739 = vld [vmem:[%s0 + $0x94] sm:$0xff]
    %v1740 = vld [vmem:[%s0 + $0x9c] sm:$0xff]
    %v1741 = vld [vmem:[%s0 + $0xa4] sm:$0xff]
    %v1742 = vld [vmem:[%s0 + $0xac] sm:$0xff]
    %v1743 = vld [vmem:[%s0 + $0xb4] sm:$0xff]
    %v1744 = vld [vmem:[%s0 + $0xbc] sm:$0x3]
    %s1745 = scalar_lea.vmem %s1, 10
    %v1746 = vld [vmem:[%s1745] sm:$0x3]
    %1748 = vset.pattern.permute.xlu0 0
    %1749 = vperm.xlu0 %1748, %v1722
    %v1750 = vpop.permute.xlu0 %1749
    %1753 = vset.pattern.permute.xlu0 0
    %1754 = vperm.xlu0 %1753, %v1723
    %v1755 = vpop.permute.xlu0 %1754
    %1758 = vset.pattern.permute.xlu0 0
    %1759 = vperm.xlu0 %1758, %v1724
    %v1760 = vpop.permute.xlu0 %1759
    %1763 = vset.pattern.permute.xlu0 0
    %1764 = vperm.xlu0 %1763, %v1725
    %v1765 = vpop.permute.xlu0 %1764
    %1768 = vset.pattern.permute.xlu0 0
    %1769 = vperm.xlu0 %1768, %v1726
    %v1770 = vpop.permute.xlu0 %1769
    %1773 = vset.pattern.permute.xlu0 0
    %1774 = vperm.xlu0 %1773, %v1727
    %v1775 = vpop.permute.xlu0 %1774
    %1778 = vset.pattern.permute.xlu0 0
    %1779 = vperm.xlu0 %1778, %v1728
    %v1780 = vpop.permute.xlu0 %1779
    %1783 = vset.pattern.permute.xlu0 0
    %1784 = vperm.xlu0 %1783, %v1729
    %v1785 = vpop.permute.xlu0 %1784
    %1788 = vset.pattern.permute.xlu0 0
    %1789 = vperm.xlu0 %1788, %v1730
    %v1790 = vpop.permute.xlu0 %1789
    %1793 = vset.pattern.permute.xlu0 0
    %1794 = vperm.xlu0 %1793, %v1731
    %v1795 = vpop.permute.xlu0 %1794
    %1798 = vset.pattern.permute.xlu0 0
    %1799 = vperm.xlu0 %1798, %v1732
    %v1800 = vpop.permute.xlu0 %1799
    %1803 = vset.pattern.permute.xlu0 0
    %1804 = vperm.xlu0 %1803, %v1733
    %v1805 = vpop.permute.xlu0 %1804
    %1808 = vset.pattern.permute.xlu0 0
    %1809 = vperm.xlu0 %1808, %v1734
    %v1810 = vpop.permute.xlu0 %1809
    %1813 = vset.pattern.permute.xlu0 0
    %1814 = vperm.xlu0 %1813, %v1735
    %v1815 = vpop.permute.xlu0 %1814
    %1818 = vset.pattern.permute.xlu0 0
    %1819 = vperm.xlu0 %1818, %v1736
    %v1820 = vpop.permute.xlu0 %1819
    %1823 = vset.pattern.permute.xlu0 0
    %1824 = vperm.xlu0 %1823, %v1737
    %v1825 = vpop.permute.xlu0 %1824
    %1828 = vset.pattern.permute.xlu0 0
    %1829 = vperm.xlu0 %1828, %v1738
    %v1830 = vpop.permute.xlu0 %1829
    %1833 = vset.pattern.permute.xlu0 0
    %1834 = vperm.xlu0 %1833, %v1739
    %v1835 = vpop.permute.xlu0 %1834
    %1838 = vset.pattern.permute.xlu0 0
    %1839 = vperm.xlu0 %1838, %v1740
    %v1840 = vpop.permute.xlu0 %1839
    %1843 = vset.pattern.permute.xlu0 0
    %1844 = vperm.xlu0 %1843, %v1741
    %v1845 = vpop.permute.xlu0 %1844
    %1848 = vset.pattern.permute.xlu0 0
    %1849 = vperm.xlu0 %1848, %v1742
    %v1850 = vpop.permute.xlu0 %1849
    %1853 = vset.pattern.permute.xlu0 0
    %1854 = vperm.xlu0 %1853, %v1743
    %v1855 = vpop.permute.xlu0 %1854
    %1858 = vset.pattern.permute.xlu0 0
    %1859 = vperm.xlu0 %1858, %v1744
    %v1860 = vpop.permute.xlu0 %1859
    %v1862 = vperm.slane %v1746, 0
    %v1863 = vmul.f32 %v1750, %v1862
    %v1864 = vmul.f32 %v1755, %v1862
    %v1865 = vmul.f32 %v1760, %v1862
    %v1866 = vmul.f32 %v1765, %v1862
    %v1867 = vmul.f32 %v1770, %v1862
    %v1868 = vmul.f32 %v1775, %v1862
    %v1869 = vmul.f32 %v1780, %v1862
    %v1870 = vmul.f32 %v1785, %v1862
    %v1871 = vmul.f32 %v1790, %v1862
    %v1872 = vmul.f32 %v1795, %v1862
    %v1873 = vmul.f32 %v1800, %v1862
    %v1874 = vmul.f32 %v1805, %v1862
    %v1875 = vmul.f32 %v1810, %v1862
    %v1876 = vmul.f32 %v1815, %v1862
    %v1877 = vmul.f32 %v1820, %v1862
    %v1878 = vmul.f32 %v1825, %v1862
    %v1879 = vmul.f32 %v1830, %v1862
    %v1880 = vmul.f32 %v1835, %v1862
    %v1881 = vmul.f32 %v1840, %v1862
    %v1882 = vmul.f32 %v1845, %v1862
    %v1883 = vmul.f32 %v1850, %v1862
    %v1884 = vmul.f32 %v1855, %v1862
    %v1885 = vmul.f32 %v1860, %v1862
    %v1886 = vadd.f32 %v1699, %v1863
    %v1887 = vadd.f32 %v1700, %v1864
    %v1888 = vadd.f32 %v1701, %v1865
    %v1889 = vadd.f32 %v1702, %v1866
    %v1890 = vadd.f32 %v1703, %v1867
    %v1891 = vadd.f32 %v1704, %v1868
    %v1892 = vadd.f32 %v1705, %v1869
    %v1893 = vadd.f32 %v1706, %v1870
    %v1894 = vadd.f32 %v1707, %v1871
    %v1895 = vadd.f32 %v1708, %v1872
    %v1896 = vadd.f32 %v1709, %v1873
    %v1897 = vadd.f32 %v1710, %v1874
    %v1898 = vadd.f32 %v1711, %v1875
    %v1899 = vadd.f32 %v1712, %v1876
    %v1900 = vadd.f32 %v1713, %v1877
    %v1901 = vadd.f32 %v1714, %v1878
    %v1902 = vadd.f32 %v1715, %v1879
    %v1903 = vadd.f32 %v1716, %v1880
    %v1904 = vadd.f32 %v1717, %v1881
    %v1905 = vadd.f32 %v1718, %v1882
    %v1906 = vadd.f32 %v1719, %v1883
    %v1907 = vadd.f32 %v1720, %v1884
    %v1908 = vadd.f32 %v1721, %v1885
    %1909 = vset.pattern.permute.xlu0 1
    %1910 = vperm.xlu0 %1909, %v1722
    %v1911 = vpop.permute.xlu0 %1910
    %1913 = vset.pattern.permute.xlu0 1
    %1914 = vperm.xlu0 %1913, %v1723
    %v1915 = vpop.permute.xlu0 %1914
    %1917 = vset.pattern.permute.xlu0 1
    %1918 = vperm.xlu0 %1917, %v1724
    %v1919 = vpop.permute.xlu0 %1918
    %1921 = vset.pattern.permute.xlu0 1
    %1922 = vperm.xlu0 %1921, %v1725
    %v1923 = vpop.permute.xlu0 %1922
    %1925 = vset.pattern.permute.xlu0 1
    %1926 = vperm.xlu0 %1925, %v1726
    %v1927 = vpop.permute.xlu0 %1926
    %1929 = vset.pattern.permute.xlu0 1
    %1930 = vperm.xlu0 %1929, %v1727
    %v1931 = vpop.permute.xlu0 %1930
    %1933 = vset.pattern.permute.xlu0 1
    %1934 = vperm.xlu0 %1933, %v1728
    %v1935 = vpop.permute.xlu0 %1934
    %1937 = vset.pattern.permute.xlu0 1
    %1938 = vperm.xlu0 %1937, %v1729
    %v1939 = vpop.permute.xlu0 %1938
    %1941 = vset.pattern.permute.xlu0 1
    %1942 = vperm.xlu0 %1941, %v1730
    %v1943 = vpop.permute.xlu0 %1942
    %1945 = vset.pattern.permute.xlu0 1
    %1946 = vperm.xlu0 %1945, %v1731
    %v1947 = vpop.permute.xlu0 %1946
    %1949 = vset.pattern.permute.xlu0 1
    %1950 = vperm.xlu0 %1949, %v1732
    %v1951 = vpop.permute.xlu0 %1950
    %1953 = vset.pattern.permute.xlu0 1
    %1954 = vperm.xlu0 %1953, %v1733
    %v1955 = vpop.permute.xlu0 %1954
    %1957 = vset.pattern.permute.xlu0 1
    %1958 = vperm.xlu0 %1957, %v1734
    %v1959 = vpop.permute.xlu0 %1958
    %1961 = vset.pattern.permute.xlu0 1
    %1962 = vperm.xlu0 %1961, %v1735
    %v1963 = vpop.permute.xlu0 %1962
    %1965 = vset.pattern.permute.xlu0 1
    %1966 = vperm.xlu0 %1965, %v1736
    %v1967 = vpop.permute.xlu0 %1966
    %1969 = vset.pattern.permute.xlu0 1
    %1970 = vperm.xlu0 %1969, %v1737
    %v1971 = vpop.permute.xlu0 %1970
    %1973 = vset.pattern.permute.xlu0 1
    %1974 = vperm.xlu0 %1973, %v1738
    %v1975 = vpop.permute.xlu0 %1974
    %1977 = vset.pattern.permute.xlu0 1
    %1978 = vperm.xlu0 %1977, %v1739
    %v1979 = vpop.permute.xlu0 %1978
    %1981 = vset.pattern.permute.xlu0 1
    %1982 = vperm.xlu0 %1981, %v1740
    %v1983 = vpop.permute.xlu0 %1982
    %1985 = vset.pattern.permute.xlu0 1
    %1986 = vperm.xlu0 %1985, %v1741
    %v1987 = vpop.permute.xlu0 %1986
    %1989 = vset.pattern.permute.xlu0 1
    %1990 = vperm.xlu0 %1989, %v1742
    %v1991 = vpop.permute.xlu0 %1990
    %1993 = vset.pattern.permute.xlu0 1
    %1994 = vperm.xlu0 %1993, %v1743
    %v1995 = vpop.permute.xlu0 %1994
    %1997 = vset.pattern.permute.xlu0 1
    %1998 = vperm.xlu0 %1997, %v1744
    %v1999 = vpop.permute.xlu0 %1998
    %v2001 = vperm.slane %v1746, 1
    %v2002 = vmul.f32 %v1911, %v2001
    %v2003 = vmul.f32 %v1915, %v2001
    %v2004 = vmul.f32 %v1919, %v2001
    %v2005 = vmul.f32 %v1923, %v2001
    %v2006 = vmul.f32 %v1927, %v2001
    %v2007 = vmul.f32 %v1931, %v2001
    %v2008 = vmul.f32 %v1935, %v2001
    %v2009 = vmul.f32 %v1939, %v2001
    %v2010 = vmul.f32 %v1943, %v2001
    %v2011 = vmul.f32 %v1947, %v2001
    %v2012 = vmul.f32 %v1951, %v2001
    %v2013 = vmul.f32 %v1955, %v2001
    %v2014 = vmul.f32 %v1959, %v2001
    %v2015 = vmul.f32 %v1963, %v2001
    %v2016 = vmul.f32 %v1967, %v2001
    %v2017 = vmul.f32 %v1971, %v2001
    %v2018 = vmul.f32 %v1975, %v2001
    %v2019 = vmul.f32 %v1979, %v2001
    %v2020 = vmul.f32 %v1983, %v2001
    %v2021 = vmul.f32 %v1987, %v2001
    %v2022 = vmul.f32 %v1991, %v2001
    %v2023 = vmul.f32 %v1995, %v2001
    %v2024 = vmul.f32 %v1999, %v2001
    %v2025 = vadd.f32 %v1886, %v2002
    %v2026 = vadd.f32 %v1887, %v2003
    %v2027 = vadd.f32 %v1888, %v2004
    %v2028 = vadd.f32 %v1889, %v2005
    %v2029 = vadd.f32 %v1890, %v2006
    %v2030 = vadd.f32 %v1891, %v2007
    %v2031 = vadd.f32 %v1892, %v2008
    %v2032 = vadd.f32 %v1893, %v2009
    %v2033 = vadd.f32 %v1894, %v2010
    %v2034 = vadd.f32 %v1895, %v2011
    %v2035 = vadd.f32 %v1896, %v2012
    %v2036 = vadd.f32 %v1897, %v2013
    %v2037 = vadd.f32 %v1898, %v2014
    %v2038 = vadd.f32 %v1899, %v2015
    %v2039 = vadd.f32 %v1900, %v2016
    %v2040 = vadd.f32 %v1901, %v2017
    %v2041 = vadd.f32 %v1902, %v2018
    %v2042 = vadd.f32 %v1903, %v2019
    %v2043 = vadd.f32 %v1904, %v2020
    %v2044 = vadd.f32 %v1905, %v2021
    %v2045 = vadd.f32 %v1906, %v2022
    %v2046 = vadd.f32 %v1907, %v2023
    %v2047 = vadd.f32 %v1908, %v2024
    %v2048 = vld [vmem:[%s0 + $0x14] sm:$0xff]
    %v2049 = vld [vmem:[%s0 + $0x1c] sm:$0xff]
    %v2050 = vld [vmem:[%s0 + $0x24] sm:$0xff]
    %v2051 = vld [vmem:[%s0 + $0x2c] sm:$0xff]
    %v2052 = vld [vmem:[%s0 + $0x34] sm:$0xff]
    %v2053 = vld [vmem:[%s0 + $0x3c] sm:$0xff]
    %v2054 = vld [vmem:[%s0 + $0x44] sm:$0xff]
    %v2055 = vld [vmem:[%s0 + $0x4c] sm:$0xff]
    %v2056 = vld [vmem:[%s0 + $0x54] sm:$0xff]
    %v2057 = vld [vmem:[%s0 + $0x5c] sm:$0xff]
    %v2058 = vld [vmem:[%s0 + $0x64] sm:$0xff]
    %v2059 = vld [vmem:[%s0 + $0x6c] sm:$0xff]
    %v2060 = vld [vmem:[%s0 + $0x74] sm:$0xff]
    %v2061 = vld [vmem:[%s0 + $0x7c] sm:$0xff]
    %v2062 = vld [vmem:[%s0 + $0x84] sm:$0xff]
    %v2063 = vld [vmem:[%s0 + $0x8c] sm:$0xff]
    %v2064 = vld [vmem:[%s0 + $0x94] sm:$0xff]
    %v2065 = vld [vmem:[%s0 + $0x9c] sm:$0xff]
    %v2066 = vld [vmem:[%s0 + $0xa4] sm:$0xff]
    %v2067 = vld [vmem:[%s0 + $0xac] sm:$0xff]
    %v2068 = vld [vmem:[%s0 + $0xb4] sm:$0xff]
    %v2069 = vld [vmem:[%s0 + $0xbc] sm:$0xff]
    %v2070 = vld [vmem:[%s0 + $0xc4] sm:$0x3]
    %s2071 = scalar_lea.vmem %s1, 12
    %v2072 = vld [vmem:[%s2071] sm:$0x3]
    %2074 = vset.pattern.permute.xlu0 0
    %2075 = vperm.xlu0 %2074, %v2048
    %v2076 = vpop.permute.xlu0 %2075
    %2079 = vset.pattern.permute.xlu0 0
    %2080 = vperm.xlu0 %2079, %v2049
    %v2081 = vpop.permute.xlu0 %2080
    %2084 = vset.pattern.permute.xlu0 0
    %2085 = vperm.xlu0 %2084, %v2050
    %v2086 = vpop.permute.xlu0 %2085
    %2089 = vset.pattern.permute.xlu0 0
    %2090 = vperm.xlu0 %2089, %v2051
    %v2091 = vpop.permute.xlu0 %2090
    %2094 = vset.pattern.permute.xlu0 0
    %2095 = vperm.xlu0 %2094, %v2052
    %v2096 = vpop.permute.xlu0 %2095
    %2099 = vset.pattern.permute.xlu0 0
    %2100 = vperm.xlu0 %2099, %v2053
    %v2101 = vpop.permute.xlu0 %2100
    %2104 = vset.pattern.permute.xlu0 0
    %2105 = vperm.xlu0 %2104, %v2054
    %v2106 = vpop.permute.xlu0 %2105
    %2109 = vset.pattern.permute.xlu0 0
    %2110 = vperm.xlu0 %2109, %v2055
    %v2111 = vpop.permute.xlu0 %2110
    %2114 = vset.pattern.permute.xlu0 0
    %2115 = vperm.xlu0 %2114, %v2056
    %v2116 = vpop.permute.xlu0 %2115
    %2119 = vset.pattern.permute.xlu0 0
    %2120 = vperm.xlu0 %2119, %v2057
    %v2121 = vpop.permute.xlu0 %2120
    %2124 = vset.pattern.permute.xlu0 0
    %2125 = vperm.xlu0 %2124, %v2058
    %v2126 = vpop.permute.xlu0 %2125
    %2129 = vset.pattern.permute.xlu0 0
    %2130 = vperm.xlu0 %2129, %v2059
    %v2131 = vpop.permute.xlu0 %2130
    %2134 = vset.pattern.permute.xlu0 0
    %2135 = vperm.xlu0 %2134, %v2060
    %v2136 = vpop.permute.xlu0 %2135
    %2139 = vset.pattern.permute.xlu0 0
    %2140 = vperm.xlu0 %2139, %v2061
    %v2141 = vpop.permute.xlu0 %2140
    %2144 = vset.pattern.permute.xlu0 0
    %2145 = vperm.xlu0 %2144, %v2062
    %v2146 = vpop.permute.xlu0 %2145
    %2149 = vset.pattern.permute.xlu0 0
    %2150 = vperm.xlu0 %2149, %v2063
    %v2151 = vpop.permute.xlu0 %2150
    %2154 = vset.pattern.permute.xlu0 0
    %2155 = vperm.xlu0 %2154, %v2064
    %v2156 = vpop.permute.xlu0 %2155
    %2159 = vset.pattern.permute.xlu0 0
    %2160 = vperm.xlu0 %2159, %v2065
    %v2161 = vpop.permute.xlu0 %2160
    %2164 = vset.pattern.permute.xlu0 0
    %2165 = vperm.xlu0 %2164, %v2066
    %v2166 = vpop.permute.xlu0 %2165
    %2169 = vset.pattern.permute.xlu0 0
    %2170 = vperm.xlu0 %2169, %v2067
    %v2171 = vpop.permute.xlu0 %2170
    %2174 = vset.pattern.permute.xlu0 0
    %2175 = vperm.xlu0 %2174, %v2068
    %v2176 = vpop.permute.xlu0 %2175
    %2179 = vset.pattern.permute.xlu0 0
    %2180 = vperm.xlu0 %2179, %v2069
    %v2181 = vpop.permute.xlu0 %2180
    %2184 = vset.pattern.permute.xlu0 0
    %2185 = vperm.xlu0 %2184, %v2070
    %v2186 = vpop.permute.xlu0 %2185
    %v2188 = vperm.slane %v2072, 0
    %v2189 = vmul.f32 %v2076, %v2188
    %v2190 = vmul.f32 %v2081, %v2188
    %v2191 = vmul.f32 %v2086, %v2188
    %v2192 = vmul.f32 %v2091, %v2188
    %v2193 = vmul.f32 %v2096, %v2188
    %v2194 = vmul.f32 %v2101, %v2188
    %v2195 = vmul.f32 %v2106, %v2188
    %v2196 = vmul.f32 %v2111, %v2188
    %v2197 = vmul.f32 %v2116, %v2188
    %v2198 = vmul.f32 %v2121, %v2188
    %v2199 = vmul.f32 %v2126, %v2188
    %v2200 = vmul.f32 %v2131, %v2188
    %v2201 = vmul.f32 %v2136, %v2188
    %v2202 = vmul.f32 %v2141, %v2188
    %v2203 = vmul.f32 %v2146, %v2188
    %v2204 = vmul.f32 %v2151, %v2188
    %v2205 = vmul.f32 %v2156, %v2188
    %v2206 = vmul.f32 %v2161, %v2188
    %v2207 = vmul.f32 %v2166, %v2188
    %v2208 = vmul.f32 %v2171, %v2188
    %v2209 = vmul.f32 %v2176, %v2188
    %v2210 = vmul.f32 %v2181, %v2188
    %v2211 = vmul.f32 %v2186, %v2188
    %v2212 = vadd.f32 %v2025, %v2189
    %v2213 = vadd.f32 %v2026, %v2190
    %v2214 = vadd.f32 %v2027, %v2191
    %v2215 = vadd.f32 %v2028, %v2192
    %v2216 = vadd.f32 %v2029, %v2193
    %v2217 = vadd.f32 %v2030, %v2194
    %v2218 = vadd.f32 %v2031, %v2195
    %v2219 = vadd.f32 %v2032, %v2196
    %v2220 = vadd.f32 %v2033, %v2197
    %v2221 = vadd.f32 %v2034, %v2198
    %v2222 = vadd.f32 %v2035, %v2199
    %v2223 = vadd.f32 %v2036, %v2200
    %v2224 = vadd.f32 %v2037, %v2201
    %v2225 = vadd.f32 %v2038, %v2202
    %v2226 = vadd.f32 %v2039, %v2203
    %v2227 = vadd.f32 %v2040, %v2204
    %v2228 = vadd.f32 %v2041, %v2205
    %v2229 = vadd.f32 %v2042, %v2206
    %v2230 = vadd.f32 %v2043, %v2207
    %v2231 = vadd.f32 %v2044, %v2208
    %v2232 = vadd.f32 %v2045, %v2209
    %v2233 = vadd.f32 %v2046, %v2210
    %v2234 = vadd.f32 %v2047, %v2211
    %2235 = vset.pattern.permute.xlu0 1
    %2236 = vperm.xlu0 %2235, %v2048
    %v2237 = vpop.permute.xlu0 %2236
    %2239 = vset.pattern.permute.xlu0 1
    %2240 = vperm.xlu0 %2239, %v2049
    %v2241 = vpop.permute.xlu0 %2240
    %2243 = vset.pattern.permute.xlu0 1
    %2244 = vperm.xlu0 %2243, %v2050
    %v2245 = vpop.permute.xlu0 %2244
    %2247 = vset.pattern.permute.xlu0 1
    %2248 = vperm.xlu0 %2247, %v2051
    %v2249 = vpop.permute.xlu0 %2248
    %2251 = vset.pattern.permute.xlu0 1
    %2252 = vperm.xlu0 %2251, %v2052
    %v2253 = vpop.permute.xlu0 %2252
    %2255 = vset.pattern.permute.xlu0 1
    %2256 = vperm.xlu0 %2255, %v2053
    %v2257 = vpop.permute.xlu0 %2256
    %2259 = vset.pattern.permute.xlu0 1
    %2260 = vperm.xlu0 %2259, %v2054
    %v2261 = vpop.permute.xlu0 %2260
    %2263 = vset.pattern.permute.xlu0 1
    %2264 = vperm.xlu0 %2263, %v2055
    %v2265 = vpop.permute.xlu0 %2264
    %2267 = vset.pattern.permute.xlu0 1
    %2268 = vperm.xlu0 %2267, %v2056
    %v2269 = vpop.permute.xlu0 %2268
    %2271 = vset.pattern.permute.xlu0 1
    %2272 = vperm.xlu0 %2271, %v2057
    %v2273 = vpop.permute.xlu0 %2272
    %2275 = vset.pattern.permute.xlu0 1
    %2276 = vperm.xlu0 %2275, %v2058
    %v2277 = vpop.permute.xlu0 %2276
    %2279 = vset.pattern.permute.xlu0 1
    %2280 = vperm.xlu0 %2279, %v2059
    %v2281 = vpop.permute.xlu0 %2280
    %2283 = vset.pattern.permute.xlu0 1
    %2284 = vperm.xlu0 %2283, %v2060
    %v2285 = vpop.permute.xlu0 %2284
    %2287 = vset.pattern.permute.xlu0 1
    %2288 = vperm.xlu0 %2287, %v2061
    %v2289 = vpop.permute.xlu0 %2288
    %2291 = vset.pattern.permute.xlu0 1
    %2292 = vperm.xlu0 %2291, %v2062
    %v2293 = vpop.permute.xlu0 %2292
    %2295 = vset.pattern.permute.xlu0 1
    %2296 = vperm.xlu0 %2295, %v2063
    %v2297 = vpop.permute.xlu0 %2296
    %2299 = vset.pattern.permute.xlu0 1
    %2300 = vperm.xlu0 %2299, %v2064
    %v2301 = vpop.permute.xlu0 %2300
    %2303 = vset.pattern.permute.xlu0 1
    %2304 = vperm.xlu0 %2303, %v2065
    %v2305 = vpop.permute.xlu0 %2304
    %2307 = vset.pattern.permute.xlu0 1
    %2308 = vperm.xlu0 %2307, %v2066
    %v2309 = vpop.permute.xlu0 %2308
    %2311 = vset.pattern.permute.xlu0 1
    %2312 = vperm.xlu0 %2311, %v2067
    %v2313 = vpop.permute.xlu0 %2312
    %2315 = vset.pattern.permute.xlu0 1
    %2316 = vperm.xlu0 %2315, %v2068
    %v2317 = vpop.permute.xlu0 %2316
    %2319 = vset.pattern.permute.xlu0 1
    %2320 = vperm.xlu0 %2319, %v2069
    %v2321 = vpop.permute.xlu0 %2320
    %2323 = vset.pattern.permute.xlu0 1
    %2324 = vperm.xlu0 %2323, %v2070
    %v2325 = vpop.permute.xlu0 %2324
    %v2327 = vperm.slane %v2072, 1
    %v2328 = vmul.f32 %v2237, %v2327
    %v2329 = vmul.f32 %v2241, %v2327
    %v2330 = vmul.f32 %v2245, %v2327
    %v2331 = vmul.f32 %v2249, %v2327
    %v2332 = vmul.f32 %v2253, %v2327
    %v2333 = vmul.f32 %v2257, %v2327
    %v2334 = vmul.f32 %v2261, %v2327
    %v2335 = vmul.f32 %v2265, %v2327
    %v2336 = vmul.f32 %v2269, %v2327
    %v2337 = vmul.f32 %v2273, %v2327
    %v2338 = vmul.f32 %v2277, %v2327
    %v2339 = vmul.f32 %v2281, %v2327
    %v2340 = vmul.f32 %v2285, %v2327
    %v2341 = vmul.f32 %v2289, %v2327
    %v2342 = vmul.f32 %v2293, %v2327
    %v2343 = vmul.f32 %v2297, %v2327
    %v2344 = vmul.f32 %v2301, %v2327
    %v2345 = vmul.f32 %v2305, %v2327
    %v2346 = vmul.f32 %v2309, %v2327
    %v2347 = vmul.f32 %v2313, %v2327
    %v2348 = vmul.f32 %v2317, %v2327
    %v2349 = vmul.f32 %v2321, %v2327
    %v2350 = vmul.f32 %v2325, %v2327
    %v2351 = vadd.f32 %v2212, %v2328
    %v2352 = vadd.f32 %v2213, %v2329
    %v2353 = vadd.f32 %v2214, %v2330
    %v2354 = vadd.f32 %v2215, %v2331
    %v2355 = vadd.f32 %v2216, %v2332
    %v2356 = vadd.f32 %v2217, %v2333
    %v2357 = vadd.f32 %v2218, %v2334
    %v2358 = vadd.f32 %v2219, %v2335
    %v2359 = vadd.f32 %v2220, %v2336
    %v2360 = vadd.f32 %v2221, %v2337
    %v2361 = vadd.f32 %v2222, %v2338
    %v2362 = vadd.f32 %v2223, %v2339
    %v2363 = vadd.f32 %v2224, %v2340
    %v2364 = vadd.f32 %v2225, %v2341
    %v2365 = vadd.f32 %v2226, %v2342
    %v2366 = vadd.f32 %v2227, %v2343
    %v2367 = vadd.f32 %v2228, %v2344
    %v2368 = vadd.f32 %v2229, %v2345
    %v2369 = vadd.f32 %v2230, %v2346
    %v2370 = vadd.f32 %v2231, %v2347
    %v2371 = vadd.f32 %v2232, %v2348
    %v2372 = vadd.f32 %v2233, %v2349
    %v2373 = vadd.f32 %v2234, %v2350
    %v2374 = vld [vmem:[%s0 + $0x15] sm:$0xff]
    %v2375 = vld [vmem:[%s0 + $0x1d] sm:$0xff]
    %v2376 = vld [vmem:[%s0 + $0x25] sm:$0xff]
    %v2377 = vld [vmem:[%s0 + $0x2d] sm:$0xff]
    %v2378 = vld [vmem:[%s0 + $0x35] sm:$0xff]
    %v2379 = vld [vmem:[%s0 + $0x3d] sm:$0xff]
    %v2380 = vld [vmem:[%s0 + $0x45] sm:$0xff]
    %v2381 = vld [vmem:[%s0 + $0x4d] sm:$0xff]
    %v2382 = vld [vmem:[%s0 + $0x55] sm:$0xff]
    %v2383 = vld [vmem:[%s0 + $0x5d] sm:$0xff]
    %v2384 = vld [vmem:[%s0 + $0x65] sm:$0xff]
    %v2385 = vld [vmem:[%s0 + $0x6d] sm:$0xff]
    %v2386 = vld [vmem:[%s0 + $0x75] sm:$0xff]
    %v2387 = vld [vmem:[%s0 + $0x7d] sm:$0xff]
    %v2388 = vld [vmem:[%s0 + $0x85] sm:$0xff]
    %v2389 = vld [vmem:[%s0 + $0x8d] sm:$0xff]
    %v2390 = vld [vmem:[%s0 + $0x95] sm:$0xff]
    %v2391 = vld [vmem:[%s0 + $0x9d] sm:$0xff]
    %v2392 = vld [vmem:[%s0 + $0xa5] sm:$0xff]
    %v2393 = vld [vmem:[%s0 + $0xad] sm:$0xff]
    %v2394 = vld [vmem:[%s0 + $0xb5] sm:$0xff]
    %v2395 = vld [vmem:[%s0 + $0xbd] sm:$0xff]
    %v2396 = vld [vmem:[%s0 + $0xc5] sm:$0x3]
    %s2397 = scalar_lea.vmem %s1, 14
    %v2398 = vld [vmem:[%s2397] sm:$0x3]
    %2400 = vset.pattern.permute.xlu0 0
    %2401 = vperm.xlu0 %2400, %v2374
    %v2402 = vpop.permute.xlu0 %2401
    %2405 = vset.pattern.permute.xlu0 0
    %2406 = vperm.xlu0 %2405, %v2375
    %v2407 = vpop.permute.xlu0 %2406
    %2410 = vset.pattern.permute.xlu0 0
    %2411 = vperm.xlu0 %2410, %v2376
    %v2412 = vpop.permute.xlu0 %2411
    %2415 = vset.pattern.permute.xlu0 0
    %2416 = vperm.xlu0 %2415, %v2377
    %v2417 = vpop.permute.xlu0 %2416
    %2420 = vset.pattern.permute.xlu0 0
    %2421 = vperm.xlu0 %2420, %v2378
    %v2422 = vpop.permute.xlu0 %2421
    %2425 = vset.pattern.permute.xlu0 0
    %2426 = vperm.xlu0 %2425, %v2379
    %v2427 = vpop.permute.xlu0 %2426
    %2430 = vset.pattern.permute.xlu0 0
    %2431 = vperm.xlu0 %2430, %v2380
    %v2432 = vpop.permute.xlu0 %2431
    %2435 = vset.pattern.permute.xlu0 0
    %2436 = vperm.xlu0 %2435, %v2381
    %v2437 = vpop.permute.xlu0 %2436
    %2440 = vset.pattern.permute.xlu0 0
    %2441 = vperm.xlu0 %2440, %v2382
    %v2442 = vpop.permute.xlu0 %2441
    %2445 = vset.pattern.permute.xlu0 0
    %2446 = vperm.xlu0 %2445, %v2383
    %v2447 = vpop.permute.xlu0 %2446
    %2450 = vset.pattern.permute.xlu0 0
    %2451 = vperm.xlu0 %2450, %v2384
    %v2452 = vpop.permute.xlu0 %2451
    %2455 = vset.pattern.permute.xlu0 0
    %2456 = vperm.xlu0 %2455, %v2385
    %v2457 = vpop.permute.xlu0 %2456
    %2460 = vset.pattern.permute.xlu0 0
    %2461 = vperm.xlu0 %2460, %v2386
    %v2462 = vpop.permute.xlu0 %2461
    %2465 = vset.pattern.permute.xlu0 0
    %2466 = vperm.xlu0 %2465, %v2387
    %v2467 = vpop.permute.xlu0 %2466
    %2470 = vset.pattern.permute.xlu0 0
    %2471 = vperm.xlu0 %2470, %v2388
    %v2472 = vpop.permute.xlu0 %2471
    %2475 = vset.pattern.permute.xlu0 0
    %2476 = vperm.xlu0 %2475, %v2389
    %v2477 = vpop.permute.xlu0 %2476
    %2480 = vset.pattern.permute.xlu0 0
    %2481 = vperm.xlu0 %2480, %v2390
    %v2482 = vpop.permute.xlu0 %2481
    %2485 = vset.pattern.permute.xlu0 0
    %2486 = vperm.xlu0 %2485, %v2391
    %v2487 = vpop.permute.xlu0 %2486
    %2490 = vset.pattern.permute.xlu0 0
    %2491 = vperm.xlu0 %2490, %v2392
    %v2492 = vpop.permute.xlu0 %2491
    %2495 = vset.pattern.permute.xlu0 0
    %2496 = vperm.xlu0 %2495, %v2393
    %v2497 = vpop.permute.xlu0 %2496
    %2500 = vset.pattern.permute.xlu0 0
    %2501 = vperm.xlu0 %2500, %v2394
    %v2502 = vpop.permute.xlu0 %2501
    %2505 = vset.pattern.permute.xlu0 0
    %2506 = vperm.xlu0 %2505, %v2395
    %v2507 = vpop.permute.xlu0 %2506
    %2510 = vset.pattern.permute.xlu0 0
    %2511 = vperm.xlu0 %2510, %v2396
    %v2512 = vpop.permute.xlu0 %2511
    %v2514 = vperm.slane %v2398, 0
    %v2515 = vmul.f32 %v2402, %v2514
    %v2516 = vmul.f32 %v2407, %v2514
    %v2517 = vmul.f32 %v2412, %v2514
    %v2518 = vmul.f32 %v2417, %v2514
    %v2519 = vmul.f32 %v2422, %v2514
    %v2520 = vmul.f32 %v2427, %v2514
    %v2521 = vmul.f32 %v2432, %v2514
    %v2522 = vmul.f32 %v2437, %v2514
    %v2523 = vmul.f32 %v2442, %v2514
    %v2524 = vmul.f32 %v2447, %v2514
    %v2525 = vmul.f32 %v2452, %v2514
    %v2526 = vmul.f32 %v2457, %v2514
    %v2527 = vmul.f32 %v2462, %v2514
    %v2528 = vmul.f32 %v2467, %v2514
    %v2529 = vmul.f32 %v2472, %v2514
    %v2530 = vmul.f32 %v2477, %v2514
    %v2531 = vmul.f32 %v2482, %v2514
    %v2532 = vmul.f32 %v2487, %v2514
    %v2533 = vmul.f32 %v2492, %v2514
    %v2534 = vmul.f32 %v2497, %v2514
    %v2535 = vmul.f32 %v2502, %v2514
    %v2536 = vmul.f32 %v2507, %v2514
    %v2537 = vmul.f32 %v2512, %v2514
    %v2538 = vadd.f32 %v2351, %v2515
    %v2539 = vadd.f32 %v2352, %v2516
    %v2540 = vadd.f32 %v2353, %v2517
    %v2541 = vadd.f32 %v2354, %v2518
    %v2542 = vadd.f32 %v2355, %v2519
    %v2543 = vadd.f32 %v2356, %v2520
    %v2544 = vadd.f32 %v2357, %v2521
    %v2545 = vadd.f32 %v2358, %v2522
    %v2546 = vadd.f32 %v2359, %v2523
    %v2547 = vadd.f32 %v2360, %v2524
    %v2548 = vadd.f32 %v2361, %v2525
    %v2549 = vadd.f32 %v2362, %v2526
    %v2550 = vadd.f32 %v2363, %v2527
    %v2551 = vadd.f32 %v2364, %v2528
    %v2552 = vadd.f32 %v2365, %v2529
    %v2553 = vadd.f32 %v2366, %v2530
    %v2554 = vadd.f32 %v2367, %v2531
    %v2555 = vadd.f32 %v2368, %v2532
    %v2556 = vadd.f32 %v2369, %v2533
    %v2557 = vadd.f32 %v2370, %v2534
    %v2558 = vadd.f32 %v2371, %v2535
    %v2559 = vadd.f32 %v2372, %v2536
    %v2560 = vadd.f32 %v2373, %v2537
    %2561 = vset.pattern.permute.xlu0 1
    %2562 = vperm.xlu0 %2561, %v2374
    %v2563 = vpop.permute.xlu0 %2562
    %2565 = vset.pattern.permute.xlu0 1
    %2566 = vperm.xlu0 %2565, %v2375
    %v2567 = vpop.permute.xlu0 %2566
    %2569 = vset.pattern.permute.xlu0 1
    %2570 = vperm.xlu0 %2569, %v2376
    %v2571 = vpop.permute.xlu0 %2570
    %2573 = vset.pattern.permute.xlu0 1
    %2574 = vperm.xlu0 %2573, %v2377
    %v2575 = vpop.permute.xlu0 %2574
    %2577 = vset.pattern.permute.xlu0 1
    %2578 = vperm.xlu0 %2577, %v2378
    %v2579 = vpop.permute.xlu0 %2578
    %2581 = vset.pattern.permute.xlu0 1
    %2582 = vperm.xlu0 %2581, %v2379
    %v2583 = vpop.permute.xlu0 %2582
    %2585 = vset.pattern.permute.xlu0 1
    %2586 = vperm.xlu0 %2585, %v2380
    %v2587 = vpop.permute.xlu0 %2586
    %2589 = vset.pattern.permute.xlu0 1
    %2590 = vperm.xlu0 %2589, %v2381
    %v2591 = vpop.permute.xlu0 %2590
    %2593 = vset.pattern.permute.xlu0 1
    %2594 = vperm.xlu0 %2593, %v2382
    %v2595 = vpop.permute.xlu0 %2594
    %2597 = vset.pattern.permute.xlu0 1
    %2598 = vperm.xlu0 %2597, %v2383
    %v2599 = vpop.permute.xlu0 %2598
    %2601 = vset.pattern.permute.xlu0 1
    %2602 = vperm.xlu0 %2601, %v2384
    %v2603 = vpop.permute.xlu0 %2602
    %2605 = vset.pattern.permute.xlu0 1
    %2606 = vperm.xlu0 %2605, %v2385
    %v2607 = vpop.permute.xlu0 %2606
    %2609 = vset.pattern.permute.xlu0 1
    %2610 = vperm.xlu0 %2609, %v2386
    %v2611 = vpop.permute.xlu0 %2610
    %2613 = vset.pattern.permute.xlu0 1
    %2614 = vperm.xlu0 %2613, %v2387
    %v2615 = vpop.permute.xlu0 %2614
    %2617 = vset.pattern.permute.xlu0 1
    %2618 = vperm.xlu0 %2617, %v2388
    %v2619 = vpop.permute.xlu0 %2618
    %2621 = vset.pattern.permute.xlu0 1
    %2622 = vperm.xlu0 %2621, %v2389
    %v2623 = vpop.permute.xlu0 %2622
    %2625 = vset.pattern.permute.xlu0 1
    %2626 = vperm.xlu0 %2625, %v2390
    %v2627 = vpop.permute.xlu0 %2626
    %2629 = vset.pattern.permute.xlu0 1
    %2630 = vperm.xlu0 %2629, %v2391
    %v2631 = vpop.permute.xlu0 %2630
    %2633 = vset.pattern.permute.xlu0 1
    %2634 = vperm.xlu0 %2633, %v2392
    %v2635 = vpop.permute.xlu0 %2634
    %2637 = vset.pattern.permute.xlu0 1
    %2638 = vperm.xlu0 %2637, %v2393
    %v2639 = vpop.permute.xlu0 %2638
    %2641 = vset.pattern.permute.xlu0 1
    %2642 = vperm.xlu0 %2641, %v2394
    %v2643 = vpop.permute.xlu0 %2642
    %2645 = vset.pattern.permute.xlu0 1
    %2646 = vperm.xlu0 %2645, %v2395
    %v2647 = vpop.permute.xlu0 %2646
    %2649 = vset.pattern.permute.xlu0 1
    %2650 = vperm.xlu0 %2649, %v2396
    %v2651 = vpop.permute.xlu0 %2650
    %v2653 = vperm.slane %v2398, 1
    %v2654 = vmul.f32 %v2563, %v2653
    %v2655 = vmul.f32 %v2567, %v2653
    %v2656 = vmul.f32 %v2571, %v2653
    %v2657 = vmul.f32 %v2575, %v2653
    %v2658 = vmul.f32 %v2579, %v2653
    %v2659 = vmul.f32 %v2583, %v2653
    %v2660 = vmul.f32 %v2587, %v2653
    %v2661 = vmul.f32 %v2591, %v2653
    %v2662 = vmul.f32 %v2595, %v2653
    %v2663 = vmul.f32 %v2599, %v2653
    %v2664 = vmul.f32 %v2603, %v2653
    %v2665 = vmul.f32 %v2607, %v2653
    %v2666 = vmul.f32 %v2611, %v2653
    %v2667 = vmul.f32 %v2615, %v2653
    %v2668 = vmul.f32 %v2619, %v2653
    %v2669 = vmul.f32 %v2623, %v2653
    %v2670 = vmul.f32 %v2627, %v2653
    %v2671 = vmul.f32 %v2631, %v2653
    %v2672 = vmul.f32 %v2635, %v2653
    %v2673 = vmul.f32 %v2639, %v2653
    %v2674 = vmul.f32 %v2643, %v2653
    %v2675 = vmul.f32 %v2647, %v2653
    %v2676 = vmul.f32 %v2651, %v2653
    %v2677 = vadd.f32 %v2538, %v2654
    %v2678 = vadd.f32 %v2539, %v2655
    %v2679 = vadd.f32 %v2540, %v2656
    %v2680 = vadd.f32 %v2541, %v2657
    %v2681 = vadd.f32 %v2542, %v2658
    %v2682 = vadd.f32 %v2543, %v2659
    %v2683 = vadd.f32 %v2544, %v2660
    %v2684 = vadd.f32 %v2545, %v2661
    %v2685 = vadd.f32 %v2546, %v2662
    %v2686 = vadd.f32 %v2547, %v2663
    %v2687 = vadd.f32 %v2548, %v2664
    %v2688 = vadd.f32 %v2549, %v2665
    %v2689 = vadd.f32 %v2550, %v2666
    %v2690 = vadd.f32 %v2551, %v2667
    %v2691 = vadd.f32 %v2552, %v2668
    %v2692 = vadd.f32 %v2553, %v2669
    %v2693 = vadd.f32 %v2554, %v2670
    %v2694 = vadd.f32 %v2555, %v2671
    %v2695 = vadd.f32 %v2556, %v2672
    %v2696 = vadd.f32 %v2557, %v2673
    %v2697 = vadd.f32 %v2558, %v2674
    %v2698 = vadd.f32 %v2559, %v2675
    %v2699 = vadd.f32 %v2560, %v2676
    %v2700 = vld [vmem:[%s0 + $0x16] sm:$0xff]
    %v2701 = vld [vmem:[%s0 + $0x1e] sm:$0xff]
    %v2702 = vld [vmem:[%s0 + $0x26] sm:$0xff]
    %v2703 = vld [vmem:[%s0 + $0x2e] sm:$0xff]
    %v2704 = vld [vmem:[%s0 + $0x36] sm:$0xff]
    %v2705 = vld [vmem:[%s0 + $0x3e] sm:$0xff]
    %v2706 = vld [vmem:[%s0 + $0x46] sm:$0xff]
    %v2707 = vld [vmem:[%s0 + $0x4e] sm:$0xff]
    %v2708 = vld [vmem:[%s0 + $0x56] sm:$0xff]
    %v2709 = vld [vmem:[%s0 + $0x5e] sm:$0xff]
    %v2710 = vld [vmem:[%s0 + $0x66] sm:$0xff]
    %v2711 = vld [vmem:[%s0 + $0x6e] sm:$0xff]
    %v2712 = vld [vmem:[%s0 + $0x76] sm:$0xff]
    %v2713 = vld [vmem:[%s0 + $0x7e] sm:$0xff]
    %v2714 = vld [vmem:[%s0 + $0x86] sm:$0xff]
    %v2715 = vld [vmem:[%s0 + $0x8e] sm:$0xff]
    %v2716 = vld [vmem:[%s0 + $0x96] sm:$0xff]
    %v2717 = vld [vmem:[%s0 + $0x9e] sm:$0xff]
    %v2718 = vld [vmem:[%s0 + $0xa6] sm:$0xff]
    %v2719 = vld [vmem:[%s0 + $0xae] sm:$0xff]
    %v2720 = vld [vmem:[%s0 + $0xb6] sm:$0xff]
    %v2721 = vld [vmem:[%s0 + $0xbe] sm:$0xff]
    %v2722 = vld [vmem:[%s0 + $0xc6] sm:$0x3]
    %s2723 = scalar_lea.vmem %s1, 16
    %v2724 = vld [vmem:[%s2723] sm:$0x3]
    %2726 = vset.pattern.permute.xlu0 0
    %2727 = vperm.xlu0 %2726, %v2700
    %v2728 = vpop.permute.xlu0 %2727
    %2731 = vset.pattern.permute.xlu0 0
    %2732 = vperm.xlu0 %2731, %v2701
    %v2733 = vpop.permute.xlu0 %2732
    %2736 = vset.pattern.permute.xlu0 0
    %2737 = vperm.xlu0 %2736, %v2702
    %v2738 = vpop.permute.xlu0 %2737
    %2741 = vset.pattern.permute.xlu0 0
    %2742 = vperm.xlu0 %2741, %v2703
    %v2743 = vpop.permute.xlu0 %2742
    %2746 = vset.pattern.permute.xlu0 0
    %2747 = vperm.xlu0 %2746, %v2704
    %v2748 = vpop.permute.xlu0 %2747
    %2751 = vset.pattern.permute.xlu0 0
    %2752 = vperm.xlu0 %2751, %v2705
    %v2753 = vpop.permute.xlu0 %2752
    %2756 = vset.pattern.permute.xlu0 0
    %2757 = vperm.xlu0 %2756, %v2706
    %v2758 = vpop.permute.xlu0 %2757
    %2761 = vset.pattern.permute.xlu0 0
    %2762 = vperm.xlu0 %2761, %v2707
    %v2763 = vpop.permute.xlu0 %2762
    %2766 = vset.pattern.permute.xlu0 0
    %2767 = vperm.xlu0 %2766, %v2708
    %v2768 = vpop.permute.xlu0 %2767
    %2771 = vset.pattern.permute.xlu0 0
    %2772 = vperm.xlu0 %2771, %v2709
    %v2773 = vpop.permute.xlu0 %2772
    %2776 = vset.pattern.permute.xlu0 0
    %2777 = vperm.xlu0 %2776, %v2710
    %v2778 = vpop.permute.xlu0 %2777
    %2781 = vset.pattern.permute.xlu0 0
    %2782 = vperm.xlu0 %2781, %v2711
    %v2783 = vpop.permute.xlu0 %2782
    %2786 = vset.pattern.permute.xlu0 0
    %2787 = vperm.xlu0 %2786, %v2712
    %v2788 = vpop.permute.xlu0 %2787
    %2791 = vset.pattern.permute.xlu0 0
    %2792 = vperm.xlu0 %2791, %v2713
    %v2793 = vpop.permute.xlu0 %2792
    %2796 = vset.pattern.permute.xlu0 0
    %2797 = vperm.xlu0 %2796, %v2714
    %v2798 = vpop.permute.xlu0 %2797
    %2801 = vset.pattern.permute.xlu0 0
    %2802 = vperm.xlu0 %2801, %v2715
    %v2803 = vpop.permute.xlu0 %2802
    %2806 = vset.pattern.permute.xlu0 0
    %2807 = vperm.xlu0 %2806, %v2716
    %v2808 = vpop.permute.xlu0 %2807
    %2811 = vset.pattern.permute.xlu0 0
    %2812 = vperm.xlu0 %2811, %v2717
    %v2813 = vpop.permute.xlu0 %2812
    %2816 = vset.pattern.permute.xlu0 0
    %2817 = vperm.xlu0 %2816, %v2718
    %v2818 = vpop.permute.xlu0 %2817
    %2821 = vset.pattern.permute.xlu0 0
    %2822 = vperm.xlu0 %2821, %v2719
    %v2823 = vpop.permute.xlu0 %2822
    %2826 = vset.pattern.permute.xlu0 0
    %2827 = vperm.xlu0 %2826, %v2720
    %v2828 = vpop.permute.xlu0 %2827
    %2831 = vset.pattern.permute.xlu0 0
    %2832 = vperm.xlu0 %2831, %v2721
    %v2833 = vpop.permute.xlu0 %2832
    %2836 = vset.pattern.permute.xlu0 0
    %2837 = vperm.xlu0 %2836, %v2722
    %v2838 = vpop.permute.xlu0 %2837
    %v2840 = vperm.slane %v2724, 0
    %v2841 = vmul.f32 %v2728, %v2840
    %v2842 = vmul.f32 %v2733, %v2840
    %v2843 = vmul.f32 %v2738, %v2840
    %v2844 = vmul.f32 %v2743, %v2840
    %v2845 = vmul.f32 %v2748, %v2840
    %v2846 = vmul.f32 %v2753, %v2840
    %v2847 = vmul.f32 %v2758, %v2840
    %v2848 = vmul.f32 %v2763, %v2840
    %v2849 = vmul.f32 %v2768, %v2840
    %v2850 = vmul.f32 %v2773, %v2840
    %v2851 = vmul.f32 %v2778, %v2840
    %v2852 = vmul.f32 %v2783, %v2840
    %v2853 = vmul.f32 %v2788, %v2840
    %v2854 = vmul.f32 %v2793, %v2840
    %v2855 = vmul.f32 %v2798, %v2840
    %v2856 = vmul.f32 %v2803, %v2840
    %v2857 = vmul.f32 %v2808, %v2840
    %v2858 = vmul.f32 %v2813, %v2840
    %v2859 = vmul.f32 %v2818, %v2840
    %v2860 = vmul.f32 %v2823, %v2840
    %v2861 = vmul.f32 %v2828, %v2840
    %v2862 = vmul.f32 %v2833, %v2840
    %v2863 = vmul.f32 %v2838, %v2840
    %v2864 = vadd.f32 %v2677, %v2841
    %v2865 = vadd.f32 %v2678, %v2842
    %v2866 = vadd.f32 %v2679, %v2843
    %v2867 = vadd.f32 %v2680, %v2844
    %v2868 = vadd.f32 %v2681, %v2845
    %v2869 = vadd.f32 %v2682, %v2846
    %v2870 = vadd.f32 %v2683, %v2847
    %v2871 = vadd.f32 %v2684, %v2848
    %v2872 = vadd.f32 %v2685, %v2849
    %v2873 = vadd.f32 %v2686, %v2850
    %v2874 = vadd.f32 %v2687, %v2851
    %v2875 = vadd.f32 %v2688, %v2852
    %v2876 = vadd.f32 %v2689, %v2853
    %v2877 = vadd.f32 %v2690, %v2854
    %v2878 = vadd.f32 %v2691, %v2855
    %v2879 = vadd.f32 %v2692, %v2856
    %v2880 = vadd.f32 %v2693, %v2857
    %v2881 = vadd.f32 %v2694, %v2858
    %v2882 = vadd.f32 %v2695, %v2859
    %v2883 = vadd.f32 %v2696, %v2860
    %v2884 = vadd.f32 %v2697, %v2861
    %v2885 = vadd.f32 %v2698, %v2862
    %v2886 = vadd.f32 %v2699, %v2863
    %2887 = vset.pattern.permute.xlu0 1
    %2888 = vperm.xlu0 %2887, %v2700
    %v2889 = vpop.permute.xlu0 %2888
    %2891 = vset.pattern.permute.xlu0 1
    %2892 = vperm.xlu0 %2891, %v2701
    %v2893 = vpop.permute.xlu0 %2892
    %2895 = vset.pattern.permute.xlu0 1
    %2896 = vperm.xlu0 %2895, %v2702
    %v2897 = vpop.permute.xlu0 %2896
    %2899 = vset.pattern.permute.xlu0 1
    %2900 = vperm.xlu0 %2899, %v2703
    %v2901 = vpop.permute.xlu0 %2900
    %2903 = vset.pattern.permute.xlu0 1
    %2904 = vperm.xlu0 %2903, %v2704
    %v2905 = vpop.permute.xlu0 %2904
    %2907 = vset.pattern.permute.xlu0 1
    %2908 = vperm.xlu0 %2907, %v2705
    %v2909 = vpop.permute.xlu0 %2908
    %2911 = vset.pattern.permute.xlu0 1
    %2912 = vperm.xlu0 %2911, %v2706
    %v2913 = vpop.permute.xlu0 %2912
    %2915 = vset.pattern.permute.xlu0 1
    %2916 = vperm.xlu0 %2915, %v2707
    %v2917 = vpop.permute.xlu0 %2916
    %2919 = vset.pattern.permute.xlu0 1
    %2920 = vperm.xlu0 %2919, %v2708
    %v2921 = vpop.permute.xlu0 %2920
    %2923 = vset.pattern.permute.xlu0 1
    %2924 = vperm.xlu0 %2923, %v2709
    %v2925 = vpop.permute.xlu0 %2924
    %2927 = vset.pattern.permute.xlu0 1
    %2928 = vperm.xlu0 %2927, %v2710
    %v2929 = vpop.permute.xlu0 %2928
    %2931 = vset.pattern.permute.xlu0 1
    %2932 = vperm.xlu0 %2931, %v2711
    %v2933 = vpop.permute.xlu0 %2932
    %2935 = vset.pattern.permute.xlu0 1
    %2936 = vperm.xlu0 %2935, %v2712
    %v2937 = vpop.permute.xlu0 %2936
    %2939 = vset.pattern.permute.xlu0 1
    %2940 = vperm.xlu0 %2939, %v2713
    %v2941 = vpop.permute.xlu0 %2940
    %2943 = vset.pattern.permute.xlu0 1
    %2944 = vperm.xlu0 %2943, %v2714
    %v2945 = vpop.permute.xlu0 %2944
    %2947 = vset.pattern.permute.xlu0 1
    %2948 = vperm.xlu0 %2947, %v2715
    %v2949 = vpop.permute.xlu0 %2948
    %2951 = vset.pattern.permute.xlu0 1
    %2952 = vperm.xlu0 %2951, %v2716
    %v2953 = vpop.permute.xlu0 %2952
    %2955 = vset.pattern.permute.xlu0 1
    %2956 = vperm.xlu0 %2955, %v2717
    %v2957 = vpop.permute.xlu0 %2956
    %2959 = vset.pattern.permute.xlu0 1
    %2960 = vperm.xlu0 %2959, %v2718
    %v2961 = vpop.permute.xlu0 %2960
    %2963 = vset.pattern.permute.xlu0 1
    %2964 = vperm.xlu0 %2963, %v2719
    %v2965 = vpop.permute.xlu0 %2964
    %2967 = vset.pattern.permute.xlu0 1
    %2968 = vperm.xlu0 %2967, %v2720
    %v2969 = vpop.permute.xlu0 %2968
    %2971 = vset.pattern.permute.xlu0 1
    %2972 = vperm.xlu0 %2971, %v2721
    %v2973 = vpop.permute.xlu0 %2972
    %2975 = vset.pattern.permute.xlu0 1
    %2976 = vperm.xlu0 %2975, %v2722
    %v2977 = vpop.permute.xlu0 %2976
    %v2979 = vperm.slane %v2724, 1
    %v2980 = vmul.f32 %v2889, %v2979
    %v2981 = vmul.f32 %v2893, %v2979
    %v2982 = vmul.f32 %v2897, %v2979
    %v2983 = vmul.f32 %v2901, %v2979
    %v2984 = vmul.f32 %v2905, %v2979
    %v2985 = vmul.f32 %v2909, %v2979
    %v2986 = vmul.f32 %v2913, %v2979
    %v2987 = vmul.f32 %v2917, %v2979
    %v2988 = vmul.f32 %v2921, %v2979
    %v2989 = vmul.f32 %v2925, %v2979
    %v2990 = vmul.f32 %v2929, %v2979
    %v2991 = vmul.f32 %v2933, %v2979
    %v2992 = vmul.f32 %v2937, %v2979
    %v2993 = vmul.f32 %v2941, %v2979
    %v2994 = vmul.f32 %v2945, %v2979
    %v2995 = vmul.f32 %v2949, %v2979
    %v2996 = vmul.f32 %v2953, %v2979
    %v2997 = vmul.f32 %v2957, %v2979
    %v2998 = vmul.f32 %v2961, %v2979
    %v2999 = vmul.f32 %v2965, %v2979
    %v3000 = vmul.f32 %v2969, %v2979
    %v3001 = vmul.f32 %v2973, %v2979
    %v3002 = vmul.f32 %v2977, %v2979
    %v3003 = vadd.f32 %v2864, %v2980
    %v3004 = vadd.f32 %v2865, %v2981
    %v3005 = vadd.f32 %v2866, %v2982
    %v3006 = vadd.f32 %v2867, %v2983
    %v3007 = vadd.f32 %v2868, %v2984
    %v3008 = vadd.f32 %v2869, %v2985
    %v3009 = vadd.f32 %v2870, %v2986
    %v3010 = vadd.f32 %v2871, %v2987
    %v3011 = vadd.f32 %v2872, %v2988
    %v3012 = vadd.f32 %v2873, %v2989
    %v3013 = vadd.f32 %v2874, %v2990
    %v3014 = vadd.f32 %v2875, %v2991
    %v3015 = vadd.f32 %v2876, %v2992
    %v3016 = vadd.f32 %v2877, %v2993
    %v3017 = vadd.f32 %v2878, %v2994
    %v3018 = vadd.f32 %v2879, %v2995
    %v3019 = vadd.f32 %v2880, %v2996
    %v3020 = vadd.f32 %v2881, %v2997
    %v3021 = vadd.f32 %v2882, %v2998
    %v3022 = vadd.f32 %v2883, %v2999
    %v3023 = vadd.f32 %v2884, %v3000
    %v3024 = vadd.f32 %v2885, %v3001
    %v3025 = vadd.f32 %v2886, %v3002
    %v3026 = vld [vmem:[%s2] sm:$0x1]
    %v3028 = vperm.slane %v3026, 0
    %v3030 = vadd.f32 %v3003, %v3028
    %v3031 = vadd.f32 %v3004, %v3028
    %v3032 = vadd.f32 %v3005, %v3028
    %v3033 = vadd.f32 %v3006, %v3028
    %v3034 = vadd.f32 %v3007, %v3028
    %v3035 = vadd.f32 %v3008, %v3028
    %v3036 = vadd.f32 %v3009, %v3028
    %v3037 = vadd.f32 %v3010, %v3028
    %v3038 = vadd.f32 %v3011, %v3028
    %v3039 = vadd.f32 %v3012, %v3028
    %v3040 = vadd.f32 %v3013, %v3028
    %v3041 = vadd.f32 %v3014, %v3028
    %v3042 = vadd.f32 %v3015, %v3028
    %v3043 = vadd.f32 %v3016, %v3028
    %v3044 = vadd.f32 %v3017, %v3028
    %v3045 = vadd.f32 %v3018, %v3028
    %v3046 = vadd.f32 %v3019, %v3028
    %v3047 = vadd.f32 %v3020, %v3028
    %v3048 = vadd.f32 %v3021, %v3028
    %v3049 = vadd.f32 %v3022, %v3028
    %v3050 = vadd.f32 %v3023, %v3028
    %v3051 = vadd.f32 %v3024, %v3028
    %v3052 = vadd.f32 %v3025, %v3028
    %v3053 = vmax.f32 %v3030, 0.0
    %v3054 = vmax.f32 %v3031, 0.0
    %v3055 = vmax.f32 %v3032, 0.0
    %v3056 = vmax.f32 %v3033, 0.0
    %v3057 = vmax.f32 %v3034, 0.0
    %v3058 = vmax.f32 %v3035, 0.0
    %v3059 = vmax.f32 %v3036, 0.0
    %v3060 = vmax.f32 %v3037, 0.0
    %v3061 = vmax.f32 %v3038, 0.0
    %v3062 = vmax.f32 %v3039, 0.0
    %v3063 = vmax.f32 %v3040, 0.0
    %v3064 = vmax.f32 %v3041, 0.0
    %v3065 = vmax.f32 %v3042, 0.0
    %v3066 = vmax.f32 %v3043, 0.0
    %v3067 = vmax.f32 %v3044, 0.0
    %v3068 = vmax.f32 %v3045, 0.0
    %v3069 = vmax.f32 %v3046, 0.0
    %v3070 = vmax.f32 %v3047, 0.0
    %v3071 = vmax.f32 %v3048, 0.0
    %v3072 = vmax.f32 %v3049, 0.0
    %v3073 = vmax.f32 %v3050, 0.0
    %v3074 = vmax.f32 %v3051, 0.0
    %v3075 = vmax.f32 %v3052, 0.0
    %v3076 = vpack.c.bf16 %v3053, %v3053
    %v3077 = vpack.c.bf16 %v3054, %v3054
    %v3078 = vpack.c.bf16 %v3055, %v3055
    %v3079 = vpack.c.bf16 %v3056, %v3056
    %v3080 = vpack.c.bf16 %v3057, %v3057
    %v3081 = vpack.c.bf16 %v3058, %v3058
    %v3082 = vpack.c.bf16 %v3059, %v3059
    %v3083 = vpack.c.bf16 %v3060, %v3060
    %v3084 = vpack.c.bf16 %v3061, %v3061
    %v3085 = vpack.c.bf16 %v3062, %v3062
    %v3086 = vpack.c.bf16 %v3063, %v3063
    %v3087 = vpack.c.bf16 %v3064, %v3064
    %v3088 = vpack.c.bf16 %v3065, %v3065
    %v3089 = vpack.c.bf16 %v3066, %v3066
    %v3090 = vpack.c.bf16 %v3067, %v3067
    %v3091 = vpack.c.bf16 %v3068, %v3068
    %v3092 = vpack.c.bf16 %v3069, %v3069
    %v3093 = vpack.c.bf16 %v3070, %v3070
    %v3094 = vpack.c.bf16 %v3071, %v3071
    %v3095 = vpack.c.bf16 %v3072, %v3072
    %v3096 = vpack.c.bf16 %v3073, %v3073
    %v3097 = vpack.c.bf16 %v3074, %v3074
    %v3098 = vpack.c.bf16 %v3075, %v3075
    %3099 = vst.msk [vmem:[#allocation2] sm:$0xf] %vm79, %v3076
    %3100 = vst.msk [vmem:[#allocation2 + $0x4] sm:$0xf] %vm79, %v3077
    %3101 = vst.msk [vmem:[#allocation2 + $0x8] sm:$0xf] %vm79, %v3078
    %3102 = vst.msk [vmem:[#allocation2 + $0xc] sm:$0xf] %vm79, %v3079
    %3103 = vst.msk [vmem:[#allocation2 + $0x10] sm:$0xf] %vm79, %v3080
    %3104 = vst.msk [vmem:[#allocation2 + $0x14] sm:$0xf] %vm79, %v3081
    %3105 = vst.msk [vmem:[#allocation2 + $0x18] sm:$0xf] %vm79, %v3082
    %3106 = vst.msk [vmem:[#allocation2 + $0x1c] sm:$0xf] %vm79, %v3083
    %3107 = vst.msk [vmem:[#allocation2 + $0x20] sm:$0xf] %vm79, %v3084
    %3108 = vst.msk [vmem:[#allocation2 + $0x24] sm:$0xf] %vm79, %v3085
    %3109 = vst.msk [vmem:[#allocation2 + $0x28] sm:$0xf] %vm79, %v3086
    %3110 = vst.msk [vmem:[#allocation2 + $0x2c] sm:$0xf] %vm79, %v3087
    %3111 = vst.msk [vmem:[#allocation2 + $0x30] sm:$0xf] %vm79, %v3088
    %3112 = vst.msk [vmem:[#allocation2 + $0x34] sm:$0xf] %vm79, %v3089
    %3113 = vst.msk [vmem:[#allocation2 + $0x38] sm:$0xf] %vm79, %v3090
    %3114 = vst.msk [vmem:[#allocation2 + $0x3c] sm:$0xf] %vm79, %v3091
    %3115 = vst.msk [vmem:[#allocation2 + $0x40] sm:$0xf] %vm79, %v3092
    %3116 = vst.msk [vmem:[#allocation2 + $0x44] sm:$0xf] %vm79, %v3093
    %3117 = vst.msk [vmem:[#allocation2 + $0x48] sm:$0xf] %vm79, %v3094
    %3118 = vst.msk [vmem:[#allocation2 + $0x4c] sm:$0xf] %vm79, %v3095
    %3119 = vst.msk [vmem:[#allocation2 + $0x50] sm:$0xf] %vm79, %v3096
    %3120 = vst.msk [vmem:[#allocation2 + $0x54] sm:$0xf] %vm79, %v3097
    %vm3121 = vcmask 253952
    %3122 = vst.msk [vmem:[#allocation2 + $0x58] sm:$0x1] %vm3121, %v3098
    %v3123 = vld [vmem:[#allocation2] sm:$0xf]
    %v3124 = vld [vmem:[#allocation2 + $0x4] sm:$0xf]
    %v3125 = vld [vmem:[#allocation2 + $0x8] sm:$0xf]
    %v3126 = vld [vmem:[#allocation2 + $0xc] sm:$0xf]
    %v3127 = vld [vmem:[#allocation2 + $0x10] sm:$0xf]
    %v3128 = vld [vmem:[#allocation2 + $0x14] sm:$0xf]
    %v3129 = vld [vmem:[#allocation2 + $0x18] sm:$0xf]
    %v3130 = vld [vmem:[#allocation2 + $0x1c] sm:$0xf]
    %v3131 = vld [vmem:[#allocation2 + $0x20] sm:$0xf]
    %v3132 = vld [vmem:[#allocation2 + $0x24] sm:$0xf]
    %v3133 = vld [vmem:[#allocation2 + $0x28] sm:$0xf]
    %v3134 = vld [vmem:[#allocation2 + $0x2c] sm:$0xf]
    %v3135 = vld [vmem:[#allocation2 + $0x30] sm:$0xf]
    %v3136 = vld [vmem:[#allocation2 + $0x34] sm:$0xf]
    %v3137 = vld [vmem:[#allocation2 + $0x38] sm:$0xf]
    %v3138 = vld [vmem:[#allocation2 + $0x3c] sm:$0xf]
    %v3139 = vld [vmem:[#allocation2 + $0x40] sm:$0xf]
    %v3140 = vld [vmem:[#allocation2 + $0x44] sm:$0xf]
    %v3141 = vld [vmem:[#allocation2 + $0x48] sm:$0xf]
    %v3142 = vld [vmem:[#allocation2 + $0x4c] sm:$0xf]
    %v3143 = vld [vmem:[#allocation2 + $0x50] sm:$0xf]
    %v3144 = vld [vmem:[#allocation2 + $0x54] sm:$0xf]
    %v3145 = vld [vmem:[#allocation2 + $0x58] sm:$0xf]
    %v3146 = vld [vmem:[#allocation2 + $0x5c] sm:$0xf]
    %v3147 = vld [vmem:[#allocation2 + $0x60] sm:$0x1]
    %v3148 = vld [vmem:[#allocation2 + $0x4] sm:$0xe]
    %v3149 = vld [vmem:[#allocation2 + $0x60] sm:$0xf]
    %v3150 = vld [vmem:[#allocation2 + $0x64] sm:$0x1]
    %v3151 = vld [vmem:[#allocation2 + $0x64] sm:$0x3]
    %v3176 = vunpack.c.l.b16 %v3123
    %v3177 = vunpack.c.l.b16 %v3124
    %v3178 = vunpack.c.l.b16 %v3125
    %v3179 = vunpack.c.l.b16 %v3126
    %v3180 = vunpack.c.l.b16 %v3127
    %v3181 = vunpack.c.l.b16 %v3128
    %v3182 = vunpack.c.l.b16 %v3129
    %v3183 = vunpack.c.l.b16 %v3130
    %v3184 = vunpack.c.l.b16 %v3131
    %v3185 = vunpack.c.l.b16 %v3132
    %v3186 = vunpack.c.l.b16 %v3133
    %v3187 = vunpack.c.l.b16 %v3134
    %v3188 = vunpack.c.l.b16 %v3135
    %v3189 = vunpack.c.l.b16 %v3136
    %v3190 = vunpack.c.l.b16 %v3137
    %v3191 = vunpack.c.l.b16 %v3138
    %v3192 = vunpack.c.l.b16 %v3139
    %v3193 = vunpack.c.l.b16 %v3140
    %v3194 = vunpack.c.l.b16 %v3141
    %v3195 = vunpack.c.l.b16 %v3142
    %v3196 = vunpack.c.l.b16 %v3143
    %v3197 = vunpack.c.l.b16 %v3144
    %v3198 = vunpack.c.l.b16 %v3145
    %v3199 = vunpack.c.l.b16 %v3146
    %v3200 = vpack.c.b16 %v3177, %v3176
    %v3201 = vpack.c.b16 %v3179, %v3178
    %v3202 = vpack.c.b16 %v3181, %v3180
    %v3203 = vpack.c.b16 %v3183, %v3182
    %v3204 = vpack.c.b16 %v3185, %v3184
    %v3205 = vpack.c.b16 %v3187, %v3186
    %v3206 = vpack.c.b16 %v3189, %v3188
    %v3207 = vpack.c.b16 %v3191, %v3190
    %v3208 = vpack.c.b16 %v3193, %v3192
    %v3209 = vpack.c.b16 %v3195, %v3194
    %v3210 = vpack.c.b16 %v3197, %v3196
    %v3211 = vpack.c.b16 %v3199, %v3198
    %v3213 = vunpack.c.l.b16 %v3147
    %v3214 = vpack.c.b16 %v3213, %v3213
    %vm3215 = vsmask.f32 7424
    %v3217 = vshrl.u32 %v3200, 16
    %v3219 = vshll.u32 %v3200, 16
    %v3221 = vrot.slane %v3219, 1
    %v3222 = vor.u32 %v3217, %v3221
    %v3224 = vshll.u32 %v3201, 16
    %v3226 = vrot.slane %v3224, 1
    %v3227 = vsel %vm3215, %v3222, %v3226
    %v3228 = vshrl.u32 %v3201, 16
    %v3230 = vor.u32 %v3228, %v3226
    %v3232 = vshll.u32 %v3202, 16
    %v3234 = vrot.slane %v3232, 1
    %v3235 = vsel %vm3215, %v3230, %v3234
    %v3236 = vshrl.u32 %v3202, 16
    %v3238 = vor.u32 %v3236, %v3234
    %v3240 = vshll.u32 %v3203, 16
    %v3242 = vrot.slane %v3240, 1
    %v3243 = vsel %vm3215, %v3238, %v3242
    %v3244 = vshrl.u32 %v3203, 16
    %v3246 = vor.u32 %v3244, %v3242
    %v3248 = vshll.u32 %v3204, 16
    %v3250 = vrot.slane %v3248, 1
    %v3251 = vsel %vm3215, %v3246, %v3250
    %v3252 = vshrl.u32 %v3204, 16
    %v3254 = vor.u32 %v3252, %v3250
    %v3256 = vshll.u32 %v3205, 16
    %v3258 = vrot.slane %v3256, 1
    %v3259 = vsel %vm3215, %v3254, %v3258
    %v3260 = vshrl.u32 %v3205, 16
    %v3262 = vor.u32 %v3260, %v3258
    %v3264 = vshll.u32 %v3206, 16
    %v3266 = vrot.slane %v3264, 1
    %v3267 = vsel %vm3215, %v3262, %v3266
    %v3268 = vshrl.u32 %v3206, 16
    %v3270 = vor.u32 %v3268, %v3266
    %v3272 = vshll.u32 %v3207, 16
    %v3274 = vrot.slane %v3272, 1
    %v3275 = vsel %vm3215, %v3270, %v3274
    %v3276 = vshrl.u32 %v3207, 16
    %v3278 = vor.u32 %v3276, %v3274
    %v3280 = vshll.u32 %v3208, 16
    %v3282 = vrot.slane %v3280, 1
    %v3283 = vsel %vm3215, %v3278, %v3282
    %v3284 = vshrl.u32 %v3208, 16
    %v3286 = vor.u32 %v3284, %v3282
    %v3288 = vshll.u32 %v3209, 16
    %v3290 = vrot.slane %v3288, 1
    %v3291 = vsel %vm3215, %v3286, %v3290
    %v3292 = vshrl.u32 %v3209, 16
    %v3294 = vor.u32 %v3292, %v3290
    %v3296 = vshll.u32 %v3210, 16
    %v3298 = vrot.slane %v3296, 1
    %v3299 = vsel %vm3215, %v3294, %v3298
    %v3300 = vshrl.u32 %v3210, 16
    %v3302 = vor.u32 %v3300, %v3298
    %v3304 = vshll.u32 %v3211, 16
    %v3306 = vrot.slane %v3304, 1
    %v3307 = vsel %vm3215, %v3302, %v3306
    %v3308 = vshrl.u32 %v3211, 16
    %v3310 = vor.u32 %v3308, %v3306
    %v3312 = vshll.u32 %v3214, 16
    %v3314 = vrot.slane %v3312, 1
    %v3315 = vsel %vm3215, %v3310, %v3314
    %3316 = vrot.lane.b32.xlu0 %v3227, 32
    %v3317 = vpop.permute.xlu0 %3316
    %3318 = vrot.lane.b32.xlu0 %v3235, 32
    %v3319 = vpop.permute.xlu0 %3318
    %3320 = vrot.lane.b32.xlu0 %v3243, 32
    %v3321 = vpop.permute.xlu0 %3320
    %3322 = vrot.lane.b32.xlu0 %v3251, 32
    %v3323 = vpop.permute.xlu0 %3322
    %3324 = vrot.lane.b32.xlu0 %v3259, 32
    %v3325 = vpop.permute.xlu0 %3324
    %3326 = vrot.lane.b32.xlu0 %v3267, 32
    %v3327 = vpop.permute.xlu0 %3326
    %3328 = vrot.lane.b32.xlu0 %v3275, 32
    %v3329 = vpop.permute.xlu0 %3328
    %3330 = vrot.lane.b32.xlu0 %v3283, 32
    %v3331 = vpop.permute.xlu0 %3330
    %3332 = vrot.lane.b32.xlu0 %v3291, 32
    %v3333 = vpop.permute.xlu0 %3332
    %3334 = vrot.lane.b32.xlu0 %v3299, 32
    %v3335 = vpop.permute.xlu0 %3334
    %3336 = vrot.lane.b32.xlu0 %v3307, 32
    %v3337 = vpop.permute.xlu0 %3336
    %3338 = vrot.lane.b32.xlu0 %v3315, 32
    %v3339 = vpop.permute.xlu0 %3338
    %v3343 = vunpack.c.l.b16 %v3148
    %v3344 = vunpack.c.l.b16 %v3149
    %v3345 = vunpack.c.l.b16 %v3150
    %v3346 = vpack.c.b16 %v3178, %v3343
    %v3347 = vpack.c.b16 %v3180, %v3179
    %v3348 = vpack.c.b16 %v3182, %v3181
    %v3349 = vpack.c.b16 %v3184, %v3183
    %v3350 = vpack.c.b16 %v3186, %v3185
    %v3351 = vpack.c.b16 %v3188, %v3187
    %v3352 = vpack.c.b16 %v3190, %v3189
    %v3353 = vpack.c.b16 %v3192, %v3191
    %v3354 = vpack.c.b16 %v3194, %v3193
    %v3355 = vpack.c.b16 %v3196, %v3195
    %v3356 = vpack.c.b16 %v3198, %v3197
    %v3357 = vpack.c.b16 %v3344, %v3199
    %v3358 = vpack.c.b16 %v3345, %v3345
    %vm3359 = vcmask 1046528
    %v3360 = vrot.slane %v3346, 1
    %v3361 = vrot.slane %v3347, 1
    %v3362 = vsel %vm3359, %v3360, %v3361
    %v3363 = vrot.slane %v3348, 1
    %v3364 = vsel %vm3359, %v3361, %v3363
    %v3365 = vrot.slane %v3349, 1
    %v3366 = vsel %vm3359, %v3363, %v3365
    %v3367 = vrot.slane %v3350, 1
    %v3368 = vsel %vm3359, %v3365, %v3367
    %v3369 = vrot.slane %v3351, 1
    %v3370 = vsel %vm3359, %v3367, %v3369
    %v3371 = vrot.slane %v3352, 1
    %v3372 = vsel %vm3359, %v3369, %v3371
    %v3373 = vrot.slane %v3353, 1
    %v3374 = vsel %vm3359, %v3371, %v3373
    %v3375 = vrot.slane %v3354, 1
    %v3376 = vsel %vm3359, %v3373, %v3375
    %v3377 = vrot.slane %v3355, 1
    %v3378 = vsel %vm3359, %v3375, %v3377
    %v3379 = vrot.slane %v3356, 1
    %v3380 = vsel %vm3359, %v3377, %v3379
    %v3381 = vrot.slane %v3357, 1
    %v3382 = vsel %vm3359, %v3379, %v3381
    %v3383 = vrot.slane %v3358, 1
    %v3384 = vsel %vm3359, %v3381, %v3383
    %3385 = vrot.lane.b32.xlu0 %v3362, 64
    %v3386 = vpop.permute.xlu0 %3385
    %3387 = vrot.lane.b32.xlu0 %v3364, 64
    %v3388 = vpop.permute.xlu0 %3387
    %3389 = vrot.lane.b32.xlu0 %v3366, 64
    %v3390 = vpop.permute.xlu0 %3389
    %3391 = vrot.lane.b32.xlu0 %v3368, 64
    %v3392 = vpop.permute.xlu0 %3391
    %3393 = vrot.lane.b32.xlu0 %v3370, 64
    %v3394 = vpop.permute.xlu0 %3393
    %3395 = vrot.lane.b32.xlu0 %v3372, 64
    %v3396 = vpop.permute.xlu0 %3395
    %3397 = vrot.lane.b32.xlu0 %v3374, 64
    %v3398 = vpop.permute.xlu0 %3397
    %3399 = vrot.lane.b32.xlu0 %v3376, 64
    %v3400 = vpop.permute.xlu0 %3399
    %3401 = vrot.lane.b32.xlu0 %v3378, 64
    %v3402 = vpop.permute.xlu0 %3401
    %3403 = vrot.lane.b32.xlu0 %v3380, 64
    %v3404 = vpop.permute.xlu0 %3403
    %3405 = vrot.lane.b32.xlu0 %v3382, 64
    %v3406 = vpop.permute.xlu0 %3405
    %3407 = vrot.lane.b32.xlu0 %v3384, 64
    %v3408 = vpop.permute.xlu0 %3407
    %v3410 = vunpack.c.l.b16 %v3151
    %v3411 = vpack.c.b16 %v3410, %v3410
    %vm3412 = vsmask.f32 6400
    %v3414 = vshrl.u32 %v3346, 16
    %v3416 = vrot.slane %v3414, 1
    %v3417 = vshll.u32 %v3346, 16
    %v3419 = vrot.slane %v3417, 2
    %v3420 = vor.u32 %v3416, %v3419
    %v3422 = vshrl.u32 %v3347, 16
    %v3424 = vrot.slane %v3422, 1
    %v3425 = vshll.u32 %v3347, 16
    %v3427 = vrot.slane %v3425, 2
    %v3428 = vor.u32 %v3424, %v3427
    %v3429 = vsel %vm3412, %v3420, %v3428
    %v3431 = vshrl.u32 %v3348, 16
    %v3433 = vrot.slane %v3431, 1
    %v3434 = vshll.u32 %v3348, 16
    %v3436 = vrot.slane %v3434, 2
    %v3437 = vor.u32 %v3433, %v3436
    %v3438 = vsel %vm3412, %v3428, %v3437
    %v3440 = vshrl.u32 %v3349, 16
    %v3442 = vrot.slane %v3440, 1
    %v3443 = vshll.u32 %v3349, 16
    %v3445 = vrot.slane %v3443, 2
    %v3446 = vor.u32 %v3442, %v3445
    %v3447 = vsel %vm3412, %v3437, %v3446
    %v3449 = vshrl.u32 %v3350, 16
    %v3451 = vrot.slane %v3449, 1
    %v3452 = vshll.u32 %v3350, 16
    %v3454 = vrot.slane %v3452, 2
    %v3455 = vor.u32 %v3451, %v3454
    %v3456 = vsel %vm3412, %v3446, %v3455
    %v3458 = vshrl.u32 %v3351, 16
    %v3460 = vrot.slane %v3458, 1
    %v3461 = vshll.u32 %v3351, 16
    %v3463 = vrot.slane %v3461, 2
    %v3464 = vor.u32 %v3460, %v3463
    %v3465 = vsel %vm3412, %v3455, %v3464
    %v3467 = vshrl.u32 %v3352, 16
    %v3469 = vrot.slane %v3467, 1
    %v3470 = vshll.u32 %v3352, 16
    %v3472 = vrot.slane %v3470, 2
    %v3473 = vor.u32 %v3469, %v3472
    %v3474 = vsel %vm3412, %v3464, %v3473
    %v3476 = vshrl.u32 %v3353, 16
    %v3478 = vrot.slane %v3476, 1
    %v3479 = vshll.u32 %v3353, 16
    %v3481 = vrot.slane %v3479, 2
    %v3482 = vor.u32 %v3478, %v3481
    %v3483 = vsel %vm3412, %v3473, %v3482
    %v3485 = vshrl.u32 %v3354, 16
    %v3487 = vrot.slane %v3485, 1
    %v3488 = vshll.u32 %v3354, 16
    %v3490 = vrot.slane %v3488, 2
    %v3491 = vor.u32 %v3487, %v3490
    %v3492 = vsel %vm3412, %v3482, %v3491
    %v3494 = vshrl.u32 %v3355, 16
    %v3496 = vrot.slane %v3494, 1
    %v3497 = vshll.u32 %v3355, 16
    %v3499 = vrot.slane %v3497, 2
    %v3500 = vor.u32 %v3496, %v3499
    %v3501 = vsel %vm3412, %v3491, %v3500
    %v3503 = vshrl.u32 %v3356, 16
    %v3505 = vrot.slane %v3503, 1
    %v3506 = vshll.u32 %v3356, 16
    %v3508 = vrot.slane %v3506, 2
    %v3509 = vor.u32 %v3505, %v3508
    %v3510 = vsel %vm3412, %v3500, %v3509
    %v3512 = vshrl.u32 %v3357, 16
    %v3514 = vrot.slane %v3512, 1
    %v3515 = vshll.u32 %v3357, 16
    %v3517 = vrot.slane %v3515, 2
    %v3518 = vor.u32 %v3514, %v3517
    %v3519 = vsel %vm3412, %v3509, %v3518
    %v3521 = vshrl.u32 %v3411, 16
    %v3523 = vrot.slane %v3521, 1
    %v3524 = vshll.u32 %v3411, 16
    %v3526 = vrot.slane %v3524, 2
    %v3527 = vor.u32 %v3523, %v3526
    %v3528 = vsel %vm3412, %v3518, %v3527
    %3529 = vrot.lane.b32.xlu0 %v3429, 96
    %v3530 = vpop.permute.xlu0 %3529
    %3531 = vrot.lane.b32.xlu0 %v3438, 96
    %v3532 = vpop.permute.xlu0 %3531
    %3533 = vrot.lane.b32.xlu0 %v3447, 96
    %v3534 = vpop.permute.xlu0 %3533
    %3535 = vrot.lane.b32.xlu0 %v3456, 96
    %v3536 = vpop.permute.xlu0 %3535
    %3537 = vrot.lane.b32.xlu0 %v3465, 96
    %v3538 = vpop.permute.xlu0 %3537
    %3539 = vrot.lane.b32.xlu0 %v3474, 96
    %v3540 = vpop.permute.xlu0 %3539
    %3541 = vrot.lane.b32.xlu0 %v3483, 96
    %v3542 = vpop.permute.xlu0 %3541
    %3543 = vrot.lane.b32.xlu0 %v3492, 96
    %v3544 = vpop.permute.xlu0 %3543
    %3545 = vrot.lane.b32.xlu0 %v3501, 96
    %v3546 = vpop.permute.xlu0 %3545
    %3547 = vrot.lane.b32.xlu0 %v3510, 96
    %v3548 = vpop.permute.xlu0 %3547
    %3549 = vrot.lane.b32.xlu0 %v3519, 96
    %v3550 = vpop.permute.xlu0 %3549
    %3551 = vrot.lane.b32.xlu0 %v3528, 96
    %v3552 = vpop.permute.xlu0 %3551
    %vm3553 = vcmask 261120
    %v3555 = vsel %vm3553, %v3200, %v3317
    %v3557 = vsel %vm3553, %v3201, %v3319
    %v3559 = vsel %vm3553, %v3202, %v3321
    %v3561 = vsel %vm3553, %v3203, %v3323
    %v3563 = vsel %vm3553, %v3204, %v3325
    %v3565 = vsel %vm3553, %v3205, %v3327
    %v3567 = vsel %vm3553, %v3206, %v3329
    %v3569 = vsel %vm3553, %v3207, %v3331
    %v3571 = vsel %vm3553, %v3208, %v3333
    %v3573 = vsel %vm3553, %v3209, %v3335
    %v3575 = vsel %vm3553, %v3210, %v3337
    %v3577 = vsel %vm3553, %v3211, %v3339
    %vm3578 = vcmask 523264
    %v3580 = vsel %vm3578, %v3555, %v3386
    %v3582 = vsel %vm3578, %v3557, %v3388
    %v3584 = vsel %vm3578, %v3559, %v3390
    %v3586 = vsel %vm3578, %v3561, %v3392
    %v3588 = vsel %vm3578, %v3563, %v3394
    %v3590 = vsel %vm3578, %v3565, %v3396
    %v3592 = vsel %vm3578, %v3567, %v3398
    %v3594 = vsel %vm3578, %v3569, %v3400
    %v3596 = vsel %vm3578, %v3571, %v3402
    %v3598 = vsel %vm3578, %v3573, %v3404
    %v3600 = vsel %vm3578, %v3575, %v3406
    %v3602 = vsel %vm3578, %v3577, %v3408
    %vm3603 = vcmask 785408
    %v3605 = vsel %vm3603, %v3580, %v3530
    %v3608 = vsel %vm3603, %v3582, %v3532
    %v3611 = vsel %vm3603, %v3584, %v3534
    %v3614 = vsel %vm3603, %v3586, %v3536
    %v3617 = vsel %vm3603, %v3588, %v3538
    %v3620 = vsel %vm3603, %v3590, %v3540
    %v3623 = vsel %vm3603, %v3592, %v3542
    %v3626 = vsel %vm3603, %v3594, %v3544
    %v3629 = vsel %vm3603, %v3596, %v3546
    %v3632 = vsel %vm3603, %v3598, %v3548
    %v3635 = vsel %vm3603, %v3600, %v3550
    %v3638 = vsel %vm3603, %v3602, %v3552
    %v3640 = vld [vmem:[%s3] sm:$0xf]
    %v3641 = vld [vmem:[%s3 + $0x4] sm:$0xf]
    %v3642 = vld [vmem:[%s3 + $0x8] sm:$0xf]
    %v3643 = vld [vmem:[%s3 + $0xc] sm:$0xf]
    %v3644 = vld [vmem:[%s3 + $0x10] sm:$0xf]
    %v3645 = vld [vmem:[%s3 + $0x14] sm:$0xf]
    %v3646 = vld [vmem:[%s3 + $0x18] sm:$0xf]
    %v3647 = vld [vmem:[%s3 + $0x1c] sm:$0xf]
    %v3648 = vld [vmem:[%s3 + $0x20] sm:$0xf]
    %v3649 = vld [vmem:[%s3 + $0x24] sm:$0xf]
    %v3650 = vld [vmem:[%s3 + $0x28] sm:$0xf]
    %v3651 = vld [vmem:[%s3 + $0x2c] sm:$0xf]
    %v3652 = vld [vmem:[%s3 + $0x30] sm:$0xf]
    %v3653 = vld [vmem:[%s3 + $0x34] sm:$0xf]
    %v3654 = vld [vmem:[%s3 + $0x38] sm:$0xf]
    %v3655 = vld [vmem:[%s3 + $0x3c] sm:$0xf]
    %v3656 = vld [vmem:[%s4] sm:$0x1]
    %v3658 = vperm.slane %v3656, 0
    %v3676 = vunpack.c.l.b16 %v3640
    %v3677 = vunpack.c.l.b16 %v3641
    %v3678 = vunpack.c.l.b16 %v3642
    %v3679 = vunpack.c.l.b16 %v3643
    %v3680 = vunpack.c.l.b16 %v3644
    %v3681 = vunpack.c.l.b16 %v3645
    %v3682 = vunpack.c.l.b16 %v3646
    %v3683 = vunpack.c.l.b16 %v3647
    %v3684 = vunpack.c.l.b16 %v3648
    %v3685 = vunpack.c.l.b16 %v3649
    %v3686 = vunpack.c.l.b16 %v3650
    %v3687 = vunpack.c.l.b16 %v3651
    %v3688 = vunpack.c.l.b16 %v3652
    %v3689 = vunpack.c.l.b16 %v3653
    %v3690 = vunpack.c.l.b16 %v3654
    %v3691 = vunpack.c.l.b16 %v3655
    %v3692 = vpack.c.b16 %v3677, %v3676
    %v3693 = vpack.c.b16 %v3679, %v3678
    %v3694 = vpack.c.b16 %v3681, %v3680
    %v3695 = vpack.c.b16 %v3683, %v3682
    %v3696 = vpack.c.b16 %v3685, %v3684
    %v3697 = vpack.c.b16 %v3687, %v3686
    %v3698 = vpack.c.b16 %v3689, %v3688
    %v3699 = vpack.c.b16 %v3691, %v3690
    %3708 = vmatpush.bf16.msra.mxu0 %v3699
    %3709 = vmatpush.bf16.msra.mxu0 %v3698
    %3710 = vmatpush.bf16.msra.mxu0 %v3697
    %3711 = vmatpush.bf16.msra.mxu0 %v3696
    %3712 = vmatpush.bf16.msra.mxu0 %v3695
    %3713 = vmatpush.bf16.msra.mxu0 %v3694
    %3714 = vmatpush.bf16.msra.mxu0 %v3693
    %3715 = vmatpush.bf16.msra.mxu0 %v3692
    %3716 = vmatmul.bf16.gmra.mxu0 %v3605
    %v3717 = vpop.f32.mrf.mxu0
    %v3718 = vadd.f32 %v3658, %v3717
    %v3719 = vpop.f32.mrf.mxu0
    %v3720 = vadd.f32 %v3658, %v3719
    %3721 = vmatmul.bf16.gmra.mxu0 %v3608
    %v3722 = vpop.f32.mrf.mxu0
    %v3723 = vadd.f32 %v3658, %v3722
    %v3724 = vpop.f32.mrf.mxu0
    %v3725 = vadd.f32 %v3658, %v3724
    %3726 = vmatmul.bf16.gmra.mxu0 %v3611
    %v3727 = vpop.f32.mrf.mxu0
    %v3728 = vadd.f32 %v3658, %v3727
    %v3729 = vpop.f32.mrf.mxu0
    %v3730 = vadd.f32 %v3658, %v3729
    %3731 = vmatmul.bf16.gmra.mxu0 %v3614
    %v3732 = vpop.f32.mrf.mxu0
    %v3733 = vadd.f32 %v3658, %v3732
    %v3734 = vpop.f32.mrf.mxu0
    %v3735 = vadd.f32 %v3658, %v3734
    %3736 = vmatmul.bf16.gmra.mxu0 %v3617
    %v3737 = vpop.f32.mrf.mxu0
    %v3738 = vadd.f32 %v3658, %v3737
    %v3739 = vpop.f32.mrf.mxu0
    %v3740 = vadd.f32 %v3658, %v3739
    %3741 = vmatmul.bf16.gmra.mxu0 %v3620
    %v3742 = vpop.f32.mrf.mxu0
    %v3743 = vadd.f32 %v3658, %v3742
    %v3744 = vpop.f32.mrf.mxu0
    %v3745 = vadd.f32 %v3658, %v3744
    %3746 = vmatmul.bf16.gmra.mxu0 %v3623
    %v3747 = vpop.f32.mrf.mxu0
    %v3748 = vadd.f32 %v3658, %v3747
    %v3749 = vpop.f32.mrf.mxu0
    %v3750 = vadd.f32 %v3658, %v3749
    %3751 = vmatmul.bf16.gmra.mxu0 %v3626
    %v3752 = vpop.f32.mrf.mxu0
    %v3753 = vadd.f32 %v3658, %v3752
    %v3754 = vpop.f32.mrf.mxu0
    %v3755 = vadd.f32 %v3658, %v3754
    %3756 = vmatmul.bf16.gmra.mxu0 %v3629
    %v3757 = vpop.f32.mrf.mxu0
    %v3758 = vadd.f32 %v3658, %v3757
    %v3759 = vpop.f32.mrf.mxu0
    %v3760 = vadd.f32 %v3658, %v3759
    %3761 = vmatmul.bf16.gmra.mxu0 %v3632
    %v3762 = vpop.f32.mrf.mxu0
    %v3763 = vadd.f32 %v3658, %v3762
    %v3764 = vpop.f32.mrf.mxu0
    %v3765 = vadd.f32 %v3658, %v3764
    %3766 = vmatmul.bf16.gmra.mxu0 %v3635
    %v3767 = vpop.f32.mrf.mxu0
    %v3768 = vadd.f32 %v3658, %v3767
    %v3769 = vpop.f32.mrf.mxu0
    %v3770 = vadd.f32 %v3658, %v3769
    %3771 = vmatmul.bf16.gmra.mxu0 %v3638
    %v3772 = vpop.f32.mrf.mxu0
    %v3773 = vadd.f32 %v3658, %v3772
    %v3774 = vpop.f32.mrf.mxu0
    %v3775 = vadd.f32 %v3658, %v3774
    %3776 = vdwg.mxu0
    %v3777 = vmax.f32 %v3718, 0.0
    %v3778 = vmax.f32 %v3720, 0.0
    %v3779 = vmax.f32 %v3723, 0.0
    %v3780 = vmax.f32 %v3725, 0.0
    %v3781 = vmax.f32 %v3728, 0.0
    %v3782 = vmax.f32 %v3730, 0.0
    %v3783 = vmax.f32 %v3733, 0.0
    %v3784 = vmax.f32 %v3735, 0.0
    %v3785 = vmax.f32 %v3738, 0.0
    %v3786 = vmax.f32 %v3740, 0.0
    %v3787 = vmax.f32 %v3743, 0.0
    %v3788 = vmax.f32 %v3745, 0.0
    %v3789 = vmax.f32 %v3748, 0.0
    %v3790 = vmax.f32 %v3750, 0.0
    %v3791 = vmax.f32 %v3753, 0.0
    %v3792 = vmax.f32 %v3755, 0.0
    %v3793 = vmax.f32 %v3758, 0.0
    %v3794 = vmax.f32 %v3760, 0.0
    %v3795 = vmax.f32 %v3763, 0.0
    %v3796 = vmax.f32 %v3765, 0.0
    %v3797 = vmax.f32 %v3768, 0.0
    %v3798 = vmax.f32 %v3770, 0.0
    %v3799 = vmax.f32 %v3773, 0.0
    %v3800 = vmax.f32 %v3775, 0.0
    %v3801 = vpack.c.bf16 %v3777, %v3777
    %v3802 = vpack.c.bf16 %v3778, %v3778
    %v3803 = vpack.c.bf16 %v3779, %v3779
    %v3804 = vpack.c.bf16 %v3780, %v3780
    %v3805 = vpack.c.bf16 %v3781, %v3781
    %v3806 = vpack.c.bf16 %v3782, %v3782
    %v3807 = vpack.c.bf16 %v3783, %v3783
    %v3808 = vpack.c.bf16 %v3784, %v3784
    %v3809 = vpack.c.bf16 %v3785, %v3785
    %v3810 = vpack.c.bf16 %v3786, %v3786
    %v3811 = vpack.c.bf16 %v3787, %v3787
    %v3812 = vpack.c.bf16 %v3788, %v3788
    %v3813 = vpack.c.bf16 %v3789, %v3789
    %v3814 = vpack.c.bf16 %v3790, %v3790
    %v3815 = vpack.c.bf16 %v3791, %v3791
    %v3816 = vpack.c.bf16 %v3792, %v3792
    %v3817 = vpack.c.bf16 %v3793, %v3793
    %v3818 = vpack.c.bf16 %v3794, %v3794
    %v3819 = vpack.c.bf16 %v3795, %v3795
    %v3820 = vpack.c.bf16 %v3796, %v3796
    %v3821 = vpack.c.bf16 %v3797, %v3797
    %v3822 = vpack.c.bf16 %v3798, %v3798
    %v3823 = vpack.c.bf16 %v3799, %v3799
    %v3824 = vpack.c.bf16 %v3800, %v3800
    %3825 = vst.msk [vmem:[#allocation3] sm:$0xf] %vm84, %v3801
    %3826 = vst.msk [vmem:[#allocation3 + $0x4] sm:$0xf] %vm84, %v3802
    %3827 = vst.msk [vmem:[#allocation3 + $0x8] sm:$0xf] %vm84, %v3803
    %3828 = vst.msk [vmem:[#allocation3 + $0xc] sm:$0xf] %vm84, %v3804
    %3829 = vst.msk [vmem:[#allocation3 + $0x10] sm:$0xf] %vm84, %v3805
    %3830 = vst.msk [vmem:[#allocation3 + $0x14] sm:$0xf] %vm84, %v3806
    %3831 = vst.msk [vmem:[#allocation3 + $0x18] sm:$0xf] %vm84, %v3807
    %3832 = vst.msk [vmem:[#allocation3 + $0x1c] sm:$0xf] %vm84, %v3808
    %3833 = vst.msk [vmem:[#allocation3 + $0x20] sm:$0xf] %vm84, %v3809
    %3834 = vst.msk [vmem:[#allocation3 + $0x24] sm:$0xf] %vm84, %v3810
    %3835 = vst.msk [vmem:[#allocation3 + $0x28] sm:$0xf] %vm84, %v3811
    %3836 = vst.msk [vmem:[#allocation3 + $0x2c] sm:$0xf] %vm84, %v3812
    %3837 = vst.msk [vmem:[#allocation3 + $0x30] sm:$0xf] %vm84, %v3813
    %3838 = vst.msk [vmem:[#allocation3 + $0x34] sm:$0xf] %vm84, %v3814
    %3839 = vst.msk [vmem:[#allocation3 + $0x38] sm:$0xf] %vm84, %v3815
    %3840 = vst.msk [vmem:[#allocation3 + $0x3c] sm:$0xf] %vm84, %v3816
    %3841 = vst.msk [vmem:[#allocation3 + $0x40] sm:$0xf] %vm84, %v3817
    %3842 = vst.msk [vmem:[#allocation3 + $0x44] sm:$0xf] %vm84, %v3818
    %3843 = vst.msk [vmem:[#allocation3 + $0x48] sm:$0xf] %vm84, %v3819
    %3844 = vst.msk [vmem:[#allocation3 + $0x4c] sm:$0xf] %vm84, %v3820
    %3845 = vst.msk [vmem:[#allocation3 + $0x50] sm:$0xf] %vm84, %v3821
    %3846 = vst.msk [vmem:[#allocation3 + $0x54] sm:$0xf] %vm84, %v3822
    %3847 = vst.msk [vmem:[#allocation3 + $0x58] sm:$0xf] %vm84, %v3823
    %3848 = vst.msk [vmem:[#allocation3 + $0x5c] sm:$0xf] %vm84, %v3824
    %v3849 = vld [vmem:[#allocation3] sm:$0xf]
    %v3850 = vld [vmem:[#allocation3 + $0x4] sm:$0xf]
    %v3851 = vld [vmem:[#allocation3 + $0x8] sm:$0xf]
    %v3852 = vld [vmem:[#allocation3 + $0xc] sm:$0xf]
    %v3853 = vld [vmem:[#allocation3 + $0x10] sm:$0xf]
    %v3854 = vld [vmem:[#allocation3 + $0x14] sm:$0xf]
    %v3855 = vld [vmem:[#allocation3 + $0x18] sm:$0xf]
    %v3856 = vld [vmem:[#allocation3 + $0x1c] sm:$0xf]
    %v3857 = vld [vmem:[#allocation3 + $0x20] sm:$0xf]
    %v3858 = vld [vmem:[#allocation3 + $0x24] sm:$0xf]
    %v3859 = vld [vmem:[#allocation3 + $0x28] sm:$0xf]
    %v3860 = vld [vmem:[#allocation3 + $0x2c] sm:$0xf]
    %v3861 = vld [vmem:[#allocation3 + $0x30] sm:$0xf]
    %v3862 = vld [vmem:[#allocation3 + $0x34] sm:$0xf]
    %v3863 = vld [vmem:[#allocation3 + $0x38] sm:$0xf]
    %v3864 = vld [vmem:[#allocation3 + $0x3c] sm:$0xf]
    %v3865 = vld [vmem:[#allocation3 + $0x40] sm:$0xf]
    %v3866 = vld [vmem:[#allocation3 + $0x44] sm:$0xf]
    %v3867 = vld [vmem:[#allocation3 + $0x48] sm:$0xf]
    %v3868 = vld [vmem:[#allocation3 + $0x4c] sm:$0xf]
    %v3869 = vld [vmem:[#allocation3 + $0x50] sm:$0xf]
    %v3870 = vld [vmem:[#allocation3 + $0x54] sm:$0xf]
    %v3871 = vld [vmem:[#allocation3 + $0x58] sm:$0xf]
    %v3872 = vld [vmem:[#allocation3 + $0x5c] sm:$0xf]
    %v3873 = vld [vmem:[#allocation3 + $0x60] sm:$0x1]
    %v3874 = vld [vmem:[#allocation3 + $0x4] sm:$0xe]
    %v3875 = vld [vmem:[#allocation3 + $0x60] sm:$0xf]
    %v3876 = vld [vmem:[#allocation3 + $0x64] sm:$0x1]
    %v3877 = vld [vmem:[#allocation3 + $0x64] sm:$0x3]
    %v3902 = vunpack.c.l.b16 %v3849
    %v3903 = vunpack.c.l.b16 %v3850
    %v3904 = vunpack.c.l.b16 %v3851
    %v3905 = vunpack.c.l.b16 %v3852
    %v3906 = vunpack.c.l.b16 %v3853
    %v3907 = vunpack.c.l.b16 %v3854
    %v3908 = vunpack.c.l.b16 %v3855
    %v3909 = vunpack.c.l.b16 %v3856
    %v3910 = vunpack.c.l.b16 %v3857
    %v3911 = vunpack.c.l.b16 %v3858
    %v3912 = vunpack.c.l.b16 %v3859
    %v3913 = vunpack.c.l.b16 %v3860
    %v3914 = vunpack.c.l.b16 %v3861
    %v3915 = vunpack.c.l.b16 %v3862
    %v3916 = vunpack.c.l.b16 %v3863
    %v3917 = vunpack.c.l.b16 %v3864
    %v3918 = vunpack.c.l.b16 %v3865
    %v3919 = vunpack.c.l.b16 %v3866
    %v3920 = vunpack.c.l.b16 %v3867
    %v3921 = vunpack.c.l.b16 %v3868
    %v3922 = vunpack.c.l.b16 %v3869
    %v3923 = vunpack.c.l.b16 %v3870
    %v3924 = vunpack.c.l.b16 %v3871
    %v3925 = vunpack.c.l.b16 %v3872
    %v3926 = vpack.c.b16 %v3903, %v3902
    %v3927 = vpack.c.b16 %v3905, %v3904
    %v3928 = vpack.c.b16 %v3907, %v3906
    %v3929 = vpack.c.b16 %v3909, %v3908
    %v3930 = vpack.c.b16 %v3911, %v3910
    %v3931 = vpack.c.b16 %v3913, %v3912
    %v3932 = vpack.c.b16 %v3915, %v3914
    %v3933 = vpack.c.b16 %v3917, %v3916
    %v3934 = vpack.c.b16 %v3919, %v3918
    %v3935 = vpack.c.b16 %v3921, %v3920
    %v3936 = vpack.c.b16 %v3923, %v3922
    %v3937 = vpack.c.b16 %v3925, %v3924
    %v3939 = vunpack.c.l.b16 %v3873
    %v3940 = vpack.c.b16 %v3939, %v3939
    %v3942 = vshrl.u32 %v3926, 16
    %v3944 = vshll.u32 %v3926, 16
    %v3946 = vrot.slane %v3944, 1
    %v3947 = vor.u32 %v3942, %v3946
    %v3949 = vshll.u32 %v3927, 16
    %v3951 = vrot.slane %v3949, 1
    %v3952 = vsel %vm3215, %v3947, %v3951
    %v3953 = vshrl.u32 %v3927, 16
    %v3955 = vor.u32 %v3953, %v3951
    %v3957 = vshll.u32 %v3928, 16
    %v3959 = vrot.slane %v3957, 1
    %v3960 = vsel %vm3215, %v3955, %v3959
    %v3961 = vshrl.u32 %v3928, 16
    %v3963 = vor.u32 %v3961, %v3959
    %v3965 = vshll.u32 %v3929, 16
    %v3967 = vrot.slane %v3965, 1
    %v3968 = vsel %vm3215, %v3963, %v3967
    %v3969 = vshrl.u32 %v3929, 16
    %v3971 = vor.u32 %v3969, %v3967
    %v3973 = vshll.u32 %v3930, 16
    %v3975 = vrot.slane %v3973, 1
    %v3976 = vsel %vm3215, %v3971, %v3975
    %v3977 = vshrl.u32 %v3930, 16
    %v3979 = vor.u32 %v3977, %v3975
    %v3981 = vshll.u32 %v3931, 16
    %v3983 = vrot.slane %v3981, 1
    %v3984 = vsel %vm3215, %v3979, %v3983
    %v3985 = vshrl.u32 %v3931, 16
    %v3987 = vor.u32 %v3985, %v3983
    %v3989 = vshll.u32 %v3932, 16
    %v3991 = vrot.slane %v3989, 1
    %v3992 = vsel %vm3215, %v3987, %v3991
    %v3993 = vshrl.u32 %v3932, 16
    %v3995 = vor.u32 %v3993, %v3991
    %v3997 = vshll.u32 %v3933, 16
    %v3999 = vrot.slane %v3997, 1
    %v4000 = vsel %vm3215, %v3995, %v3999
    %v4001 = vshrl.u32 %v3933, 16
    %v4003 = vor.u32 %v4001, %v3999
    %v4005 = vshll.u32 %v3934, 16
    %v4007 = vrot.slane %v4005, 1
    %v4008 = vsel %vm3215, %v4003, %v4007
    %v4009 = vshrl.u32 %v3934, 16
    %v4011 = vor.u32 %v4009, %v4007
    %v4013 = vshll.u32 %v3935, 16
    %v4015 = vrot.slane %v4013, 1
    %v4016 = vsel %vm3215, %v4011, %v4015
    %v4017 = vshrl.u32 %v3935, 16
    %v4019 = vor.u32 %v4017, %v4015
    %v4021 = vshll.u32 %v3936, 16
    %v4023 = vrot.slane %v4021, 1
    %v4024 = vsel %vm3215, %v4019, %v4023
    %v4025 = vshrl.u32 %v3936, 16
    %v4027 = vor.u32 %v4025, %v4023
    %v4029 = vshll.u32 %v3937, 16
    %v4031 = vrot.slane %v4029, 1
    %v4032 = vsel %vm3215, %v4027, %v4031
    %v4033 = vshrl.u32 %v3937, 16
    %v4035 = vor.u32 %v4033, %v4031
    %v4037 = vshll.u32 %v3940, 16
    %v4039 = vrot.slane %v4037, 1
    %v4040 = vsel %vm3215, %v4035, %v4039
    %4041 = vrot.lane.b32.xlu0 %v3952, 64
    %v4042 = vpop.permute.xlu0 %4041
    %4043 = vrot.lane.b32.xlu0 %v3960, 64
    %v4044 = vpop.permute.xlu0 %4043
    %4045 = vrot.lane.b32.xlu0 %v3968, 64
    %v4046 = vpop.permute.xlu0 %4045
    %4047 = vrot.lane.b32.xlu0 %v3976, 64
    %v4048 = vpop.permute.xlu0 %4047
    %4049 = vrot.lane.b32.xlu0 %v3984, 64
    %v4050 = vpop.permute.xlu0 %4049
    %4051 = vrot.lane.b32.xlu0 %v3992, 64
    %v4052 = vpop.permute.xlu0 %4051
    %4053 = vrot.lane.b32.xlu0 %v4000, 64
    %v4054 = vpop.permute.xlu0 %4053
    %4055 = vrot.lane.b32.xlu0 %v4008, 64
    %v4056 = vpop.permute.xlu0 %4055
    %4057 = vrot.lane.b32.xlu0 %v4016, 64
    %v4058 = vpop.permute.xlu0 %4057
    %4059 = vrot.lane.b32.xlu0 %v4024, 64
    %v4060 = vpop.permute.xlu0 %4059
    %4061 = vrot.lane.b32.xlu0 %v4032, 64
    %v4062 = vpop.permute.xlu0 %4061
    %4063 = vrot.lane.b32.xlu0 %v4040, 64
    %v4064 = vpop.permute.xlu0 %4063
    %v4068 = vunpack.c.l.b16 %v3874
    %v4069 = vunpack.c.l.b16 %v3875
    %v4070 = vunpack.c.l.b16 %v3876
    %v4071 = vpack.c.b16 %v3904, %v4068
    %v4072 = vpack.c.b16 %v3906, %v3905
    %v4073 = vpack.c.b16 %v3908, %v3907
    %v4074 = vpack.c.b16 %v3910, %v3909
    %v4075 = vpack.c.b16 %v3912, %v3911
    %v4076 = vpack.c.b16 %v3914, %v3913
    %v4077 = vpack.c.b16 %v3916, %v3915
    %v4078 = vpack.c.b16 %v3918, %v3917
    %v4079 = vpack.c.b16 %v3920, %v3919
    %v4080 = vpack.c.b16 %v3922, %v3921
    %v4081 = vpack.c.b16 %v3924, %v3923
    %v4082 = vpack.c.b16 %v4069, %v3925
    %v4083 = vpack.c.b16 %v4070, %v4070
    %v4084 = vrot.slane %v4071, 1
    %v4085 = vrot.slane %v4072, 1
    %v4086 = vsel %vm3359, %v4084, %v4085
    %v4087 = vrot.slane %v4073, 1
    %v4088 = vsel %vm3359, %v4085, %v4087
    %v4089 = vrot.slane %v4074, 1
    %v4090 = vsel %vm3359, %v4087, %v4089
    %v4091 = vrot.slane %v4075, 1
    %v4092 = vsel %vm3359, %v4089, %v4091
    %v4093 = vrot.slane %v4076, 1
    %v4094 = vsel %vm3359, %v4091, %v4093
    %v4095 = vrot.slane %v4077, 1
    %v4096 = vsel %vm3359, %v4093, %v4095
    %v4097 = vrot.slane %v4078, 1
    %v4098 = vsel %vm3359, %v4095, %v4097
    %v4099 = vrot.slane %v4079, 1
    %v4100 = vsel %vm3359, %v4097, %v4099
    %v4101 = vrot.slane %v4080, 1
    %v4102 = vsel %vm3359, %v4099, %v4101
    %v4103 = vrot.slane %v4081, 1
    %v4104 = vsel %vm3359, %v4101, %v4103
    %v4105 = vrot.slane %v4082, 1
    %v4106 = vsel %vm3359, %v4103, %v4105
    %v4107 = vrot.slane %v4083, 1
    %v4108 = vsel %vm3359, %v4105, %v4107
    %v4110 = vunpack.c.l.b16 %v3877
    %v4111 = vpack.c.b16 %v4110, %v4110
    %v4113 = vshrl.u32 %v4071, 16
    %v4115 = vrot.slane %v4113, 1
    %v4116 = vshll.u32 %v4071, 16
    %v4118 = vrot.slane %v4116, 2
    %v4119 = vor.u32 %v4115, %v4118
    %v4121 = vshrl.u32 %v4072, 16
    %v4123 = vrot.slane %v4121, 1
    %v4124 = vshll.u32 %v4072, 16
    %v4126 = vrot.slane %v4124, 2
    %v4127 = vor.u32 %v4123, %v4126
    %v4128 = vsel %vm3412, %v4119, %v4127
    %v4130 = vshrl.u32 %v4073, 16
    %v4132 = vrot.slane %v4130, 1
    %v4133 = vshll.u32 %v4073, 16
    %v4135 = vrot.slane %v4133, 2
    %v4136 = vor.u32 %v4132, %v4135
    %v4137 = vsel %vm3412, %v4127, %v4136
    %v4139 = vshrl.u32 %v4074, 16
    %v4141 = vrot.slane %v4139, 1
    %v4142 = vshll.u32 %v4074, 16
    %v4144 = vrot.slane %v4142, 2
    %v4145 = vor.u32 %v4141, %v4144
    %v4146 = vsel %vm3412, %v4136, %v4145
    %v4148 = vshrl.u32 %v4075, 16
    %v4150 = vrot.slane %v4148, 1
    %v4151 = vshll.u32 %v4075, 16
    %v4153 = vrot.slane %v4151, 2
    %v4154 = vor.u32 %v4150, %v4153
    %v4155 = vsel %vm3412, %v4145, %v4154
    %v4157 = vshrl.u32 %v4076, 16
    %v4159 = vrot.slane %v4157, 1
    %v4160 = vshll.u32 %v4076, 16
    %v4162 = vrot.slane %v4160, 2
    %v4163 = vor.u32 %v4159, %v4162
    %v4164 = vsel %vm3412, %v4154, %v4163
    %v4166 = vshrl.u32 %v4077, 16
    %v4168 = vrot.slane %v4166, 1
    %v4169 = vshll.u32 %v4077, 16
    %v4171 = vrot.slane %v4169, 2
    %v4172 = vor.u32 %v4168, %v4171
    %v4173 = vsel %vm3412, %v4163, %v4172
    %v4175 = vshrl.u32 %v4078, 16
    %v4177 = vrot.slane %v4175, 1
    %v4178 = vshll.u32 %v4078, 16
    %v4180 = vrot.slane %v4178, 2
    %v4181 = vor.u32 %v4177, %v4180
    %v4182 = vsel %vm3412, %v4172, %v4181
    %v4184 = vshrl.u32 %v4079, 16
    %v4186 = vrot.slane %v4184, 1
    %v4187 = vshll.u32 %v4079, 16
    %v4189 = vrot.slane %v4187, 2
    %v4190 = vor.u32 %v4186, %v4189
    %v4191 = vsel %vm3412, %v4181, %v4190
    %v4193 = vshrl.u32 %v4080, 16
    %v4195 = vrot.slane %v4193, 1
    %v4196 = vshll.u32 %v4080, 16
    %v4198 = vrot.slane %v4196, 2
    %v4199 = vor.u32 %v4195, %v4198
    %v4200 = vsel %vm3412, %v4190, %v4199
    %v4202 = vshrl.u32 %v4081, 16
    %v4204 = vrot.slane %v4202, 1
    %v4205 = vshll.u32 %v4081, 16
    %v4207 = vrot.slane %v4205, 2
    %v4208 = vor.u32 %v4204, %v4207
    %v4209 = vsel %vm3412, %v4199, %v4208
    %v4211 = vshrl.u32 %v4082, 16
    %v4213 = vrot.slane %v4211, 1
    %v4214 = vshll.u32 %v4082, 16
    %v4216 = vrot.slane %v4214, 2
    %v4217 = vor.u32 %v4213, %v4216
    %v4218 = vsel %vm3412, %v4208, %v4217
    %v4220 = vshrl.u32 %v4111, 16
    %v4222 = vrot.slane %v4220, 1
    %v4223 = vshll.u32 %v4111, 16
    %v4225 = vrot.slane %v4223, 2
    %v4226 = vor.u32 %v4222, %v4225
    %v4227 = vsel %vm3412, %v4217, %v4226
    %4228 = vrot.lane.b32.xlu0 %v4128, 64
    %v4229 = vpop.permute.xlu0 %4228
    %4230 = vrot.lane.b32.xlu0 %v4137, 64
    %v4231 = vpop.permute.xlu0 %4230
    %4232 = vrot.lane.b32.xlu0 %v4146, 64
    %v4233 = vpop.permute.xlu0 %4232
    %4234 = vrot.lane.b32.xlu0 %v4155, 64
    %v4235 = vpop.permute.xlu0 %4234
    %4236 = vrot.lane.b32.xlu0 %v4164, 64
    %v4237 = vpop.permute.xlu0 %4236
    %4238 = vrot.lane.b32.xlu0 %v4173, 64
    %v4239 = vpop.permute.xlu0 %4238
    %4240 = vrot.lane.b32.xlu0 %v4182, 64
    %v4241 = vpop.permute.xlu0 %4240
    %4242 = vrot.lane.b32.xlu0 %v4191, 64
    %v4243 = vpop.permute.xlu0 %4242
    %4244 = vrot.lane.b32.xlu0 %v4200, 64
    %v4245 = vpop.permute.xlu0 %4244
    %4246 = vrot.lane.b32.xlu0 %v4209, 64
    %v4247 = vpop.permute.xlu0 %4246
    %4248 = vrot.lane.b32.xlu0 %v4218, 64
    %v4249 = vpop.permute.xlu0 %4248
    %4250 = vrot.lane.b32.xlu0 %v4227, 64
    %v4251 = vpop.permute.xlu0 %4250
    %v4253 = vsel %vm3578, %v3926, %v4042
    %v4256 = vsel %vm3578, %v3927, %v4044
    %v4259 = vsel %vm3578, %v3928, %v4046
    %v4262 = vsel %vm3578, %v3929, %v4048
    %v4265 = vsel %vm3578, %v3930, %v4050
    %v4268 = vsel %vm3578, %v3931, %v4052
    %v4271 = vsel %vm3578, %v3932, %v4054
    %v4274 = vsel %vm3578, %v3933, %v4056
    %v4277 = vsel %vm3578, %v3934, %v4058
    %v4280 = vsel %vm3578, %v3935, %v4060
    %v4283 = vsel %vm3578, %v3936, %v4062
    %v4286 = vsel %vm3578, %v3937, %v4064
    %v4290 = vsel %vm3578, %v4086, %v4229
    %v4294 = vsel %vm3578, %v4088, %v4231
    %v4298 = vsel %vm3578, %v4090, %v4233
    %v4302 = vsel %vm3578, %v4092, %v4235
    %v4306 = vsel %vm3578, %v4094, %v4237
    %v4310 = vsel %vm3578, %v4096, %v4239
    %v4314 = vsel %vm3578, %v4098, %v4241
    %v4318 = vsel %vm3578, %v4100, %v4243
    %v4322 = vsel %vm3578, %v4102, %v4245
    %v4326 = vsel %vm3578, %v4104, %v4247
    %v4330 = vsel %vm3578, %v4106, %v4249
    %v4334 = vsel %vm3578, %v4108, %v4251
    %v4336 = vld [vmem:[%s5] sm:$0xf]
    %v4337 = vld [vmem:[%s5 + $0x4] sm:$0xf]
    %v4338 = vld [vmem:[%s5 + $0x8] sm:$0xf]
    %v4339 = vld [vmem:[%s5 + $0xc] sm:$0xf]
    %v4340 = vld [vmem:[%s5 + $0x10] sm:$0xf]
    %v4341 = vld [vmem:[%s5 + $0x14] sm:$0xf]
    %v4342 = vld [vmem:[%s5 + $0x18] sm:$0xf]
    %v4343 = vld [vmem:[%s5 + $0x1c] sm:$0xf]
    %v4344 = vld [vmem:[%s5 + $0x20] sm:$0xf]
    %v4345 = vld [vmem:[%s5 + $0x24] sm:$0xf]
    %v4346 = vld [vmem:[%s5 + $0x28] sm:$0xf]
    %v4347 = vld [vmem:[%s5 + $0x2c] sm:$0xf]
    %v4348 = vld [vmem:[%s5 + $0x30] sm:$0xf]
    %v4349 = vld [vmem:[%s5 + $0x34] sm:$0xf]
    %v4350 = vld [vmem:[%s5 + $0x38] sm:$0xf]
    %v4351 = vld [vmem:[%s5 + $0x3c] sm:$0xf]
    %v4352 = vld [vmem:[%s5 + $0x40] sm:$0xf]
    %v4353 = vld [vmem:[%s5 + $0x44] sm:$0xf]
    %v4354 = vld [vmem:[%s5 + $0x48] sm:$0xf]
    %v4355 = vld [vmem:[%s5 + $0x4c] sm:$0xf]
    %v4356 = vld [vmem:[%s5 + $0x50] sm:$0xf]
    %v4357 = vld [vmem:[%s5 + $0x54] sm:$0xf]
    %v4358 = vld [vmem:[%s5 + $0x58] sm:$0xf]
    %v4359 = vld [vmem:[%s5 + $0x5c] sm:$0xf]
    %v4360 = vld [vmem:[%s5 + $0x60] sm:$0xf]
    %v4361 = vld [vmem:[%s5 + $0x64] sm:$0xf]
    %v4362 = vld [vmem:[%s5 + $0x68] sm:$0xf]
    %v4363 = vld [vmem:[%s5 + $0x6c] sm:$0xf]
    %v4364 = vld [vmem:[%s5 + $0x70] sm:$0xf]
    %v4365 = vld [vmem:[%s5 + $0x74] sm:$0xf]
    %v4366 = vld [vmem:[%s5 + $0x78] sm:$0xf]
    %v4367 = vld [vmem:[%s5 + $0x7c] sm:$0xf]
    %v4368 = vld [vmem:[%s6] sm:$0x1]
    %v4370 = vperm.slane %v4368, 0
    %v4404 = vunpack.c.l.b16 %v4336
    %v4405 = vunpack.c.l.b16 %v4337
    %v4406 = vunpack.c.l.b16 %v4338
    %v4407 = vunpack.c.l.b16 %v4339
    %v4408 = vunpack.c.l.b16 %v4340
    %v4409 = vunpack.c.l.b16 %v4341
    %v4410 = vunpack.c.l.b16 %v4342
    %v4411 = vunpack.c.l.b16 %v4343
    %v4412 = vunpack.c.l.b16 %v4344
    %v4413 = vunpack.c.l.b16 %v4345
    %v4414 = vunpack.c.l.b16 %v4346
    %v4415 = vunpack.c.l.b16 %v4347
    %v4416 = vunpack.c.l.b16 %v4348
    %v4417 = vunpack.c.l.b16 %v4349
    %v4418 = vunpack.c.l.b16 %v4350
    %v4419 = vunpack.c.l.b16 %v4351
    %v4420 = vunpack.c.l.b16 %v4352
    %v4421 = vunpack.c.l.b16 %v4353
    %v4422 = vunpack.c.l.b16 %v4354
    %v4423 = vunpack.c.l.b16 %v4355
    %v4424 = vunpack.c.l.b16 %v4356
    %v4425 = vunpack.c.l.b16 %v4357
    %v4426 = vunpack.c.l.b16 %v4358
    %v4427 = vunpack.c.l.b16 %v4359
    %v4428 = vunpack.c.l.b16 %v4360
    %v4429 = vunpack.c.l.b16 %v4361
    %v4430 = vunpack.c.l.b16 %v4362
    %v4431 = vunpack.c.l.b16 %v4363
    %v4432 = vunpack.c.l.b16 %v4364
    %v4433 = vunpack.c.l.b16 %v4365
    %v4434 = vunpack.c.l.b16 %v4366
    %v4435 = vunpack.c.l.b16 %v4367
    %v4436 = vpack.c.b16 %v4405, %v4404
    %v4437 = vpack.c.b16 %v4407, %v4406
    %v4438 = vpack.c.b16 %v4409, %v4408
    %v4439 = vpack.c.b16 %v4411, %v4410
    %v4440 = vpack.c.b16 %v4413, %v4412
    %v4441 = vpack.c.b16 %v4415, %v4414
    %v4442 = vpack.c.b16 %v4417, %v4416
    %v4443 = vpack.c.b16 %v4419, %v4418
    %v4444 = vpack.c.b16 %v4421, %v4420
    %v4445 = vpack.c.b16 %v4423, %v4422
    %v4446 = vpack.c.b16 %v4425, %v4424
    %v4447 = vpack.c.b16 %v4427, %v4426
    %v4448 = vpack.c.b16 %v4429, %v4428
    %v4449 = vpack.c.b16 %v4431, %v4430
    %v4450 = vpack.c.b16 %v4433, %v4432
    %v4451 = vpack.c.b16 %v4435, %v4434
    %4468 = vmatpush.bf16.msra.mxu0 %v4443
    %4469 = vmatpush.bf16.msra.mxu0 %v4442
    %4470 = vmatpush.bf16.msra.mxu0 %v4441
    %4471 = vmatpush.bf16.msra.mxu0 %v4440
    %4472 = vmatpush.bf16.msra.mxu0 %v4439
    %4473 = vmatpush.bf16.msra.mxu0 %v4438
    %4474 = vmatpush.bf16.msra.mxu0 %v4437
    %4475 = vmatpush.bf16.msra.mxu0 %v4436
    %4476 = vmatmul.bf16.gmra.mxu0 %v4253
    %v4477 = vpop.f32.mrf.mxu0
    %v4478 = vadd.f32 %v4370, %v4477
    %v4479 = vpop.f32.mrf.mxu0
    %v4480 = vadd.f32 %v4370, %v4479
    %4481 = vmatmul.bf16.gmra.mxu0 %v4256
    %v4482 = vpop.f32.mrf.mxu0
    %v4483 = vadd.f32 %v4370, %v4482
    %v4484 = vpop.f32.mrf.mxu0
    %v4485 = vadd.f32 %v4370, %v4484
    %4486 = vmatmul.bf16.gmra.mxu0 %v4259
    %v4487 = vpop.f32.mrf.mxu0
    %v4488 = vadd.f32 %v4370, %v4487
    %v4489 = vpop.f32.mrf.mxu0
    %v4490 = vadd.f32 %v4370, %v4489
    %4491 = vmatmul.bf16.gmra.mxu0 %v4262
    %v4492 = vpop.f32.mrf.mxu0
    %v4493 = vadd.f32 %v4370, %v4492
    %v4494 = vpop.f32.mrf.mxu0
    %v4495 = vadd.f32 %v4370, %v4494
    %4496 = vmatmul.bf16.gmra.mxu0 %v4265
    %v4497 = vpop.f32.mrf.mxu0
    %v4498 = vadd.f32 %v4370, %v4497
    %v4499 = vpop.f32.mrf.mxu0
    %v4500 = vadd.f32 %v4370, %v4499
    %4501 = vmatmul.bf16.gmra.mxu0 %v4268
    %v4502 = vpop.f32.mrf.mxu0
    %v4503 = vadd.f32 %v4370, %v4502
    %v4504 = vpop.f32.mrf.mxu0
    %v4505 = vadd.f32 %v4370, %v4504
    %4506 = vmatmul.bf16.gmra.mxu0 %v4271
    %v4507 = vpop.f32.mrf.mxu0
    %v4508 = vadd.f32 %v4370, %v4507
    %v4509 = vpop.f32.mrf.mxu0
    %v4510 = vadd.f32 %v4370, %v4509
    %4511 = vmatmul.bf16.gmra.mxu0 %v4274
    %v4512 = vpop.f32.mrf.mxu0
    %v4513 = vadd.f32 %v4370, %v4512
    %v4514 = vpop.f32.mrf.mxu0
    %v4515 = vadd.f32 %v4370, %v4514
    %4516 = vmatmul.bf16.gmra.mxu0 %v4277
    %v4517 = vpop.f32.mrf.mxu0
    %v4518 = vadd.f32 %v4370, %v4517
    %v4519 = vpop.f32.mrf.mxu0
    %v4520 = vadd.f32 %v4370, %v4519
    %4521 = vmatmul.bf16.gmra.mxu0 %v4280
    %v4522 = vpop.f32.mrf.mxu0
    %v4523 = vadd.f32 %v4370, %v4522
    %v4524 = vpop.f32.mrf.mxu0
    %v4525 = vadd.f32 %v4370, %v4524
    %4526 = vmatmul.bf16.gmra.mxu0 %v4283
    %v4527 = vpop.f32.mrf.mxu0
    %v4528 = vadd.f32 %v4370, %v4527
    %v4529 = vpop.f32.mrf.mxu0
    %v4530 = vadd.f32 %v4370, %v4529
    %4531 = vmatmul.bf16.gmra.mxu0 %v4286
    %v4532 = vpop.f32.mrf.mxu0
    %v4533 = vadd.f32 %v4370, %v4532
    %v4534 = vpop.f32.mrf.mxu0
    %v4535 = vadd.f32 %v4370, %v4534
    %4536 = vdwg.mxu0
    %4537 = vmatpush.bf16.msra.mxu0 %v4451
    %4538 = vmatpush.bf16.msra.mxu0 %v4450
    %4539 = vmatpush.bf16.msra.mxu0 %v4449
    %4540 = vmatpush.bf16.msra.mxu0 %v4448
    %4541 = vmatpush.bf16.msra.mxu0 %v4447
    %4542 = vmatpush.bf16.msra.mxu0 %v4446
    %4543 = vmatpush.bf16.msra.mxu0 %v4445
    %4544 = vmatpush.bf16.msra.mxu0 %v4444
    %4545 = vmatmul.bf16.gmra.mxu0 %v4290
    %v4546 = vpop.f32.mrf.mxu0
    %v4547 = vadd.f32 %v4478, %v4546
    %v4548 = vpop.f32.mrf.mxu0
    %v4549 = vadd.f32 %v4480, %v4548
    %4550 = vmatmul.bf16.gmra.mxu0 %v4294
    %v4551 = vpop.f32.mrf.mxu0
    %v4552 = vadd.f32 %v4483, %v4551
    %v4553 = vpop.f32.mrf.mxu0
    %v4554 = vadd.f32 %v4485, %v4553
    %4555 = vmatmul.bf16.gmra.mxu0 %v4298
    %v4556 = vpop.f32.mrf.mxu0
    %v4557 = vadd.f32 %v4488, %v4556
    %v4558 = vpop.f32.mrf.mxu0
    %v4559 = vadd.f32 %v4490, %v4558
    %4560 = vmatmul.bf16.gmra.mxu0 %v4302
    %v4561 = vpop.f32.mrf.mxu0
    %v4562 = vadd.f32 %v4493, %v4561
    %v4563 = vpop.f32.mrf.mxu0
    %v4564 = vadd.f32 %v4495, %v4563
    %4565 = vmatmul.bf16.gmra.mxu0 %v4306
    %v4566 = vpop.f32.mrf.mxu0
    %v4567 = vadd.f32 %v4498, %v4566
    %v4568 = vpop.f32.mrf.mxu0
    %v4569 = vadd.f32 %v4500, %v4568
    %4570 = vmatmul.bf16.gmra.mxu0 %v4310
    %v4571 = vpop.f32.mrf.mxu0
    %v4572 = vadd.f32 %v4503, %v4571
    %v4573 = vpop.f32.mrf.mxu0
    %v4574 = vadd.f32 %v4505, %v4573
    %4575 = vmatmul.bf16.gmra.mxu0 %v4314
    %v4576 = vpop.f32.mrf.mxu0
    %v4577 = vadd.f32 %v4508, %v4576
    %v4578 = vpop.f32.mrf.mxu0
    %v4579 = vadd.f32 %v4510, %v4578
    %4580 = vmatmul.bf16.gmra.mxu0 %v4318
    %v4581 = vpop.f32.mrf.mxu0
    %v4582 = vadd.f32 %v4513, %v4581
    %v4583 = vpop.f32.mrf.mxu0
    %v4584 = vadd.f32 %v4515, %v4583
    %4585 = vmatmul.bf16.gmra.mxu0 %v4322
    %v4586 = vpop.f32.mrf.mxu0
    %v4587 = vadd.f32 %v4518, %v4586
    %v4588 = vpop.f32.mrf.mxu0
    %v4589 = vadd.f32 %v4520, %v4588
    %4590 = vmatmul.bf16.gmra.mxu0 %v4326
    %v4591 = vpop.f32.mrf.mxu0
    %v4592 = vadd.f32 %v4523, %v4591
    %v4593 = vpop.f32.mrf.mxu0
    %v4594 = vadd.f32 %v4525, %v4593
    %4595 = vmatmul.bf16.gmra.mxu0 %v4330
    %v4596 = vpop.f32.mrf.mxu0
    %v4597 = vadd.f32 %v4528, %v4596
    %v4598 = vpop.f32.mrf.mxu0
    %v4599 = vadd.f32 %v4530, %v4598
    %4600 = vmatmul.bf16.gmra.mxu0 %v4334
    %v4601 = vpop.f32.mrf.mxu0
    %v4602 = vadd.f32 %v4533, %v4601
    %v4603 = vpop.f32.mrf.mxu0
    %v4604 = vadd.f32 %v4535, %v4603
    %4605 = vdwg.mxu0
    %v4606 = vmax.f32 %v4547, 0.0
    %v4607 = vmax.f32 %v4549, 0.0
    %v4608 = vmax.f32 %v4552, 0.0
    %v4609 = vmax.f32 %v4554, 0.0
    %v4610 = vmax.f32 %v4557, 0.0
    %v4611 = vmax.f32 %v4559, 0.0
    %v4612 = vmax.f32 %v4562, 0.0
    %v4613 = vmax.f32 %v4564, 0.0
    %v4614 = vmax.f32 %v4567, 0.0
    %v4615 = vmax.f32 %v4569, 0.0
    %v4616 = vmax.f32 %v4572, 0.0
    %v4617 = vmax.f32 %v4574, 0.0
    %v4618 = vmax.f32 %v4577, 0.0
    %v4619 = vmax.f32 %v4579, 0.0
    %v4620 = vmax.f32 %v4582, 0.0
    %v4621 = vmax.f32 %v4584, 0.0
    %v4622 = vmax.f32 %v4587, 0.0
    %v4623 = vmax.f32 %v4589, 0.0
    %v4624 = vmax.f32 %v4592, 0.0
    %v4625 = vmax.f32 %v4594, 0.0
    %v4626 = vmax.f32 %v4597, 0.0
    %v4627 = vmax.f32 %v4599, 0.0
    %v4628 = vmax.f32 %v4602, 0.0
    %v4629 = vmax.f32 %v4604, 0.0
    %v4630 = vpack.c.bf16 %v4606, %v4606
    %v4631 = vpack.c.bf16 %v4607, %v4607
    %v4632 = vpack.c.bf16 %v4608, %v4608
    %v4633 = vpack.c.bf16 %v4609, %v4609
    %v4634 = vpack.c.bf16 %v4610, %v4610
    %v4635 = vpack.c.bf16 %v4611, %v4611
    %v4636 = vpack.c.bf16 %v4612, %v4612
    %v4637 = vpack.c.bf16 %v4613, %v4613
    %v4638 = vpack.c.bf16 %v4614, %v4614
    %v4639 = vpack.c.bf16 %v4615, %v4615
    %v4640 = vpack.c.bf16 %v4616, %v4616
    %v4641 = vpack.c.bf16 %v4617, %v4617
    %v4642 = vpack.c.bf16 %v4618, %v4618
    %v4643 = vpack.c.bf16 %v4619, %v4619
    %v4644 = vpack.c.bf16 %v4620, %v4620
    %v4645 = vpack.c.bf16 %v4621, %v4621
    %v4646 = vpack.c.bf16 %v4622, %v4622
    %v4647 = vpack.c.bf16 %v4623, %v4623
    %v4648 = vpack.c.bf16 %v4624, %v4624
    %v4649 = vpack.c.bf16 %v4625, %v4625
    %v4650 = vpack.c.bf16 %v4626, %v4626
    %v4651 = vpack.c.bf16 %v4627, %v4627
    %v4652 = vpack.c.bf16 %v4628, %v4628
    %v4653 = vpack.c.bf16 %v4629, %v4629
    %4654 = vst [vmem:[#allocation4] sm:$0xf] %v4630
    %4655 = vst [vmem:[#allocation4 + $0x4] sm:$0xf] %v4631
    %4656 = vst [vmem:[#allocation4 + $0x8] sm:$0xf] %v4632
    %4657 = vst [vmem:[#allocation4 + $0xc] sm:$0xf] %v4633
    %4658 = vst [vmem:[#allocation4 + $0x10] sm:$0xf] %v4634
    %4659 = vst [vmem:[#allocation4 + $0x14] sm:$0xf] %v4635
    %4660 = vst [vmem:[#allocation4 + $0x18] sm:$0xf] %v4636
    %4661 = vst [vmem:[#allocation4 + $0x1c] sm:$0xf] %v4637
    %4662 = vst [vmem:[#allocation4 + $0x20] sm:$0xf] %v4638
    %4663 = vst [vmem:[#allocation4 + $0x24] sm:$0xf] %v4639
    %4664 = vst [vmem:[#allocation4 + $0x28] sm:$0xf] %v4640
    %4665 = vst [vmem:[#allocation4 + $0x2c] sm:$0xf] %v4641
    %4666 = vst [vmem:[#allocation4 + $0x30] sm:$0xf] %v4642
    %4667 = vst [vmem:[#allocation4 + $0x34] sm:$0xf] %v4643
    %4668 = vst [vmem:[#allocation4 + $0x38] sm:$0xf] %v4644
    %4669 = vst [vmem:[#allocation4 + $0x3c] sm:$0xf] %v4645
    %4670 = vst [vmem:[#allocation4 + $0x40] sm:$0xf] %v4646
    %4671 = vst [vmem:[#allocation4 + $0x44] sm:$0xf] %v4647
    %4672 = vst [vmem:[#allocation4 + $0x48] sm:$0xf] %v4648
    %4673 = vst [vmem:[#allocation4 + $0x4c] sm:$0xf] %v4649
    %4674 = vst [vmem:[#allocation4 + $0x50] sm:$0xf] %v4650
    %4675 = vst [vmem:[#allocation4 + $0x54] sm:$0xf] %v4651
    %4676 = vst [vmem:[#allocation4 + $0x58] sm:$0xf] %v4652
    %4677 = vst [vmem:[#allocation4 + $0x5c] sm:$0xf] %v4653
    %v4678 = vld [vmem:[#allocation4] sm:$0xf]
    %v4679 = vld [vmem:[#allocation4 + $0x4] sm:$0xf]
    %v4680 = vld [vmem:[#allocation4 + $0x8] sm:$0xf]
    %v4681 = vld [vmem:[#allocation4 + $0xc] sm:$0xf]
    %v4682 = vld [vmem:[#allocation4 + $0x10] sm:$0xf]
    %v4683 = vld [vmem:[#allocation4 + $0x14] sm:$0xf]
    %v4684 = vld [vmem:[#allocation4 + $0x18] sm:$0xf]
    %v4685 = vld [vmem:[#allocation4 + $0x1c] sm:$0xf]
    %v4686 = vld [vmem:[#allocation4 + $0x20] sm:$0xf]
    %v4687 = vld [vmem:[#allocation4 + $0x24] sm:$0xf]
    %v4688 = vld [vmem:[#allocation4 + $0x28] sm:$0xf]
    %v4689 = vld [vmem:[#allocation4 + $0x2c] sm:$0xf]
    %v4690 = vld [vmem:[#allocation4 + $0x30] sm:$0xf]
    %v4691 = vld [vmem:[#allocation4 + $0x34] sm:$0xf]
    %v4692 = vld [vmem:[#allocation4 + $0x38] sm:$0xf]
    %v4693 = vld [vmem:[#allocation4 + $0x3c] sm:$0xf]
    %v4694 = vld [vmem:[#allocation4 + $0x40] sm:$0xf]
    %v4695 = vld [vmem:[#allocation4 + $0x44] sm:$0xf]
    %v4696 = vld [vmem:[#allocation4 + $0x48] sm:$0xf]
    %v4697 = vld [vmem:[#allocation4 + $0x4c] sm:$0xf]
    %v4698 = vld [vmem:[#allocation4 + $0x50] sm:$0xf]
    %v4699 = vld [vmem:[#allocation4 + $0x54] sm:$0xf]
    %v4700 = vld [vmem:[#allocation4 + $0x58] sm:$0xf]
    %v4701 = vld [vmem:[#allocation4 + $0x5c] sm:$0xf]
    %v4702 = vld [vmem:[#allocation4 + $0x60] sm:$0x1]
    %v4703 = vld [vmem:[#allocation4 + $0x4] sm:$0xe]
    %v4704 = vld [vmem:[#allocation4 + $0x8] sm:$0xf]
    %v4705 = vld [vmem:[#allocation4 + $0xc] sm:$0xf]
    %v4706 = vld [vmem:[#allocation4 + $0x10] sm:$0xf]
    %v4707 = vld [vmem:[#allocation4 + $0x14] sm:$0xf]
    %v4708 = vld [vmem:[#allocation4 + $0x18] sm:$0xf]
    %v4709 = vld [vmem:[#allocation4 + $0x1c] sm:$0xf]
    %v4710 = vld [vmem:[#allocation4 + $0x20] sm:$0xf]
    %v4711 = vld [vmem:[#allocation4 + $0x24] sm:$0xf]
    %v4712 = vld [vmem:[#allocation4 + $0x28] sm:$0xf]
    %v4713 = vld [vmem:[#allocation4 + $0x2c] sm:$0xf]
    %v4714 = vld [vmem:[#allocation4 + $0x30] sm:$0xf]
    %v4715 = vld [vmem:[#allocation4 + $0x34] sm:$0xf]
    %v4716 = vld [vmem:[#allocation4 + $0x38] sm:$0xf]
    %v4717 = vld [vmem:[#allocation4 + $0x3c] sm:$0xf]
    %v4718 = vld [vmem:[#allocation4 + $0x40] sm:$0xf]
    %v4719 = vld [vmem:[#allocation4 + $0x44] sm:$0xf]
    %v4720 = vld [vmem:[#allocation4 + $0x48] sm:$0xf]
    %v4721 = vld [vmem:[#allocation4 + $0x4c] sm:$0xf]
    %v4722 = vld [vmem:[#allocation4 + $0x50] sm:$0xf]
    %v4723 = vld [vmem:[#allocation4 + $0x54] sm:$0xf]
    %v4724 = vld [vmem:[#allocation4 + $0x58] sm:$0xf]
    %v4725 = vld [vmem:[#allocation4 + $0x5c] sm:$0xf]
    %v4726 = vld [vmem:[#allocation4 + $0x60] sm:$0xf]
    %v4727 = vld [vmem:[#allocation4 + $0x64] sm:$0x1]
    %v4728 = vld [vmem:[#allocation4 + $0x64] sm:$0x3]
    %v4753 = vunpack.c.l.b16 %v4678
    %v4754 = vunpack.c.l.b16 %v4679
    %v4755 = vunpack.c.l.b16 %v4680
    %v4756 = vunpack.c.l.b16 %v4681
    %v4757 = vunpack.c.l.b16 %v4682
    %v4758 = vunpack.c.l.b16 %v4683
    %v4759 = vunpack.c.l.b16 %v4684
    %v4760 = vunpack.c.l.b16 %v4685
    %v4761 = vunpack.c.l.b16 %v4686
    %v4762 = vunpack.c.l.b16 %v4687
    %v4763 = vunpack.c.l.b16 %v4688
    %v4764 = vunpack.c.l.b16 %v4689
    %v4765 = vunpack.c.l.b16 %v4690
    %v4766 = vunpack.c.l.b16 %v4691
    %v4767 = vunpack.c.l.b16 %v4692
    %v4768 = vunpack.c.l.b16 %v4693
    %v4769 = vunpack.c.l.b16 %v4694
    %v4770 = vunpack.c.l.b16 %v4695
    %v4771 = vunpack.c.l.b16 %v4696
    %v4772 = vunpack.c.l.b16 %v4697
    %v4773 = vunpack.c.l.b16 %v4698
    %v4774 = vunpack.c.l.b16 %v4699
    %v4775 = vunpack.c.l.b16 %v4700
    %v4776 = vunpack.c.l.b16 %v4701
    %v4777 = vpack.c.b16 %v4754, %v4753
    %v4778 = vpack.c.b16 %v4756, %v4755
    %v4779 = vpack.c.b16 %v4758, %v4757
    %v4780 = vpack.c.b16 %v4760, %v4759
    %v4781 = vpack.c.b16 %v4762, %v4761
    %v4782 = vpack.c.b16 %v4764, %v4763
    %v4783 = vpack.c.b16 %v4766, %v4765
    %v4784 = vpack.c.b16 %v4768, %v4767
    %v4785 = vpack.c.b16 %v4770, %v4769
    %v4786 = vpack.c.b16 %v4772, %v4771
    %v4787 = vpack.c.b16 %v4774, %v4773
    %v4788 = vpack.c.b16 %v4776, %v4775
    %v4802 = vunpack.c.l.b16 %v4702
    %v4803 = vpack.c.b16 %v4802, %v4802
    %v4805 = vshrl.u32 %v4777, 16
    %v4807 = vshll.u32 %v4777, 16
    %v4809 = vrot.slane %v4807, 1
    %v4810 = vor.u32 %v4805, %v4809
    %v4812 = vshll.u32 %v4778, 16
    %v4814 = vrot.slane %v4812, 1
    %v4815 = vsel %vm3215, %v4810, %v4814
    %v4816 = vshrl.u32 %v4778, 16
    %v4818 = vor.u32 %v4816, %v4814
    %v4820 = vshll.u32 %v4779, 16
    %v4822 = vrot.slane %v4820, 1
    %v4823 = vsel %vm3215, %v4818, %v4822
    %v4824 = vshrl.u32 %v4779, 16
    %v4826 = vor.u32 %v4824, %v4822
    %v4828 = vshll.u32 %v4780, 16
    %v4830 = vrot.slane %v4828, 1
    %v4831 = vsel %vm3215, %v4826, %v4830
    %v4832 = vshrl.u32 %v4780, 16
    %v4834 = vor.u32 %v4832, %v4830
    %v4836 = vshll.u32 %v4781, 16
    %v4838 = vrot.slane %v4836, 1
    %v4839 = vsel %vm3215, %v4834, %v4838
    %v4840 = vshrl.u32 %v4781, 16
    %v4842 = vor.u32 %v4840, %v4838
    %v4844 = vshll.u32 %v4782, 16
    %v4846 = vrot.slane %v4844, 1
    %v4847 = vsel %vm3215, %v4842, %v4846
    %v4848 = vshrl.u32 %v4782, 16
    %v4850 = vor.u32 %v4848, %v4846
    %v4852 = vshll.u32 %v4783, 16
    %v4854 = vrot.slane %v4852, 1
    %v4855 = vsel %vm3215, %v4850, %v4854
    %v4856 = vshrl.u32 %v4783, 16
    %v4858 = vor.u32 %v4856, %v4854
    %v4860 = vshll.u32 %v4784, 16
    %v4862 = vrot.slane %v4860, 1
    %v4863 = vsel %vm3215, %v4858, %v4862
    %v4864 = vshrl.u32 %v4784, 16
    %v4866 = vor.u32 %v4864, %v4862
    %v4868 = vshll.u32 %v4785, 16
    %v4870 = vrot.slane %v4868, 1
    %v4871 = vsel %vm3215, %v4866, %v4870
    %v4872 = vshrl.u32 %v4785, 16
    %v4874 = vor.u32 %v4872, %v4870
    %v4876 = vshll.u32 %v4786, 16
    %v4878 = vrot.slane %v4876, 1
    %v4879 = vsel %vm3215, %v4874, %v4878
    %v4880 = vshrl.u32 %v4786, 16
    %v4882 = vor.u32 %v4880, %v4878
    %v4884 = vshll.u32 %v4787, 16
    %v4886 = vrot.slane %v4884, 1
    %v4887 = vsel %vm3215, %v4882, %v4886
    %v4888 = vshrl.u32 %v4787, 16
    %v4890 = vor.u32 %v4888, %v4886
    %v4892 = vshll.u32 %v4788, 16
    %v4894 = vrot.slane %v4892, 1
    %v4895 = vsel %vm3215, %v4890, %v4894
    %v4896 = vshrl.u32 %v4788, 16
    %v4898 = vor.u32 %v4896, %v4894
    %v4900 = vshll.u32 %v4803, 16
    %v4902 = vrot.slane %v4900, 1
    %v4903 = vsel %vm3215, %v4898, %v4902
    %v4941 = vunpack.c.l.b16 %v4703
    %v4942 = vunpack.c.l.b16 %v4704
    %v4943 = vunpack.c.l.b16 %v4705
    %v4944 = vunpack.c.l.b16 %v4706
    %v4945 = vunpack.c.l.b16 %v4707
    %v4946 = vunpack.c.l.b16 %v4708
    %v4947 = vunpack.c.l.b16 %v4709
    %v4948 = vunpack.c.l.b16 %v4710
    %v4949 = vunpack.c.l.b16 %v4711
    %v4950 = vunpack.c.l.b16 %v4712
    %v4951 = vunpack.c.l.b16 %v4713
    %v4952 = vunpack.c.l.b16 %v4714
    %v4953 = vunpack.c.l.b16 %v4715
    %v4954 = vunpack.c.l.b16 %v4716
    %v4955 = vunpack.c.l.b16 %v4717
    %v4956 = vunpack.c.l.b16 %v4718
    %v4957 = vunpack.c.l.b16 %v4719
    %v4958 = vunpack.c.l.b16 %v4720
    %v4959 = vunpack.c.l.b16 %v4721
    %v4960 = vunpack.c.l.b16 %v4722
    %v4961 = vunpack.c.l.b16 %v4723
    %v4962 = vunpack.c.l.b16 %v4724
    %v4963 = vunpack.c.l.b16 %v4725
    %v4964 = vunpack.c.l.b16 %v4726
    %v4965 = vunpack.c.l.b16 %v4727
    %v4966 = vpack.c.b16 %v4942, %v4941
    %v4967 = vpack.c.b16 %v4944, %v4943
    %v4968 = vpack.c.b16 %v4946, %v4945
    %v4969 = vpack.c.b16 %v4948, %v4947
    %v4970 = vpack.c.b16 %v4950, %v4949
    %v4971 = vpack.c.b16 %v4952, %v4951
    %v4972 = vpack.c.b16 %v4954, %v4953
    %v4973 = vpack.c.b16 %v4956, %v4955
    %v4974 = vpack.c.b16 %v4958, %v4957
    %v4975 = vpack.c.b16 %v4960, %v4959
    %v4976 = vpack.c.b16 %v4962, %v4961
    %v4977 = vpack.c.b16 %v4964, %v4963
    %v4978 = vpack.c.b16 %v4965, %v4965
    %v4979 = vrot.slane %v4966, 1
    %v4980 = vrot.slane %v4967, 1
    %v4981 = vsel %vm3359, %v4979, %v4980
    %v4982 = vrot.slane %v4968, 1
    %v4983 = vsel %vm3359, %v4980, %v4982
    %v4984 = vrot.slane %v4969, 1
    %v4985 = vsel %vm3359, %v4982, %v4984
    %v4986 = vrot.slane %v4970, 1
    %v4987 = vsel %vm3359, %v4984, %v4986
    %v4988 = vrot.slane %v4971, 1
    %v4989 = vsel %vm3359, %v4986, %v4988
    %v4990 = vrot.slane %v4972, 1
    %v4991 = vsel %vm3359, %v4988, %v4990
    %v4992 = vrot.slane %v4973, 1
    %v4993 = vsel %vm3359, %v4990, %v4992
    %v4994 = vrot.slane %v4974, 1
    %v4995 = vsel %vm3359, %v4992, %v4994
    %v4996 = vrot.slane %v4975, 1
    %v4997 = vsel %vm3359, %v4994, %v4996
    %v4998 = vrot.slane %v4976, 1
    %v4999 = vsel %vm3359, %v4996, %v4998
    %v5000 = vrot.slane %v4977, 1
    %v5001 = vsel %vm3359, %v4998, %v5000
    %v5002 = vrot.slane %v4978, 1
    %v5003 = vsel %vm3359, %v5000, %v5002
    %v5017 = vunpack.c.l.b16 %v4728
    %v5018 = vpack.c.b16 %v5017, %v5017
    %v5020 = vshrl.u32 %v4966, 16
    %v5022 = vrot.slane %v5020, 1
    %v5023 = vshll.u32 %v4966, 16
    %v5025 = vrot.slane %v5023, 2
    %v5026 = vor.u32 %v5022, %v5025
    %v5028 = vshrl.u32 %v4967, 16
    %v5030 = vrot.slane %v5028, 1
    %v5031 = vshll.u32 %v4967, 16
    %v5033 = vrot.slane %v5031, 2
    %v5034 = vor.u32 %v5030, %v5033
    %v5035 = vsel %vm3412, %v5026, %v5034
    %v5037 = vshrl.u32 %v4968, 16
    %v5039 = vrot.slane %v5037, 1
    %v5040 = vshll.u32 %v4968, 16
    %v5042 = vrot.slane %v5040, 2
    %v5043 = vor.u32 %v5039, %v5042
    %v5044 = vsel %vm3412, %v5034, %v5043
    %v5046 = vshrl.u32 %v4969, 16
    %v5048 = vrot.slane %v5046, 1
    %v5049 = vshll.u32 %v4969, 16
    %v5051 = vrot.slane %v5049, 2
    %v5052 = vor.u32 %v5048, %v5051
    %v5053 = vsel %vm3412, %v5043, %v5052
    %v5055 = vshrl.u32 %v4970, 16
    %v5057 = vrot.slane %v5055, 1
    %v5058 = vshll.u32 %v4970, 16
    %v5060 = vrot.slane %v5058, 2
    %v5061 = vor.u32 %v5057, %v5060
    %v5062 = vsel %vm3412, %v5052, %v5061
    %v5064 = vshrl.u32 %v4971, 16
    %v5066 = vrot.slane %v5064, 1
    %v5067 = vshll.u32 %v4971, 16
    %v5069 = vrot.slane %v5067, 2
    %v5070 = vor.u32 %v5066, %v5069
    %v5071 = vsel %vm3412, %v5061, %v5070
    %v5073 = vshrl.u32 %v4972, 16
    %v5075 = vrot.slane %v5073, 1
    %v5076 = vshll.u32 %v4972, 16
    %v5078 = vrot.slane %v5076, 2
    %v5079 = vor.u32 %v5075, %v5078
    %v5080 = vsel %vm3412, %v5070, %v5079
    %v5082 = vshrl.u32 %v4973, 16
    %v5084 = vrot.slane %v5082, 1
    %v5085 = vshll.u32 %v4973, 16
    %v5087 = vrot.slane %v5085, 2
    %v5088 = vor.u32 %v5084, %v5087
    %v5089 = vsel %vm3412, %v5079, %v5088
    %v5091 = vshrl.u32 %v4974, 16
    %v5093 = vrot.slane %v5091, 1
    %v5094 = vshll.u32 %v4974, 16
    %v5096 = vrot.slane %v5094, 2
    %v5097 = vor.u32 %v5093, %v5096
    %v5098 = vsel %vm3412, %v5088, %v5097
    %v5100 = vshrl.u32 %v4975, 16
    %v5102 = vrot.slane %v5100, 1
    %v5103 = vshll.u32 %v4975, 16
    %v5105 = vrot.slane %v5103, 2
    %v5106 = vor.u32 %v5102, %v5105
    %v5107 = vsel %vm3412, %v5097, %v5106
    %v5109 = vshrl.u32 %v4976, 16
    %v5111 = vrot.slane %v5109, 1
    %v5112 = vshll.u32 %v4976, 16
    %v5114 = vrot.slane %v5112, 2
    %v5115 = vor.u32 %v5111, %v5114
    %v5116 = vsel %vm3412, %v5106, %v5115
    %v5118 = vshrl.u32 %v4977, 16
    %v5120 = vrot.slane %v5118, 1
    %v5121 = vshll.u32 %v4977, 16
    %v5123 = vrot.slane %v5121, 2
    %v5124 = vor.u32 %v5120, %v5123
    %v5125 = vsel %vm3412, %v5115, %v5124
    %v5127 = vshrl.u32 %v5018, 16
    %v5129 = vrot.slane %v5127, 1
    %v5130 = vshll.u32 %v5018, 16
    %v5132 = vrot.slane %v5130, 2
    %v5133 = vor.u32 %v5129, %v5132
    %v5134 = vsel %vm3412, %v5124, %v5133
    %v5147 = vld [vmem:[%s7] sm:$0xf]
    %v5148 = vld [vmem:[%s7 + $0x4] sm:$0xf]
    %v5149 = vld [vmem:[%s7 + $0x8] sm:$0xf]
    %v5150 = vld [vmem:[%s7 + $0xc] sm:$0xf]
    %v5151 = vld [vmem:[%s7 + $0x10] sm:$0xf]
    %v5152 = vld [vmem:[%s7 + $0x14] sm:$0xf]
    %v5153 = vld [vmem:[%s7 + $0x18] sm:$0xf]
    %v5154 = vld [vmem:[%s7 + $0x1c] sm:$0xf]
    %v5155 = vld [vmem:[%s7 + $0x20] sm:$0xf]
    %v5156 = vld [vmem:[%s7 + $0x24] sm:$0xf]
    %v5157 = vld [vmem:[%s7 + $0x28] sm:$0xf]
    %v5158 = vld [vmem:[%s7 + $0x2c] sm:$0xf]
    %v5159 = vld [vmem:[%s7 + $0x30] sm:$0xf]
    %v5160 = vld [vmem:[%s7 + $0x34] sm:$0xf]
    %v5161 = vld [vmem:[%s7 + $0x38] sm:$0xf]
    %v5162 = vld [vmem:[%s7 + $0x3c] sm:$0xf]
    %v5163 = vld [vmem:[%s7 + $0x40] sm:$0xf]
    %v5164 = vld [vmem:[%s7 + $0x44] sm:$0xf]
    %v5165 = vld [vmem:[%s7 + $0x48] sm:$0xf]
    %v5166 = vld [vmem:[%s7 + $0x4c] sm:$0xf]
    %v5167 = vld [vmem:[%s7 + $0x50] sm:$0xf]
    %v5168 = vld [vmem:[%s7 + $0x54] sm:$0xf]
    %v5169 = vld [vmem:[%s7 + $0x58] sm:$0xf]
    %v5170 = vld [vmem:[%s7 + $0x5c] sm:$0xf]
    %v5171 = vld [vmem:[%s7 + $0x60] sm:$0xf]
    %v5172 = vld [vmem:[%s7 + $0x64] sm:$0xf]
    %v5173 = vld [vmem:[%s7 + $0x68] sm:$0xf]
    %v5174 = vld [vmem:[%s7 + $0x6c] sm:$0xf]
    %v5175 = vld [vmem:[%s7 + $0x70] sm:$0xf]
    %v5176 = vld [vmem:[%s7 + $0x74] sm:$0xf]
    %v5177 = vld [vmem:[%s7 + $0x78] sm:$0xf]
    %v5178 = vld [vmem:[%s7 + $0x7c] sm:$0xf]
    %v5179 = vld [vmem:[%s7 + $0x80] sm:$0xf]
    %v5180 = vld [vmem:[%s7 + $0x84] sm:$0xf]
    %v5181 = vld [vmem:[%s7 + $0x88] sm:$0xf]
    %v5182 = vld [vmem:[%s7 + $0x8c] sm:$0xf]
    %v5183 = vld [vmem:[%s7 + $0x90] sm:$0xf]
    %v5184 = vld [vmem:[%s7 + $0x94] sm:$0xf]
    %v5185 = vld [vmem:[%s7 + $0x98] sm:$0xf]
    %v5186 = vld [vmem:[%s7 + $0x9c] sm:$0xf]
    %v5187 = vld [vmem:[%s7 + $0xa0] sm:$0xf]
    %v5188 = vld [vmem:[%s7 + $0xa4] sm:$0xf]
    %v5189 = vld [vmem:[%s7 + $0xa8] sm:$0xf]
    %v5190 = vld [vmem:[%s7 + $0xac] sm:$0xf]
    %v5191 = vld [vmem:[%s7 + $0xb0] sm:$0xf]
    %v5192 = vld [vmem:[%s7 + $0xb4] sm:$0xf]
    %v5193 = vld [vmem:[%s7 + $0xb8] sm:$0xf]
    %v5194 = vld [vmem:[%s7 + $0xbc] sm:$0xf]
    %v5195 = vld [vmem:[%s7 + $0xc0] sm:$0xf]
    %v5196 = vld [vmem:[%s7 + $0xc4] sm:$0xf]
    %v5197 = vld [vmem:[%s7 + $0xc8] sm:$0xf]
    %v5198 = vld [vmem:[%s7 + $0xcc] sm:$0xf]
    %v5199 = vld [vmem:[%s7 + $0xd0] sm:$0xf]
    %v5200 = vld [vmem:[%s7 + $0xd4] sm:$0xf]
    %v5201 = vld [vmem:[%s7 + $0xd8] sm:$0xf]
    %v5202 = vld [vmem:[%s7 + $0xdc] sm:$0xf]
    %v5203 = vld [vmem:[%s7 + $0xe0] sm:$0xf]
    %v5204 = vld [vmem:[%s7 + $0xe4] sm:$0xf]
    %v5205 = vld [vmem:[%s7 + $0xe8] sm:$0xf]
    %v5206 = vld [vmem:[%s7 + $0xec] sm:$0xf]
    %v5207 = vld [vmem:[%s7 + $0xf0] sm:$0xf]
    %v5208 = vld [vmem:[%s7 + $0xf4] sm:$0xf]
    %v5209 = vld [vmem:[%s7 + $0xf8] sm:$0xf]
    %v5210 = vld [vmem:[%s7 + $0xfc] sm:$0xf]
    %v5211 = vld [vmem:[%s8] sm:$0x1]
    %v5213 = vperm.slane %v5211, 0
    %v5279 = vunpack.c.l.b16 %v5147
    %v5280 = vunpack.c.l.b16 %v5148
    %v5281 = vunpack.c.l.b16 %v5149
    %v5282 = vunpack.c.l.b16 %v5150
    %v5283 = vunpack.c.l.b16 %v5151
    %v5284 = vunpack.c.l.b16 %v5152
    %v5285 = vunpack.c.l.b16 %v5153
    %v5286 = vunpack.c.l.b16 %v5154
    %v5287 = vunpack.c.l.b16 %v5155
    %v5288 = vunpack.c.l.b16 %v5156
    %v5289 = vunpack.c.l.b16 %v5157
    %v5290 = vunpack.c.l.b16 %v5158
    %v5291 = vunpack.c.l.b16 %v5159
    %v5292 = vunpack.c.l.b16 %v5160
    %v5293 = vunpack.c.l.b16 %v5161
    %v5294 = vunpack.c.l.b16 %v5162
    %v5295 = vunpack.c.l.b16 %v5163
    %v5296 = vunpack.c.l.b16 %v5164
    %v5297 = vunpack.c.l.b16 %v5165
    %v5298 = vunpack.c.l.b16 %v5166
    %v5299 = vunpack.c.l.b16 %v5167
    %v5300 = vunpack.c.l.b16 %v5168
    %v5301 = vunpack.c.l.b16 %v5169
    %v5302 = vunpack.c.l.b16 %v5170
    %v5303 = vunpack.c.l.b16 %v5171
    %v5304 = vunpack.c.l.b16 %v5172
    %v5305 = vunpack.c.l.b16 %v5173
    %v5306 = vunpack.c.l.b16 %v5174
    %v5307 = vunpack.c.l.b16 %v5175
    %v5308 = vunpack.c.l.b16 %v5176
    %v5309 = vunpack.c.l.b16 %v5177
    %v5310 = vunpack.c.l.b16 %v5178
    %v5311 = vunpack.c.l.b16 %v5179
    %v5312 = vunpack.c.l.b16 %v5180
    %v5313 = vunpack.c.l.b16 %v5181
    %v5314 = vunpack.c.l.b16 %v5182
    %v5315 = vunpack.c.l.b16 %v5183
    %v5316 = vunpack.c.l.b16 %v5184
    %v5317 = vunpack.c.l.b16 %v5185
    %v5318 = vunpack.c.l.b16 %v5186
    %v5319 = vunpack.c.l.b16 %v5187
    %v5320 = vunpack.c.l.b16 %v5188
    %v5321 = vunpack.c.l.b16 %v5189
    %v5322 = vunpack.c.l.b16 %v5190
    %v5323 = vunpack.c.l.b16 %v5191
    %v5324 = vunpack.c.l.b16 %v5192
    %v5325 = vunpack.c.l.b16 %v5193
    %v5326 = vunpack.c.l.b16 %v5194
    %v5327 = vunpack.c.l.b16 %v5195
    %v5328 = vunpack.c.l.b16 %v5196
    %v5329 = vunpack.c.l.b16 %v5197
    %v5330 = vunpack.c.l.b16 %v5198
    %v5331 = vunpack.c.l.b16 %v5199
    %v5332 = vunpack.c.l.b16 %v5200
    %v5333 = vunpack.c.l.b16 %v5201
    %v5334 = vunpack.c.l.b16 %v5202
    %v5335 = vunpack.c.l.b16 %v5203
    %v5336 = vunpack.c.l.b16 %v5204
    %v5337 = vunpack.c.l.b16 %v5205
    %v5338 = vunpack.c.l.b16 %v5206
    %v5339 = vunpack.c.l.b16 %v5207
    %v5340 = vunpack.c.l.b16 %v5208
    %v5341 = vunpack.c.l.b16 %v5209
    %v5342 = vunpack.c.l.b16 %v5210
    %v5343 = vpack.c.b16 %v5280, %v5279
    %v5344 = vpack.c.b16 %v5282, %v5281
    %v5345 = vpack.c.b16 %v5284, %v5283
    %v5346 = vpack.c.b16 %v5286, %v5285
    %v5347 = vpack.c.b16 %v5288, %v5287
    %v5348 = vpack.c.b16 %v5290, %v5289
    %v5349 = vpack.c.b16 %v5292, %v5291
    %v5350 = vpack.c.b16 %v5294, %v5293
    %v5351 = vpack.c.b16 %v5296, %v5295
    %v5352 = vpack.c.b16 %v5298, %v5297
    %v5353 = vpack.c.b16 %v5300, %v5299
    %v5354 = vpack.c.b16 %v5302, %v5301
    %v5355 = vpack.c.b16 %v5304, %v5303
    %v5356 = vpack.c.b16 %v5306, %v5305
    %v5357 = vpack.c.b16 %v5308, %v5307
    %v5358 = vpack.c.b16 %v5310, %v5309
    %v5359 = vpack.c.b16 %v5312, %v5311
    %v5360 = vpack.c.b16 %v5314, %v5313
    %v5361 = vpack.c.b16 %v5316, %v5315
    %v5362 = vpack.c.b16 %v5318, %v5317
    %v5363 = vpack.c.b16 %v5320, %v5319
    %v5364 = vpack.c.b16 %v5322, %v5321
    %v5365 = vpack.c.b16 %v5324, %v5323
    %v5366 = vpack.c.b16 %v5326, %v5325
    %v5367 = vpack.c.b16 %v5328, %v5327
    %v5368 = vpack.c.b16 %v5330, %v5329
    %v5369 = vpack.c.b16 %v5332, %v5331
    %v5370 = vpack.c.b16 %v5334, %v5333
    %v5371 = vpack.c.b16 %v5336, %v5335
    %v5372 = vpack.c.b16 %v5338, %v5337
    %v5373 = vpack.c.b16 %v5340, %v5339
    %v5374 = vpack.c.b16 %v5342, %v5341
    %5407 = vmatpush.bf16.msra.mxu0 %v5350
    %5408 = vmatpush.bf16.msra.mxu0 %v5349
    %5409 = vmatpush.bf16.msra.mxu0 %v5348
    %5410 = vmatpush.bf16.msra.mxu0 %v5347
    %5411 = vmatpush.bf16.msra.mxu0 %v5346
    %5412 = vmatpush.bf16.msra.mxu0 %v5345
    %5413 = vmatpush.bf16.msra.mxu0 %v5344
    %5414 = vmatpush.bf16.msra.mxu0 %v5343
    %5415 = vmatmul.bf16.gmra.mxu0 %v4777
    %v5416 = vpop.f32.mrf.mxu0
    %v5417 = vadd.f32 %v5213, %v5416
    %v5418 = vpop.f32.mrf.mxu0
    %v5419 = vadd.f32 %v5213, %v5418
    %5420 = vmatmul.bf16.gmra.mxu0 %v4778
    %v5421 = vpop.f32.mrf.mxu0
    %v5422 = vadd.f32 %v5213, %v5421
    %v5423 = vpop.f32.mrf.mxu0
    %v5424 = vadd.f32 %v5213, %v5423
    %5425 = vmatmul.bf16.gmra.mxu0 %v4779
    %v5426 = vpop.f32.mrf.mxu0
    %v5427 = vadd.f32 %v5213, %v5426
    %v5428 = vpop.f32.mrf.mxu0
    %v5429 = vadd.f32 %v5213, %v5428
    %5430 = vmatmul.bf16.gmra.mxu0 %v4780
    %v5431 = vpop.f32.mrf.mxu0
    %v5432 = vadd.f32 %v5213, %v5431
    %v5433 = vpop.f32.mrf.mxu0
    %v5434 = vadd.f32 %v5213, %v5433
    %5435 = vmatmul.bf16.gmra.mxu0 %v4781
    %v5436 = vpop.f32.mrf.mxu0
    %v5437 = vadd.f32 %v5213, %v5436
    %v5438 = vpop.f32.mrf.mxu0
    %v5439 = vadd.f32 %v5213, %v5438
    %5440 = vmatmul.bf16.gmra.mxu0 %v4782
    %v5441 = vpop.f32.mrf.mxu0
    %v5442 = vadd.f32 %v5213, %v5441
    %v5443 = vpop.f32.mrf.mxu0
    %v5444 = vadd.f32 %v5213, %v5443
    %5445 = vmatmul.bf16.gmra.mxu0 %v4783
    %v5446 = vpop.f32.mrf.mxu0
    %v5447 = vadd.f32 %v5213, %v5446
    %v5448 = vpop.f32.mrf.mxu0
    %v5449 = vadd.f32 %v5213, %v5448
    %5450 = vmatmul.bf16.gmra.mxu0 %v4784
    %v5451 = vpop.f32.mrf.mxu0
    %v5452 = vadd.f32 %v5213, %v5451
    %v5453 = vpop.f32.mrf.mxu0
    %v5454 = vadd.f32 %v5213, %v5453
    %5455 = vmatmul.bf16.gmra.mxu0 %v4785
    %v5456 = vpop.f32.mrf.mxu0
    %v5457 = vadd.f32 %v5213, %v5456
    %v5458 = vpop.f32.mrf.mxu0
    %v5459 = vadd.f32 %v5213, %v5458
    %5460 = vmatmul.bf16.gmra.mxu0 %v4786
    %v5461 = vpop.f32.mrf.mxu0
    %v5462 = vadd.f32 %v5213, %v5461
    %v5463 = vpop.f32.mrf.mxu0
    %v5464 = vadd.f32 %v5213, %v5463
    %5465 = vmatmul.bf16.gmra.mxu0 %v4787
    %v5466 = vpop.f32.mrf.mxu0
    %v5467 = vadd.f32 %v5213, %v5466
    %v5468 = vpop.f32.mrf.mxu0
    %v5469 = vadd.f32 %v5213, %v5468
    %5470 = vmatmul.bf16.gmra.mxu0 %v4788
    %v5471 = vpop.f32.mrf.mxu0
    %v5472 = vadd.f32 %v5213, %v5471
    %v5473 = vpop.f32.mrf.mxu0
    %v5474 = vadd.f32 %v5213, %v5473
    %5475 = vdwg.mxu0
    %5476 = vmatpush.bf16.msra.mxu0 %v5358
    %5477 = vmatpush.bf16.msra.mxu0 %v5357
    %5478 = vmatpush.bf16.msra.mxu0 %v5356
    %5479 = vmatpush.bf16.msra.mxu0 %v5355
    %5480 = vmatpush.bf16.msra.mxu0 %v5354
    %5481 = vmatpush.bf16.msra.mxu0 %v5353
    %5482 = vmatpush.bf16.msra.mxu0 %v5352
    %5483 = vmatpush.bf16.msra.mxu0 %v5351
    %5484 = vmatmul.bf16.gmra.mxu0 %v4815
    %v5485 = vpop.f32.mrf.mxu0
    %v5486 = vadd.f32 %v5417, %v5485
    %v5487 = vpop.f32.mrf.mxu0
    %v5488 = vadd.f32 %v5419, %v5487
    %5489 = vmatmul.bf16.gmra.mxu0 %v4823
    %v5490 = vpop.f32.mrf.mxu0
    %v5491 = vadd.f32 %v5422, %v5490
    %v5492 = vpop.f32.mrf.mxu0
    %v5493 = vadd.f32 %v5424, %v5492
    %5494 = vmatmul.bf16.gmra.mxu0 %v4831
    %v5495 = vpop.f32.mrf.mxu0
    %v5496 = vadd.f32 %v5427, %v5495
    %v5497 = vpop.f32.mrf.mxu0
    %v5498 = vadd.f32 %v5429, %v5497
    %5499 = vmatmul.bf16.gmra.mxu0 %v4839
    %v5500 = vpop.f32.mrf.mxu0
    %v5501 = vadd.f32 %v5432, %v5500
    %v5502 = vpop.f32.mrf.mxu0
    %v5503 = vadd.f32 %v5434, %v5502
    %5504 = vmatmul.bf16.gmra.mxu0 %v4847
    %v5505 = vpop.f32.mrf.mxu0
    %v5506 = vadd.f32 %v5437, %v5505
    %v5507 = vpop.f32.mrf.mxu0
    %v5508 = vadd.f32 %v5439, %v5507
    %5509 = vmatmul.bf16.gmra.mxu0 %v4855
    %v5510 = vpop.f32.mrf.mxu0
    %v5511 = vadd.f32 %v5442, %v5510
    %v5512 = vpop.f32.mrf.mxu0
    %v5513 = vadd.f32 %v5444, %v5512
    %5514 = vmatmul.bf16.gmra.mxu0 %v4863
    %v5515 = vpop.f32.mrf.mxu0
    %v5516 = vadd.f32 %v5447, %v5515
    %v5517 = vpop.f32.mrf.mxu0
    %v5518 = vadd.f32 %v5449, %v5517
    %5519 = vmatmul.bf16.gmra.mxu0 %v4871
    %v5520 = vpop.f32.mrf.mxu0
    %v5521 = vadd.f32 %v5452, %v5520
    %v5522 = vpop.f32.mrf.mxu0
    %v5523 = vadd.f32 %v5454, %v5522
    %5524 = vmatmul.bf16.gmra.mxu0 %v4879
    %v5525 = vpop.f32.mrf.mxu0
    %v5526 = vadd.f32 %v5457, %v5525
    %v5527 = vpop.f32.mrf.mxu0
    %v5528 = vadd.f32 %v5459, %v5527
    %5529 = vmatmul.bf16.gmra.mxu0 %v4887
    %v5530 = vpop.f32.mrf.mxu0
    %v5531 = vadd.f32 %v5462, %v5530
    %v5532 = vpop.f32.mrf.mxu0
    %v5533 = vadd.f32 %v5464, %v5532
    %5534 = vmatmul.bf16.gmra.mxu0 %v4895
    %v5535 = vpop.f32.mrf.mxu0
    %v5536 = vadd.f32 %v5467, %v5535
    %v5537 = vpop.f32.mrf.mxu0
    %v5538 = vadd.f32 %v5469, %v5537
    %5539 = vmatmul.bf16.gmra.mxu0 %v4903
    %v5540 = vpop.f32.mrf.mxu0
    %v5541 = vadd.f32 %v5472, %v5540
    %v5542 = vpop.f32.mrf.mxu0
    %v5543 = vadd.f32 %v5474, %v5542
    %5544 = vdwg.mxu0
    %5545 = vmatpush.bf16.msra.mxu0 %v5366
    %5546 = vmatpush.bf16.msra.mxu0 %v5365
    %5547 = vmatpush.bf16.msra.mxu0 %v5364
    %5548 = vmatpush.bf16.msra.mxu0 %v5363
    %5549 = vmatpush.bf16.msra.mxu0 %v5362
    %5550 = vmatpush.bf16.msra.mxu0 %v5361
    %5551 = vmatpush.bf16.msra.mxu0 %v5360
    %5552 = vmatpush.bf16.msra.mxu0 %v5359
    %5553 = vmatmul.bf16.gmra.mxu0 %v4981
    %v5554 = vpop.f32.mrf.mxu0
    %v5555 = vadd.f32 %v5486, %v5554
    %v5556 = vpop.f32.mrf.mxu0
    %v5557 = vadd.f32 %v5488, %v5556
    %5558 = vmatmul.bf16.gmra.mxu0 %v4983
    %v5559 = vpop.f32.mrf.mxu0
    %v5560 = vadd.f32 %v5491, %v5559
    %v5561 = vpop.f32.mrf.mxu0
    %v5562 = vadd.f32 %v5493, %v5561
    %5563 = vmatmul.bf16.gmra.mxu0 %v4985
    %v5564 = vpop.f32.mrf.mxu0
    %v5565 = vadd.f32 %v5496, %v5564
    %v5566 = vpop.f32.mrf.mxu0
    %v5567 = vadd.f32 %v5498, %v5566
    %5568 = vmatmul.bf16.gmra.mxu0 %v4987
    %v5569 = vpop.f32.mrf.mxu0
    %v5570 = vadd.f32 %v5501, %v5569
    %v5571 = vpop.f32.mrf.mxu0
    %v5572 = vadd.f32 %v5503, %v5571
    %5573 = vmatmul.bf16.gmra.mxu0 %v4989
    %v5574 = vpop.f32.mrf.mxu0
    %v5575 = vadd.f32 %v5506, %v5574
    %v5576 = vpop.f32.mrf.mxu0
    %v5577 = vadd.f32 %v5508, %v5576
    %5578 = vmatmul.bf16.gmra.mxu0 %v4991
    %v5579 = vpop.f32.mrf.mxu0
    %v5580 = vadd.f32 %v5511, %v5579
    %v5581 = vpop.f32.mrf.mxu0
    %v5582 = vadd.f32 %v5513, %v5581
    %5583 = vmatmul.bf16.gmra.mxu0 %v4993
    %v5584 = vpop.f32.mrf.mxu0
    %v5585 = vadd.f32 %v5516, %v5584
    %v5586 = vpop.f32.mrf.mxu0
    %v5587 = vadd.f32 %v5518, %v5586
    %5588 = vmatmul.bf16.gmra.mxu0 %v4995
    %v5589 = vpop.f32.mrf.mxu0
    %v5590 = vadd.f32 %v5521, %v5589
    %v5591 = vpop.f32.mrf.mxu0
    %v5592 = vadd.f32 %v5523, %v5591
    %5593 = vmatmul.bf16.gmra.mxu0 %v4997
    %v5594 = vpop.f32.mrf.mxu0
    %v5595 = vadd.f32 %v5526, %v5594
    %v5596 = vpop.f32.mrf.mxu0
    %v5597 = vadd.f32 %v5528, %v5596
    %5598 = vmatmul.bf16.gmra.mxu0 %v4999
    %v5599 = vpop.f32.mrf.mxu0
    %v5600 = vadd.f32 %v5531, %v5599
    %v5601 = vpop.f32.mrf.mxu0
    %v5602 = vadd.f32 %v5533, %v5601
    %5603 = vmatmul.bf16.gmra.mxu0 %v5001
    %v5604 = vpop.f32.mrf.mxu0
    %v5605 = vadd.f32 %v5536, %v5604
    %v5606 = vpop.f32.mrf.mxu0
    %v5607 = vadd.f32 %v5538, %v5606
    %5608 = vmatmul.bf16.gmra.mxu0 %v5003
    %v5609 = vpop.f32.mrf.mxu0
    %v5610 = vadd.f32 %v5541, %v5609
    %v5611 = vpop.f32.mrf.mxu0
    %v5612 = vadd.f32 %v5543, %v5611
    %5613 = vdwg.mxu0
    %5614 = vmatpush.bf16.msra.mxu0 %v5374
    %5615 = vmatpush.bf16.msra.mxu0 %v5373
    %5616 = vmatpush.bf16.msra.mxu0 %v5372
    %5617 = vmatpush.bf16.msra.mxu0 %v5371
    %5618 = vmatpush.bf16.msra.mxu0 %v5370
    %5619 = vmatpush.bf16.msra.mxu0 %v5369
    %5620 = vmatpush.bf16.msra.mxu0 %v5368
    %5621 = vmatpush.bf16.msra.mxu0 %v5367
    %5622 = vmatmul.bf16.gmra.mxu0 %v5035
    %v5623 = vpop.f32.mrf.mxu0
    %v5624 = vadd.f32 %v5555, %v5623
    %v5625 = vpop.f32.mrf.mxu0
    %v5626 = vadd.f32 %v5557, %v5625
    %5627 = vmatmul.bf16.gmra.mxu0 %v5044
    %v5628 = vpop.f32.mrf.mxu0
    %v5629 = vadd.f32 %v5560, %v5628
    %v5630 = vpop.f32.mrf.mxu0
    %v5631 = vadd.f32 %v5562, %v5630
    %5632 = vmatmul.bf16.gmra.mxu0 %v5053
    %v5633 = vpop.f32.mrf.mxu0
    %v5634 = vadd.f32 %v5565, %v5633
    %v5635 = vpop.f32.mrf.mxu0
    %v5636 = vadd.f32 %v5567, %v5635
    %5637 = vmatmul.bf16.gmra.mxu0 %v5062
    %v5638 = vpop.f32.mrf.mxu0
    %v5639 = vadd.f32 %v5570, %v5638
    %v5640 = vpop.f32.mrf.mxu0
    %v5641 = vadd.f32 %v5572, %v5640
    %5642 = vmatmul.bf16.gmra.mxu0 %v5071
    %v5643 = vpop.f32.mrf.mxu0
    %v5644 = vadd.f32 %v5575, %v5643
    %v5645 = vpop.f32.mrf.mxu0
    %v5646 = vadd.f32 %v5577, %v5645
    %5647 = vmatmul.bf16.gmra.mxu0 %v5080
    %v5648 = vpop.f32.mrf.mxu0
    %v5649 = vadd.f32 %v5580, %v5648
    %v5650 = vpop.f32.mrf.mxu0
    %v5651 = vadd.f32 %v5582, %v5650
    %5652 = vmatmul.bf16.gmra.mxu0 %v5089
    %v5653 = vpop.f32.mrf.mxu0
    %v5654 = vadd.f32 %v5585, %v5653
    %v5655 = vpop.f32.mrf.mxu0
    %v5656 = vadd.f32 %v5587, %v5655
    %5657 = vmatmul.bf16.gmra.mxu0 %v5098
    %v5658 = vpop.f32.mrf.mxu0
    %v5659 = vadd.f32 %v5590, %v5658
    %v5660 = vpop.f32.mrf.mxu0
    %v5661 = vadd.f32 %v5592, %v5660
    %5662 = vmatmul.bf16.gmra.mxu0 %v5107
    %v5663 = vpop.f32.mrf.mxu0
    %v5664 = vadd.f32 %v5595, %v5663
    %v5665 = vpop.f32.mrf.mxu0
    %v5666 = vadd.f32 %v5597, %v5665
    %5667 = vmatmul.bf16.gmra.mxu0 %v5116
    %v5668 = vpop.f32.mrf.mxu0
    %v5669 = vadd.f32 %v5600, %v5668
    %v5670 = vpop.f32.mrf.mxu0
    %v5671 = vadd.f32 %v5602, %v5670
    %5672 = vmatmul.bf16.gmra.mxu0 %v5125
    %v5673 = vpop.f32.mrf.mxu0
    %v5674 = vadd.f32 %v5605, %v5673
    %v5675 = vpop.f32.mrf.mxu0
    %v5676 = vadd.f32 %v5607, %v5675
    %5677 = vmatmul.bf16.gmra.mxu0 %v5134
    %v5678 = vpop.f32.mrf.mxu0
    %v5679 = vadd.f32 %v5610, %v5678
    %v5680 = vpop.f32.mrf.mxu0
    %v5681 = vadd.f32 %v5612, %v5680
    %5682 = vdwg.mxu0
    %v5683 = vmax.f32 %v5624, 0.0
    %v5684 = vmax.f32 %v5626, 0.0
    %v5685 = vmax.f32 %v5629, 0.0
    %v5686 = vmax.f32 %v5631, 0.0
    %v5687 = vmax.f32 %v5634, 0.0
    %v5688 = vmax.f32 %v5636, 0.0
    %v5689 = vmax.f32 %v5639, 0.0
    %v5690 = vmax.f32 %v5641, 0.0
    %v5691 = vmax.f32 %v5644, 0.0
    %v5692 = vmax.f32 %v5646, 0.0
    %v5693 = vmax.f32 %v5649, 0.0
    %v5694 = vmax.f32 %v5651, 0.0
    %v5695 = vmax.f32 %v5654, 0.0
    %v5696 = vmax.f32 %v5656, 0.0
    %v5697 = vmax.f32 %v5659, 0.0
    %v5698 = vmax.f32 %v5661, 0.0
    %v5699 = vmax.f32 %v5664, 0.0
    %v5700 = vmax.f32 %v5666, 0.0
    %v5701 = vmax.f32 %v5669, 0.0
    %v5702 = vmax.f32 %v5671, 0.0
    %v5703 = vmax.f32 %v5674, 0.0
    %v5704 = vmax.f32 %v5676, 0.0
    %v5705 = vmax.f32 %v5679, 0.0
    %v5706 = vmax.f32 %v5681, 0.0
    %v5707 = vpack.c.bf16 %v5683, %v5683
    %v5708 = vpack.c.bf16 %v5684, %v5684
    %v5709 = vpack.c.bf16 %v5685, %v5685
    %v5710 = vpack.c.bf16 %v5686, %v5686
    %v5711 = vpack.c.bf16 %v5687, %v5687
    %v5712 = vpack.c.bf16 %v5688, %v5688
    %v5713 = vpack.c.bf16 %v5689, %v5689
    %v5714 = vpack.c.bf16 %v5690, %v5690
    %v5715 = vpack.c.bf16 %v5691, %v5691
    %v5716 = vpack.c.bf16 %v5692, %v5692
    %v5717 = vpack.c.bf16 %v5693, %v5693
    %v5718 = vpack.c.bf16 %v5694, %v5694
    %v5719 = vpack.c.bf16 %v5695, %v5695
    %v5720 = vpack.c.bf16 %v5696, %v5696
    %v5721 = vpack.c.bf16 %v5697, %v5697
    %v5722 = vpack.c.bf16 %v5698, %v5698
    %v5723 = vpack.c.bf16 %v5699, %v5699
    %v5724 = vpack.c.bf16 %v5700, %v5700
    %v5725 = vpack.c.bf16 %v5701, %v5701
    %v5726 = vpack.c.bf16 %v5702, %v5702
    %v5727 = vpack.c.bf16 %v5703, %v5703
    %v5728 = vpack.c.bf16 %v5704, %v5704
    %v5729 = vpack.c.bf16 %v5705, %v5705
    %v5730 = vpack.c.bf16 %v5706, %v5706
    %5731 = vst [vmem:[#allocation5] sm:$0xf] %v5707
    %5732 = vst [vmem:[#allocation5 + $0x4] sm:$0xf] %v5708
    %5733 = vst [vmem:[#allocation5 + $0x8] sm:$0xf] %v5709
    %5734 = vst [vmem:[#allocation5 + $0xc] sm:$0xf] %v5710
    %5735 = vst [vmem:[#allocation5 + $0x10] sm:$0xf] %v5711
    %5736 = vst [vmem:[#allocation5 + $0x14] sm:$0xf] %v5712
    %5737 = vst [vmem:[#allocation5 + $0x18] sm:$0xf] %v5713
    %5738 = vst [vmem:[#allocation5 + $0x1c] sm:$0xf] %v5714
    %5739 = vst [vmem:[#allocation5 + $0x20] sm:$0xf] %v5715
    %5740 = vst [vmem:[#allocation5 + $0x24] sm:$0xf] %v5716
    %5741 = vst [vmem:[#allocation5 + $0x28] sm:$0xf] %v5717
    %5742 = vst [vmem:[#allocation5 + $0x2c] sm:$0xf] %v5718
    %5743 = vst [vmem:[#allocation5 + $0x30] sm:$0xf] %v5719
    %5744 = vst [vmem:[#allocation5 + $0x34] sm:$0xf] %v5720
    %5745 = vst [vmem:[#allocation5 + $0x38] sm:$0xf] %v5721
    %5746 = vst [vmem:[#allocation5 + $0x3c] sm:$0xf] %v5722
    %5747 = vst [vmem:[#allocation5 + $0x40] sm:$0xf] %v5723
    %5748 = vst [vmem:[#allocation5 + $0x44] sm:$0xf] %v5724
    %5749 = vst [vmem:[#allocation5 + $0x48] sm:$0xf] %v5725
    %5750 = vst [vmem:[#allocation5 + $0x4c] sm:$0xf] %v5726
    %5751 = vst [vmem:[#allocation5 + $0x50] sm:$0xf] %v5727
    %5752 = vst [vmem:[#allocation5 + $0x54] sm:$0xf] %v5728
    %5753 = vst [vmem:[#allocation5 + $0x58] sm:$0xf] %v5729
    %5754 = vst [vmem:[#allocation5 + $0x5c] sm:$0xf] %v5730
    %v5755 = vld [vmem:[#allocation5] sm:$0xf]
    %v5756 = vld [vmem:[#allocation5 + $0x4] sm:$0xf]
    %v5757 = vld [vmem:[#allocation5 + $0x8] sm:$0xf]
    %v5758 = vld [vmem:[#allocation5 + $0xc] sm:$0xf]
    %v5759 = vld [vmem:[#allocation5 + $0x10] sm:$0xf]
    %v5760 = vld [vmem:[#allocation5 + $0x14] sm:$0xf]
    %v5761 = vld [vmem:[#allocation5 + $0x18] sm:$0xf]
    %v5762 = vld [vmem:[#allocation5 + $0x1c] sm:$0xf]
    %v5763 = vld [vmem:[#allocation5 + $0x20] sm:$0xf]
    %v5764 = vld [vmem:[#allocation5 + $0x24] sm:$0xf]
    %v5765 = vld [vmem:[#allocation5 + $0x28] sm:$0xf]
    %v5766 = vld [vmem:[#allocation5 + $0x2c] sm:$0xf]
    %v5767 = vld [vmem:[#allocation5 + $0x30] sm:$0xf]
    %v5768 = vld [vmem:[#allocation5 + $0x34] sm:$0xf]
    %v5769 = vld [vmem:[#allocation5 + $0x38] sm:$0xf]
    %v5770 = vld [vmem:[#allocation5 + $0x3c] sm:$0xf]
    %v5771 = vld [vmem:[#allocation5 + $0x40] sm:$0xf]
    %v5772 = vld [vmem:[#allocation5 + $0x44] sm:$0xf]
    %v5773 = vld [vmem:[#allocation5 + $0x48] sm:$0xf]
    %v5774 = vld [vmem:[#allocation5 + $0x4c] sm:$0xf]
    %v5775 = vld [vmem:[#allocation5 + $0x50] sm:$0xf]
    %v5776 = vld [vmem:[#allocation5 + $0x54] sm:$0xf]
    %v5777 = vld [vmem:[#allocation5 + $0x58] sm:$0xf]
    %v5778 = vld [vmem:[#allocation5 + $0x5c] sm:$0xf]
    %v5779 = vld [vmem:[#allocation5 + $0x60] sm:$0x1]
    %v5780 = vld [vmem:[#allocation5 + $0x4] sm:$0xe]
    %v5781 = vld [vmem:[#allocation5 + $0x8] sm:$0xf]
    %v5782 = vld [vmem:[#allocation5 + $0xc] sm:$0xf]
    %v5783 = vld [vmem:[#allocation5 + $0x10] sm:$0xf]
    %v5784 = vld [vmem:[#allocation5 + $0x14] sm:$0xf]
    %v5785 = vld [vmem:[#allocation5 + $0x18] sm:$0xf]
    %v5786 = vld [vmem:[#allocation5 + $0x1c] sm:$0xf]
    %v5787 = vld [vmem:[#allocation5 + $0x20] sm:$0xf]
    %v5788 = vld [vmem:[#allocation5 + $0x24] sm:$0xf]
    %v5789 = vld [vmem:[#allocation5 + $0x28] sm:$0xf]
    %v5790 = vld [vmem:[#allocation5 + $0x2c] sm:$0xf]
    %v5791 = vld [vmem:[#allocation5 + $0x30] sm:$0xf]
    %v5792 = vld [vmem:[#allocation5 + $0x34] sm:$0xf]
    %v5793 = vld [vmem:[#allocation5 + $0x38] sm:$0xf]
    %v5794 = vld [vmem:[#allocation5 + $0x3c] sm:$0xf]
    %v5795 = vld [vmem:[#allocation5 + $0x40] sm:$0xf]
    %v5796 = vld [vmem:[#allocation5 + $0x44] sm:$0xf]
    %v5797 = vld [vmem:[#allocation5 + $0x48] sm:$0xf]
    %v5798 = vld [vmem:[#allocation5 + $0x4c] sm:$0xf]
    %v5799 = vld [vmem:[#allocation5 + $0x50] sm:$0xf]
    %v5800 = vld [vmem:[#allocation5 + $0x54] sm:$0xf]
    %v5801 = vld [vmem:[#allocation5 + $0x58] sm:$0xf]
    %v5802 = vld [vmem:[#allocation5 + $0x5c] sm:$0xf]
    %v5803 = vld [vmem:[#allocation5 + $0x60] sm:$0xf]
    %v5804 = vld [vmem:[#allocation5 + $0x64] sm:$0x1]
    %v5805 = vld [vmem:[#allocation5 + $0x64] sm:$0x3]
    %v5830 = vunpack.c.l.b16 %v5755
    %v5831 = vunpack.c.l.b16 %v5756
    %v5832 = vunpack.c.l.b16 %v5757
    %v5833 = vunpack.c.l.b16 %v5758
    %v5834 = vunpack.c.l.b16 %v5759
    %v5835 = vunpack.c.l.b16 %v5760
    %v5836 = vunpack.c.l.b16 %v5761
    %v5837 = vunpack.c.l.b16 %v5762
    %v5838 = vunpack.c.l.b16 %v5763
    %v5839 = vunpack.c.l.b16 %v5764
    %v5840 = vunpack.c.l.b16 %v5765
    %v5841 = vunpack.c.l.b16 %v5766
    %v5842 = vunpack.c.l.b16 %v5767
    %v5843 = vunpack.c.l.b16 %v5768
    %v5844 = vunpack.c.l.b16 %v5769
    %v5845 = vunpack.c.l.b16 %v5770
    %v5846 = vunpack.c.l.b16 %v5771
    %v5847 = vunpack.c.l.b16 %v5772
    %v5848 = vunpack.c.l.b16 %v5773
    %v5849 = vunpack.c.l.b16 %v5774
    %v5850 = vunpack.c.l.b16 %v5775
    %v5851 = vunpack.c.l.b16 %v5776
    %v5852 = vunpack.c.l.b16 %v5777
    %v5853 = vunpack.c.l.b16 %v5778
    %v5854 = vpack.c.b16 %v5831, %v5830
    %v5855 = vpack.c.b16 %v5833, %v5832
    %v5856 = vpack.c.b16 %v5835, %v5834
    %v5857 = vpack.c.b16 %v5837, %v5836
    %v5858 = vpack.c.b16 %v5839, %v5838
    %v5859 = vpack.c.b16 %v5841, %v5840
    %v5860 = vpack.c.b16 %v5843, %v5842
    %v5861 = vpack.c.b16 %v5845, %v5844
    %v5862 = vpack.c.b16 %v5847, %v5846
    %v5863 = vpack.c.b16 %v5849, %v5848
    %v5864 = vpack.c.b16 %v5851, %v5850
    %v5865 = vpack.c.b16 %v5853, %v5852
    %v5879 = vunpack.c.l.b16 %v5779
    %v5880 = vpack.c.b16 %v5879, %v5879
    %v5882 = vshrl.u32 %v5854, 16
    %v5884 = vshll.u32 %v5854, 16
    %v5886 = vrot.slane %v5884, 1
    %v5887 = vor.u32 %v5882, %v5886
    %v5889 = vshll.u32 %v5855, 16
    %v5891 = vrot.slane %v5889, 1
    %v5892 = vsel %vm3215, %v5887, %v5891
    %v5893 = vshrl.u32 %v5855, 16
    %v5895 = vor.u32 %v5893, %v5891
    %v5897 = vshll.u32 %v5856, 16
    %v5899 = vrot.slane %v5897, 1
    %v5900 = vsel %vm3215, %v5895, %v5899
    %v5901 = vshrl.u32 %v5856, 16
    %v5903 = vor.u32 %v5901, %v5899
    %v5905 = vshll.u32 %v5857, 16
    %v5907 = vrot.slane %v5905, 1
    %v5908 = vsel %vm3215, %v5903, %v5907
    %v5909 = vshrl.u32 %v5857, 16
    %v5911 = vor.u32 %v5909, %v5907
    %v5913 = vshll.u32 %v5858, 16
    %v5915 = vrot.slane %v5913, 1
    %v5916 = vsel %vm3215, %v5911, %v5915
    %v5917 = vshrl.u32 %v5858, 16
    %v5919 = vor.u32 %v5917, %v5915
    %v5921 = vshll.u32 %v5859, 16
    %v5923 = vrot.slane %v5921, 1
    %v5924 = vsel %vm3215, %v5919, %v5923
    %v5925 = vshrl.u32 %v5859, 16
    %v5927 = vor.u32 %v5925, %v5923
    %v5929 = vshll.u32 %v5860, 16
    %v5931 = vrot.slane %v5929, 1
    %v5932 = vsel %vm3215, %v5927, %v5931
    %v5933 = vshrl.u32 %v5860, 16
    %v5935 = vor.u32 %v5933, %v5931
    %v5937 = vshll.u32 %v5861, 16
    %v5939 = vrot.slane %v5937, 1
    %v5940 = vsel %vm3215, %v5935, %v5939
    %v5941 = vshrl.u32 %v5861, 16
    %v5943 = vor.u32 %v5941, %v5939
    %v5945 = vshll.u32 %v5862, 16
    %v5947 = vrot.slane %v5945, 1
    %v5948 = vsel %vm3215, %v5943, %v5947
    %v5949 = vshrl.u32 %v5862, 16
    %v5951 = vor.u32 %v5949, %v5947
    %v5953 = vshll.u32 %v5863, 16
    %v5955 = vrot.slane %v5953, 1
    %v5956 = vsel %vm3215, %v5951, %v5955
    %v5957 = vshrl.u32 %v5863, 16
    %v5959 = vor.u32 %v5957, %v5955
    %v5961 = vshll.u32 %v5864, 16
    %v5963 = vrot.slane %v5961, 1
    %v5964 = vsel %vm3215, %v5959, %v5963
    %v5965 = vshrl.u32 %v5864, 16
    %v5967 = vor.u32 %v5965, %v5963
    %v5969 = vshll.u32 %v5865, 16
    %v5971 = vrot.slane %v5969, 1
    %v5972 = vsel %vm3215, %v5967, %v5971
    %v5973 = vshrl.u32 %v5865, 16
    %v5975 = vor.u32 %v5973, %v5971
    %v5977 = vshll.u32 %v5880, 16
    %v5979 = vrot.slane %v5977, 1
    %v5980 = vsel %vm3215, %v5975, %v5979
    %v6018 = vunpack.c.l.b16 %v5780
    %v6019 = vunpack.c.l.b16 %v5781
    %v6020 = vunpack.c.l.b16 %v5782
    %v6021 = vunpack.c.l.b16 %v5783
    %v6022 = vunpack.c.l.b16 %v5784
    %v6023 = vunpack.c.l.b16 %v5785
    %v6024 = vunpack.c.l.b16 %v5786
    %v6025 = vunpack.c.l.b16 %v5787
    %v6026 = vunpack.c.l.b16 %v5788
    %v6027 = vunpack.c.l.b16 %v5789
    %v6028 = vunpack.c.l.b16 %v5790
    %v6029 = vunpack.c.l.b16 %v5791
    %v6030 = vunpack.c.l.b16 %v5792
    %v6031 = vunpack.c.l.b16 %v5793
    %v6032 = vunpack.c.l.b16 %v5794
    %v6033 = vunpack.c.l.b16 %v5795
    %v6034 = vunpack.c.l.b16 %v5796
    %v6035 = vunpack.c.l.b16 %v5797
    %v6036 = vunpack.c.l.b16 %v5798
    %v6037 = vunpack.c.l.b16 %v5799
    %v6038 = vunpack.c.l.b16 %v5800
    %v6039 = vunpack.c.l.b16 %v5801
    %v6040 = vunpack.c.l.b16 %v5802
    %v6041 = vunpack.c.l.b16 %v5803
    %v6042 = vunpack.c.l.b16 %v5804
    %v6043 = vpack.c.b16 %v6019, %v6018
    %v6044 = vpack.c.b16 %v6021, %v6020
    %v6045 = vpack.c.b16 %v6023, %v6022
    %v6046 = vpack.c.b16 %v6025, %v6024
    %v6047 = vpack.c.b16 %v6027, %v6026
    %v6048 = vpack.c.b16 %v6029, %v6028
    %v6049 = vpack.c.b16 %v6031, %v6030
    %v6050 = vpack.c.b16 %v6033, %v6032
    %v6051 = vpack.c.b16 %v6035, %v6034
    %v6052 = vpack.c.b16 %v6037, %v6036
    %v6053 = vpack.c.b16 %v6039, %v6038
    %v6054 = vpack.c.b16 %v6041, %v6040
    %v6055 = vpack.c.b16 %v6042, %v6042
    %v6056 = vrot.slane %v6043, 1
    %v6057 = vrot.slane %v6044, 1
    %v6058 = vsel %vm3359, %v6056, %v6057
    %v6059 = vrot.slane %v6045, 1
    %v6060 = vsel %vm3359, %v6057, %v6059
    %v6061 = vrot.slane %v6046, 1
    %v6062 = vsel %vm3359, %v6059, %v6061
    %v6063 = vrot.slane %v6047, 1
    %v6064 = vsel %vm3359, %v6061, %v6063
    %v6065 = vrot.slane %v6048, 1
    %v6066 = vsel %vm3359, %v6063, %v6065
    %v6067 = vrot.slane %v6049, 1
    %v6068 = vsel %vm3359, %v6065, %v6067
    %v6069 = vrot.slane %v6050, 1
    %v6070 = vsel %vm3359, %v6067, %v6069
    %v6071 = vrot.slane %v6051, 1
    %v6072 = vsel %vm3359, %v6069, %v6071
    %v6073 = vrot.slane %v6052, 1
    %v6074 = vsel %vm3359, %v6071, %v6073
    %v6075 = vrot.slane %v6053, 1
    %v6076 = vsel %vm3359, %v6073, %v6075
    %v6077 = vrot.slane %v6054, 1
    %v6078 = vsel %vm3359, %v6075, %v6077
    %v6079 = vrot.slane %v6055, 1
    %v6080 = vsel %vm3359, %v6077, %v6079
    %v6094 = vunpack.c.l.b16 %v5805
    %v6095 = vpack.c.b16 %v6094, %v6094
    %v6097 = vshrl.u32 %v6043, 16
    %v6099 = vrot.slane %v6097, 1
    %v6100 = vshll.u32 %v6043, 16
    %v6102 = vrot.slane %v6100, 2
    %v6103 = vor.u32 %v6099, %v6102
    %v6105 = vshrl.u32 %v6044, 16
    %v6107 = vrot.slane %v6105, 1
    %v6108 = vshll.u32 %v6044, 16
    %v6110 = vrot.slane %v6108, 2
    %v6111 = vor.u32 %v6107, %v6110
    %v6112 = vsel %vm3412, %v6103, %v6111
    %v6114 = vshrl.u32 %v6045, 16
    %v6116 = vrot.slane %v6114, 1
    %v6117 = vshll.u32 %v6045, 16
    %v6119 = vrot.slane %v6117, 2
    %v6120 = vor.u32 %v6116, %v6119
    %v6121 = vsel %vm3412, %v6111, %v6120
    %v6123 = vshrl.u32 %v6046, 16
    %v6125 = vrot.slane %v6123, 1
    %v6126 = vshll.u32 %v6046, 16
    %v6128 = vrot.slane %v6126, 2
    %v6129 = vor.u32 %v6125, %v6128
    %v6130 = vsel %vm3412, %v6120, %v6129
    %v6132 = vshrl.u32 %v6047, 16
    %v6134 = vrot.slane %v6132, 1
    %v6135 = vshll.u32 %v6047, 16
    %v6137 = vrot.slane %v6135, 2
    %v6138 = vor.u32 %v6134, %v6137
    %v6139 = vsel %vm3412, %v6129, %v6138
    %v6141 = vshrl.u32 %v6048, 16
    %v6143 = vrot.slane %v6141, 1
    %v6144 = vshll.u32 %v6048, 16
    %v6146 = vrot.slane %v6144, 2
    %v6147 = vor.u32 %v6143, %v6146
    %v6148 = vsel %vm3412, %v6138, %v6147
    %v6150 = vshrl.u32 %v6049, 16
    %v6152 = vrot.slane %v6150, 1
    %v6153 = vshll.u32 %v6049, 16
    %v6155 = vrot.slane %v6153, 2
    %v6156 = vor.u32 %v6152, %v6155
    %v6157 = vsel %vm3412, %v6147, %v6156
    %v6159 = vshrl.u32 %v6050, 16
    %v6161 = vrot.slane %v6159, 1
    %v6162 = vshll.u32 %v6050, 16
    %v6164 = vrot.slane %v6162, 2
    %v6165 = vor.u32 %v6161, %v6164
    %v6166 = vsel %vm3412, %v6156, %v6165
    %v6168 = vshrl.u32 %v6051, 16
    %v6170 = vrot.slane %v6168, 1
    %v6171 = vshll.u32 %v6051, 16
    %v6173 = vrot.slane %v6171, 2
    %v6174 = vor.u32 %v6170, %v6173
    %v6175 = vsel %vm3412, %v6165, %v6174
    %v6177 = vshrl.u32 %v6052, 16
    %v6179 = vrot.slane %v6177, 1
    %v6180 = vshll.u32 %v6052, 16
    %v6182 = vrot.slane %v6180, 2
    %v6183 = vor.u32 %v6179, %v6182
    %v6184 = vsel %vm3412, %v6174, %v6183
    %v6186 = vshrl.u32 %v6053, 16
    %v6188 = vrot.slane %v6186, 1
    %v6189 = vshll.u32 %v6053, 16
    %v6191 = vrot.slane %v6189, 2
    %v6192 = vor.u32 %v6188, %v6191
    %v6193 = vsel %vm3412, %v6183, %v6192
    %v6195 = vshrl.u32 %v6054, 16
    %v6197 = vrot.slane %v6195, 1
    %v6198 = vshll.u32 %v6054, 16
    %v6200 = vrot.slane %v6198, 2
    %v6201 = vor.u32 %v6197, %v6200
    %v6202 = vsel %vm3412, %v6192, %v6201
    %v6204 = vshrl.u32 %v6095, 16
    %v6206 = vrot.slane %v6204, 1
    %v6207 = vshll.u32 %v6095, 16
    %v6209 = vrot.slane %v6207, 2
    %v6210 = vor.u32 %v6206, %v6209
    %v6211 = vsel %vm3412, %v6201, %v6210
    %v6224 = vld [vmem:[#allocation9] sm:$0xff]
    %v6225 = vld [vmem:[#allocation9 + $0x8] sm:$0xff]
    %v6226 = vld [vmem:[#allocation9 + $0x10] sm:$0xff]
    %v6227 = vld [vmem:[#allocation9 + $0x18] sm:$0xff]
    %v6228 = vld [vmem:[#allocation9 + $0x20] sm:$0xff]
    %v6229 = vld [vmem:[#allocation9 + $0x28] sm:$0xff]
    %v6230 = vld [vmem:[#allocation9 + $0x30] sm:$0xff]
    %v6231 = vld [vmem:[#allocation9 + $0x38] sm:$0xff]
    %v6232 = vld [vmem:[#allocation9 + $0x40] sm:$0xff]
    %v6233 = vld [vmem:[#allocation9 + $0x48] sm:$0xff]
    %v6234 = vld [vmem:[#allocation9 + $0x50] sm:$0xff]
    %v6235 = vld [vmem:[#allocation9 + $0x58] sm:$0xff]
    %v6236 = vld [vmem:[#allocation9 + $0x60] sm:$0xff]
    %v6237 = vld [vmem:[#allocation9 + $0x68] sm:$0xff]
    %v6238 = vld [vmem:[#allocation9 + $0x70] sm:$0xff]
    %v6239 = vld [vmem:[#allocation9 + $0x78] sm:$0xff]
    %v6240 = vld [vmem:[#allocation9 + $0x80] sm:$0xff]
    %v6241 = vld [vmem:[#allocation9 + $0x88] sm:$0xff]
    %v6242 = vld [vmem:[#allocation9 + $0x90] sm:$0xff]
    %v6243 = vld [vmem:[#allocation9 + $0x98] sm:$0xff]
    %v6244 = vld [vmem:[#allocation9 + $0xa0] sm:$0xff]
    %v6245 = vld [vmem:[#allocation9 + $0xa8] sm:$0xff]
    %v6246 = vld [vmem:[#allocation9 + $0xb0] sm:$0xff]
    %v6247 = vld [vmem:[#allocation9 + $0xb8] sm:$0xff]
    %v6248 = vld [vmem:[#allocation9 + $0xc0] sm:$0xff]
    %v6249 = vld [vmem:[#allocation9 + $0xc8] sm:$0xff]
    %v6250 = vld [vmem:[#allocation9 + $0xd0] sm:$0xff]
    %v6251 = vld [vmem:[#allocation9 + $0xd8] sm:$0xff]
    %v6252 = vld [vmem:[#allocation9 + $0xe0] sm:$0xff]
    %v6253 = vld [vmem:[#allocation9 + $0xe8] sm:$0xff]
    %v6254 = vld [vmem:[#allocation9 + $0xf0] sm:$0xff]
    %v6255 = vld [vmem:[#allocation9 + $0xf8] sm:$0xff]
    %v6256 = vld [vmem:[#allocation9 + $0x100] sm:$0xff]
    %v6257 = vld [vmem:[#allocation9 + $0x108] sm:$0xff]
    %v6258 = vld [vmem:[#allocation9 + $0x110] sm:$0xff]
    %v6259 = vld [vmem:[#allocation9 + $0x118] sm:$0xff]
    %v6260 = vld [vmem:[#allocation9 + $0x120] sm:$0xff]
    %v6261 = vld [vmem:[#allocation9 + $0x128] sm:$0xff]
    %v6262 = vld [vmem:[#allocation9 + $0x130] sm:$0xff]
    %v6263 = vld [vmem:[#allocation9 + $0x138] sm:$0xff]
    %v6264 = vld [vmem:[#allocation9 + $0x140] sm:$0xff]
    %v6265 = vld [vmem:[#allocation9 + $0x148] sm:$0xff]
    %v6266 = vld [vmem:[#allocation9 + $0x150] sm:$0xff]
    %v6267 = vld [vmem:[#allocation9 + $0x158] sm:$0xff]
    %v6268 = vld [vmem:[#allocation9 + $0x160] sm:$0xff]
    %v6269 = vld [vmem:[#allocation9 + $0x168] sm:$0xff]
    %v6270 = vld [vmem:[#allocation9 + $0x170] sm:$0xff]
    %v6271 = vld [vmem:[#allocation9 + $0x178] sm:$0xff]
    %v6272 = vld [vmem:[#allocation9 + $0x180] sm:$0xff]
    %v6273 = vld [vmem:[#allocation9 + $0x188] sm:$0xff]
    %v6274 = vld [vmem:[#allocation9 + $0x190] sm:$0xff]
    %v6275 = vld [vmem:[#allocation9 + $0x198] sm:$0xff]
    %v6276 = vld [vmem:[#allocation9 + $0x1a0] sm:$0xff]
    %v6277 = vld [vmem:[#allocation9 + $0x1a8] sm:$0xff]
    %v6278 = vld [vmem:[#allocation9 + $0x1b0] sm:$0xff]
    %v6279 = vld [vmem:[#allocation9 + $0x1b8] sm:$0xff]
    %v6280 = vld [vmem:[#allocation9 + $0x1c0] sm:$0xff]
    %v6281 = vld [vmem:[#allocation9 + $0x1c8] sm:$0xff]
    %v6282 = vld [vmem:[#allocation9 + $0x1d0] sm:$0xff]
    %v6283 = vld [vmem:[#allocation9 + $0x1d8] sm:$0xff]
    %v6284 = vld [vmem:[#allocation9 + $0x1e0] sm:$0xff]
    %v6285 = vld [vmem:[#allocation9 + $0x1e8] sm:$0xff]
    %v6286 = vld [vmem:[#allocation9 + $0x1f0] sm:$0xff]
    %v6287 = vld [vmem:[#allocation9 + $0x1f8] sm:$0xff]
    %v6288 = vld [vmem:[%s10] sm:$0x3]
    %v6290 = vperm.slane %v6288, 0
    %v6291 = vperm.slane %v6288, 1
    %v6358 = vunpack.c.l.b16 %v6224
    %v6359 = vunpack.c.h.b16 %v6224
    %v6360 = vunpack.c.l.b16 %v6225
    %v6361 = vunpack.c.h.b16 %v6225
    %v6362 = vunpack.c.l.b16 %v6226
    %v6363 = vunpack.c.h.b16 %v6226
    %v6364 = vunpack.c.l.b16 %v6227
    %v6365 = vunpack.c.h.b16 %v6227
    %v6366 = vunpack.c.l.b16 %v6228
    %v6367 = vunpack.c.h.b16 %v6228
    %v6368 = vunpack.c.l.b16 %v6229
    %v6369 = vunpack.c.h.b16 %v6229
    %v6370 = vunpack.c.l.b16 %v6230
    %v6371 = vunpack.c.h.b16 %v6230
    %v6372 = vunpack.c.l.b16 %v6231
    %v6373 = vunpack.c.h.b16 %v6231
    %v6374 = vunpack.c.l.b16 %v6232
    %v6375 = vunpack.c.h.b16 %v6232
    %v6376 = vunpack.c.l.b16 %v6233
    %v6377 = vunpack.c.h.b16 %v6233
    %v6378 = vunpack.c.l.b16 %v6234
    %v6379 = vunpack.c.h.b16 %v6234
    %v6380 = vunpack.c.l.b16 %v6235
    %v6381 = vunpack.c.h.b16 %v6235
    %v6382 = vunpack.c.l.b16 %v6236
    %v6383 = vunpack.c.h.b16 %v6236
    %v6384 = vunpack.c.l.b16 %v6237
    %v6385 = vunpack.c.h.b16 %v6237
    %v6386 = vunpack.c.l.b16 %v6238
    %v6387 = vunpack.c.h.b16 %v6238
    %v6388 = vunpack.c.l.b16 %v6239
    %v6389 = vunpack.c.h.b16 %v6239
    %v6390 = vunpack.c.l.b16 %v6240
    %v6391 = vunpack.c.h.b16 %v6240
    %v6392 = vunpack.c.l.b16 %v6241
    %v6393 = vunpack.c.h.b16 %v6241
    %v6394 = vunpack.c.l.b16 %v6242
    %v6395 = vunpack.c.h.b16 %v6242
    %v6396 = vunpack.c.l.b16 %v6243
    %v6397 = vunpack.c.h.b16 %v6243
    %v6398 = vunpack.c.l.b16 %v6244
    %v6399 = vunpack.c.h.b16 %v6244
    %v6400 = vunpack.c.l.b16 %v6245
    %v6401 = vunpack.c.h.b16 %v6245
    %v6402 = vunpack.c.l.b16 %v6246
    %v6403 = vunpack.c.h.b16 %v6246
    %v6404 = vunpack.c.l.b16 %v6247
    %v6405 = vunpack.c.h.b16 %v6247
    %v6406 = vunpack.c.l.b16 %v6248
    %v6407 = vunpack.c.h.b16 %v6248
    %v6408 = vunpack.c.l.b16 %v6249
    %v6409 = vunpack.c.h.b16 %v6249
    %v6410 = vunpack.c.l.b16 %v6250
    %v6411 = vunpack.c.h.b16 %v6250
    %v6412 = vunpack.c.l.b16 %v6251
    %v6413 = vunpack.c.h.b16 %v6251
    %v6414 = vunpack.c.l.b16 %v6252
    %v6415 = vunpack.c.h.b16 %v6252
    %v6416 = vunpack.c.l.b16 %v6253
    %v6417 = vunpack.c.h.b16 %v6253
    %v6418 = vunpack.c.l.b16 %v6254
    %v6419 = vunpack.c.h.b16 %v6254
    %v6420 = vunpack.c.l.b16 %v6255
    %v6421 = vunpack.c.h.b16 %v6255
    %v6422 = vunpack.c.l.b16 %v6256
    %v6423 = vunpack.c.h.b16 %v6256
    %v6424 = vunpack.c.l.b16 %v6257
    %v6425 = vunpack.c.h.b16 %v6257
    %v6426 = vunpack.c.l.b16 %v6258
    %v6427 = vunpack.c.h.b16 %v6258
    %v6428 = vunpack.c.l.b16 %v6259
    %v6429 = vunpack.c.h.b16 %v6259
    %v6430 = vunpack.c.l.b16 %v6260
    %v6431 = vunpack.c.h.b16 %v6260
    %v6432 = vunpack.c.l.b16 %v6261
    %v6433 = vunpack.c.h.b16 %v6261
    %v6434 = vunpack.c.l.b16 %v6262
    %v6435 = vunpack.c.h.b16 %v6262
    %v6436 = vunpack.c.l.b16 %v6263
    %v6437 = vunpack.c.h.b16 %v6263
    %v6438 = vunpack.c.l.b16 %v6264
    %v6439 = vunpack.c.h.b16 %v6264
    %v6440 = vunpack.c.l.b16 %v6265
    %v6441 = vunpack.c.h.b16 %v6265
    %v6442 = vunpack.c.l.b16 %v6266
    %v6443 = vunpack.c.h.b16 %v6266
    %v6444 = vunpack.c.l.b16 %v6267
    %v6445 = vunpack.c.h.b16 %v6267
    %v6446 = vunpack.c.l.b16 %v6268
    %v6447 = vunpack.c.h.b16 %v6268
    %v6448 = vunpack.c.l.b16 %v6269
    %v6449 = vunpack.c.h.b16 %v6269
    %v6450 = vunpack.c.l.b16 %v6270
    %v6451 = vunpack.c.h.b16 %v6270
    %v6452 = vunpack.c.l.b16 %v6271
    %v6453 = vunpack.c.h.b16 %v6271
    %v6454 = vunpack.c.l.b16 %v6272
    %v6455 = vunpack.c.h.b16 %v6272
    %v6456 = vunpack.c.l.b16 %v6273
    %v6457 = vunpack.c.h.b16 %v6273
    %v6458 = vunpack.c.l.b16 %v6274
    %v6459 = vunpack.c.h.b16 %v6274
    %v6460 = vunpack.c.l.b16 %v6275
    %v6461 = vunpack.c.h.b16 %v6275
    %v6462 = vunpack.c.l.b16 %v6276
    %v6463 = vunpack.c.h.b16 %v6276
    %v6464 = vunpack.c.l.b16 %v6277
    %v6465 = vunpack.c.h.b16 %v6277
    %v6466 = vunpack.c.l.b16 %v6278
    %v6467 = vunpack.c.h.b16 %v6278
    %v6468 = vunpack.c.l.b16 %v6279
    %v6469 = vunpack.c.h.b16 %v6279
    %v6470 = vunpack.c.l.b16 %v6280
    %v6471 = vunpack.c.h.b16 %v6280
    %v6472 = vunpack.c.l.b16 %v6281
    %v6473 = vunpack.c.h.b16 %v6281
    %v6474 = vunpack.c.l.b16 %v6282
    %v6475 = vunpack.c.h.b16 %v6282
    %v6476 = vunpack.c.l.b16 %v6283
    %v6477 = vunpack.c.h.b16 %v6283
    %v6478 = vunpack.c.l.b16 %v6284
    %v6479 = vunpack.c.h.b16 %v6284
    %v6480 = vunpack.c.l.b16 %v6285
    %v6481 = vunpack.c.h.b16 %v6285
    %v6482 = vunpack.c.l.b16 %v6286
    %v6483 = vunpack.c.h.b16 %v6286
    %v6484 = vunpack.c.l.b16 %v6287
    %v6485 = vunpack.c.h.b16 %v6287
    %v6486 = vpack.c.b16 %v6360, %v6358
    %v6487 = vpack.c.b16 %v6361, %v6359
    %v6488 = vpack.c.b16 %v6364, %v6362
    %v6489 = vpack.c.b16 %v6365, %v6363
    %v6490 = vpack.c.b16 %v6368, %v6366
    %v6491 = vpack.c.b16 %v6369, %v6367
    %v6492 = vpack.c.b16 %v6372, %v6370
    %v6493 = vpack.c.b16 %v6373, %v6371
    %v6494 = vpack.c.b16 %v6376, %v6374
    %v6495 = vpack.c.b16 %v6377, %v6375
    %v6496 = vpack.c.b16 %v6380, %v6378
    %v6497 = vpack.c.b16 %v6381, %v6379
    %v6498 = vpack.c.b16 %v6384, %v6382
    %v6499 = vpack.c.b16 %v6385, %v6383
    %v6500 = vpack.c.b16 %v6388, %v6386
    %v6501 = vpack.c.b16 %v6389, %v6387
    %v6502 = vpack.c.b16 %v6392, %v6390
    %v6503 = vpack.c.b16 %v6393, %v6391
    %v6504 = vpack.c.b16 %v6396, %v6394
    %v6505 = vpack.c.b16 %v6397, %v6395
    %v6506 = vpack.c.b16 %v6400, %v6398
    %v6507 = vpack.c.b16 %v6401, %v6399
    %v6508 = vpack.c.b16 %v6404, %v6402
    %v6509 = vpack.c.b16 %v6405, %v6403
    %v6510 = vpack.c.b16 %v6408, %v6406
    %v6511 = vpack.c.b16 %v6409, %v6407
    %v6512 = vpack.c.b16 %v6412, %v6410
    %v6513 = vpack.c.b16 %v6413, %v6411
    %v6514 = vpack.c.b16 %v6416, %v6414
    %v6515 = vpack.c.b16 %v6417, %v6415
    %v6516 = vpack.c.b16 %v6420, %v6418
    %v6517 = vpack.c.b16 %v6421, %v6419
    %v6518 = vpack.c.b16 %v6424, %v6422
    %v6519 = vpack.c.b16 %v6425, %v6423
    %v6520 = vpack.c.b16 %v6428, %v6426
    %v6521 = vpack.c.b16 %v6429, %v6427
    %v6522 = vpack.c.b16 %v6432, %v6430
    %v6523 = vpack.c.b16 %v6433, %v6431
    %v6524 = vpack.c.b16 %v6436, %v6434
    %v6525 = vpack.c.b16 %v6437, %v6435
    %v6526 = vpack.c.b16 %v6440, %v6438
    %v6527 = vpack.c.b16 %v6441, %v6439
    %v6528 = vpack.c.b16 %v6444, %v6442
    %v6529 = vpack.c.b16 %v6445, %v6443
    %v6530 = vpack.c.b16 %v6448, %v6446
    %v6531 = vpack.c.b16 %v6449, %v6447
    %v6532 = vpack.c.b16 %v6452, %v6450
    %v6533 = vpack.c.b16 %v6453, %v6451
    %v6534 = vpack.c.b16 %v6456, %v6454
    %v6535 = vpack.c.b16 %v6457, %v6455
    %v6536 = vpack.c.b16 %v6460, %v6458
    %v6537 = vpack.c.b16 %v6461, %v6459
    %v6538 = vpack.c.b16 %v6464, %v6462
    %v6539 = vpack.c.b16 %v6465, %v6463
    %v6540 = vpack.c.b16 %v6468, %v6466
    %v6541 = vpack.c.b16 %v6469, %v6467
    %v6542 = vpack.c.b16 %v6472, %v6470
    %v6543 = vpack.c.b16 %v6473, %v6471
    %v6544 = vpack.c.b16 %v6476, %v6474
    %v6545 = vpack.c.b16 %v6477, %v6475
    %v6546 = vpack.c.b16 %v6480, %v6478
    %v6547 = vpack.c.b16 %v6481, %v6479
    %v6548 = vpack.c.b16 %v6484, %v6482
    %v6549 = vpack.c.b16 %v6485, %v6483
    %6614 = vmatpush.bf16.msra.mxu0 %v6500
    %6615 = vmatpush.bf16.msra.mxu0 %v6498
    %6616 = vmatpush.bf16.msra.mxu0 %v6496
    %6617 = vmatpush.bf16.msra.mxu0 %v6494
    %6618 = vmatpush.bf16.msra.mxu0 %v6492
    %6619 = vmatpush.bf16.msra.mxu0 %v6490
    %6620 = vmatpush.bf16.msra.mxu0 %v6488
    %6621 = vmatpush.bf16.msra.mxu0 %v6486
    %6622 = vmatmul.bf16.gmra.mxu0 %v5854
    %v6623 = vpop.f32.mrf.mxu0
    %v6624 = vadd.f32 %v6290, %v6623
    %v6625 = vpop.f32.mrf.mxu0
    %v6626 = vadd.f32 %v6290, %v6625
    %6627 = vmatmul.bf16.gmra.mxu0 %v5855
    %v6628 = vpop.f32.mrf.mxu0
    %v6629 = vadd.f32 %v6290, %v6628
    %v6630 = vpop.f32.mrf.mxu0
    %v6631 = vadd.f32 %v6290, %v6630
    %6632 = vmatmul.bf16.gmra.mxu0 %v5856
    %v6633 = vpop.f32.mrf.mxu0
    %v6634 = vadd.f32 %v6290, %v6633
    %v6635 = vpop.f32.mrf.mxu0
    %v6636 = vadd.f32 %v6290, %v6635
    %6637 = vmatmul.bf16.gmra.mxu0 %v5857
    %v6638 = vpop.f32.mrf.mxu0
    %v6639 = vadd.f32 %v6290, %v6638
    %v6640 = vpop.f32.mrf.mxu0
    %v6641 = vadd.f32 %v6290, %v6640
    %6642 = vmatmul.bf16.gmra.mxu0 %v5858
    %v6643 = vpop.f32.mrf.mxu0
    %v6644 = vadd.f32 %v6290, %v6643
    %v6645 = vpop.f32.mrf.mxu0
    %v6646 = vadd.f32 %v6290, %v6645
    %6647 = vmatmul.bf16.gmra.mxu0 %v5859
    %v6648 = vpop.f32.mrf.mxu0
    %v6649 = vadd.f32 %v6290, %v6648
    %v6650 = vpop.f32.mrf.mxu0
    %v6651 = vadd.f32 %v6290, %v6650
    %6652 = vmatmul.bf16.gmra.mxu0 %v5860
    %v6653 = vpop.f32.mrf.mxu0
    %v6654 = vadd.f32 %v6290, %v6653
    %v6655 = vpop.f32.mrf.mxu0
    %v6656 = vadd.f32 %v6290, %v6655
    %6657 = vmatmul.bf16.gmra.mxu0 %v5861
    %v6658 = vpop.f32.mrf.mxu0
    %v6659 = vadd.f32 %v6290, %v6658
    %v6660 = vpop.f32.mrf.mxu0
    %v6661 = vadd.f32 %v6290, %v6660
    %6662 = vmatmul.bf16.gmra.mxu0 %v5862
    %v6663 = vpop.f32.mrf.mxu0
    %v6664 = vadd.f32 %v6290, %v6663
    %v6665 = vpop.f32.mrf.mxu0
    %v6666 = vadd.f32 %v6290, %v6665
    %6667 = vmatmul.bf16.gmra.mxu0 %v5863
    %v6668 = vpop.f32.mrf.mxu0
    %v6669 = vadd.f32 %v6290, %v6668
    %v6670 = vpop.f32.mrf.mxu0
    %v6671 = vadd.f32 %v6290, %v6670
    %6672 = vmatmul.bf16.gmra.mxu0 %v5864
    %v6673 = vpop.f32.mrf.mxu0
    %v6674 = vadd.f32 %v6290, %v6673
    %v6675 = vpop.f32.mrf.mxu0
    %v6676 = vadd.f32 %v6290, %v6675
    %6677 = vmatmul.bf16.gmra.mxu0 %v5865
    %v6678 = vpop.f32.mrf.mxu0
    %v6679 = vadd.f32 %v6290, %v6678
    %v6680 = vpop.f32.mrf.mxu0
    %v6681 = vadd.f32 %v6290, %v6680
    %6682 = vdwg.mxu0
    %6683 = vmatpush.bf16.msra.mxu0 %v6516
    %6684 = vmatpush.bf16.msra.mxu0 %v6514
    %6685 = vmatpush.bf16.msra.mxu0 %v6512
    %6686 = vmatpush.bf16.msra.mxu0 %v6510
    %6687 = vmatpush.bf16.msra.mxu0 %v6508
    %6688 = vmatpush.bf16.msra.mxu0 %v6506
    %6689 = vmatpush.bf16.msra.mxu0 %v6504
    %6690 = vmatpush.bf16.msra.mxu0 %v6502
    %6691 = vmatmul.bf16.gmra.mxu0 %v5892
    %v6692 = vpop.f32.mrf.mxu0
    %v6693 = vadd.f32 %v6624, %v6692
    %v6694 = vpop.f32.mrf.mxu0
    %v6695 = vadd.f32 %v6626, %v6694
    %6696 = vmatmul.bf16.gmra.mxu0 %v5900
    %v6697 = vpop.f32.mrf.mxu0
    %v6698 = vadd.f32 %v6629, %v6697
    %v6699 = vpop.f32.mrf.mxu0
    %v6700 = vadd.f32 %v6631, %v6699
    %6701 = vmatmul.bf16.gmra.mxu0 %v5908
    %v6702 = vpop.f32.mrf.mxu0
    %v6703 = vadd.f32 %v6634, %v6702
    %v6704 = vpop.f32.mrf.mxu0
    %v6705 = vadd.f32 %v6636, %v6704
    %6706 = vmatmul.bf16.gmra.mxu0 %v5916
    %v6707 = vpop.f32.mrf.mxu0
    %v6708 = vadd.f32 %v6639, %v6707
    %v6709 = vpop.f32.mrf.mxu0
    %v6710 = vadd.f32 %v6641, %v6709
    %6711 = vmatmul.bf16.gmra.mxu0 %v5924
    %v6712 = vpop.f32.mrf.mxu0
    %v6713 = vadd.f32 %v6644, %v6712
    %v6714 = vpop.f32.mrf.mxu0
    %v6715 = vadd.f32 %v6646, %v6714
    %6716 = vmatmul.bf16.gmra.mxu0 %v5932
    %v6717 = vpop.f32.mrf.mxu0
    %v6718 = vadd.f32 %v6649, %v6717
    %v6719 = vpop.f32.mrf.mxu0
    %v6720 = vadd.f32 %v6651, %v6719
    %6721 = vmatmul.bf16.gmra.mxu0 %v5940
    %v6722 = vpop.f32.mrf.mxu0
    %v6723 = vadd.f32 %v6654, %v6722
    %v6724 = vpop.f32.mrf.mxu0
    %v6725 = vadd.f32 %v6656, %v6724
    %6726 = vmatmul.bf16.gmra.mxu0 %v5948
    %v6727 = vpop.f32.mrf.mxu0
    %v6728 = vadd.f32 %v6659, %v6727
    %v6729 = vpop.f32.mrf.mxu0
    %v6730 = vadd.f32 %v6661, %v6729
    %6731 = vmatmul.bf16.gmra.mxu0 %v5956
    %v6732 = vpop.f32.mrf.mxu0
    %v6733 = vadd.f32 %v6664, %v6732
    %v6734 = vpop.f32.mrf.mxu0
    %v6735 = vadd.f32 %v6666, %v6734
    %6736 = vmatmul.bf16.gmra.mxu0 %v5964
    %v6737 = vpop.f32.mrf.mxu0
    %v6738 = vadd.f32 %v6669, %v6737
    %v6739 = vpop.f32.mrf.mxu0
    %v6740 = vadd.f32 %v6671, %v6739
    %6741 = vmatmul.bf16.gmra.mxu0 %v5972
    %v6742 = vpop.f32.mrf.mxu0
    %v6743 = vadd.f32 %v6674, %v6742
    %v6744 = vpop.f32.mrf.mxu0
    %v6745 = vadd.f32 %v6676, %v6744
    %6746 = vmatmul.bf16.gmra.mxu0 %v5980
    %v6747 = vpop.f32.mrf.mxu0
    %v6748 = vadd.f32 %v6679, %v6747
    %v6749 = vpop.f32.mrf.mxu0
    %v6750 = vadd.f32 %v6681, %v6749
    %6751 = vdwg.mxu0
    %6752 = vmatpush.bf16.msra.mxu0 %v6532
    %6753 = vmatpush.bf16.msra.mxu0 %v6530
    %6754 = vmatpush.bf16.msra.mxu0 %v6528
    %6755 = vmatpush.bf16.msra.mxu0 %v6526
    %6756 = vmatpush.bf16.msra.mxu0 %v6524
    %6757 = vmatpush.bf16.msra.mxu0 %v6522
    %6758 = vmatpush.bf16.msra.mxu0 %v6520
    %6759 = vmatpush.bf16.msra.mxu0 %v6518
    %6760 = vmatmul.bf16.gmra.mxu0 %v6058
    %v6761 = vpop.f32.mrf.mxu0
    %v6762 = vadd.f32 %v6693, %v6761
    %v6763 = vpop.f32.mrf.mxu0
    %v6764 = vadd.f32 %v6695, %v6763
    %6765 = vmatmul.bf16.gmra.mxu0 %v6060
    %v6766 = vpop.f32.mrf.mxu0
    %v6767 = vadd.f32 %v6698, %v6766
    %v6768 = vpop.f32.mrf.mxu0
    %v6769 = vadd.f32 %v6700, %v6768
    %6770 = vmatmul.bf16.gmra.mxu0 %v6062
    %v6771 = vpop.f32.mrf.mxu0
    %v6772 = vadd.f32 %v6703, %v6771
    %v6773 = vpop.f32.mrf.mxu0
    %v6774 = vadd.f32 %v6705, %v6773
    %6775 = vmatmul.bf16.gmra.mxu0 %v6064
    %v6776 = vpop.f32.mrf.mxu0
    %v6777 = vadd.f32 %v6708, %v6776
    %v6778 = vpop.f32.mrf.mxu0
    %v6779 = vadd.f32 %v6710, %v6778
    %6780 = vmatmul.bf16.gmra.mxu0 %v6066
    %v6781 = vpop.f32.mrf.mxu0
    %v6782 = vadd.f32 %v6713, %v6781
    %v6783 = vpop.f32.mrf.mxu0
    %v6784 = vadd.f32 %v6715, %v6783
    %6785 = vmatmul.bf16.gmra.mxu0 %v6068
    %v6786 = vpop.f32.mrf.mxu0
    %v6787 = vadd.f32 %v6718, %v6786
    %v6788 = vpop.f32.mrf.mxu0
    %v6789 = vadd.f32 %v6720, %v6788
    %6790 = vmatmul.bf16.gmra.mxu0 %v6070
    %v6791 = vpop.f32.mrf.mxu0
    %v6792 = vadd.f32 %v6723, %v6791
    %v6793 = vpop.f32.mrf.mxu0
    %v6794 = vadd.f32 %v6725, %v6793
    %6795 = vmatmul.bf16.gmra.mxu0 %v6072
    %v6796 = vpop.f32.mrf.mxu0
    %v6797 = vadd.f32 %v6728, %v6796
    %v6798 = vpop.f32.mrf.mxu0
    %v6799 = vadd.f32 %v6730, %v6798
    %6800 = vmatmul.bf16.gmra.mxu0 %v6074
    %v6801 = vpop.f32.mrf.mxu0
    %v6802 = vadd.f32 %v6733, %v6801
    %v6803 = vpop.f32.mrf.mxu0
    %v6804 = vadd.f32 %v6735, %v6803
    %6805 = vmatmul.bf16.gmra.mxu0 %v6076
    %v6806 = vpop.f32.mrf.mxu0
    %v6807 = vadd.f32 %v6738, %v6806
    %v6808 = vpop.f32.mrf.mxu0
    %v6809 = vadd.f32 %v6740, %v6808
    %6810 = vmatmul.bf16.gmra.mxu0 %v6078
    %v6811 = vpop.f32.mrf.mxu0
    %v6812 = vadd.f32 %v6743, %v6811
    %v6813 = vpop.f32.mrf.mxu0
    %v6814 = vadd.f32 %v6745, %v6813
    %6815 = vmatmul.bf16.gmra.mxu0 %v6080
    %v6816 = vpop.f32.mrf.mxu0
    %v6817 = vadd.f32 %v6748, %v6816
    %v6818 = vpop.f32.mrf.mxu0
    %v6819 = vadd.f32 %v6750, %v6818
    %6820 = vdwg.mxu0
    %6821 = vmatpush.bf16.msra.mxu0 %v6548
    %6822 = vmatpush.bf16.msra.mxu0 %v6546
    %6823 = vmatpush.bf16.msra.mxu0 %v6544
    %6824 = vmatpush.bf16.msra.mxu0 %v6542
    %6825 = vmatpush.bf16.msra.mxu0 %v6540
    %6826 = vmatpush.bf16.msra.mxu0 %v6538
    %6827 = vmatpush.bf16.msra.mxu0 %v6536
    %6828 = vmatpush.bf16.msra.mxu0 %v6534
    %6829 = vmatmul.bf16.gmra.mxu0 %v6112
    %v6830 = vpop.f32.mrf.mxu0
    %v6831 = vadd.f32 %v6762, %v6830
    %v6832 = vpop.f32.mrf.mxu0
    %v6833 = vadd.f32 %v6764, %v6832
    %6834 = vmatmul.bf16.gmra.mxu0 %v6121
    %v6835 = vpop.f32.mrf.mxu0
    %v6836 = vadd.f32 %v6767, %v6835
    %v6837 = vpop.f32.mrf.mxu0
    %v6838 = vadd.f32 %v6769, %v6837
    %6839 = vmatmul.bf16.gmra.mxu0 %v6130
    %v6840 = vpop.f32.mrf.mxu0
    %v6841 = vadd.f32 %v6772, %v6840
    %v6842 = vpop.f32.mrf.mxu0
    %v6843 = vadd.f32 %v6774, %v6842
    %6844 = vmatmul.bf16.gmra.mxu0 %v6139
    %v6845 = vpop.f32.mrf.mxu0
    %v6846 = vadd.f32 %v6777, %v6845
    %v6847 = vpop.f32.mrf.mxu0
    %v6848 = vadd.f32 %v6779, %v6847
    %6849 = vmatmul.bf16.gmra.mxu0 %v6148
    %v6850 = vpop.f32.mrf.mxu0
    %v6851 = vadd.f32 %v6782, %v6850
    %v6852 = vpop.f32.mrf.mxu0
    %v6853 = vadd.f32 %v6784, %v6852
    %6854 = vmatmul.bf16.gmra.mxu0 %v6157
    %v6855 = vpop.f32.mrf.mxu0
    %v6856 = vadd.f32 %v6787, %v6855
    %v6857 = vpop.f32.mrf.mxu0
    %v6858 = vadd.f32 %v6789, %v6857
    %6859 = vmatmul.bf16.gmra.mxu0 %v6166
    %v6860 = vpop.f32.mrf.mxu0
    %v6861 = vadd.f32 %v6792, %v6860
    %v6862 = vpop.f32.mrf.mxu0
    %v6863 = vadd.f32 %v6794, %v6862
    %6864 = vmatmul.bf16.gmra.mxu0 %v6175
    %v6865 = vpop.f32.mrf.mxu0
    %v6866 = vadd.f32 %v6797, %v6865
    %v6867 = vpop.f32.mrf.mxu0
    %v6868 = vadd.f32 %v6799, %v6867
    %6869 = vmatmul.bf16.gmra.mxu0 %v6184
    %v6870 = vpop.f32.mrf.mxu0
    %v6871 = vadd.f32 %v6802, %v6870
    %v6872 = vpop.f32.mrf.mxu0
    %v6873 = vadd.f32 %v6804, %v6872
    %6874 = vmatmul.bf16.gmra.mxu0 %v6193
    %v6875 = vpop.f32.mrf.mxu0
    %v6876 = vadd.f32 %v6807, %v6875
    %v6877 = vpop.f32.mrf.mxu0
    %v6878 = vadd.f32 %v6809, %v6877
    %6879 = vmatmul.bf16.gmra.mxu0 %v6202
    %v6880 = vpop.f32.mrf.mxu0
    %v6881 = vadd.f32 %v6812, %v6880
    %v6882 = vpop.f32.mrf.mxu0
    %v6883 = vadd.f32 %v6814, %v6882
    %6884 = vmatmul.bf16.gmra.mxu0 %v6211
    %v6885 = vpop.f32.mrf.mxu0
    %v6886 = vadd.f32 %v6817, %v6885
    %v6887 = vpop.f32.mrf.mxu0
    %v6888 = vadd.f32 %v6819, %v6887
    %6889 = vdwg.mxu0
    %6890 = vmatpush.bf16.msra.mxu0 %v6501
    %6891 = vmatpush.bf16.msra.mxu0 %v6499
    %6892 = vmatpush.bf16.msra.mxu0 %v6497
    %6893 = vmatpush.bf16.msra.mxu0 %v6495
    %6894 = vmatpush.bf16.msra.mxu0 %v6493
    %6895 = vmatpush.bf16.msra.mxu0 %v6491
    %6896 = vmatpush.bf16.msra.mxu0 %v6489
    %6897 = vmatpush.bf16.msra.mxu0 %v6487
    %6898 = vmatmul.bf16.gmra.mxu0 %v5854
    %v6899 = vpop.f32.mrf.mxu0
    %v6900 = vadd.f32 %v6291, %v6899
    %v6901 = vpop.f32.mrf.mxu0
    %v6902 = vadd.f32 %v6291, %v6901
    %6903 = vmatmul.bf16.gmra.mxu0 %v5855
    %v6904 = vpop.f32.mrf.mxu0
    %v6905 = vadd.f32 %v6291, %v6904
    %v6906 = vpop.f32.mrf.mxu0
    %v6907 = vadd.f32 %v6291, %v6906
    %6908 = vmatmul.bf16.gmra.mxu0 %v5856
    %v6909 = vpop.f32.mrf.mxu0
    %v6910 = vadd.f32 %v6291, %v6909
    %v6911 = vpop.f32.mrf.mxu0
    %v6912 = vadd.f32 %v6291, %v6911
    %6913 = vmatmul.bf16.gmra.mxu0 %v5857
    %v6914 = vpop.f32.mrf.mxu0
    %v6915 = vadd.f32 %v6291, %v6914
    %v6916 = vpop.f32.mrf.mxu0
    %v6917 = vadd.f32 %v6291, %v6916
    %6918 = vmatmul.bf16.gmra.mxu0 %v5858
    %v6919 = vpop.f32.mrf.mxu0
    %v6920 = vadd.f32 %v6291, %v6919
    %v6921 = vpop.f32.mrf.mxu0
    %v6922 = vadd.f32 %v6291, %v6921
    %6923 = vmatmul.bf16.gmra.mxu0 %v5859
    %v6924 = vpop.f32.mrf.mxu0
    %v6925 = vadd.f32 %v6291, %v6924
    %v6926 = vpop.f32.mrf.mxu0
    %v6927 = vadd.f32 %v6291, %v6926
    %6928 = vmatmul.bf16.gmra.mxu0 %v5860
    %v6929 = vpop.f32.mrf.mxu0
    %v6930 = vadd.f32 %v6291, %v6929
    %v6931 = vpop.f32.mrf.mxu0
    %v6932 = vadd.f32 %v6291, %v6931
    %6933 = vmatmul.bf16.gmra.mxu0 %v5861
    %v6934 = vpop.f32.mrf.mxu0
    %v6935 = vadd.f32 %v6291, %v6934
    %v6936 = vpop.f32.mrf.mxu0
    %v6937 = vadd.f32 %v6291, %v6936
    %6938 = vmatmul.bf16.gmra.mxu0 %v5862
    %v6939 = vpop.f32.mrf.mxu0
    %v6940 = vadd.f32 %v6291, %v6939
    %v6941 = vpop.f32.mrf.mxu0
    %v6942 = vadd.f32 %v6291, %v6941
    %6943 = vmatmul.bf16.gmra.mxu0 %v5863
    %v6944 = vpop.f32.mrf.mxu0
    %v6945 = vadd.f32 %v6291, %v6944
    %v6946 = vpop.f32.mrf.mxu0
    %v6947 = vadd.f32 %v6291, %v6946
    %6948 = vmatmul.bf16.gmra.mxu0 %v5864
    %v6949 = vpop.f32.mrf.mxu0
    %v6950 = vadd.f32 %v6291, %v6949
    %v6951 = vpop.f32.mrf.mxu0
    %v6952 = vadd.f32 %v6291, %v6951
    %6953 = vmatmul.bf16.gmra.mxu0 %v5865
    %v6954 = vpop.f32.mrf.mxu0
    %v6955 = vadd.f32 %v6291, %v6954
    %v6956 = vpop.f32.mrf.mxu0
    %v6957 = vadd.f32 %v6291, %v6956
    %6958 = vdwg.mxu0
    %6959 = vmatpush.bf16.msra.mxu0 %v6517
    %6960 = vmatpush.bf16.msra.mxu0 %v6515
    %6961 = vmatpush.bf16.msra.mxu0 %v6513
    %6962 = vmatpush.bf16.msra.mxu0 %v6511
    %6963 = vmatpush.bf16.msra.mxu0 %v6509
    %6964 = vmatpush.bf16.msra.mxu0 %v6507
    %6965 = vmatpush.bf16.msra.mxu0 %v6505
    %6966 = vmatpush.bf16.msra.mxu0 %v6503
    %6967 = vmatmul.bf16.gmra.mxu0 %v5892
    %v6968 = vpop.f32.mrf.mxu0
    %v6969 = vadd.f32 %v6900, %v6968
    %v6970 = vpop.f32.mrf.mxu0
    %v6971 = vadd.f32 %v6902, %v6970
    %6972 = vmatmul.bf16.gmra.mxu0 %v5900
    %v6973 = vpop.f32.mrf.mxu0
    %v6974 = vadd.f32 %v6905, %v6973
    %v6975 = vpop.f32.mrf.mxu0
    %v6976 = vadd.f32 %v6907, %v6975
    %6977 = vmatmul.bf16.gmra.mxu0 %v5908
    %v6978 = vpop.f32.mrf.mxu0
    %v6979 = vadd.f32 %v6910, %v6978
    %v6980 = vpop.f32.mrf.mxu0
    %v6981 = vadd.f32 %v6912, %v6980
    %6982 = vmatmul.bf16.gmra.mxu0 %v5916
    %v6983 = vpop.f32.mrf.mxu0
    %v6984 = vadd.f32 %v6915, %v6983
    %v6985 = vpop.f32.mrf.mxu0
    %v6986 = vadd.f32 %v6917, %v6985
    %6987 = vmatmul.bf16.gmra.mxu0 %v5924
    %v6988 = vpop.f32.mrf.mxu0
    %v6989 = vadd.f32 %v6920, %v6988
    %v6990 = vpop.f32.mrf.mxu0
    %v6991 = vadd.f32 %v6922, %v6990
    %6992 = vmatmul.bf16.gmra.mxu0 %v5932
    %v6993 = vpop.f32.mrf.mxu0
    %v6994 = vadd.f32 %v6925, %v6993
    %v6995 = vpop.f32.mrf.mxu0
    %v6996 = vadd.f32 %v6927, %v6995
    %6997 = vmatmul.bf16.gmra.mxu0 %v5940
    %v6998 = vpop.f32.mrf.mxu0
    %v6999 = vadd.f32 %v6930, %v6998
    %v7000 = vpop.f32.mrf.mxu0
    %v7001 = vadd.f32 %v6932, %v7000
    %7002 = vmatmul.bf16.gmra.mxu0 %v5948
    %v7003 = vpop.f32.mrf.mxu0
    %v7004 = vadd.f32 %v6935, %v7003
    %v7005 = vpop.f32.mrf.mxu0
    %v7006 = vadd.f32 %v6937, %v7005
    %7007 = vmatmul.bf16.gmra.mxu0 %v5956
    %v7008 = vpop.f32.mrf.mxu0
    %v7009 = vadd.f32 %v6940, %v7008
    %v7010 = vpop.f32.mrf.mxu0
    %v7011 = vadd.f32 %v6942, %v7010
    %7012 = vmatmul.bf16.gmra.mxu0 %v5964
    %v7013 = vpop.f32.mrf.mxu0
    %v7014 = vadd.f32 %v6945, %v7013
    %v7015 = vpop.f32.mrf.mxu0
    %v7016 = vadd.f32 %v6947, %v7015
    %7017 = vmatmul.bf16.gmra.mxu0 %v5972
    %v7018 = vpop.f32.mrf.mxu0
    %v7019 = vadd.f32 %v6950, %v7018
    %v7020 = vpop.f32.mrf.mxu0
    %v7021 = vadd.f32 %v6952, %v7020
    %7022 = vmatmul.bf16.gmra.mxu0 %v5980
    %v7023 = vpop.f32.mrf.mxu0
    %v7024 = vadd.f32 %v6955, %v7023
    %v7025 = vpop.f32.mrf.mxu0
    %v7026 = vadd.f32 %v6957, %v7025
    %7027 = vdwg.mxu0
    %7028 = vmatpush.bf16.msra.mxu0 %v6533
    %7029 = vmatpush.bf16.msra.mxu0 %v6531
    %7030 = vmatpush.bf16.msra.mxu0 %v6529
    %7031 = vmatpush.bf16.msra.mxu0 %v6527
    %7032 = vmatpush.bf16.msra.mxu0 %v6525
    %7033 = vmatpush.bf16.msra.mxu0 %v6523
    %7034 = vmatpush.bf16.msra.mxu0 %v6521
    %7035 = vmatpush.bf16.msra.mxu0 %v6519
    %7036 = vmatmul.bf16.gmra.mxu0 %v6058
    %v7037 = vpop.f32.mrf.mxu0
    %v7038 = vadd.f32 %v6969, %v7037
    %v7039 = vpop.f32.mrf.mxu0
    %v7040 = vadd.f32 %v6971, %v7039
    %7041 = vmatmul.bf16.gmra.mxu0 %v6060
    %v7042 = vpop.f32.mrf.mxu0
    %v7043 = vadd.f32 %v6974, %v7042
    %v7044 = vpop.f32.mrf.mxu0
    %v7045 = vadd.f32 %v6976, %v7044
    %7046 = vmatmul.bf16.gmra.mxu0 %v6062
    %v7047 = vpop.f32.mrf.mxu0
    %v7048 = vadd.f32 %v6979, %v7047
    %v7049 = vpop.f32.mrf.mxu0
    %v7050 = vadd.f32 %v6981, %v7049
    %7051 = vmatmul.bf16.gmra.mxu0 %v6064
    %v7052 = vpop.f32.mrf.mxu0
    %v7053 = vadd.f32 %v6984, %v7052
    %v7054 = vpop.f32.mrf.mxu0
    %v7055 = vadd.f32 %v6986, %v7054
    %7056 = vmatmul.bf16.gmra.mxu0 %v6066
    %v7057 = vpop.f32.mrf.mxu0
    %v7058 = vadd.f32 %v6989, %v7057
    %v7059 = vpop.f32.mrf.mxu0
    %v7060 = vadd.f32 %v6991, %v7059
    %7061 = vmatmul.bf16.gmra.mxu0 %v6068
    %v7062 = vpop.f32.mrf.mxu0
    %v7063 = vadd.f32 %v6994, %v7062
    %v7064 = vpop.f32.mrf.mxu0
    %v7065 = vadd.f32 %v6996, %v7064
    %7066 = vmatmul.bf16.gmra.mxu0 %v6070
    %v7067 = vpop.f32.mrf.mxu0
    %v7068 = vadd.f32 %v6999, %v7067
    %v7069 = vpop.f32.mrf.mxu0
    %v7070 = vadd.f32 %v7001, %v7069
    %7071 = vmatmul.bf16.gmra.mxu0 %v6072
    %v7072 = vpop.f32.mrf.mxu0
    %v7073 = vadd.f32 %v7004, %v7072
    %v7074 = vpop.f32.mrf.mxu0
    %v7075 = vadd.f32 %v7006, %v7074
    %7076 = vmatmul.bf16.gmra.mxu0 %v6074
    %v7077 = vpop.f32.mrf.mxu0
    %v7078 = vadd.f32 %v7009, %v7077
    %v7079 = vpop.f32.mrf.mxu0
    %v7080 = vadd.f32 %v7011, %v7079
    %7081 = vmatmul.bf16.gmra.mxu0 %v6076
    %v7082 = vpop.f32.mrf.mxu0
    %v7083 = vadd.f32 %v7014, %v7082
    %v7084 = vpop.f32.mrf.mxu0
    %v7085 = vadd.f32 %v7016, %v7084
    %7086 = vmatmul.bf16.gmra.mxu0 %v6078
    %v7087 = vpop.f32.mrf.mxu0
    %v7088 = vadd.f32 %v7019, %v7087
    %v7089 = vpop.f32.mrf.mxu0
    %v7090 = vadd.f32 %v7021, %v7089
    %7091 = vmatmul.bf16.gmra.mxu0 %v6080
    %v7092 = vpop.f32.mrf.mxu0
    %v7093 = vadd.f32 %v7024, %v7092
    %v7094 = vpop.f32.mrf.mxu0
    %v7095 = vadd.f32 %v7026, %v7094
    %7096 = vdwg.mxu0
    %7097 = vmatpush.bf16.msra.mxu0 %v6549
    %7098 = vmatpush.bf16.msra.mxu0 %v6547
    %7099 = vmatpush.bf16.msra.mxu0 %v6545
    %7100 = vmatpush.bf16.msra.mxu0 %v6543
    %7101 = vmatpush.bf16.msra.mxu0 %v6541
    %7102 = vmatpush.bf16.msra.mxu0 %v6539
    %7103 = vmatpush.bf16.msra.mxu0 %v6537
    %7104 = vmatpush.bf16.msra.mxu0 %v6535
    %7105 = vmatmul.bf16.gmra.mxu0 %v6112
    %v7106 = vpop.f32.mrf.mxu0
    %v7107 = vadd.f32 %v7038, %v7106
    %v7108 = vpop.f32.mrf.mxu0
    %v7109 = vadd.f32 %v7040, %v7108
    %7110 = vmatmul.bf16.gmra.mxu0 %v6121
    %v7111 = vpop.f32.mrf.mxu0
    %v7112 = vadd.f32 %v7043, %v7111
    %v7113 = vpop.f32.mrf.mxu0
    %v7114 = vadd.f32 %v7045, %v7113
    %7115 = vmatmul.bf16.gmra.mxu0 %v6130
    %v7116 = vpop.f32.mrf.mxu0
    %v7117 = vadd.f32 %v7048, %v7116
    %v7118 = vpop.f32.mrf.mxu0
    %v7119 = vadd.f32 %v7050, %v7118
    %7120 = vmatmul.bf16.gmra.mxu0 %v6139
    %v7121 = vpop.f32.mrf.mxu0
    %v7122 = vadd.f32 %v7053, %v7121
    %v7123 = vpop.f32.mrf.mxu0
    %v7124 = vadd.f32 %v7055, %v7123
    %7125 = vmatmul.bf16.gmra.mxu0 %v6148
    %v7126 = vpop.f32.mrf.mxu0
    %v7127 = vadd.f32 %v7058, %v7126
    %v7128 = vpop.f32.mrf.mxu0
    %v7129 = vadd.f32 %v7060, %v7128
    %7130 = vmatmul.bf16.gmra.mxu0 %v6157
    %v7131 = vpop.f32.mrf.mxu0
    %v7132 = vadd.f32 %v7063, %v7131
    %v7133 = vpop.f32.mrf.mxu0
    %v7134 = vadd.f32 %v7065, %v7133
    %7135 = vmatmul.bf16.gmra.mxu0 %v6166
    %v7136 = vpop.f32.mrf.mxu0
    %v7137 = vadd.f32 %v7068, %v7136
    %v7138 = vpop.f32.mrf.mxu0
    %v7139 = vadd.f32 %v7070, %v7138
    %7140 = vmatmul.bf16.gmra.mxu0 %v6175
    %v7141 = vpop.f32.mrf.mxu0
    %v7142 = vadd.f32 %v7073, %v7141
    %v7143 = vpop.f32.mrf.mxu0
    %v7144 = vadd.f32 %v7075, %v7143
    %7145 = vmatmul.bf16.gmra.mxu0 %v6184
    %v7146 = vpop.f32.mrf.mxu0
    %v7147 = vadd.f32 %v7078, %v7146
    %v7148 = vpop.f32.mrf.mxu0
    %v7149 = vadd.f32 %v7080, %v7148
    %7150 = vmatmul.bf16.gmra.mxu0 %v6193
    %v7151 = vpop.f32.mrf.mxu0
    %v7152 = vadd.f32 %v7083, %v7151
    %v7153 = vpop.f32.mrf.mxu0
    %v7154 = vadd.f32 %v7085, %v7153
    %7155 = vmatmul.bf16.gmra.mxu0 %v6202
    %v7156 = vpop.f32.mrf.mxu0
    %v7157 = vadd.f32 %v7088, %v7156
    %v7158 = vpop.f32.mrf.mxu0
    %v7159 = vadd.f32 %v7090, %v7158
    %7160 = vmatmul.bf16.gmra.mxu0 %v6211
    %v7161 = vpop.f32.mrf.mxu0
    %v7162 = vadd.f32 %v7093, %v7161
    %v7163 = vpop.f32.mrf.mxu0
    %v7164 = vadd.f32 %v7095, %v7163
    %7165 = vdwg.mxu0
    %v7166 = vmax.f32 %v6831, 0.0
    %v7167 = vmax.f32 %v7107, 0.0
    %v7168 = vmax.f32 %v6833, 0.0
    %v7169 = vmax.f32 %v7109, 0.0
    %v7170 = vmax.f32 %v6836, 0.0
    %v7171 = vmax.f32 %v7112, 0.0
    %v7172 = vmax.f32 %v6838, 0.0
    %v7173 = vmax.f32 %v7114, 0.0
    %v7174 = vmax.f32 %v6841, 0.0
    %v7175 = vmax.f32 %v7117, 0.0
    %v7176 = vmax.f32 %v6843, 0.0
    %v7177 = vmax.f32 %v7119, 0.0
    %v7178 = vmax.f32 %v6846, 0.0
    %v7179 = vmax.f32 %v7122, 0.0
    %v7180 = vmax.f32 %v6848, 0.0
    %v7181 = vmax.f32 %v7124, 0.0
    %v7182 = vmax.f32 %v6851, 0.0
    %v7183 = vmax.f32 %v7127, 0.0
    %v7184 = vmax.f32 %v6853, 0.0
    %v7185 = vmax.f32 %v7129, 0.0
    %v7186 = vmax.f32 %v6856, 0.0
    %v7187 = vmax.f32 %v7132, 0.0
    %v7188 = vmax.f32 %v6858, 0.0
    %v7189 = vmax.f32 %v7134, 0.0
    %v7190 = vmax.f32 %v6861, 0.0
    %v7191 = vmax.f32 %v7137, 0.0
    %v7192 = vmax.f32 %v6863, 0.0
    %v7193 = vmax.f32 %v7139, 0.0
    %v7194 = vmax.f32 %v6866, 0.0
    %v7195 = vmax.f32 %v7142, 0.0
    %v7196 = vmax.f32 %v6868, 0.0
    %v7197 = vmax.f32 %v7144, 0.0
    %v7198 = vmax.f32 %v6871, 0.0
    %v7199 = vmax.f32 %v7147, 0.0
    %v7200 = vmax.f32 %v6873, 0.0
    %v7201 = vmax.f32 %v7149, 0.0
    %v7202 = vmax.f32 %v6876, 0.0
    %v7203 = vmax.f32 %v7152, 0.0
    %v7204 = vmax.f32 %v6878, 0.0
    %v7205 = vmax.f32 %v7154, 0.0
    %v7206 = vmax.f32 %v6881, 0.0
    %v7207 = vmax.f32 %v7157, 0.0
    %v7208 = vmax.f32 %v6883, 0.0
    %v7209 = vmax.f32 %v7159, 0.0
    %v7210 = vmax.f32 %v6886, 0.0
    %v7211 = vmax.f32 %v7162, 0.0
    %v7212 = vmax.f32 %v6888, 0.0
    %v7213 = vmax.f32 %v7164, 0.0
    %v7214 = vpack.c.bf16 %v7167, %v7166
    %v7215 = vpack.c.bf16 %v7169, %v7168
    %v7216 = vpack.c.bf16 %v7171, %v7170
    %v7217 = vpack.c.bf16 %v7173, %v7172
    %v7218 = vpack.c.bf16 %v7175, %v7174
    %v7219 = vpack.c.bf16 %v7177, %v7176
    %v7220 = vpack.c.bf16 %v7179, %v7178
    %v7221 = vpack.c.bf16 %v7181, %v7180
    %v7222 = vpack.c.bf16 %v7183, %v7182
    %v7223 = vpack.c.bf16 %v7185, %v7184
    %v7224 = vpack.c.bf16 %v7187, %v7186
    %v7225 = vpack.c.bf16 %v7189, %v7188
    %v7226 = vpack.c.bf16 %v7191, %v7190
    %v7227 = vpack.c.bf16 %v7193, %v7192
    %v7228 = vpack.c.bf16 %v7195, %v7194
    %v7229 = vpack.c.bf16 %v7197, %v7196
    %v7230 = vpack.c.bf16 %v7199, %v7198
    %v7231 = vpack.c.bf16 %v7201, %v7200
    %v7232 = vpack.c.bf16 %v7203, %v7202
    %v7233 = vpack.c.bf16 %v7205, %v7204
    %v7234 = vpack.c.bf16 %v7207, %v7206
    %v7235 = vpack.c.bf16 %v7209, %v7208
    %v7236 = vpack.c.bf16 %v7211, %v7210
    %v7237 = vpack.c.bf16 %v7213, %v7212
    %7238 = vst [vmem:[#allocation6] sm:$0xff] %v7214
    %7239 = vst [vmem:[#allocation6 + $0x8] sm:$0xff] %v7215
    %7240 = vst [vmem:[#allocation6 + $0x10] sm:$0xff] %v7216
    %7241 = vst [vmem:[#allocation6 + $0x18] sm:$0xff] %v7217
    %7242 = vst [vmem:[#allocation6 + $0x20] sm:$0xff] %v7218
    %7243 = vst [vmem:[#allocation6 + $0x28] sm:$0xff] %v7219
    %7244 = vst [vmem:[#allocation6 + $0x30] sm:$0xff] %v7220
    %7245 = vst [vmem:[#allocation6 + $0x38] sm:$0xff] %v7221
    %7246 = vst [vmem:[#allocation6 + $0x40] sm:$0xff] %v7222
    %7247 = vst [vmem:[#allocation6 + $0x48] sm:$0xff] %v7223
    %7248 = vst [vmem:[#allocation6 + $0x50] sm:$0xff] %v7224
    %7249 = vst [vmem:[#allocation6 + $0x58] sm:$0xff] %v7225
    %7250 = vst [vmem:[#allocation6 + $0x60] sm:$0xff] %v7226
    %7251 = vst [vmem:[#allocation6 + $0x68] sm:$0xff] %v7227
    %7252 = vst [vmem:[#allocation6 + $0x70] sm:$0xff] %v7228
    %7253 = vst [vmem:[#allocation6 + $0x78] sm:$0xff] %v7229
    %7254 = vst [vmem:[#allocation6 + $0x80] sm:$0xff] %v7230
    %7255 = vst [vmem:[#allocation6 + $0x88] sm:$0xff] %v7231
    %7256 = vst [vmem:[#allocation6 + $0x90] sm:$0xff] %v7232
    %7257 = vst [vmem:[#allocation6 + $0x98] sm:$0xff] %v7233
    %7258 = vst [vmem:[#allocation6 + $0xa0] sm:$0xff] %v7234
    %7259 = vst [vmem:[#allocation6 + $0xa8] sm:$0xff] %v7235
    %7260 = vst [vmem:[#allocation6 + $0xb0] sm:$0xff] %v7236
    %7261 = vst [vmem:[#allocation6 + $0xb8] sm:$0xff] %v7237
    %v7262 = vld [vmem:[#allocation11] sm:$0xff]
    %v7263 = vld [vmem:[#allocation11 + $0x8] sm:$0xff]
    %v7264 = vld [vmem:[#allocation11 + $0x10] sm:$0xff]
    %v7265 = vld [vmem:[#allocation11 + $0x18] sm:$0xff]
    %v7266 = vld [vmem:[#allocation11 + $0x20] sm:$0xff]
    %v7267 = vld [vmem:[#allocation11 + $0x28] sm:$0xff]
    %v7268 = vld [vmem:[#allocation11 + $0x30] sm:$0xff]
    %v7269 = vld [vmem:[#allocation11 + $0x38] sm:$0xff]
    %v7270 = vld [vmem:[#allocation11 + $0x40] sm:$0xff]
    %v7271 = vld [vmem:[#allocation11 + $0x48] sm:$0xff]
    %v7272 = vld [vmem:[#allocation11 + $0x50] sm:$0xff]
    %v7273 = vld [vmem:[#allocation11 + $0x58] sm:$0xff]
    %v7274 = vld [vmem:[#allocation11 + $0x60] sm:$0xff]
    %v7275 = vld [vmem:[#allocation11 + $0x68] sm:$0xff]
    %v7276 = vld [vmem:[#allocation11 + $0x70] sm:$0xff]
    %v7277 = vld [vmem:[#allocation11 + $0x78] sm:$0xff]
    %v7278 = vld [vmem:[#allocation11 + $0x80] sm:$0xff]
    %v7279 = vld [vmem:[#allocation11 + $0x88] sm:$0xff]
    %v7280 = vld [vmem:[#allocation11 + $0x90] sm:$0xff]
    %v7281 = vld [vmem:[#allocation11 + $0x98] sm:$0xff]
    %v7282 = vld [vmem:[#allocation11 + $0xa0] sm:$0xff]
    %v7283 = vld [vmem:[#allocation11 + $0xa8] sm:$0xff]
    %v7284 = vld [vmem:[#allocation11 + $0xb0] sm:$0xff]
    %v7285 = vld [vmem:[#allocation11 + $0xb8] sm:$0xff]
    %v7286 = vld [vmem:[#allocation11 + $0xc0] sm:$0xf]
    %v7287 = vld [vmem:[#allocation11 + $0xc8] sm:$0xf]
    %v7288 = vld [vmem:[#allocation6] sm:$0xff]
    %v7289 = vld [vmem:[#allocation6 + $0x8] sm:$0xff]
    %v7290 = vld [vmem:[#allocation6 + $0x10] sm:$0xff]
    %v7291 = vld [vmem:[#allocation6 + $0x18] sm:$0xff]
    %v7292 = vld [vmem:[#allocation6 + $0x20] sm:$0xff]
    %v7293 = vld [vmem:[#allocation6 + $0x28] sm:$0xff]
    %v7294 = vld [vmem:[#allocation6 + $0x30] sm:$0xff]
    %v7295 = vld [vmem:[#allocation6 + $0x38] sm:$0xff]
    %v7296 = vld [vmem:[#allocation6 + $0x40] sm:$0xff]
    %v7297 = vld [vmem:[#allocation6 + $0x48] sm:$0xff]
    %v7298 = vld [vmem:[#allocation6 + $0x50] sm:$0xff]
    %v7299 = vld [vmem:[#allocation6 + $0x58] sm:$0xff]
    %v7300 = vld [vmem:[#allocation6 + $0x60] sm:$0x33]
    %v7301 = vunpack.c.l.bf16 %v7288
    %v7302 = vunpack.c.h.bf16 %v7288
    %v7303 = vunpack.c.l.bf16 %v7289
    %v7304 = vunpack.c.h.bf16 %v7289
    %v7305 = vunpack.c.l.bf16 %v7290
    %v7306 = vunpack.c.h.bf16 %v7290
    %v7307 = vunpack.c.l.bf16 %v7291
    %v7308 = vunpack.c.h.bf16 %v7291
    %v7309 = vunpack.c.l.bf16 %v7292
    %v7310 = vunpack.c.h.bf16 %v7292
    %v7311 = vunpack.c.l.bf16 %v7293
    %v7312 = vunpack.c.h.bf16 %v7293
    %v7313 = vunpack.c.l.bf16 %v7294
    %v7314 = vunpack.c.h.bf16 %v7294
    %v7315 = vunpack.c.l.bf16 %v7295
    %v7316 = vunpack.c.h.bf16 %v7295
    %v7317 = vunpack.c.l.bf16 %v7296
    %v7318 = vunpack.c.h.bf16 %v7296
    %v7319 = vunpack.c.l.bf16 %v7297
    %v7320 = vunpack.c.h.bf16 %v7297
    %v7321 = vunpack.c.l.bf16 %v7298
    %v7322 = vunpack.c.h.bf16 %v7298
    %v7323 = vunpack.c.l.bf16 %v7299
    %v7324 = vunpack.c.h.bf16 %v7299
    %v7325 = vunpack.c.l.bf16 %v7300
    %v7326 = vunpack.c.h.bf16 %v7300
    %v7327 = vmul.f32 %v7301, %v7262
    %v7328 = vmul.f32 %v7302, %v7263
    %v7329 = vmul.f32 %v7303, %v7264
    %v7330 = vmul.f32 %v7304, %v7265
    %v7331 = vmul.f32 %v7305, %v7266
    %v7332 = vmul.f32 %v7306, %v7267
    %v7333 = vmul.f32 %v7307, %v7268
    %v7334 = vmul.f32 %v7308, %v7269
    %v7335 = vmul.f32 %v7309, %v7270
    %v7336 = vmul.f32 %v7310, %v7271
    %v7337 = vmul.f32 %v7311, %v7272
    %v7338 = vmul.f32 %v7312, %v7273
    %v7339 = vmul.f32 %v7313, %v7274
    %v7340 = vmul.f32 %v7314, %v7275
    %v7341 = vmul.f32 %v7315, %v7276
    %v7342 = vmul.f32 %v7316, %v7277
    %v7343 = vmul.f32 %v7317, %v7278
    %v7344 = vmul.f32 %v7318, %v7279
    %v7345 = vmul.f32 %v7319, %v7280
    %v7346 = vmul.f32 %v7320, %v7281
    %v7347 = vmul.f32 %v7321, %v7282
    %v7348 = vmul.f32 %v7322, %v7283
    %v7349 = vmul.f32 %v7323, %v7284
    %v7350 = vmul.f32 %v7324, %v7285
    %v7351 = vmul.f32 %v7325, %v7286
    %v7352 = vmul.f32 %v7326, %v7287
    %v7353 = vadd.f32 %v7327, %v7329
    %v7354 = vadd.f32 %v7353, %v7331
    %v7355 = vadd.f32 %v7354, %v7333
    %v7356 = vadd.f32 %v7355, %v7335
    %v7357 = vadd.f32 %v7356, %v7337
    %v7358 = vadd.f32 %v7357, %v7339
    %v7359 = vadd.f32 %v7358, %v7341
    %v7360 = vadd.f32 %v7359, %v7343
    %v7361 = vadd.f32 %v7360, %v7345
    %v7362 = vadd.f32 %v7361, %v7347
    %v7363 = vadd.f32 %v7362, %v7349
    %vm7364 = vcmask 1043456
    %v7365 = vsel %vm7364, %v7351, 0.0
    %v7366 = vadd.f32 %v7363, %v7365
    %v7367 = vrot.slane %v7366, 4
    %v7368 = vadd.f32 %v7366, %v7367
    %v7369 = vrot.slane %v7368, 2
    %v7370 = vadd.f32 %v7368, %v7369
    %v7371 = vrot.slane %v7370, 1
    %v7372 = vadd.f32 %v7370, %v7371
    %v7373 = vadd.f32 %v7328, %v7330
    %v7374 = vadd.f32 %v7373, %v7332
    %v7375 = vadd.f32 %v7374, %v7334
    %v7376 = vadd.f32 %v7375, %v7336
    %v7377 = vadd.f32 %v7376, %v7338
    %v7378 = vadd.f32 %v7377, %v7340
    %v7379 = vadd.f32 %v7378, %v7342
    %v7380 = vadd.f32 %v7379, %v7344
    %v7381 = vadd.f32 %v7380, %v7346
    %v7382 = vadd.f32 %v7381, %v7348
    %v7383 = vadd.f32 %v7382, %v7350
    %v7384 = vsel %vm7364, %v7352, 0.0
    %v7385 = vadd.f32 %v7383, %v7384
    %v7386 = vrot.slane %v7385, 4
    %v7387 = vadd.f32 %v7385, %v7386
    %v7388 = vrot.slane %v7387, 2
    %v7389 = vadd.f32 %v7387, %v7388
    %v7390 = vrot.slane %v7389, 1
    %v7391 = vadd.f32 %v7389, %v7390
    %v7394 = vrot.slane %v7391, 7
    %vm7395 = vcmask 1040384
    %v7396 = vsel %vm7395, %v7372, %v7394
    %v7398 = vlaneseq
    %vm7399 = vcmp.ge.s32.totalorder %v7398, 0
    %vm7400 = vcmp.lt.s32.totalorder %v7398, 256
    %vm7401 = vmand %vm7399, %vm7400
    %7402 = vst.msk [vmem:[#allocation7] ss:$2 sm:$0x3] %vm7401, %v7396
    %v7403 = vld [vmem:[#allocation6 + $0x60] sm:$0xcc]
    %v7404 = vld [vmem:[#allocation6 + $0x68] sm:$0xff]
    %v7405 = vld [vmem:[#allocation6 + $0x70] sm:$0xff]
    %v7406 = vld [vmem:[#allocation6 + $0x78] sm:$0xff]
    %v7407 = vld [vmem:[#allocation6 + $0x80] sm:$0xff]
    %v7408 = vld [vmem:[#allocation6 + $0x88] sm:$0xff]
    %v7409 = vld [vmem:[#allocation6 + $0x90] sm:$0xff]
    %v7410 = vld [vmem:[#allocation6 + $0x98] sm:$0xff]
    %v7411 = vld [vmem:[#allocation6 + $0xa0] sm:$0xff]
    %v7412 = vld [vmem:[#allocation6 + $0xa8] sm:$0xff]
    %v7413 = vld [vmem:[#allocation6 + $0xb0] sm:$0xff]
    %v7414 = vld [vmem:[#allocation6 + $0xb8] sm:$0xff]
    %v7415 = vld [vmem:[#allocation6 + $0xc0] sm:$0xff]
    %v7416 = vunpack.c.l.bf16 %v7403
    %v7417 = vunpack.c.h.bf16 %v7403
    %v7418 = vunpack.c.l.bf16 %v7404
    %v7419 = vunpack.c.h.bf16 %v7404
    %v7420 = vunpack.c.l.bf16 %v7405
    %v7421 = vunpack.c.h.bf16 %v7405
    %v7422 = vunpack.c.l.bf16 %v7406
    %v7423 = vunpack.c.h.bf16 %v7406
    %v7424 = vunpack.c.l.bf16 %v7407
    %v7425 = vunpack.c.h.bf16 %v7407
    %v7426 = vunpack.c.l.bf16 %v7408
    %v7427 = vunpack.c.h.bf16 %v7408
    %v7428 = vunpack.c.l.bf16 %v7409
    %v7429 = vunpack.c.h.bf16 %v7409
    %v7430 = vunpack.c.l.bf16 %v7410
    %v7431 = vunpack.c.h.bf16 %v7410
    %v7432 = vunpack.c.l.bf16 %v7411
    %v7433 = vunpack.c.h.bf16 %v7411
    %v7434 = vunpack.c.l.bf16 %v7412
    %v7435 = vunpack.c.h.bf16 %v7412
    %v7436 = vunpack.c.l.bf16 %v7413
    %v7437 = vunpack.c.h.bf16 %v7413
    %v7438 = vunpack.c.l.bf16 %v7414
    %v7439 = vunpack.c.h.bf16 %v7414
    %v7440 = vunpack.c.l.bf16 %v7415
    %v7441 = vunpack.c.h.bf16 %v7415
    %v7468 = vrot.slane %v7262, 4
    %v7469 = vrot.slane %v7263, 4
    %v7470 = vrot.slane %v7264, 4
    %v7471 = vsel %vm7364, %v7468, %v7470
    %v7472 = vrot.slane %v7265, 4
    %v7473 = vsel %vm7364, %v7469, %v7472
    %v7474 = vrot.slane %v7266, 4
    %v7475 = vsel %vm7364, %v7470, %v7474
    %v7476 = vrot.slane %v7267, 4
    %v7477 = vsel %vm7364, %v7472, %v7476
    %v7478 = vrot.slane %v7268, 4
    %v7479 = vsel %vm7364, %v7474, %v7478
    %v7480 = vrot.slane %v7269, 4
    %v7481 = vsel %vm7364, %v7476, %v7480
    %v7482 = vrot.slane %v7270, 4
    %v7483 = vsel %vm7364, %v7478, %v7482
    %v7484 = vrot.slane %v7271, 4
    %v7485 = vsel %vm7364, %v7480, %v7484
    %v7486 = vrot.slane %v7272, 4
    %v7487 = vsel %vm7364, %v7482, %v7486
    %v7488 = vrot.slane %v7273, 4
    %v7489 = vsel %vm7364, %v7484, %v7488
    %v7490 = vrot.slane %v7274, 4
    %v7491 = vsel %vm7364, %v7486, %v7490
    %v7492 = vrot.slane %v7275, 4
    %v7493 = vsel %vm7364, %v7488, %v7492
    %v7494 = vrot.slane %v7276, 4
    %v7495 = vsel %vm7364, %v7490, %v7494
    %v7496 = vrot.slane %v7277, 4
    %v7497 = vsel %vm7364, %v7492, %v7496
    %v7498 = vrot.slane %v7278, 4
    %v7499 = vsel %vm7364, %v7494, %v7498
    %v7500 = vrot.slane %v7279, 4
    %v7501 = vsel %vm7364, %v7496, %v7500
    %v7502 = vrot.slane %v7280, 4
    %v7503 = vsel %vm7364, %v7498, %v7502
    %v7504 = vrot.slane %v7281, 4
    %v7505 = vsel %vm7364, %v7500, %v7504
    %v7506 = vrot.slane %v7282, 4
    %v7507 = vsel %vm7364, %v7502, %v7506
    %v7508 = vrot.slane %v7283, 4
    %v7509 = vsel %vm7364, %v7504, %v7508
    %v7510 = vrot.slane %v7284, 4
    %v7511 = vsel %vm7364, %v7506, %v7510
    %v7512 = vrot.slane %v7285, 4
    %v7513 = vsel %vm7364, %v7508, %v7512
    %v7514 = vrot.slane %v7286, 4
    %v7515 = vsel %vm7364, %v7510, %v7514
    %v7516 = vrot.slane %v7287, 4
    %v7517 = vsel %vm7364, %v7512, %v7516
    %v7544 = vmul.f32 %v7416, %v7468
    %v7545 = vmul.f32 %v7417, %v7469
    %v7546 = vmul.f32 %v7418, %v7471
    %v7547 = vmul.f32 %v7419, %v7473
    %v7548 = vmul.f32 %v7420, %v7475
    %v7549 = vmul.f32 %v7421, %v7477
    %v7550 = vmul.f32 %v7422, %v7479
    %v7551 = vmul.f32 %v7423, %v7481
    %v7552 = vmul.f32 %v7424, %v7483
    %v7553 = vmul.f32 %v7425, %v7485
    %v7554 = vmul.f32 %v7426, %v7487
    %v7555 = vmul.f32 %v7427, %v7489
    %v7556 = vmul.f32 %v7428, %v7491
    %v7557 = vmul.f32 %v7429, %v7493
    %v7558 = vmul.f32 %v7430, %v7495
    %v7559 = vmul.f32 %v7431, %v7497
    %v7560 = vmul.f32 %v7432, %v7499
    %v7561 = vmul.f32 %v7433, %v7501
    %v7562 = vmul.f32 %v7434, %v7503
    %v7563 = vmul.f32 %v7435, %v7505
    %v7564 = vmul.f32 %v7436, %v7507
    %v7565 = vmul.f32 %v7437, %v7509
    %v7566 = vmul.f32 %v7438, %v7511
    %v7567 = vmul.f32 %v7439, %v7513
    %v7568 = vmul.f32 %v7440, %v7515
    %v7569 = vmul.f32 %v7441, %v7517
    %v7596 = vrot.slane %v7544, 4
    %v7597 = vrot.slane %v7546, 4
    %v7598 = vsel %vm7364, %v7596, %v7597
    %v7599 = vrot.slane %v7545, 4
    %v7600 = vrot.slane %v7547, 4
    %v7601 = vsel %vm7364, %v7599, %v7600
    %v7602 = vrot.slane %v7548, 4
    %v7603 = vsel %vm7364, %v7597, %v7602
    %v7604 = vrot.slane %v7549, 4
    %v7605 = vsel %vm7364, %v7600, %v7604
    %v7606 = vrot.slane %v7550, 4
    %v7607 = vsel %vm7364, %v7602, %v7606
    %v7608 = vrot.slane %v7551, 4
    %v7609 = vsel %vm7364, %v7604, %v7608
    %v7610 = vrot.slane %v7552, 4
    %v7611 = vsel %vm7364, %v7606, %v7610
    %v7612 = vrot.slane %v7553, 4
    %v7613 = vsel %vm7364, %v7608, %v7612
    %v7614 = vrot.slane %v7554, 4
    %v7615 = vsel %vm7364, %v7610, %v7614
    %v7616 = vrot.slane %v7555, 4
    %v7617 = vsel %vm7364, %v7612, %v7616
    %v7618 = vrot.slane %v7556, 4
    %v7619 = vsel %vm7364, %v7614, %v7618
    %v7620 = vrot.slane %v7557, 4
    %v7621 = vsel %vm7364, %v7616, %v7620
    %v7622 = vrot.slane %v7558, 4
    %v7623 = vsel %vm7364, %v7618, %v7622
    %v7624 = vrot.slane %v7559, 4
    %v7625 = vsel %vm7364, %v7620, %v7624
    %v7626 = vrot.slane %v7560, 4
    %v7627 = vsel %vm7364, %v7622, %v7626
    %v7628 = vrot.slane %v7561, 4
    %v7629 = vsel %vm7364, %v7624, %v7628
    %v7630 = vrot.slane %v7562, 4
    %v7631 = vsel %vm7364, %v7626, %v7630
    %v7632 = vrot.slane %v7563, 4
    %v7633 = vsel %vm7364, %v7628, %v7632
    %v7634 = vrot.slane %v7564, 4
    %v7635 = vsel %vm7364, %v7630, %v7634
    %v7636 = vrot.slane %v7565, 4
    %v7637 = vsel %vm7364, %v7632, %v7636
    %v7638 = vrot.slane %v7566, 4
    %v7639 = vsel %vm7364, %v7634, %v7638
    %v7640 = vrot.slane %v7567, 4
    %v7641 = vsel %vm7364, %v7636, %v7640
    %v7642 = vrot.slane %v7568, 4
    %v7643 = vsel %vm7364, %v7638, %v7642
    %v7644 = vrot.slane %v7569, 4
    %v7645 = vsel %vm7364, %v7640, %v7644
    %v7672 = vadd.f32 %v7598, %v7603
    %v7673 = vadd.f32 %v7672, %v7607
    %v7674 = vadd.f32 %v7673, %v7611
    %v7675 = vadd.f32 %v7674, %v7615
    %v7676 = vadd.f32 %v7675, %v7619
    %v7677 = vadd.f32 %v7676, %v7623
    %v7678 = vadd.f32 %v7677, %v7627
    %v7679 = vadd.f32 %v7678, %v7631
    %v7680 = vadd.f32 %v7679, %v7635
    %v7681 = vadd.f32 %v7680, %v7639
    %v7682 = vadd.f32 %v7681, %v7643
    %v7683 = vsel %vm7364, %v7642, 0.0
    %v7684 = vadd.f32 %v7682, %v7683
    %v7685 = vrot.slane %v7684, 4
    %v7686 = vadd.f32 %v7684, %v7685
    %v7687 = vrot.slane %v7686, 2
    %v7688 = vadd.f32 %v7686, %v7687
    %v7689 = vrot.slane %v7688, 1
    %v7690 = vadd.f32 %v7688, %v7689
    %v7691 = vadd.f32 %v7601, %v7605
    %v7692 = vadd.f32 %v7691, %v7609
    %v7693 = vadd.f32 %v7692, %v7613
    %v7694 = vadd.f32 %v7693, %v7617
    %v7695 = vadd.f32 %v7694, %v7621
    %v7696 = vadd.f32 %v7695, %v7625
    %v7697 = vadd.f32 %v7696, %v7629
    %v7698 = vadd.f32 %v7697, %v7633
    %v7699 = vadd.f32 %v7698, %v7637
    %v7700 = vadd.f32 %v7699, %v7641
    %v7701 = vadd.f32 %v7700, %v7645
    %v7702 = vsel %vm7364, %v7644, 0.0
    %v7703 = vadd.f32 %v7701, %v7702
    %v7704 = vrot.slane %v7703, 4
    %v7705 = vadd.f32 %v7703, %v7704
    %v7706 = vrot.slane %v7705, 2
    %v7707 = vadd.f32 %v7705, %v7706
    %v7708 = vrot.slane %v7707, 1
    %v7709 = vadd.f32 %v7707, %v7708
    %v7712 = vrot.slane %v7709, 7
    %v7713 = vsel %vm7395, %v7690, %v7712
    %s7715 = scalar_lea.vmem [#allocation7], 1
    %7716 = vst.msk [vmem:[%s7715] ss:$2 sm:$0x3] %vm7401, %v7713
    %v7717 = vld [vmem:[#allocation7] sm:$0xf]
    %7719 = vst [vmem:[#allocation1] ss:$4 sm:$0xff] %v7717
    %v7720 = vld.sshfl [vmem:[#allocation1] sm:$0xff pattern:$0x73625140]
    %v7721 = vld.sshfl [vmem:[#allocation1 + $0x8] sm:$0xff pattern:$0x73625140]
    %vm7724 = vcmask 1041408
    %v7725 = vsel %vm7724, %v7720, 0.0
    %v7726 = vsel %vm7724, %v7721, 0.0
    %v7727 = vadd.f32 %v7725, %v7726
    %7728 = vadd.xlane.f32.xlu0 %v7727
    %v7729 = vpop.xlane.xlu0 %7728
    %v7730 = vld [vmem:[#allocation8] sm:$0x1]
    %v7732 = vperm.slane %v7730, 0
    %v7734 = vadd.f32 %v7729, %v7732
    %v7735 = vtanh.pop %v7734
    %vm7736 = vcmask 1024
    %7737 = vst.msk [vmem:[%s13] sm:$0x3] %vm7736, %v7735
    // Predicated region
    $region62: #{cnn_forward.1} parent=1 // pred_check
      _
    $region63: #{cnn_forward.1} parent=1 // pred_check_branch
      %7739 = sbr.rel (0) target = $region65
    $region64: #{cnn_forward.1} parent=1 // pred_region
      _
    $region65: #{cnn_forward.1} parent=1 // pred_fallthru
      _
    // Predicated region
    $region66: #{cnn_forward.1} parent=1 // pred_check
      _
    $region67: #{cnn_forward.1} parent=1 // pred_check_branch
      %7741 = sbr.rel (0) target = $region69
    $region68: #{cnn_forward.1} parent=1 // pred_region
      _
    $region69: #{cnn_forward.1} parent=1 // pred_fallthru
      _
    %7742 = vsyncpa [#allocation10], 1
    %7743 = vsyncpa [#allocation12], 1

</llo_original>
